<compile_context>
chip_gen: v7x
topology: tpu7x:2x2x1
jax: 0.10.0
libtpu: 0.0.40
codegen_flags: <defaults>
</compile_context>

<pallas_src>
import jax
import jax.numpy as jnp
from jax.experimental import pallas as pl
from jax.experimental.pallas import tpu as pltpu


# ----------------------------------------------------------------------------
# In-kernel conv-stack helper (channel-major / lane-dense layout).
# ----------------------------------------------------------------------------
def _run_conv_stack(buf_ref, inputs, w_refs, b_refs, H, W):
    """Stack of [3x3 'same' conv + bias + ReLU] layers on ONE image.

    buf_ref : VMEM scratch (Cmax, H*W + 2*(W+1)) f32 flat padded activation.
    inputs  : list of (Ci, H*W) f32 values, channel-concatenated (in order)
              into the first layer's input (replaces wrapper-side concat).
    w_refs  : per-layer Ref (9, Cout, Cin); tap t = dh*3 + dw.
    b_refs  : per-layer Ref (Cout, 1).
    Returns the last layer's output as a (CoutLast, H*W) f32 value.
    """
    HW = H * W
    OFF = W + 1
    cbuf = buf_ref.shape[0]

    # Zero the two halo margins (vertically out-of-range taps read these).
    # Re-done every step: scratch persists across grid steps and a
    # program_id==0 init is unsafe under megacore "parallel" sharding.
    buf_ref[pl.ds(0, cbuf), pl.ds(0, OFF)] = jnp.zeros((cbuf, OFF), jnp.float32)
    buf_ref[pl.ds(0, cbuf), pl.ds(OFF + HW, OFF)] = jnp.zeros(
        (cbuf, OFF), jnp.float32)

    # Horizontal validity masks (left/right neighbours that would wrap rows).
    col = jax.lax.broadcasted_iota(jnp.int32, (1, HW), 1)
    ww = col % W
    valid_l = ww >= 1          # taps with dw == 0 read column w-1
    valid_r = ww <= W - 2      # taps with dw == 2 read column w+1

    # Channel-stack the first layer's input directly into the buffer.
    c0 = 0
    for xin in inputs:
        buf_ref[pl.ds(c0, xin.shape[0]), pl.ds(OFF, HW)] = xin
        c0 += xin.shape[0]
    assert c0 == w_refs[0].shape[2], "input channels != first-layer Cin"

    x = None
    for li, (w_ref, b_ref) in enumerate(zip(w_refs, b_refs)):
        _, cout, cin = w_ref.shape
        if li > 0:
            # Previous layer's output becomes this layer's (padded) input.
            buf_ref[pl.ds(0, cin), pl.ds(OFF, HW)] = x

        acc = None
        for dh in range(3):
            for dw in range(3):
                t = dh * 3 + dw
                s = (dh - 1) * W + (dw - 1)
                tap = buf_ref[pl.ds(0, cin), pl.ds(OFF + s, HW)]   # (cin, HW)
                if dw == 0:
                    tap = jnp.where(valid_l, tap, 0.0)
                elif dw == 2:
                    tap = jnp.where(valid_r, tap, 0.0)
                wt = w_ref[t]                                       # (cout, cin)
                if cin >= 8:
                    # MXU path: 9 accumulating K=Cin matmuls (no im2col slab).
                    part = jnp.dot(wt, tap,
                                   preferred_element_type=jnp.float32)
                    acc = part if acc is None else acc + part
                else:
                    # Tiny-Cin layers (1-3 channels): a K<8 matmul wastes the
                    # MXU; do the few multiply-adds on the VPU instead.
                    for ci in range(cin):
                        part = wt[:, ci:ci + 1] * tap[ci:ci + 1, :]
                        acc = part if acc is None else acc + part
        x = jnp.maximum(acc + b_ref[...], 0.0)      # ConvBlock bias + ReLU
    return x


# ----------------------------------------------------------------------------
# Kernel factories.
# ----------------------------------------------------------------------------
def _make_branches_kernel(n_fft, n_sp, Hf, Wf, Hs, Ws):
    """Both branch stacks (fft + spatial) fused in one kernel, per batch elt."""
    def kernel(*refs):
        xr_ref, xi_ref, xs_ref = refs[0], refs[1], refs[2]
        p = 3
        fw = refs[p:p + 2 * n_fft]; p += 2 * n_fft
        sw = refs[p:p + 2 * n_sp]; p += 2 * n_sp
        yf_ref, ys_ref = refs[p], refs[p + 1]
        buf_f, buf_s = refs[p + 2], refs[p + 3]
        # fft branch: first-layer input = channel-concat of (real, imag).
        yf_ref[0] = _run_conv_stack(buf_f, [xr_ref[0], xi_ref[0]],
                                    fw[0::2], fw[1::2], Hf, Wf)
        # spatial branch.
        ys_ref[0] = _run_conv_stack(buf_s, [xs_ref[0]],
                                    sw[0::2], sw[1::2], Hs, Ws)
    return kernel


def _make_output_conv_kernel(H, W):
    """output_conv ConvBlock; the 3-way channel concat is done in-kernel."""
    def kernel(x1_ref, x2_ref, x0_ref, w_ref, b_ref, o_ref, buf_ref):
        o_ref[0] = _run_conv_stack(
            buf_ref, [x1_ref[0], x2_ref[0], x0_ref[0]], [w_ref], [b_ref], H, W)
    return kernel


# ----------------------------------------------------------------------------
# Host-side wrappers.
# ----------------------------------------------------------------------------
def _weight_operands(layers):
    """(3,3,Cin,Cout) HWIO weights -> [(9,Cout,Cin), (Cout,1)] operands."""
    ops, specs, dims = [], [], []
    for (w, b) in layers:
        kh, kw, cin, cout = w.shape
        assert (kh, kw) == (3, 3)
        dims.append((cin, cout))
        ops.append(jnp.transpose(w, (0, 1, 3, 2)).reshape(9, cout, cin))
        ops.append(b.reshape(cout, 1))
        specs.append(pl.BlockSpec((9, cout, cin), lambda n: (0, 0, 0)))
        specs.append(pl.BlockSpec((cout, 1), lambda n: (0, 0)))
    return ops, specs, dims


def _branch_conv_stacks(x_fft_re, x_fft_im, x_sp, fft_layers, sp_layers):
    """Both ConvBlock stacks fused in ONE pallas_call (two outputs)."""
    N, cf, Hf, Wf = x_fft_re.shape
    _, cs, Hs, Ws = x_sp.shape
    HWf, HWs = Hf * Wf, Hs * Ws

    f_ops, f_specs, f_dims = _weight_operands(fft_layers)
    s_ops, s_specs, s_dims = _weight_operands(sp_layers)
    assert f_dims[0][0] == 2 * cf and s_dims[0][0] == cs
    coutf, couts = f_dims[-1][1], s_dims[-1][1]
    cmax_f = max(max(d) for d in f_dims)
    cmax_s = max(max(d) for d in s_dims)

    operands = [x_fft_re.reshape(N, cf, HWf),      # free reshapes (contiguous)
                x_fft_im.reshape(N, cf, HWf),
                x_sp.reshape(N, cs, HWs)] + f_ops + s_ops
    in_specs = [pl.BlockSpec((1, cf, HWf), lambda n: (n, 0, 0)),
                pl.BlockSpec((1, cf, HWf), lambda n: (n, 0, 0)),
                pl.BlockSpec((1, cs, HWs), lambda n: (n, 0, 0))] + f_specs + s_specs

    yf, ys = pl.pallas_call(
        _make_branches_kernel(len(fft_layers), len(sp_layers), Hf, Wf, Hs, Ws),
        out_shape=(jax.ShapeDtypeStruct((N, coutf, HWf), jnp.float32),
                   jax.ShapeDtypeStruct((N, couts, HWs), jnp.float32)),
        grid=(N,),
        in_specs=in_specs,
        out_specs=(pl.BlockSpec((1, coutf, HWf), lambda n: (n, 0, 0)),
                   pl.BlockSpec((1, couts, HWs), lambda n: (n, 0, 0))),
        scratch_shapes=[
            pltpu.VMEM((cmax_f, HWf + 2 * (Wf + 1)), jnp.float32),
            pltpu.VMEM((cmax_s, HWs + 2 * (Ws + 1)), jnp.float32),
        ],
        compiler_params=pltpu.CompilerParams(
            dimension_semantics=("parallel",),
            vmem_limit_bytes=32 * 1024 * 1024),
    )(*operands)
    return yf.reshape(N, coutf, Hf, Wf), ys.reshape(N, couts, Hs, Ws)


def _output_conv(x1, x2, x0, layer):
    """output_conv ConvBlock on the channel-concat of (x1, x2, x0)."""
    N, c1, H, W = x1.shape
    _, c2, _, _ = x2.shape
    _, c0, _, _ = x0.shape
    HW = H * W
    w, b = layer
    cin, cout = w.shape[2], w.shape[3]
    assert cin == c1 + c2 + c0
    w_ops, w_specs, _ = _weight_operands([(w, b)])

    out = pl.pallas_call(
        _make_output_conv_kernel(H, W),
        out_shape=jax.ShapeDtypeStruct((N, cout, HW), jnp.float32),
        grid=(N,),
        in_specs=[pl.BlockSpec((1, c1, HW), lambda n: (n, 0, 0)),
                  pl.BlockSpec((1, c2, HW), lambda n: (n, 0, 0)),
                  pl.BlockSpec((1, c0, HW), lambda n: (n, 0, 0))] + w_specs,
        out_specs=pl.BlockSpec((1, cout, HW), lambda n: (n, 0, 0)),
        scratch_shapes=[
            pltpu.VMEM((max(cin, cout), HW + 2 * (W + 1)), jnp.float32)],
        compiler_params=pltpu.CompilerParams(
            dimension_semantics=("parallel",),
            vmem_limit_bytes=32 * 1024 * 1024),
    )(x1.reshape(N, c1, HW), x2.reshape(N, c2, HW), x0.reshape(N, c0, HW),
      *w_ops)
    return out.reshape(N, cout, H, W)


# ----------------------------------------------------------------------------
# FFTBlock forward.
# ----------------------------------------------------------------------------
def fft_block_forward(noisy_images, params):
    """FFTBlock.forward.  noisy_images: (N, C, H, W) f32 (module assumes C=1)."""
    ftt_layers, conv_layers, out_layer = params

    # Frequency glue: no Pallas FFT primitive -> jnp.fft, matching torch
    # defaults (rfftn over dims (-1,-2); fftshift/ifftshift over ALL dims).
    fftshifted = jnp.fft.fftshift(jnp.fft.rfftn(noisy_images, axes=(-1, -2)))

    # Both ConvBlock stacks in one fused Pallas call; the real/imag channel
    # concat happens inside the kernel.
    x_1, x_2 = _branch_conv_stacks(fftshifted.real, fftshifted.imag,
                                   noisy_images, ftt_layers, conv_layers)

    # Back to image domain (module hard-codes the 2-channel real/imag split).
    cplx = jax.lax.complex(x_1[:, :1, :, :], x_1[:, 1:2, :, :])
    x_1 = jnp.fft.irfftn(jnp.fft.ifftshift(cplx), axes=(-1, -2)).astype(jnp.float32)

    # output_conv (ConvBlock); the 3-way concat is built inside the kernel.
    # TODO(synk): fusing this into the branch kernel is blocked by the irfftn.
    out = _output_conv(x_1, x_2, noisy_images, out_layer)
    return jnp.maximum(out, 0.0)     # output_relu (idempotent after ConvBlock ReLU)


# ----------------------------------------------------------------------------
# Deterministic parameter init (torch Conv2d-style uniform bounds).
# ----------------------------------------------------------------------------
def init_fft_block_params(key, channels=1, filters=16):
    def conv_init(k, cin, cout):
        kw, kb = jax.random.split(k)
        limit = float(cin * 9) ** -0.5
        w = jax.random.uniform(kw, (3, 3, cin, cout), jnp.float32, -limit, limit)
        b = jax.random.uniform(kb, (cout,), jnp.float32, -limit, limit)
        return w, b

    keys = jax.random.split(key, 7)
    ftt_layers = [conv_init(keys[0], 2, filters),
                  conv_init(keys[1], filters, filters),
                  conv_init(keys[2], filters, 2)]
    conv_layers = [conv_init(keys[3], channels, filters),
                   conv_init(keys[4], filters, filters),
                   conv_init(keys[5], filters, channels)]
    out_layer = conv_init(keys[6], 3 * channels, channels)
    return ftt_layers, conv_layers, out_layer


# ----------------------------------------------------------------------------
# Pure-XLA reference forward (lax.conv) — sanity check only.
# ----------------------------------------------------------------------------
def _reference_forward(noisy_images, params):
    def conv_relu(x, w, b):
        y = jax.lax.conv_general_dilated(
            x, w, window_strides=(1, 1), padding=((1, 1), (1, 1)),
            dimension_numbers=("NCHW", "HWIO", "NCHW"))
        return jnp.maximum(y + b.reshape(1, -1, 1, 1), 0.0)

    def stack(x, layers):
        for (w, b) in layers:
            x = conv_relu(x, w, b)
        return x

    ftt_layers, conv_layers, out_layer = params
    fftshifted = jnp.fft.fftshift(jnp.fft.rfftn(noisy_images, axes=(-1, -2)))
    x_1 = jnp.concatenate([fftshifted.real, fftshifted.imag], axis=1)
    x_1 = stack(x_1, ftt_layers)
    x_2 = stack(noisy_images, conv_layers)
    cplx = jax.lax.complex(x_1[:, :1], x_1[:, 1:2])
    x_1 = jnp.fft.irfftn(jnp.fft.ifftshift(cplx), axes=(-1, -2)).astype(jnp.float32)
    cat = jnp.concatenate([x_1, x_2, noisy_images], axis=1)
    return jnp.maximum(stack(cat, [out_layer]), 0.0)


if __name__ == "__main__":
    key = jax.random.PRNGKey(0)
    kx, kp = jax.random.split(key)

    # channels must be 1: FFTBlock hard-codes the 2-channel real/imag split.
    channels, filters = 1, 16
    N, H, W = 2, 16, 16

    noisy_images = jax.random.normal(kx, (N, channels, H, W), jnp.float32)
    params = init_fft_block_params(kp, channels=channels, filters=filters)

    fwd = jax.jit(fft_block_forward)
    out = jax.block_until_ready(fwd(noisy_images, params))

    assert out.shape == (N, channels, H, W), out.shape
    assert out.dtype == jnp.float32
    assert bool(jnp.all(out >= 0.0))                   # ReLU output
    assert bool(jnp.all(jnp.isfinite(out)))

    # Cross-check against the pure-XLA reference forward.
    ref = jax.block_until_ready(jax.jit(_reference_forward)(noisy_images, params))
    rel_err = float(jnp.max(jnp.abs(out - ref)) / (jnp.max(jnp.abs(ref)) + 1e-3))
    assert rel_err < 5e-2, f"mismatch vs reference: rel_err={rel_err}"

    print("KERNEL_OK")
</pallas_src>

<mosaic_0001>
module attributes {stable_mosaic.version = 11 : i64} {
  func.func @kernel(%arg0: i32, %arg1: memref<1x1x144xf32, #tpu.memory_space<vmem>>, %arg2: memref<1x1x144xf32, #tpu.memory_space<vmem>>, %arg3: memref<1x1x256xf32, #tpu.memory_space<vmem>>, %arg4: memref<9x16x2xf32, #tpu.memory_space<vmem>>, %arg5: memref<16x1xf32, #tpu.memory_space<vmem>>, %arg6: memref<9x16x16xf32, #tpu.memory_space<vmem>>, %arg7: memref<16x1xf32, #tpu.memory_space<vmem>>, %arg8: memref<9x2x16xf32, #tpu.memory_space<vmem>>, %arg9: memref<2x1xf32, #tpu.memory_space<vmem>>, %arg10: memref<9x16x1xf32, #tpu.memory_space<vmem>>, %arg11: memref<16x1xf32, #tpu.memory_space<vmem>>, %arg12: memref<9x16x16xf32, #tpu.memory_space<vmem>>, %arg13: memref<16x1xf32, #tpu.memory_space<vmem>>, %arg14: memref<9x1x16xf32, #tpu.memory_space<vmem>>, %arg15: memref<1x1xf32, #tpu.memory_space<vmem>>, %arg16: memref<1x2x144xf32, #tpu.memory_space<vmem>>, %arg17: memref<1x1x256xf32, #tpu.memory_space<vmem>>, %arg18: memref<16x178xf32, #tpu.memory_space<vmem>>, %arg19: memref<16x290xf32, #tpu.memory_space<vmem>>) attributes {dimension_semantics = [#tpu.dimension_semantics<parallel>], iteration_bounds = array<i64: 2>, scalar_prefetch = 0 : i64, scratch_operands = 2 : i64, tpu.core_type = #tpu.core_type<tc>, window_params = [{transform_indices = @transform_0, window_bounds = array<i64: 1, 1, 144>}, {transform_indices = @transform_1, window_bounds = array<i64: 1, 1, 144>}, {transform_indices = @transform_2, window_bounds = array<i64: 1, 1, 256>}, {pipeline_mode = #tpu.pipeline_mode<synchronous>, transform_indices = @transform_3, window_bounds = array<i64: 9, 16, 2>}, {pipeline_mode = #tpu.pipeline_mode<synchronous>, transform_indices = @transform_4, window_bounds = array<i64: 16, 1>}, {pipeline_mode = #tpu.pipeline_mode<synchronous>, transform_indices = @transform_5, window_bounds = array<i64: 9, 16, 16>}, {pipeline_mode = #tpu.pipeline_mode<synchronous>, transform_indices = @transform_6, window_bounds = array<i64: 16, 1>}, {pipeline_mode = #tpu.pipeline_mode<synchronous>, transform_indices = @transform_7, window_bounds = array<i64: 9, 2, 16>}, {pipeline_mode = #tpu.pipeline_mode<synchronous>, transform_indices = @transform_8, window_bounds = array<i64: 2, 1>}, {pipeline_mode = #tpu.pipeline_mode<synchronous>, transform_indices = @transform_9, window_bounds = array<i64: 9, 16, 1>}, {pipeline_mode = #tpu.pipeline_mode<synchronous>, transform_indices = @transform_10, window_bounds = array<i64: 16, 1>}, {pipeline_mode = #tpu.pipeline_mode<synchronous>, transform_indices = @transform_11, window_bounds = array<i64: 9, 16, 16>}, {pipeline_mode = #tpu.pipeline_mode<synchronous>, transform_indices = @transform_12, window_bounds = array<i64: 16, 1>}, {pipeline_mode = #tpu.pipeline_mode<synchronous>, transform_indices = @transform_13, window_bounds = array<i64: 9, 1, 16>}, {pipeline_mode = #tpu.pipeline_mode<synchronous>, transform_indices = @transform_14, window_bounds = array<i64: 1, 1>}, {transform_indices = @transform_15, window_bounds = array<i64: 1, 2, 144>}, {transform_indices = @transform_16, window_bounds = array<i64: 1, 1, 256>}]} {
    %c0 = arith.constant 0 : index
    %c0_0 = arith.constant 0 : index
    %c0_1 = arith.constant 0 : index
    %0 = vector.load %arg1[%c0, %c0_0, %c0_1] : memref<1x1x144xf32, #tpu.memory_space<vmem>>, vector<1x1x144xf32>
    %1 = vector.shape_cast %0 : vector<1x1x144xf32> to vector<1x144xf32>
    %c0_2 = arith.constant 0 : index
    %c0_3 = arith.constant 0 : index
    %c0_4 = arith.constant 0 : index
    %2 = vector.load %arg2[%c0_2, %c0_3, %c0_4] : memref<1x1x144xf32, #tpu.memory_space<vmem>>, vector<1x1x144xf32>
    %3 = vector.shape_cast %2 : vector<1x1x144xf32> to vector<1x144xf32>
    %cst = arith.constant 0.000000e+00 : f32
    %4 = vector.broadcast %cst : f32 to vector<16x17xf32>
    %c0_5 = arith.constant 0 : index
    %c0_6 = arith.constant 0 : index
    %5 = vector.load %arg18[%c0_5, %c0_6] : memref<16x178xf32, #tpu.memory_space<vmem>>, vector<16x17xf32>
    tpu.vector_store %arg18[%c0_5, %c0_6], %4 {strides = array<i32>} : memref<16x178xf32, #tpu.memory_space<vmem>>, vector<16x17xf32>,
    %cst_7 = arith.constant 0.000000e+00 : f32
    %6 = vector.broadcast %cst_7 : f32 to vector<16x17xf32>
    %c0_8 = arith.constant 0 : index
    %c161 = arith.constant 161 : index
    %7 = vector.load %arg18[%c0_8, %c161] : memref<16x178xf32, #tpu.memory_space<vmem>>, vector<16x17xf32>
    tpu.vector_store %arg18[%c0_8, %c161], %6 {strides = array<i32>} : memref<16x178xf32, #tpu.memory_space<vmem>>, vector<16x17xf32>,
    %8 = tpu.iota {dimensions = array<i32: 1>} : vector<1x144xi32>
    %c16_i32 = arith.constant 16 : i32
    %c0_i32 = arith.constant 0 : i32
    %9 = arith.cmpi eq, %c16_i32, %c0_i32 : i32
    %c1_i32 = arith.constant 1 : i32
    %10 = arith.select %9, %c1_i32, %c16_i32 : i32
    %11 = vector.broadcast %10 : i32 to vector<1x144xi32>
    %12 = arith.remsi %8, %11 : vector<1x144xi32>
    %c0_i32_9 = arith.constant 0 : i32
    %13 = vector.broadcast %c0_i32_9 : i32 to vector<1x144xi32>
    %14 = arith.cmpi ne, %12, %13 : vector<1x144xi32>
    %c0_i32_10 = arith.constant 0 : i32
    %15 = vector.broadcast %c0_i32_10 : i32 to vector<1x144xi32>
    %16 = arith.cmpi slt, %12, %15 : vector<1x144xi32>
    %c0_i32_11 = arith.constant 0 : i32
    %17 = arith.cmpi slt, %10, %c0_i32_11 : i32
    %18 = vector.broadcast %17 : i1 to vector<1x144xi1>
    %19 = vector.broadcast %18 : vector<1x144xi1> to vector<1x144xi1>
    %20 = arith.xori %16, %19 : vector<1x144xi1>
    %21 = arith.andi %20, %14 : vector<1x144xi1>
    %22 = vector.broadcast %10 : i32 to vector<1x144xi32>
    %23 = arith.addi %12, %22 : vector<1x144xi32>
    %24 = arith.select %21, %23, %12 : vector<1x144xi1>, vector<1x144xi32>
    %c1_i32_12 = arith.constant 1 : i32
    %25 = vector.broadcast %c1_i32_12 : i32 to vector<1x144xi32>
    %26 = arith.cmpi sge, %24, %25 : vector<1x144xi32>
    %c14_i32 = arith.constant 14 : i32
    %27 = vector.broadcast %c14_i32 : i32 to vector<1x144xi32>
    %28 = arith.cmpi sle, %24, %27 : vector<1x144xi32>
    %c0_13 = arith.constant 0 : index
    %c17 = arith.constant 17 : index
    %29 = vector.load %arg18[%c0_13, %c17] : memref<16x178xf32, #tpu.memory_space<vmem>>, vector<1x144xf32>
    tpu.vector_store %arg18[%c0_13, %c17], %1 {strides = array<i32>} : memref<16x178xf32, #tpu.memory_space<vmem>>, vector<1x144xf32>,
    %c1 = arith.constant 1 : index
    %c17_14 = arith.constant 17 : index
    %30 = vector.load %arg18[%c1, %c17_14] : memref<16x178xf32, #tpu.memory_space<vmem>>, vector<1x144xf32>
    tpu.vector_store %arg18[%c1, %c17_14], %3 {strides = array<i32>} : memref<16x178xf32, #tpu.memory_space<vmem>>, vector<1x144xf32>,
    %c0_15 = arith.constant 0 : index
    %c0_16 = arith.constant 0 : index
    %31 = vector.load %arg18[%c0_15, %c0_16] : memref<16x178xf32, #tpu.memory_space<vmem>>, vector<2x144xf32>
    %cst_17 = arith.constant 0.000000e+00 : f32
    %32 = vector.shape_cast %26 : vector<1x144xi1> to vector<1x144xi1>
    %33 = vector.broadcast %32 : vector<1x144xi1> to vector<2x144xi1>
    %34 = vector.broadcast %cst_17 : f32 to vector<2x144xf32>
    %35 = arith.select %33, %31, %34 : vector<2x144xi1>, vector<2x144xf32>
    %c0_18 = arith.constant 0 : index
    %c0_19 = arith.constant 0 : index
    %c0_20 = arith.constant 0 : index
    %36 = vector.load %arg4[%c0_18, %c0_19, %c0_20] : memref<9x16x2xf32, #tpu.memory_space<vmem>>, vector<1x16x2xf32>
    %37 = vector.shape_cast %36 : vector<1x16x2xf32> to vector<16x2xf32>
    %38 = vector.extract_strided_slice %37 {offsets = [0, 0], sizes = [16, 1], strides = [1, 1]} : vector<16x2xf32> to vector<16x1xf32>
    %39 = vector.extract_strided_slice %35 {offsets = [0, 0], sizes = [1, 144], strides = [1, 1]} : vector<2x144xf32> to vector<1x144xf32>
    %40 = vector.broadcast %38 : vector<16x1xf32> to vector<16x144xf32>
    %41 = vector.broadcast %39 : vector<1x144xf32> to vector<16x144xf32>
    %42 = arith.mulf %40, %41 : vector<16x144xf32>
    %43 = vector.extract_strided_slice %37 {offsets = [0, 1], sizes = [16, 1], strides = [1, 1]} : vector<16x2xf32> to vector<16x1xf32>
    %44 = vector.extract_strided_slice %35 {offsets = [1, 0], sizes = [1, 144], strides = [1, 1]} : vector<2x144xf32> to vector<1x144xf32>
    %45 = vector.broadcast %43 : vector<16x1xf32> to vector<16x144xf32>
    %46 = vector.broadcast %44 : vector<1x144xf32> to vector<16x144xf32>
    %47 = arith.mulf %45, %46 : vector<16x144xf32>
    %48 = arith.addf %42, %47 : vector<16x144xf32>
    %c0_21 = arith.constant 0 : index
    %c1_22 = arith.constant 1 : index
    %49 = vector.load %arg18[%c0_21, %c1_22] : memref<16x178xf32, #tpu.memory_space<vmem>>, vector<2x144xf32>
    %c1_23 = arith.constant 1 : index
    %c0_24 = arith.constant 0 : index
    %c0_25 = arith.constant 0 : index
    %50 = vector.load %arg4[%c1_23, %c0_24, %c0_25] : memref<9x16x2xf32, #tpu.memory_space<vmem>>, vector<1x16x2xf32>
    %51 = vector.shape_cast %50 : vector<1x16x2xf32> to vector<16x2xf32>
    %52 = vector.extract_strided_slice %51 {offsets = [0, 0], sizes = [16, 1], strides = [1, 1]} : vector<16x2xf32> to vector<16x1xf32>
    %53 = vector.extract_strided_slice %49 {offsets = [0, 0], sizes = [1, 144], strides = [1, 1]} : vector<2x144xf32> to vector<1x144xf32>
    %54 = vector.broadcast %52 : vector<16x1xf32> to vector<16x144xf32>
    %55 = vector.broadcast %53 : vector<1x144xf32> to vector<16x144xf32>
    %56 = arith.mulf %54, %55 : vector<16x144xf32>
    %57 = arith.addf %48, %56 : vector<16x144xf32>
    %58 = vector.extract_strided_slice %51 {offsets = [0, 1], sizes = [16, 1], strides = [1, 1]} : vector<16x2xf32> to vector<16x1xf32>
    %59 = vector.extract_strided_slice %49 {offsets = [1, 0], sizes = [1, 144], strides = [1, 1]} : vector<2x144xf32> to vector<1x144xf32>
    %60 = vector.broadcast %58 : vector<16x1xf32> to vector<16x144xf32>
    %61 = vector.broadcast %59 : vector<1x144xf32> to vector<16x144xf32>
    %62 = arith.mulf %60, %61 : vector<16x144xf32>
    %63 = arith.addf %57, %62 : vector<16x144xf32>
    %c0_26 = arith.constant 0 : index
    %c2 = arith.constant 2 : index
    %64 = vector.load %arg18[%c0_26, %c2] : memref<16x178xf32, #tpu.memory_space<vmem>>, vector<2x144xf32>
    %cst_27 = arith.constant 0.000000e+00 : f32
    %65 = vector.shape_cast %28 : vector<1x144xi1> to vector<1x144xi1>
    %66 = vector.broadcast %65 : vector<1x144xi1> to vector<2x144xi1>
    %67 = vector.broadcast %cst_27 : f32 to vector<2x144xf32>
    %68 = arith.select %66, %64, %67 : vector<2x144xi1>, vector<2x144xf32>
    %c2_28 = arith.constant 2 : index
    %c0_29 = arith.constant 0 : index
    %c0_30 = arith.constant 0 : index
    %69 = vector.load %arg4[%c2_28, %c0_29, %c0_30] : memref<9x16x2xf32, #tpu.memory_space<vmem>>, vector<1x16x2xf32>
    %70 = vector.shape_cast %69 : vector<1x16x2xf32> to vector<16x2xf32>
    %71 = vector.extract_strided_slice %70 {offsets = [0, 0], sizes = [16, 1], strides = [1, 1]} : vector<16x2xf32> to vector<16x1xf32>
    %72 = vector.extract_strided_slice %68 {offsets = [0, 0], sizes = [1, 144], strides = [1, 1]} : vector<2x144xf32> to vector<1x144xf32>
    %73 = vector.broadcast %71 : vector<16x1xf32> to vector<16x144xf32>
    %74 = vector.broadcast %72 : vector<1x144xf32> to vector<16x144xf32>
    %75 = arith.mulf %73, %74 : vector<16x144xf32>
    %76 = arith.addf %63, %75 : vector<16x144xf32>
    %77 = vector.extract_strided_slice %70 {offsets = [0, 1], sizes = [16, 1], strides = [1, 1]} : vector<16x2xf32> to vector<16x1xf32>
    %78 = vector.extract_strided_slice %68 {offsets = [1, 0], sizes = [1, 144], strides = [1, 1]} : vector<2x144xf32> to vector<1x144xf32>
    %79 = vector.broadcast %77 : vector<16x1xf32> to vector<16x144xf32>
    %80 = vector.broadcast %78 : vector<1x144xf32> to vector<16x144xf32>
    %81 = arith.mulf %79, %80 : vector<16x144xf32>
    %82 = arith.addf %76, %81 : vector<16x144xf32>
    %c0_31 = arith.constant 0 : index
    %c16 = arith.constant 16 : index
    %83 = vector.load %arg18[%c0_31, %c16] : memref<16x178xf32, #tpu.memory_space<vmem>>, vector<2x144xf32>
    %cst_32 = arith.constant 0.000000e+00 : f32
    %84 = vector.shape_cast %26 : vector<1x144xi1> to vector<1x144xi1>
    %85 = vector.broadcast %84 : vector<1x144xi1> to vector<2x144xi1>
    %86 = vector.broadcast %cst_32 : f32 to vector<2x144xf32>
    %87 = arith.select %85, %83, %86 : vector<2x144xi1>, vector<2x144xf32>
    %c3 = arith.constant 3 : index
    %c0_33 = arith.constant 0 : index
    %c0_34 = arith.constant 0 : index
    %88 = vector.load %arg4[%c3, %c0_33, %c0_34] : memref<9x16x2xf32, #tpu.memory_space<vmem>>, vector<1x16x2xf32>
    %89 = vector.shape_cast %88 : vector<1x16x2xf32> to vector<16x2xf32>
    %90 = vector.extract_strided_slice %89 {offsets = [0, 0], sizes = [16, 1], strides = [1, 1]} : vector<16x2xf32> to vector<16x1xf32>
    %91 = vector.extract_strided_slice %87 {offsets = [0, 0], sizes = [1, 144], strides = [1, 1]} : vector<2x144xf32> to vector<1x144xf32>
    %92 = vector.broadcast %90 : vector<16x1xf32> to vector<16x144xf32>
    %93 = vector.broadcast %91 : vector<1x144xf32> to vector<16x144xf32>
    %94 = arith.mulf %92, %93 : vector<16x144xf32>
    %95 = arith.addf %82, %94 : vector<16x144xf32>
    %96 = vector.extract_strided_slice %89 {offsets = [0, 1], sizes = [16, 1], strides = [1, 1]} : vector<16x2xf32> to vector<16x1xf32>
    %97 = vector.extract_strided_slice %87 {offsets = [1, 0], sizes = [1, 144], strides = [1, 1]} : vector<2x144xf32> to vector<1x144xf32>
    %98 = vector.broadcast %96 : vector<16x1xf32> to vector<16x144xf32>
    %99 = vector.broadcast %97 : vector<1x144xf32> to vector<16x144xf32>
    %100 = arith.mulf %98, %99 : vector<16x144xf32>
    %101 = arith.addf %95, %100 : vector<16x144xf32>
    %c0_35 = arith.constant 0 : index
    %c17_36 = arith.constant 17 : index
    %102 = vector.load %arg18[%c0_35, %c17_36] : memref<16x178xf32, #tpu.memory_space<vmem>>, vector<2x144xf32>
    %c4 = arith.constant 4 : index
    %c0_37 = arith.constant 0 : index
    %c0_38 = arith.constant 0 : index
    %103 = vector.load %arg4[%c4, %c0_37, %c0_38] : memref<9x16x2xf32, #tpu.memory_space<vmem>>, vector<1x16x2xf32>
    %104 = vector.shape_cast %103 : vector<1x16x2xf32> to vector<16x2xf32>
    %105 = vector.extract_strided_slice %104 {offsets = [0, 0], sizes = [16, 1], strides = [1, 1]} : vector<16x2xf32> to vector<16x1xf32>
    %106 = vector.extract_strided_slice %102 {offsets = [0, 0], sizes = [1, 144], strides = [1, 1]} : vector<2x144xf32> to vector<1x144xf32>
    %107 = vector.broadcast %105 : vector<16x1xf32> to vector<16x144xf32>
    %108 = vector.broadcast %106 : vector<1x144xf32> to vector<16x144xf32>
    %109 = arith.mulf %107, %108 : vector<16x144xf32>
    %110 = arith.addf %101, %109 : vector<16x144xf32>
    %111 = vector.extract_strided_slice %104 {offsets = [0, 1], sizes = [16, 1], strides = [1, 1]} : vector<16x2xf32> to vector<16x1xf32>
    %112 = vector.extract_strided_slice %102 {offsets = [1, 0], sizes = [1, 144], strides = [1, 1]} : vector<2x144xf32> to vector<1x144xf32>
    %113 = vector.broadcast %111 : vector<16x1xf32> to vector<16x144xf32>
    %114 = vector.broadcast %112 : vector<1x144xf32> to vector<16x144xf32>
    %115 = arith.mulf %113, %114 : vector<16x144xf32>
    %116 = arith.addf %110, %115 : vector<16x144xf32>
    %c0_39 = arith.constant 0 : index
    %c18 = arith.constant 18 : index
    %117 = vector.load %arg18[%c0_39, %c18] : memref<16x178xf32, #tpu.memory_space<vmem>>, vector<2x144xf32>
    %cst_40 = arith.constant 0.000000e+00 : f32
    %118 = vector.shape_cast %28 : vector<1x144xi1> to vector<1x144xi1>
    %119 = vector.broadcast %118 : vector<1x144xi1> to vector<2x144xi1>
    %120 = vector.broadcast %cst_40 : f32 to vector<2x144xf32>
    %121 = arith.select %119, %117, %120 : vector<2x144xi1>, vector<2x144xf32>
    %c5 = arith.constant 5 : index
    %c0_41 = arith.constant 0 : index
    %c0_42 = arith.constant 0 : index
    %122 = vector.load %arg4[%c5, %c0_41, %c0_42] : memref<9x16x2xf32, #tpu.memory_space<vmem>>, vector<1x16x2xf32>
    %123 = vector.shape_cast %122 : vector<1x16x2xf32> to vector<16x2xf32>
    %124 = vector.extract_strided_slice %123 {offsets = [0, 0], sizes = [16, 1], strides = [1, 1]} : vector<16x2xf32> to vector<16x1xf32>
    %125 = vector.extract_strided_slice %121 {offsets = [0, 0], sizes = [1, 144], strides = [1, 1]} : vector<2x144xf32> to vector<1x144xf32>
    %126 = vector.broadcast %124 : vector<16x1xf32> to vector<16x144xf32>
    %127 = vector.broadcast %125 : vector<1x144xf32> to vector<16x144xf32>
    %128 = arith.mulf %126, %127 : vector<16x144xf32>
    %129 = arith.addf %116, %128 : vector<16x144xf32>
    %130 = vector.extract_strided_slice %123 {offsets = [0, 1], sizes = [16, 1], strides = [1, 1]} : vector<16x2xf32> to vector<16x1xf32>
    %131 = vector.extract_strided_slice %121 {offsets = [1, 0], sizes = [1, 144], strides = [1, 1]} : vector<2x144xf32> to vector<1x144xf32>
    %132 = vector.broadcast %130 : vector<16x1xf32> to vector<16x144xf32>
    %133 = vector.broadcast %131 : vector<1x144xf32> to vector<16x144xf32>
    %134 = arith.mulf %132, %133 : vector<16x144xf32>
    %135 = arith.addf %129, %134 : vector<16x144xf32>
    %c0_43 = arith.constant 0 : index
    %c32 = arith.constant 32 : index
    %136 = vector.load %arg18[%c0_43, %c32] : memref<16x178xf32, #tpu.memory_space<vmem>>, vector<2x144xf32>
    %cst_44 = arith.constant 0.000000e+00 : f32
    %137 = vector.shape_cast %26 : vector<1x144xi1> to vector<1x144xi1>
    %138 = vector.broadcast %137 : vector<1x144xi1> to vector<2x144xi1>
    %139 = vector.broadcast %cst_44 : f32 to vector<2x144xf32>
    %140 = arith.select %138, %136, %139 : vector<2x144xi1>, vector<2x144xf32>
    %c6 = arith.constant 6 : index
    %c0_45 = arith.constant 0 : index
    %c0_46 = arith.constant 0 : index
    %141 = vector.load %arg4[%c6, %c0_45, %c0_46] : memref<9x16x2xf32, #tpu.memory_space<vmem>>, vector<1x16x2xf32>
    %142 = vector.shape_cast %141 : vector<1x16x2xf32> to vector<16x2xf32>
    %143 = vector.extract_strided_slice %142 {offsets = [0, 0], sizes = [16, 1], strides = [1, 1]} : vector<16x2xf32> to vector<16x1xf32>
    %144 = vector.extract_strided_slice %140 {offsets = [0, 0], sizes = [1, 144], strides = [1, 1]} : vector<2x144xf32> to vector<1x144xf32>
    %145 = vector.broadcast %143 : vector<16x1xf32> to vector<16x144xf32>
    %146 = vector.broadcast %144 : vector<1x144xf32> to vector<16x144xf32>
    %147 = arith.mulf %145, %146 : vector<16x144xf32>
    %148 = arith.addf %135, %147 : vector<16x144xf32>
    %149 = vector.extract_strided_slice %142 {offsets = [0, 1], sizes = [16, 1], strides = [1, 1]} : vector<16x2xf32> to vector<16x1xf32>
    %150 = vector.extract_strided_slice %140 {offsets = [1, 0], sizes = [1, 144], strides = [1, 1]} : vector<2x144xf32> to vector<1x144xf32>
    %151 = vector.broadcast %149 : vector<16x1xf32> to vector<16x144xf32>
    %152 = vector.broadcast %150 : vector<1x144xf32> to vector<16x144xf32>
    %153 = arith.mulf %151, %152 : vector<16x144xf32>
    %154 = arith.addf %148, %153 : vector<16x144xf32>
    %c0_47 = arith.constant 0 : index
    %c33 = arith.constant 33 : index
    %155 = vector.load %arg18[%c0_47, %c33] : memref<16x178xf32, #tpu.memory_space<vmem>>, vector<2x144xf32>
    %c7 = arith.constant 7 : index
    %c0_48 = arith.constant 0 : index
    %c0_49 = arith.constant 0 : index
    %156 = vector.load %arg4[%c7, %c0_48, %c0_49] : memref<9x16x2xf32, #tpu.memory_space<vmem>>, vector<1x16x2xf32>
    %157 = vector.shape_cast %156 : vector<1x16x2xf32> to vector<16x2xf32>
    %158 = vector.extract_strided_slice %157 {offsets = [0, 0], sizes = [16, 1], strides = [1, 1]} : vector<16x2xf32> to vector<16x1xf32>
    %159 = vector.extract_strided_slice %155 {offsets = [0, 0], sizes = [1, 144], strides = [1, 1]} : vector<2x144xf32> to vector<1x144xf32>
    %160 = vector.broadcast %158 : vector<16x1xf32> to vector<16x144xf32>
    %161 = vector.broadcast %159 : vector<1x144xf32> to vector<16x144xf32>
    %162 = arith.mulf %160, %161 : vector<16x144xf32>
    %163 = arith.addf %154, %162 : vector<16x144xf32>
    %164 = vector.extract_strided_slice %157 {offsets = [0, 1], sizes = [16, 1], strides = [1, 1]} : vector<16x2xf32> to vector<16x1xf32>
    %165 = vector.extract_strided_slice %155 {offsets = [1, 0], sizes = [1, 144], strides = [1, 1]} : vector<2x144xf32> to vector<1x144xf32>
    %166 = vector.broadcast %164 : vector<16x1xf32> to vector<16x144xf32>
    %167 = vector.broadcast %165 : vector<1x144xf32> to vector<16x144xf32>
    %168 = arith.mulf %166, %167 : vector<16x144xf32>
    %169 = arith.addf %163, %168 : vector<16x144xf32>
    %c0_50 = arith.constant 0 : index
    %c34 = arith.constant 34 : index
    %170 = vector.load %arg18[%c0_50, %c34] : memref<16x178xf32, #tpu.memory_space<vmem>>, vector<2x144xf32>
    %cst_51 = arith.constant 0.000000e+00 : f32
    %171 = vector.shape_cast %28 : vector<1x144xi1> to vector<1x144xi1>
    %172 = vector.broadcast %171 : vector<1x144xi1> to vector<2x144xi1>
    %173 = vector.broadcast %cst_51 : f32 to vector<2x144xf32>
    %174 = arith.select %172, %170, %173 : vector<2x144xi1>, vector<2x144xf32>
    %c8 = arith.constant 8 : index
    %c0_52 = arith.constant 0 : index
    %c0_53 = arith.constant 0 : index
    %175 = vector.load %arg4[%c8, %c0_52, %c0_53] : memref<9x16x2xf32, #tpu.memory_space<vmem>>, vector<1x16x2xf32>
    %176 = vector.shape_cast %175 : vector<1x16x2xf32> to vector<16x2xf32>
    %177 = vector.extract_strided_slice %176 {offsets = [0, 0], sizes = [16, 1], strides = [1, 1]} : vector<16x2xf32> to vector<16x1xf32>
    %178 = vector.extract_strided_slice %174 {offsets = [0, 0], sizes = [1, 144], strides = [1, 1]} : vector<2x144xf32> to vector<1x144xf32>
    %179 = vector.broadcast %177 : vector<16x1xf32> to vector<16x144xf32>
    %180 = vector.broadcast %178 : vector<1x144xf32> to vector<16x144xf32>
    %181 = arith.mulf %179, %180 : vector<16x144xf32>
    %182 = arith.addf %169, %181 : vector<16x144xf32>
    %183 = vector.extract_strided_slice %176 {offsets = [0, 1], sizes = [16, 1], strides = [1, 1]} : vector<16x2xf32> to vector<16x1xf32>
    %184 = vector.extract_strided_slice %174 {offsets = [1, 0], sizes = [1, 144], strides = [1, 1]} : vector<2x144xf32> to vector<1x144xf32>
    %185 = vector.broadcast %183 : vector<16x1xf32> to vector<16x144xf32>
    %186 = vector.broadcast %184 : vector<1x144xf32> to vector<16x144xf32>
    %187 = arith.mulf %185, %186 : vector<16x144xf32>
    %188 = arith.addf %182, %187 : vector<16x144xf32>
    %c0_54 = arith.constant 0 : index
    %c0_55 = arith.constant 0 : index
    %189 = vector.load %arg5[%c0_54, %c0_55] : memref<16x1xf32, #tpu.memory_space<vmem>>, vector<16x1xf32>
    %190 = vector.broadcast %189 : vector<16x1xf32> to vector<16x144xf32>
    %191 = arith.addf %188, %190 : vector<16x144xf32>
    %cst_56 = arith.constant 0.000000e+00 : f32
    %192 = vector.broadcast %cst_56 : f32 to vector<16x144xf32>
    %193 = arith.maximumf %191, %192 : vector<16x144xf32>
    %c0_57 = arith.constant 0 : index
    %c17_58 = arith.constant 17 : index
    %194 = vector.load %arg18[%c0_57, %c17_58] : memref<16x178xf32, #tpu.memory_space<vmem>>, vector<16x144xf32>
    tpu.vector_store %arg18[%c0_57, %c17_58], %193 {strides = array<i32>} : memref<16x178xf32, #tpu.memory_space<vmem>>, vector<16x144xf32>,
    %c0_59 = arith.constant 0 : index
    %c0_60 = arith.constant 0 : index
    %195 = vector.load %arg18[%c0_59, %c0_60] : memref<16x178xf32, #tpu.memory_space<vmem>>, vector<16x144xf32>
    %cst_61 = arith.constant 0.000000e+00 : f32
    %196 = vector.shape_cast %26 : vector<1x144xi1> to vector<1x144xi1>
    %197 = vector.broadcast %196 : vector<1x144xi1> to vector<16x144xi1>
    %198 = vector.broadcast %cst_61 : f32 to vector<16x144xf32>
    %199 = arith.select %197, %195, %198 : vector<16x144xi1>, vector<16x144xf32>
    %c0_62 = arith.constant 0 : index
    %c0_63 = arith.constant 0 : index
    %c0_64 = arith.constant 0 : index
    %200 = vector.load %arg6[%c0_62, %c0_63, %c0_64] : memref<9x16x16xf32, #tpu.memory_space<vmem>>, vector<1x16x16xf32>
    %201 = vector.shape_cast %200 : vector<1x16x16xf32> to vector<16x16xf32>
    %cst_65 = arith.constant dense<0.000000e+00> : vector<16x144xf32>
    %202 = tpu.matmul %201, %199, %cst_65 {dimension_numbers = #tpu.dot_dimension_numbers<[1], [0], [0], [1], [0, 0, 1, 1], [], []>} : vector<16x16xf32>, vector<16x144xf32>, vector<16x144xf32> -> vector<16x144xf32>
    %c0_66 = arith.constant 0 : index
    %c1_67 = arith.constant 1 : index
    %203 = vector.load %arg18[%c0_66, %c1_67] : memref<16x178xf32, #tpu.memory_space<vmem>>, vector<16x144xf32>
    %c1_68 = arith.constant 1 : index
    %c0_69 = arith.constant 0 : index
    %c0_70 = arith.constant 0 : index
    %204 = vector.load %arg6[%c1_68, %c0_69, %c0_70] : memref<9x16x16xf32, #tpu.memory_space<vmem>>, vector<1x16x16xf32>
    %205 = vector.shape_cast %204 : vector<1x16x16xf32> to vector<16x16xf32>
    %cst_71 = arith.constant dense<0.000000e+00> : vector<16x144xf32>
    %206 = tpu.matmul %205, %203, %cst_71 {dimension_numbers = #tpu.dot_dimension_numbers<[1], [0], [0], [1], [0, 0, 1, 1], [], []>} : vector<16x16xf32>, vector<16x144xf32>, vector<16x144xf32> -> vector<16x144xf32>
    %207 = arith.addf %202, %206 : vector<16x144xf32>
    %c0_72 = arith.constant 0 : index
    %c2_73 = arith.constant 2 : index
    %208 = vector.load %arg18[%c0_72, %c2_73] : memref<16x178xf32, #tpu.memory_space<vmem>>, vector<16x144xf32>
    %cst_74 = arith.constant 0.000000e+00 : f32
    %209 = vector.shape_cast %28 : vector<1x144xi1> to vector<1x144xi1>
    %210 = vector.broadcast %209 : vector<1x144xi1> to vector<16x144xi1>
    %211 = vector.broadcast %cst_74 : f32 to vector<16x144xf32>
    %212 = arith.select %210, %208, %211 : vector<16x144xi1>, vector<16x144xf32>
    %c2_75 = arith.constant 2 : index
    %c0_76 = arith.constant 0 : index
    %c0_77 = arith.constant 0 : index
    %213 = vector.load %arg6[%c2_75, %c0_76, %c0_77] : memref<9x16x16xf32, #tpu.memory_space<vmem>>, vector<1x16x16xf32>
    %214 = vector.shape_cast %213 : vector<1x16x16xf32> to vector<16x16xf32>
    %cst_78 = arith.constant dense<0.000000e+00> : vector<16x144xf32>
    %215 = tpu.matmul %214, %212, %cst_78 {dimension_numbers = #tpu.dot_dimension_numbers<[1], [0], [0], [1], [0, 0, 1, 1], [], []>} : vector<16x16xf32>, vector<16x144xf32>, vector<16x144xf32> -> vector<16x144xf32>
    %216 = arith.addf %207, %215 : vector<16x144xf32>
    %c0_79 = arith.constant 0 : index
    %c16_80 = arith.constant 16 : index
    %217 = vector.load %arg18[%c0_79, %c16_80] : memref<16x178xf32, #tpu.memory_space<vmem>>, vector<16x144xf32>
    %cst_81 = arith.constant 0.000000e+00 : f32
    %218 = vector.shape_cast %26 : vector<1x144xi1> to vector<1x144xi1>
    %219 = vector.broadcast %218 : vector<1x144xi1> to vector<16x144xi1>
    %220 = vector.broadcast %cst_81 : f32 to vector<16x144xf32>
    %221 = arith.select %219, %217, %220 : vector<16x144xi1>, vector<16x144xf32>
    %c3_82 = arith.constant 3 : index
    %c0_83 = arith.constant 0 : index
    %c0_84 = arith.constant 0 : index
    %222 = vector.load %arg6[%c3_82, %c0_83, %c0_84] : memref<9x16x16xf32, #tpu.memory_space<vmem>>, vector<1x16x16xf32>
    %223 = vector.shape_cast %222 : vector<1x16x16xf32> to vector<16x16xf32>
    %cst_85 = arith.constant dense<0.000000e+00> : vector<16x144xf32>
    %224 = tpu.matmul %223, %221, %cst_85 {dimension_numbers = #tpu.dot_dimension_numbers<[1], [0], [0], [1], [0, 0, 1, 1], [], []>} : vector<16x16xf32>, vector<16x144xf32>, vector<16x144xf32> -> vector<16x144xf32>
    %225 = arith.addf %216, %224 : vector<16x144xf32>
    %c0_86 = arith.constant 0 : index
    %c17_87 = arith.constant 17 : index
    %226 = vector.load %arg18[%c0_86, %c17_87] : memref<16x178xf32, #tpu.memory_space<vmem>>, vector<16x144xf32>
    %c4_88 = arith.constant 4 : index
    %c0_89 = arith.constant 0 : index
    %c0_90 = arith.constant 0 : index
    %227 = vector.load %arg6[%c4_88, %c0_89, %c0_90] : memref<9x16x16xf32, #tpu.memory_space<vmem>>, vector<1x16x16xf32>
    %228 = vector.shape_cast %227 : vector<1x16x16xf32> to vector<16x16xf32>
    %cst_91 = arith.constant dense<0.000000e+00> : vector<16x144xf32>
    %229 = tpu.matmul %228, %226, %cst_91 {dimension_numbers = #tpu.dot_dimension_numbers<[1], [0], [0], [1], [0, 0, 1, 1], [], []>} : vector<16x16xf32>, vector<16x144xf32>, vector<16x144xf32> -> vector<16x144xf32>
    %230 = arith.addf %225, %229 : vector<16x144xf32>
    %c0_92 = arith.constant 0 : index
    %c18_93 = arith.constant 18 : index
    %231 = vector.load %arg18[%c0_92, %c18_93] : memref<16x178xf32, #tpu.memory_space<vmem>>, vector<16x144xf32>
    %cst_94 = arith.constant 0.000000e+00 : f32
    %232 = vector.shape_cast %28 : vector<1x144xi1> to vector<1x144xi1>
    %233 = vector.broadcast %232 : vector<1x144xi1> to vector<16x144xi1>
    %234 = vector.broadcast %cst_94 : f32 to vector<16x144xf32>
    %235 = arith.select %233, %231, %234 : vector<16x144xi1>, vector<16x144xf32>
    %c5_95 = arith.constant 5 : index
    %c0_96 = arith.constant 0 : index
    %c0_97 = arith.constant 0 : index
    %236 = vector.load %arg6[%c5_95, %c0_96, %c0_97] : memref<9x16x16xf32, #tpu.memory_space<vmem>>, vector<1x16x16xf32>
    %237 = vector.shape_cast %236 : vector<1x16x16xf32> to vector<16x16xf32>
    %cst_98 = arith.constant dense<0.000000e+00> : vector<16x144xf32>
    %238 = tpu.matmul %237, %235, %cst_98 {dimension_numbers = #tpu.dot_dimension_numbers<[1], [0], [0], [1], [0, 0, 1, 1], [], []>} : vector<16x16xf32>, vector<16x144xf32>, vector<16x144xf32> -> vector<16x144xf32>
    %239 = arith.addf %230, %238 : vector<16x144xf32>
    %c0_99 = arith.constant 0 : index
    %c32_100 = arith.constant 32 : index
    %240 = vector.load %arg18[%c0_99, %c32_100] : memref<16x178xf32, #tpu.memory_space<vmem>>, vector<16x144xf32>
    %cst_101 = arith.constant 0.000000e+00 : f32
    %241 = vector.shape_cast %26 : vector<1x144xi1> to vector<1x144xi1>
    %242 = vector.broadcast %241 : vector<1x144xi1> to vector<16x144xi1>
    %243 = vector.broadcast %cst_101 : f32 to vector<16x144xf32>
    %244 = arith.select %242, %240, %243 : vector<16x144xi1>, vector<16x144xf32>
    %c6_102 = arith.constant 6 : index
    %c0_103 = arith.constant 0 : index
    %c0_104 = arith.constant 0 : index
    %245 = vector.load %arg6[%c6_102, %c0_103, %c0_104] : memref<9x16x16xf32, #tpu.memory_space<vmem>>, vector<1x16x16xf32>
    %246 = vector.shape_cast %245 : vector<1x16x16xf32> to vector<16x16xf32>
    %cst_105 = arith.constant dense<0.000000e+00> : vector<16x144xf32>
    %247 = tpu.matmul %246, %244, %cst_105 {dimension_numbers = #tpu.dot_dimension_numbers<[1], [0], [0], [1], [0, 0, 1, 1], [], []>} : vector<16x16xf32>, vector<16x144xf32>, vector<16x144xf32> -> vector<16x144xf32>
    %248 = arith.addf %239, %247 : vector<16x144xf32>
    %c0_106 = arith.constant 0 : index
    %c33_107 = arith.constant 33 : index
    %249 = vector.load %arg18[%c0_106, %c33_107] : memref<16x178xf32, #tpu.memory_space<vmem>>, vector<16x144xf32>
    %c7_108 = arith.constant 7 : index
    %c0_109 = arith.constant 0 : index
    %c0_110 = arith.constant 0 : index
    %250 = vector.load %arg6[%c7_108, %c0_109, %c0_110] : memref<9x16x16xf32, #tpu.memory_space<vmem>>, vector<1x16x16xf32>
    %251 = vector.shape_cast %250 : vector<1x16x16xf32> to vector<16x16xf32>
    %cst_111 = arith.constant dense<0.000000e+00> : vector<16x144xf32>
    %252 = tpu.matmul %251, %249, %cst_111 {dimension_numbers = #tpu.dot_dimension_numbers<[1], [0], [0], [1], [0, 0, 1, 1], [], []>} : vector<16x16xf32>, vector<16x144xf32>, vector<16x144xf32> -> vector<16x144xf32>
    %253 = arith.addf %248, %252 : vector<16x144xf32>
    %c0_112 = arith.constant 0 : index
    %c34_113 = arith.constant 34 : index
    %254 = vector.load %arg18[%c0_112, %c34_113] : memref<16x178xf32, #tpu.memory_space<vmem>>, vector<16x144xf32>
    %cst_114 = arith.constant 0.000000e+00 : f32
    %255 = vector.shape_cast %28 : vector<1x144xi1> to vector<1x144xi1>
    %256 = vector.broadcast %255 : vector<1x144xi1> to vector<16x144xi1>
    %257 = vector.broadcast %cst_114 : f32 to vector<16x144xf32>
    %258 = arith.select %256, %254, %257 : vector<16x144xi1>, vector<16x144xf32>
    %c8_115 = arith.constant 8 : index
    %c0_116 = arith.constant 0 : index
    %c0_117 = arith.constant 0 : index
    %259 = vector.load %arg6[%c8_115, %c0_116, %c0_117] : memref<9x16x16xf32, #tpu.memory_space<vmem>>, vector<1x16x16xf32>
    %260 = vector.shape_cast %259 : vector<1x16x16xf32> to vector<16x16xf32>
    %cst_118 = arith.constant dense<0.000000e+00> : vector<16x144xf32>
    %261 = tpu.matmul %260, %258, %cst_118 {dimension_numbers = #tpu.dot_dimension_numbers<[1], [0], [0], [1], [0, 0, 1, 1], [], []>} : vector<16x16xf32>, vector<16x144xf32>, vector<16x144xf32> -> vector<16x144xf32>
    %262 = arith.addf %253, %261 : vector<16x144xf32>
    %c0_119 = arith.constant 0 : index
    %c0_120 = arith.constant 0 : index
    %263 = vector.load %arg7[%c0_119, %c0_120] : memref<16x1xf32, #tpu.memory_space<vmem>>, vector<16x1xf32>
    %264 = vector.broadcast %263 : vector<16x1xf32> to vector<16x144xf32>
    %265 = arith.addf %262, %264 : vector<16x144xf32>
    %cst_121 = arith.constant 0.000000e+00 : f32
    %266 = vector.broadcast %cst_121 : f32 to vector<16x144xf32>
    %267 = arith.maximumf %265, %266 : vector<16x144xf32>
    %c0_122 = arith.constant 0 : index
    %c17_123 = arith.constant 17 : index
    %268 = vector.load %arg18[%c0_122, %c17_123] : memref<16x178xf32, #tpu.memory_space<vmem>>, vector<16x144xf32>
    tpu.vector_store %arg18[%c0_122, %c17_123], %267 {strides = array<i32>} : memref<16x178xf32, #tpu.memory_space<vmem>>, vector<16x144xf32>,
    %c0_124 = arith.constant 0 : index
    %c0_125 = arith.constant 0 : index
    %269 = vector.load %arg18[%c0_124, %c0_125] : memref<16x178xf32, #tpu.memory_space<vmem>>, vector<16x144xf32>
    %cst_126 = arith.constant 0.000000e+00 : f32
    %270 = vector.shape_cast %26 : vector<1x144xi1> to vector<1x144xi1>
    %271 = vector.broadcast %270 : vector<1x144xi1> to vector<16x144xi1>
    %272 = vector.broadcast %cst_126 : f32 to vector<16x144xf32>
    %273 = arith.select %271, %269, %272 : vector<16x144xi1>, vector<16x144xf32>
    %c0_127 = arith.constant 0 : index
    %c0_128 = arith.constant 0 : index
    %c0_129 = arith.constant 0 : index
    %274 = vector.load %arg8[%c0_127, %c0_128, %c0_129] : memref<9x2x16xf32, #tpu.memory_space<vmem>>, vector<1x2x16xf32>
    %275 = vector.shape_cast %274 : vector<1x2x16xf32> to vector<2x16xf32>
    %cst_130 = arith.constant dense<0.000000e+00> : vector<2x144xf32>
    %276 = tpu.matmul %275, %273, %cst_130 {dimension_numbers = #tpu.dot_dimension_numbers<[1], [0], [0], [1], [0, 0, 1, 1], [], []>} : vector<2x16xf32>, vector<16x144xf32>, vector<2x144xf32> -> vector<2x144xf32>
    %c0_131 = arith.constant 0 : index
    %c1_132 = arith.constant 1 : index
    %277 = vector.load %arg18[%c0_131, %c1_132] : memref<16x178xf32, #tpu.memory_space<vmem>>, vector<16x144xf32>
    %c1_133 = arith.constant 1 : index
    %c0_134 = arith.constant 0 : index
    %c0_135 = arith.constant 0 : index
    %278 = vector.load %arg8[%c1_133, %c0_134, %c0_135] : memref<9x2x16xf32, #tpu.memory_space<vmem>>, vector<1x2x16xf32>
    %279 = vector.shape_cast %278 : vector<1x2x16xf32> to vector<2x16xf32>
    %cst_136 = arith.constant dense<0.000000e+00> : vector<2x144xf32>
    %280 = tpu.matmul %279, %277, %cst_136 {dimension_numbers = #tpu.dot_dimension_numbers<[1], [0], [0], [1], [0, 0, 1, 1], [], []>} : vector<2x16xf32>, vector<16x144xf32>, vector<2x144xf32> -> vector<2x144xf32>
    %281 = arith.addf %276, %280 : vector<2x144xf32>
    %c0_137 = arith.constant 0 : index
    %c2_138 = arith.constant 2 : index
    %282 = vector.load %arg18[%c0_137, %c2_138] : memref<16x178xf32, #tpu.memory_space<vmem>>, vector<16x144xf32>
    %cst_139 = arith.constant 0.000000e+00 : f32
    %283 = vector.shape_cast %28 : vector<1x144xi1> to vector<1x144xi1>
    %284 = vector.broadcast %283 : vector<1x144xi1> to vector<16x144xi1>
    %285 = vector.broadcast %cst_139 : f32 to vector<16x144xf32>
    %286 = arith.select %284, %282, %285 : vector<16x144xi1>, vector<16x144xf32>
    %c2_140 = arith.constant 2 : index
    %c0_141 = arith.constant 0 : index
    %c0_142 = arith.constant 0 : index
    %287 = vector.load %arg8[%c2_140, %c0_141, %c0_142] : memref<9x2x16xf32, #tpu.memory_space<vmem>>, vector<1x2x16xf32>
    %288 = vector.shape_cast %287 : vector<1x2x16xf32> to vector<2x16xf32>
    %cst_143 = arith.constant dense<0.000000e+00> : vector<2x144xf32>
    %289 = tpu.matmul %288, %286, %cst_143 {dimension_numbers = #tpu.dot_dimension_numbers<[1], [0], [0], [1], [0, 0, 1, 1], [], []>} : vector<2x16xf32>, vector<16x144xf32>, vector<2x144xf32> -> vector<2x144xf32>
    %290 = arith.addf %281, %289 : vector<2x144xf32>
    %c0_144 = arith.constant 0 : index
    %c16_145 = arith.constant 16 : index
    %291 = vector.load %arg18[%c0_144, %c16_145] : memref<16x178xf32, #tpu.memory_space<vmem>>, vector<16x144xf32>
    %cst_146 = arith.constant 0.000000e+00 : f32
    %292 = vector.shape_cast %26 : vector<1x144xi1> to vector<1x144xi1>
    %293 = vector.broadcast %292 : vector<1x144xi1> to vector<16x144xi1>
    %294 = vector.broadcast %cst_146 : f32 to vector<16x144xf32>
    %295 = arith.select %293, %291, %294 : vector<16x144xi1>, vector<16x144xf32>
    %c3_147 = arith.constant 3 : index
    %c0_148 = arith.constant 0 : index
    %c0_149 = arith.constant 0 : index
    %296 = vector.load %arg8[%c3_147, %c0_148, %c0_149] : memref<9x2x16xf32, #tpu.memory_space<vmem>>, vector<1x2x16xf32>
    %297 = vector.shape_cast %296 : vector<1x2x16xf32> to vector<2x16xf32>
    %cst_150 = arith.constant dense<0.000000e+00> : vector<2x144xf32>
    %298 = tpu.matmul %297, %295, %cst_150 {dimension_numbers = #tpu.dot_dimension_numbers<[1], [0], [0], [1], [0, 0, 1, 1], [], []>} : vector<2x16xf32>, vector<16x144xf32>, vector<2x144xf32> -> vector<2x144xf32>
    %299 = arith.addf %290, %298 : vector<2x144xf32>
    %c0_151 = arith.constant 0 : index
    %c17_152 = arith.constant 17 : index
    %300 = vector.load %arg18[%c0_151, %c17_152] : memref<16x178xf32, #tpu.memory_space<vmem>>, vector<16x144xf32>
    %c4_153 = arith.constant 4 : index
    %c0_154 = arith.constant 0 : index
    %c0_155 = arith.constant 0 : index
    %301 = vector.load %arg8[%c4_153, %c0_154, %c0_155] : memref<9x2x16xf32, #tpu.memory_space<vmem>>, vector<1x2x16xf32>
    %302 = vector.shape_cast %301 : vector<1x2x16xf32> to vector<2x16xf32>
    %cst_156 = arith.constant dense<0.000000e+00> : vector<2x144xf32>
    %303 = tpu.matmul %302, %300, %cst_156 {dimension_numbers = #tpu.dot_dimension_numbers<[1], [0], [0], [1], [0, 0, 1, 1], [], []>} : vector<2x16xf32>, vector<16x144xf32>, vector<2x144xf32> -> vector<2x144xf32>
    %304 = arith.addf %299, %303 : vector<2x144xf32>
    %c0_157 = arith.constant 0 : index
    %c18_158 = arith.constant 18 : index
    %305 = vector.load %arg18[%c0_157, %c18_158] : memref<16x178xf32, #tpu.memory_space<vmem>>, vector<16x144xf32>
    %cst_159 = arith.constant 0.000000e+00 : f32
    %306 = vector.shape_cast %28 : vector<1x144xi1> to vector<1x144xi1>
    %307 = vector.broadcast %306 : vector<1x144xi1> to vector<16x144xi1>
    %308 = vector.broadcast %cst_159 : f32 to vector<16x144xf32>
    %309 = arith.select %307, %305, %308 : vector<16x144xi1>, vector<16x144xf32>
    %c5_160 = arith.constant 5 : index
    %c0_161 = arith.constant 0 : index
    %c0_162 = arith.constant 0 : index
    %310 = vector.load %arg8[%c5_160, %c0_161, %c0_162] : memref<9x2x16xf32, #tpu.memory_space<vmem>>, vector<1x2x16xf32>
    %311 = vector.shape_cast %310 : vector<1x2x16xf32> to vector<2x16xf32>
    %cst_163 = arith.constant dense<0.000000e+00> : vector<2x144xf32>
    %312 = tpu.matmul %311, %309, %cst_163 {dimension_numbers = #tpu.dot_dimension_numbers<[1], [0], [0], [1], [0, 0, 1, 1], [], []>} : vector<2x16xf32>, vector<16x144xf32>, vector<2x144xf32> -> vector<2x144xf32>
    %313 = arith.addf %304, %312 : vector<2x144xf32>
    %c0_164 = arith.constant 0 : index
    %c32_165 = arith.constant 32 : index
    %314 = vector.load %arg18[%c0_164, %c32_165] : memref<16x178xf32, #tpu.memory_space<vmem>>, vector<16x144xf32>
    %cst_166 = arith.constant 0.000000e+00 : f32
    %315 = vector.shape_cast %26 : vector<1x144xi1> to vector<1x144xi1>
    %316 = vector.broadcast %315 : vector<1x144xi1> to vector<16x144xi1>
    %317 = vector.broadcast %cst_166 : f32 to vector<16x144xf32>
    %318 = arith.select %316, %314, %317 : vector<16x144xi1>, vector<16x144xf32>
    %c6_167 = arith.constant 6 : index
    %c0_168 = arith.constant 0 : index
    %c0_169 = arith.constant 0 : index
    %319 = vector.load %arg8[%c6_167, %c0_168, %c0_169] : memref<9x2x16xf32, #tpu.memory_space<vmem>>, vector<1x2x16xf32>
    %320 = vector.shape_cast %319 : vector<1x2x16xf32> to vector<2x16xf32>
    %cst_170 = arith.constant dense<0.000000e+00> : vector<2x144xf32>
    %321 = tpu.matmul %320, %318, %cst_170 {dimension_numbers = #tpu.dot_dimension_numbers<[1], [0], [0], [1], [0, 0, 1, 1], [], []>} : vector<2x16xf32>, vector<16x144xf32>, vector<2x144xf32> -> vector<2x144xf32>
    %322 = arith.addf %313, %321 : vector<2x144xf32>
    %c0_171 = arith.constant 0 : index
    %c33_172 = arith.constant 33 : index
    %323 = vector.load %arg18[%c0_171, %c33_172] : memref<16x178xf32, #tpu.memory_space<vmem>>, vector<16x144xf32>
    %c7_173 = arith.constant 7 : index
    %c0_174 = arith.constant 0 : index
    %c0_175 = arith.constant 0 : index
    %324 = vector.load %arg8[%c7_173, %c0_174, %c0_175] : memref<9x2x16xf32, #tpu.memory_space<vmem>>, vector<1x2x16xf32>
    %325 = vector.shape_cast %324 : vector<1x2x16xf32> to vector<2x16xf32>
    %cst_176 = arith.constant dense<0.000000e+00> : vector<2x144xf32>
    %326 = tpu.matmul %325, %323, %cst_176 {dimension_numbers = #tpu.dot_dimension_numbers<[1], [0], [0], [1], [0, 0, 1, 1], [], []>} : vector<2x16xf32>, vector<16x144xf32>, vector<2x144xf32> -> vector<2x144xf32>
    %327 = arith.addf %322, %326 : vector<2x144xf32>
    %c0_177 = arith.constant 0 : index
    %c34_178 = arith.constant 34 : index
    %328 = vector.load %arg18[%c0_177, %c34_178] : memref<16x178xf32, #tpu.memory_space<vmem>>, vector<16x144xf32>
    %cst_179 = arith.constant 0.000000e+00 : f32
    %329 = vector.shape_cast %28 : vector<1x144xi1> to vector<1x144xi1>
    %330 = vector.broadcast %329 : vector<1x144xi1> to vector<16x144xi1>
    %331 = vector.broadcast %cst_179 : f32 to vector<16x144xf32>
    %332 = arith.select %330, %328, %331 : vector<16x144xi1>, vector<16x144xf32>
    %c8_180 = arith.constant 8 : index
    %c0_181 = arith.constant 0 : index
    %c0_182 = arith.constant 0 : index
    %333 = vector.load %arg8[%c8_180, %c0_181, %c0_182] : memref<9x2x16xf32, #tpu.memory_space<vmem>>, vector<1x2x16xf32>
    %334 = vector.shape_cast %333 : vector<1x2x16xf32> to vector<2x16xf32>
    %cst_183 = arith.constant dense<0.000000e+00> : vector<2x144xf32>
    %335 = tpu.matmul %334, %332, %cst_183 {dimension_numbers = #tpu.dot_dimension_numbers<[1], [0], [0], [1], [0, 0, 1, 1], [], []>} : vector<2x16xf32>, vector<16x144xf32>, vector<2x144xf32> -> vector<2x144xf32>
    %336 = arith.addf %327, %335 : vector<2x144xf32>
    %c0_184 = arith.constant 0 : index
    %c0_185 = arith.constant 0 : index
    %337 = vector.load %arg9[%c0_184, %c0_185] : memref<2x1xf32, #tpu.memory_space<vmem>>, vector<2x1xf32>
    %338 = vector.broadcast %337 : vector<2x1xf32> to vector<2x144xf32>
    %339 = arith.addf %336, %338 : vector<2x144xf32>
    %cst_186 = arith.constant 0.000000e+00 : f32
    %340 = vector.broadcast %cst_186 : f32 to vector<2x144xf32>
    %341 = arith.maximumf %339, %340 : vector<2x144xf32>
    %c0_187 = arith.constant 0 : index
    %c0_188 = arith.constant 0 : index
    %c0_189 = arith.constant 0 : index
    %342 = vector.load %arg16[%c0_187, %c0_188, %c0_189] : memref<1x2x144xf32, #tpu.memory_space<vmem>>, vector<1x2x144xf32>
    %343 = vector.shape_cast %342 : vector<1x2x144xf32> to vector<2x144xf32>
    %344 = vector.shape_cast %341 : vector<2x144xf32> to vector<1x2x144xf32>
    tpu.vector_store %arg16[%c0_187, %c0_188, %c0_189], %344 {strides = array<i32>} : memref<1x2x144xf32, #tpu.memory_space<vmem>>, vector<1x2x144xf32>,
    %c0_190 = arith.constant 0 : index
    %c0_191 = arith.constant 0 : index
    %c0_192 = arith.constant 0 : index
    %345 = vector.load %arg3[%c0_190, %c0_191, %c0_192] : memref<1x1x256xf32, #tpu.memory_space<vmem>>, vector<1x1x256xf32>
    %346 = vector.shape_cast %345 : vector<1x1x256xf32> to vector<1x256xf32>
    %cst_193 = arith.constant 0.000000e+00 : f32
    %347 = vector.broadcast %cst_193 : f32 to vector<16x17xf32>
    %c0_194 = arith.constant 0 : index
    %c0_195 = arith.constant 0 : index
    %348 = vector.load %arg19[%c0_194, %c0_195] : memref<16x290xf32, #tpu.memory_space<vmem>>, vector<16x17xf32>
    tpu.vector_store %arg19[%c0_194, %c0_195], %347 {strides = array<i32>} : memref<16x290xf32, #tpu.memory_space<vmem>>, vector<16x17xf32>,
    %cst_196 = arith.constant 0.000000e+00 : f32
    %349 = vector.broadcast %cst_196 : f32 to vector<16x17xf32>
    %c0_197 = arith.constant 0 : index
    %c273 = arith.constant 273 : index
    %350 = vector.load %arg19[%c0_197, %c273] : memref<16x290xf32, #tpu.memory_space<vmem>>, vector<16x17xf32>
    tpu.vector_store %arg19[%c0_197, %c273], %349 {strides = array<i32>} : memref<16x290xf32, #tpu.memory_space<vmem>>, vector<16x17xf32>,
    %351 = tpu.iota {dimensions = array<i32: 1>} : vector<1x256xi32>
    %c16_i32_198 = arith.constant 16 : i32
    %c0_i32_199 = arith.constant 0 : i32
    %352 = arith.cmpi eq, %c16_i32_198, %c0_i32_199 : i32
    %c1_i32_200 = arith.constant 1 : i32
    %353 = arith.select %352, %c1_i32_200, %c16_i32_198 : i32
    %354 = vector.broadcast %353 : i32 to vector<1x256xi32>
    %355 = arith.remsi %351, %354 : vector<1x256xi32>
    %c0_i32_201 = arith.constant 0 : i32
    %356 = vector.broadcast %c0_i32_201 : i32 to vector<1x256xi32>
    %357 = arith.cmpi ne, %355, %356 : vector<1x256xi32>
    %c0_i32_202 = arith.constant 0 : i32
    %358 = vector.broadcast %c0_i32_202 : i32 to vector<1x256xi32>
    %359 = arith.cmpi slt, %355, %358 : vector<1x256xi32>
    %c0_i32_203 = arith.constant 0 : i32
    %360 = arith.cmpi slt, %353, %c0_i32_203 : i32
    %361 = vector.broadcast %360 : i1 to vector<1x256xi1>
    %362 = vector.broadcast %361 : vector<1x256xi1> to vector<1x256xi1>
    %363 = arith.xori %359, %362 : vector<1x256xi1>
    %364 = arith.andi %363, %357 : vector<1x256xi1>
    %365 = vector.broadcast %353 : i32 to vector<1x256xi32>
    %366 = arith.addi %355, %365 : vector<1x256xi32>
    %367 = arith.select %364, %366, %355 : vector<1x256xi1>, vector<1x256xi32>
    %c1_i32_204 = arith.constant 1 : i32
    %368 = vector.broadcast %c1_i32_204 : i32 to vector<1x256xi32>
    %369 = arith.cmpi sge, %367, %368 : vector<1x256xi32>
    %c14_i32_205 = arith.constant 14 : i32
    %370 = vector.broadcast %c14_i32_205 : i32 to vector<1x256xi32>
    %371 = arith.cmpi sle, %367, %370 : vector<1x256xi32>
    %c0_206 = arith.constant 0 : index
    %c17_207 = arith.constant 17 : index
    %372 = vector.load %arg19[%c0_206, %c17_207] : memref<16x290xf32, #tpu.memory_space<vmem>>, vector<1x256xf32>
    tpu.vector_store %arg19[%c0_206, %c17_207], %346 {strides = array<i32>} : memref<16x290xf32, #tpu.memory_space<vmem>>, vector<1x256xf32>,
    %c0_208 = arith.constant 0 : index
    %c0_209 = arith.constant 0 : index
    %373 = vector.load %arg19[%c0_208, %c0_209] : memref<16x290xf32, #tpu.memory_space<vmem>>, vector<1x256xf32>
    %cst_210 = arith.constant 0.000000e+00 : f32
    %374 = vector.broadcast %cst_210 : f32 to vector<1x256xf32>
    %375 = arith.select %369, %373, %374 : vector<1x256xi1>, vector<1x256xf32>
    %c0_211 = arith.constant 0 : index
    %c0_212 = arith.constant 0 : index
    %c0_213 = arith.constant 0 : index
    %376 = vector.load %arg10[%c0_211, %c0_212, %c0_213] : memref<9x16x1xf32, #tpu.memory_space<vmem>>, vector<1x16x1xf32>
    %377 = vector.shape_cast %376 : vector<1x16x1xf32> to vector<16x1xf32>
    %378 = vector.broadcast %377 : vector<16x1xf32> to vector<16x256xf32>
    %379 = vector.broadcast %375 : vector<1x256xf32> to vector<16x256xf32>
    %380 = arith.mulf %378, %379 : vector<16x256xf32>
    %c0_214 = arith.constant 0 : index
    %c1_215 = arith.constant 1 : index
    %381 = vector.load %arg19[%c0_214, %c1_215] : memref<16x290xf32, #tpu.memory_space<vmem>>, vector<1x256xf32>
    %c1_216 = arith.constant 1 : index
    %c0_217 = arith.constant 0 : index
    %c0_218 = arith.constant 0 : index
    %382 = vector.load %arg10[%c1_216, %c0_217, %c0_218] : memref<9x16x1xf32, #tpu.memory_space<vmem>>, vector<1x16x1xf32>
    %383 = vector.shape_cast %382 : vector<1x16x1xf32> to vector<16x1xf32>
    %384 = vector.broadcast %383 : vector<16x1xf32> to vector<16x256xf32>
    %385 = vector.broadcast %381 : vector<1x256xf32> to vector<16x256xf32>
    %386 = arith.mulf %384, %385 : vector<16x256xf32>
    %387 = arith.addf %380, %386 : vector<16x256xf32>
    %c0_219 = arith.constant 0 : index
    %c2_220 = arith.constant 2 : index
    %388 = vector.load %arg19[%c0_219, %c2_220] : memref<16x290xf32, #tpu.memory_space<vmem>>, vector<1x256xf32>
    %cst_221 = arith.constant 0.000000e+00 : f32
    %389 = vector.broadcast %cst_221 : f32 to vector<1x256xf32>
    %390 = arith.select %371, %388, %389 : vector<1x256xi1>, vector<1x256xf32>
    %c2_222 = arith.constant 2 : index
    %c0_223 = arith.constant 0 : index
    %c0_224 = arith.constant 0 : index
    %391 = vector.load %arg10[%c2_222, %c0_223, %c0_224] : memref<9x16x1xf32, #tpu.memory_space<vmem>>, vector<1x16x1xf32>
    %392 = vector.shape_cast %391 : vector<1x16x1xf32> to vector<16x1xf32>
    %393 = vector.broadcast %392 : vector<16x1xf32> to vector<16x256xf32>
    %394 = vector.broadcast %390 : vector<1x256xf32> to vector<16x256xf32>
    %395 = arith.mulf %393, %394 : vector<16x256xf32>
    %396 = arith.addf %387, %395 : vector<16x256xf32>
    %c0_225 = arith.constant 0 : index
    %c16_226 = arith.constant 16 : index
    %397 = vector.load %arg19[%c0_225, %c16_226] : memref<16x290xf32, #tpu.memory_space<vmem>>, vector<1x256xf32>
    %cst_227 = arith.constant 0.000000e+00 : f32
    %398 = vector.broadcast %cst_227 : f32 to vector<1x256xf32>
    %399 = arith.select %369, %397, %398 : vector<1x256xi1>, vector<1x256xf32>
    %c3_228 = arith.constant 3 : index
    %c0_229 = arith.constant 0 : index
    %c0_230 = arith.constant 0 : index
    %400 = vector.load %arg10[%c3_228, %c0_229, %c0_230] : memref<9x16x1xf32, #tpu.memory_space<vmem>>, vector<1x16x1xf32>
    %401 = vector.shape_cast %400 : vector<1x16x1xf32> to vector<16x1xf32>
    %402 = vector.broadcast %401 : vector<16x1xf32> to vector<16x256xf32>
    %403 = vector.broadcast %399 : vector<1x256xf32> to vector<16x256xf32>
    %404 = arith.mulf %402, %403 : vector<16x256xf32>
    %405 = arith.addf %396, %404 : vector<16x256xf32>
    %c0_231 = arith.constant 0 : index
    %c17_232 = arith.constant 17 : index
    %406 = vector.load %arg19[%c0_231, %c17_232] : memref<16x290xf32, #tpu.memory_space<vmem>>, vector<1x256xf32>
    %c4_233 = arith.constant 4 : index
    %c0_234 = arith.constant 0 : index
    %c0_235 = arith.constant 0 : index
    %407 = vector.load %arg10[%c4_233, %c0_234, %c0_235] : memref<9x16x1xf32, #tpu.memory_space<vmem>>, vector<1x16x1xf32>
    %408 = vector.shape_cast %407 : vector<1x16x1xf32> to vector<16x1xf32>
    %409 = vector.broadcast %408 : vector<16x1xf32> to vector<16x256xf32>
    %410 = vector.broadcast %406 : vector<1x256xf32> to vector<16x256xf32>
    %411 = arith.mulf %409, %410 : vector<16x256xf32>
    %412 = arith.addf %405, %411 : vector<16x256xf32>
    %c0_236 = arith.constant 0 : index
    %c18_237 = arith.constant 18 : index
    %413 = vector.load %arg19[%c0_236, %c18_237] : memref<16x290xf32, #tpu.memory_space<vmem>>, vector<1x256xf32>
    %cst_238 = arith.constant 0.000000e+00 : f32
    %414 = vector.broadcast %cst_238 : f32 to vector<1x256xf32>
    %415 = arith.select %371, %413, %414 : vector<1x256xi1>, vector<1x256xf32>
    %c5_239 = arith.constant 5 : index
    %c0_240 = arith.constant 0 : index
    %c0_241 = arith.constant 0 : index
    %416 = vector.load %arg10[%c5_239, %c0_240, %c0_241] : memref<9x16x1xf32, #tpu.memory_space<vmem>>, vector<1x16x1xf32>
    %417 = vector.shape_cast %416 : vector<1x16x1xf32> to vector<16x1xf32>
    %418 = vector.broadcast %417 : vector<16x1xf32> to vector<16x256xf32>
    %419 = vector.broadcast %415 : vector<1x256xf32> to vector<16x256xf32>
    %420 = arith.mulf %418, %419 : vector<16x256xf32>
    %421 = arith.addf %412, %420 : vector<16x256xf32>
    %c0_242 = arith.constant 0 : index
    %c32_243 = arith.constant 32 : index
    %422 = vector.load %arg19[%c0_242, %c32_243] : memref<16x290xf32, #tpu.memory_space<vmem>>, vector<1x256xf32>
    %cst_244 = arith.constant 0.000000e+00 : f32
    %423 = vector.broadcast %cst_244 : f32 to vector<1x256xf32>
    %424 = arith.select %369, %422, %423 : vector<1x256xi1>, vector<1x256xf32>
    %c6_245 = arith.constant 6 : index
    %c0_246 = arith.constant 0 : index
    %c0_247 = arith.constant 0 : index
    %425 = vector.load %arg10[%c6_245, %c0_246, %c0_247] : memref<9x16x1xf32, #tpu.memory_space<vmem>>, vector<1x16x1xf32>
    %426 = vector.shape_cast %425 : vector<1x16x1xf32> to vector<16x1xf32>
    %427 = vector.broadcast %426 : vector<16x1xf32> to vector<16x256xf32>
    %428 = vector.broadcast %424 : vector<1x256xf32> to vector<16x256xf32>
    %429 = arith.mulf %427, %428 : vector<16x256xf32>
    %430 = arith.addf %421, %429 : vector<16x256xf32>
    %c0_248 = arith.constant 0 : index
    %c33_249 = arith.constant 33 : index
    %431 = vector.load %arg19[%c0_248, %c33_249] : memref<16x290xf32, #tpu.memory_space<vmem>>, vector<1x256xf32>
    %c7_250 = arith.constant 7 : index
    %c0_251 = arith.constant 0 : index
    %c0_252 = arith.constant 0 : index
    %432 = vector.load %arg10[%c7_250, %c0_251, %c0_252] : memref<9x16x1xf32, #tpu.memory_space<vmem>>, vector<1x16x1xf32>
    %433 = vector.shape_cast %432 : vector<1x16x1xf32> to vector<16x1xf32>
    %434 = vector.broadcast %433 : vector<16x1xf32> to vector<16x256xf32>
    %435 = vector.broadcast %431 : vector<1x256xf32> to vector<16x256xf32>
    %436 = arith.mulf %434, %435 : vector<16x256xf32>
    %437 = arith.addf %430, %436 : vector<16x256xf32>
    %c0_253 = arith.constant 0 : index
    %c34_254 = arith.constant 34 : index
    %438 = vector.load %arg19[%c0_253, %c34_254] : memref<16x290xf32, #tpu.memory_space<vmem>>, vector<1x256xf32>
    %cst_255 = arith.constant 0.000000e+00 : f32
    %439 = vector.broadcast %cst_255 : f32 to vector<1x256xf32>
    %440 = arith.select %371, %438, %439 : vector<1x256xi1>, vector<1x256xf32>
    %c8_256 = arith.constant 8 : index
    %c0_257 = arith.constant 0 : index
    %c0_258 = arith.constant 0 : index
    %441 = vector.load %arg10[%c8_256, %c0_257, %c0_258] : memref<9x16x1xf32, #tpu.memory_space<vmem>>, vector<1x16x1xf32>
    %442 = vector.shape_cast %441 : vector<1x16x1xf32> to vector<16x1xf32>
    %443 = vector.broadcast %442 : vector<16x1xf32> to vector<16x256xf32>
    %444 = vector.broadcast %440 : vector<1x256xf32> to vector<16x256xf32>
    %445 = arith.mulf %443, %444 : vector<16x256xf32>
    %446 = arith.addf %437, %445 : vector<16x256xf32>
    %c0_259 = arith.constant 0 : index
    %c0_260 = arith.constant 0 : index
    %447 = vector.load %arg11[%c0_259, %c0_260] : memref<16x1xf32, #tpu.memory_space<vmem>>, vector<16x1xf32>
    %448 = vector.broadcast %447 : vector<16x1xf32> to vector<16x256xf32>
    %449 = arith.addf %446, %448 : vector<16x256xf32>
    %cst_261 = arith.constant 0.000000e+00 : f32
    %450 = vector.broadcast %cst_261 : f32 to vector<16x256xf32>
    %451 = arith.maximumf %449, %450 : vector<16x256xf32>
    %c0_262 = arith.constant 0 : index
    %c17_263 = arith.constant 17 : index
    %452 = vector.load %arg19[%c0_262, %c17_263] : memref<16x290xf32, #tpu.memory_space<vmem>>, vector<16x256xf32>
    tpu.vector_store %arg19[%c0_262, %c17_263], %451 {strides = array<i32>} : memref<16x290xf32, #tpu.memory_space<vmem>>, vector<16x256xf32>,
    %c0_264 = arith.constant 0 : index
    %c0_265 = arith.constant 0 : index
    %453 = vector.load %arg19[%c0_264, %c0_265] : memref<16x290xf32, #tpu.memory_space<vmem>>, vector<16x256xf32>
    %cst_266 = arith.constant 0.000000e+00 : f32
    %454 = vector.shape_cast %369 : vector<1x256xi1> to vector<1x256xi1>
    %455 = vector.broadcast %454 : vector<1x256xi1> to vector<16x256xi1>
    %456 = vector.broadcast %cst_266 : f32 to vector<16x256xf32>
    %457 = arith.select %455, %453, %456 : vector<16x256xi1>, vector<16x256xf32>
    %c0_267 = arith.constant 0 : index
    %c0_268 = arith.constant 0 : index
    %c0_269 = arith.constant 0 : index
    %458 = vector.load %arg12[%c0_267, %c0_268, %c0_269] : memref<9x16x16xf32, #tpu.memory_space<vmem>>, vector<1x16x16xf32>
    %459 = vector.shape_cast %458 : vector<1x16x16xf32> to vector<16x16xf32>
    %cst_270 = arith.constant dense<0.000000e+00> : vector<16x256xf32>
    %460 = tpu.matmul %459, %457, %cst_270 {dimension_numbers = #tpu.dot_dimension_numbers<[1], [0], [0], [1], [0, 0, 1, 1], [], []>} : vector<16x16xf32>, vector<16x256xf32>, vector<16x256xf32> -> vector<16x256xf32>
    %c0_271 = arith.constant 0 : index
    %c1_272 = arith.constant 1 : index
    %461 = vector.load %arg19[%c0_271, %c1_272] : memref<16x290xf32, #tpu.memory_space<vmem>>, vector<16x256xf32>
    %c1_273 = arith.constant 1 : index
    %c0_274 = arith.constant 0 : index
    %c0_275 = arith.constant 0 : index
    %462 = vector.load %arg12[%c1_273, %c0_274, %c0_275] : memref<9x16x16xf32, #tpu.memory_space<vmem>>, vector<1x16x16xf32>
    %463 = vector.shape_cast %462 : vector<1x16x16xf32> to vector<16x16xf32>
    %cst_276 = arith.constant dense<0.000000e+00> : vector<16x256xf32>
    %464 = tpu.matmul %463, %461, %cst_276 {dimension_numbers = #tpu.dot_dimension_numbers<[1], [0], [0], [1], [0, 0, 1, 1], [], []>} : vector<16x16xf32>, vector<16x256xf32>, vector<16x256xf32> -> vector<16x256xf32>
    %465 = arith.addf %460, %464 : vector<16x256xf32>
    %c0_277 = arith.constant 0 : index
    %c2_278 = arith.constant 2 : index
    %466 = vector.load %arg19[%c0_277, %c2_278] : memref<16x290xf32, #tpu.memory_space<vmem>>, vector<16x256xf32>
    %cst_279 = arith.constant 0.000000e+00 : f32
    %467 = vector.shape_cast %371 : vector<1x256xi1> to vector<1x256xi1>
    %468 = vector.broadcast %467 : vector<1x256xi1> to vector<16x256xi1>
    %469 = vector.broadcast %cst_279 : f32 to vector<16x256xf32>
    %470 = arith.select %468, %466, %469 : vector<16x256xi1>, vector<16x256xf32>
    %c2_280 = arith.constant 2 : index
    %c0_281 = arith.constant 0 : index
    %c0_282 = arith.constant 0 : index
    %471 = vector.load %arg12[%c2_280, %c0_281, %c0_282] : memref<9x16x16xf32, #tpu.memory_space<vmem>>, vector<1x16x16xf32>
    %472 = vector.shape_cast %471 : vector<1x16x16xf32> to vector<16x16xf32>
    %cst_283 = arith.constant dense<0.000000e+00> : vector<16x256xf32>
    %473 = tpu.matmul %472, %470, %cst_283 {dimension_numbers = #tpu.dot_dimension_numbers<[1], [0], [0], [1], [0, 0, 1, 1], [], []>} : vector<16x16xf32>, vector<16x256xf32>, vector<16x256xf32> -> vector<16x256xf32>
    %474 = arith.addf %465, %473 : vector<16x256xf32>
    %c0_284 = arith.constant 0 : index
    %c16_285 = arith.constant 16 : index
    %475 = vector.load %arg19[%c0_284, %c16_285] : memref<16x290xf32, #tpu.memory_space<vmem>>, vector<16x256xf32>
    %cst_286 = arith.constant 0.000000e+00 : f32
    %476 = vector.shape_cast %369 : vector<1x256xi1> to vector<1x256xi1>
    %477 = vector.broadcast %476 : vector<1x256xi1> to vector<16x256xi1>
    %478 = vector.broadcast %cst_286 : f32 to vector<16x256xf32>
    %479 = arith.select %477, %475, %478 : vector<16x256xi1>, vector<16x256xf32>
    %c3_287 = arith.constant 3 : index
    %c0_288 = arith.constant 0 : index
    %c0_289 = arith.constant 0 : index
    %480 = vector.load %arg12[%c3_287, %c0_288, %c0_289] : memref<9x16x16xf32, #tpu.memory_space<vmem>>, vector<1x16x16xf32>
    %481 = vector.shape_cast %480 : vector<1x16x16xf32> to vector<16x16xf32>
    %cst_290 = arith.constant dense<0.000000e+00> : vector<16x256xf32>
    %482 = tpu.matmul %481, %479, %cst_290 {dimension_numbers = #tpu.dot_dimension_numbers<[1], [0], [0], [1], [0, 0, 1, 1], [], []>} : vector<16x16xf32>, vector<16x256xf32>, vector<16x256xf32> -> vector<16x256xf32>
    %483 = arith.addf %474, %482 : vector<16x256xf32>
    %c0_291 = arith.constant 0 : index
    %c17_292 = arith.constant 17 : index
    %484 = vector.load %arg19[%c0_291, %c17_292] : memref<16x290xf32, #tpu.memory_space<vmem>>, vector<16x256xf32>
    %c4_293 = arith.constant 4 : index
    %c0_294 = arith.constant 0 : index
    %c0_295 = arith.constant 0 : index
    %485 = vector.load %arg12[%c4_293, %c0_294, %c0_295] : memref<9x16x16xf32, #tpu.memory_space<vmem>>, vector<1x16x16xf32>
    %486 = vector.shape_cast %485 : vector<1x16x16xf32> to vector<16x16xf32>
    %cst_296 = arith.constant dense<0.000000e+00> : vector<16x256xf32>
    %487 = tpu.matmul %486, %484, %cst_296 {dimension_numbers = #tpu.dot_dimension_numbers<[1], [0], [0], [1], [0, 0, 1, 1], [], []>} : vector<16x16xf32>, vector<16x256xf32>, vector<16x256xf32> -> vector<16x256xf32>
    %488 = arith.addf %483, %487 : vector<16x256xf32>
    %c0_297 = arith.constant 0 : index
    %c18_298 = arith.constant 18 : index
    %489 = vector.load %arg19[%c0_297, %c18_298] : memref<16x290xf32, #tpu.memory_space<vmem>>, vector<16x256xf32>
    %cst_299 = arith.constant 0.000000e+00 : f32
    %490 = vector.shape_cast %371 : vector<1x256xi1> to vector<1x256xi1>
    %491 = vector.broadcast %490 : vector<1x256xi1> to vector<16x256xi1>
    %492 = vector.broadcast %cst_299 : f32 to vector<16x256xf32>
    %493 = arith.select %491, %489, %492 : vector<16x256xi1>, vector<16x256xf32>
    %c5_300 = arith.constant 5 : index
    %c0_301 = arith.constant 0 : index
    %c0_302 = arith.constant 0 : index
    %494 = vector.load %arg12[%c5_300, %c0_301, %c0_302] : memref<9x16x16xf32, #tpu.memory_space<vmem>>, vector<1x16x16xf32>
    %495 = vector.shape_cast %494 : vector<1x16x16xf32> to vector<16x16xf32>
    %cst_303 = arith.constant dense<0.000000e+00> : vector<16x256xf32>
    %496 = tpu.matmul %495, %493, %cst_303 {dimension_numbers = #tpu.dot_dimension_numbers<[1], [0], [0], [1], [0, 0, 1, 1], [], []>} : vector<16x16xf32>, vector<16x256xf32>, vector<16x256xf32> -> vector<16x256xf32>
    %497 = arith.addf %488, %496 : vector<16x256xf32>
    %c0_304 = arith.constant 0 : index
    %c32_305 = arith.constant 32 : index
    %498 = vector.load %arg19[%c0_304, %c32_305] : memref<16x290xf32, #tpu.memory_space<vmem>>, vector<16x256xf32>
    %cst_306 = arith.constant 0.000000e+00 : f32
    %499 = vector.shape_cast %369 : vector<1x256xi1> to vector<1x256xi1>
    %500 = vector.broadcast %499 : vector<1x256xi1> to vector<16x256xi1>
    %501 = vector.broadcast %cst_306 : f32 to vector<16x256xf32>
    %502 = arith.select %500, %498, %501 : vector<16x256xi1>, vector<16x256xf32>
    %c6_307 = arith.constant 6 : index
    %c0_308 = arith.constant 0 : index
    %c0_309 = arith.constant 0 : index
    %503 = vector.load %arg12[%c6_307, %c0_308, %c0_309] : memref<9x16x16xf32, #tpu.memory_space<vmem>>, vector<1x16x16xf32>
    %504 = vector.shape_cast %503 : vector<1x16x16xf32> to vector<16x16xf32>
    %cst_310 = arith.constant dense<0.000000e+00> : vector<16x256xf32>
    %505 = tpu.matmul %504, %502, %cst_310 {dimension_numbers = #tpu.dot_dimension_numbers<[1], [0], [0], [1], [0, 0, 1, 1], [], []>} : vector<16x16xf32>, vector<16x256xf32>, vector<16x256xf32> -> vector<16x256xf32>
    %506 = arith.addf %497, %505 : vector<16x256xf32>
    %c0_311 = arith.constant 0 : index
    %c33_312 = arith.constant 33 : index
    %507 = vector.load %arg19[%c0_311, %c33_312] : memref<16x290xf32, #tpu.memory_space<vmem>>, vector<16x256xf32>
    %c7_313 = arith.constant 7 : index
    %c0_314 = arith.constant 0 : index
    %c0_315 = arith.constant 0 : index
    %508 = vector.load %arg12[%c7_313, %c0_314, %c0_315] : memref<9x16x16xf32, #tpu.memory_space<vmem>>, vector<1x16x16xf32>
    %509 = vector.shape_cast %508 : vector<1x16x16xf32> to vector<16x16xf32>
    %cst_316 = arith.constant dense<0.000000e+00> : vector<16x256xf32>
    %510 = tpu.matmul %509, %507, %cst_316 {dimension_numbers = #tpu.dot_dimension_numbers<[1], [0], [0], [1], [0, 0, 1, 1], [], []>} : vector<16x16xf32>, vector<16x256xf32>, vector<16x256xf32> -> vector<16x256xf32>
    %511 = arith.addf %506, %510 : vector<16x256xf32>
    %c0_317 = arith.constant 0 : index
    %c34_318 = arith.constant 34 : index
    %512 = vector.load %arg19[%c0_317, %c34_318] : memref<16x290xf32, #tpu.memory_space<vmem>>, vector<16x256xf32>
    %cst_319 = arith.constant 0.000000e+00 : f32
    %513 = vector.shape_cast %371 : vector<1x256xi1> to vector<1x256xi1>
    %514 = vector.broadcast %513 : vector<1x256xi1> to vector<16x256xi1>
    %515 = vector.broadcast %cst_319 : f32 to vector<16x256xf32>
    %516 = arith.select %514, %512, %515 : vector<16x256xi1>, vector<16x256xf32>
    %c8_320 = arith.constant 8 : index
    %c0_321 = arith.constant 0 : index
    %c0_322 = arith.constant 0 : index
    %517 = vector.load %arg12[%c8_320, %c0_321, %c0_322] : memref<9x16x16xf32, #tpu.memory_space<vmem>>, vector<1x16x16xf32>
    %518 = vector.shape_cast %517 : vector<1x16x16xf32> to vector<16x16xf32>
    %cst_323 = arith.constant dense<0.000000e+00> : vector<16x256xf32>
    %519 = tpu.matmul %518, %516, %cst_323 {dimension_numbers = #tpu.dot_dimension_numbers<[1], [0], [0], [1], [0, 0, 1, 1], [], []>} : vector<16x16xf32>, vector<16x256xf32>, vector<16x256xf32> -> vector<16x256xf32>
    %520 = arith.addf %511, %519 : vector<16x256xf32>
    %c0_324 = arith.constant 0 : index
    %c0_325 = arith.constant 0 : index
    %521 = vector.load %arg13[%c0_324, %c0_325] : memref<16x1xf32, #tpu.memory_space<vmem>>, vector<16x1xf32>
    %522 = vector.broadcast %521 : vector<16x1xf32> to vector<16x256xf32>
    %523 = arith.addf %520, %522 : vector<16x256xf32>
    %cst_326 = arith.constant 0.000000e+00 : f32
    %524 = vector.broadcast %cst_326 : f32 to vector<16x256xf32>
    %525 = arith.maximumf %523, %524 : vector<16x256xf32>
    %c0_327 = arith.constant 0 : index
    %c17_328 = arith.constant 17 : index
    %526 = vector.load %arg19[%c0_327, %c17_328] : memref<16x290xf32, #tpu.memory_space<vmem>>, vector<16x256xf32>
    tpu.vector_store %arg19[%c0_327, %c17_328], %525 {strides = array<i32>} : memref<16x290xf32, #tpu.memory_space<vmem>>, vector<16x256xf32>,
    %c0_329 = arith.constant 0 : index
    %c0_330 = arith.constant 0 : index
    %527 = vector.load %arg19[%c0_329, %c0_330] : memref<16x290xf32, #tpu.memory_space<vmem>>, vector<16x256xf32>
    %cst_331 = arith.constant 0.000000e+00 : f32
    %528 = vector.shape_cast %369 : vector<1x256xi1> to vector<1x256xi1>
    %529 = vector.broadcast %528 : vector<1x256xi1> to vector<16x256xi1>
    %530 = vector.broadcast %cst_331 : f32 to vector<16x256xf32>
    %531 = arith.select %529, %527, %530 : vector<16x256xi1>, vector<16x256xf32>
    %c0_332 = arith.constant 0 : index
    %c0_333 = arith.constant 0 : index
    %c0_334 = arith.constant 0 : index
    %532 = vector.load %arg14[%c0_332, %c0_333, %c0_334] : memref<9x1x16xf32, #tpu.memory_space<vmem>>, vector<1x1x16xf32>
    %533 = vector.shape_cast %532 : vector<1x1x16xf32> to vector<1x16xf32>
    %cst_335 = arith.constant dense<0.000000e+00> : vector<1x256xf32>
    %534 = tpu.matmul %533, %531, %cst_335 {dimension_numbers = #tpu.dot_dimension_numbers<[1], [0], [0], [1], [0, 0, 1, 1], [], []>} : vector<1x16xf32>, vector<16x256xf32>, vector<1x256xf32> -> vector<1x256xf32>
    %c0_336 = arith.constant 0 : index
    %c1_337 = arith.constant 1 : index
    %535 = vector.load %arg19[%c0_336, %c1_337] : memref<16x290xf32, #tpu.memory_space<vmem>>, vector<16x256xf32>
    %c1_338 = arith.constant 1 : index
    %c0_339 = arith.constant 0 : index
    %c0_340 = arith.constant 0 : index
    %536 = vector.load %arg14[%c1_338, %c0_339, %c0_340] : memref<9x1x16xf32, #tpu.memory_space<vmem>>, vector<1x1x16xf32>
    %537 = vector.shape_cast %536 : vector<1x1x16xf32> to vector<1x16xf32>
    %cst_341 = arith.constant dense<0.000000e+00> : vector<1x256xf32>
    %538 = tpu.matmul %537, %535, %cst_341 {dimension_numbers = #tpu.dot_dimension_numbers<[1], [0], [0], [1], [0, 0, 1, 1], [], []>} : vector<1x16xf32>, vector<16x256xf32>, vector<1x256xf32> -> vector<1x256xf32>
    %539 = arith.addf %534, %538 : vector<1x256xf32>
    %c0_342 = arith.constant 0 : index
    %c2_343 = arith.constant 2 : index
    %540 = vector.load %arg19[%c0_342, %c2_343] : memref<16x290xf32, #tpu.memory_space<vmem>>, vector<16x256xf32>
    %cst_344 = arith.constant 0.000000e+00 : f32
    %541 = vector.shape_cast %371 : vector<1x256xi1> to vector<1x256xi1>
    %542 = vector.broadcast %541 : vector<1x256xi1> to vector<16x256xi1>
    %543 = vector.broadcast %cst_344 : f32 to vector<16x256xf32>
    %544 = arith.select %542, %540, %543 : vector<16x256xi1>, vector<16x256xf32>
    %c2_345 = arith.constant 2 : index
    %c0_346 = arith.constant 0 : index
    %c0_347 = arith.constant 0 : index
    %545 = vector.load %arg14[%c2_345, %c0_346, %c0_347] : memref<9x1x16xf32, #tpu.memory_space<vmem>>, vector<1x1x16xf32>
    %546 = vector.shape_cast %545 : vector<1x1x16xf32> to vector<1x16xf32>
    %cst_348 = arith.constant dense<0.000000e+00> : vector<1x256xf32>
    %547 = tpu.matmul %546, %544, %cst_348 {dimension_numbers = #tpu.dot_dimension_numbers<[1], [0], [0], [1], [0, 0, 1, 1], [], []>} : vector<1x16xf32>, vector<16x256xf32>, vector<1x256xf32> -> vector<1x256xf32>
    %548 = arith.addf %539, %547 : vector<1x256xf32>
    %c0_349 = arith.constant 0 : index
    %c16_350 = arith.constant 16 : index
    %549 = vector.load %arg19[%c0_349, %c16_350] : memref<16x290xf32, #tpu.memory_space<vmem>>, vector<16x256xf32>
    %cst_351 = arith.constant 0.000000e+00 : f32
    %550 = vector.shape_cast %369 : vector<1x256xi1> to vector<1x256xi1>
    %551 = vector.broadcast %550 : vector<1x256xi1> to vector<16x256xi1>
    %552 = vector.broadcast %cst_351 : f32 to vector<16x256xf32>
    %553 = arith.select %551, %549, %552 : vector<16x256xi1>, vector<16x256xf32>
    %c3_352 = arith.constant 3 : index
    %c0_353 = arith.constant 0 : index
    %c0_354 = arith.constant 0 : index
    %554 = vector.load %arg14[%c3_352, %c0_353, %c0_354] : memref<9x1x16xf32, #tpu.memory_space<vmem>>, vector<1x1x16xf32>
    %555 = vector.shape_cast %554 : vector<1x1x16xf32> to vector<1x16xf32>
    %cst_355 = arith.constant dense<0.000000e+00> : vector<1x256xf32>
    %556 = tpu.matmul %555, %553, %cst_355 {dimension_numbers = #tpu.dot_dimension_numbers<[1], [0], [0], [1], [0, 0, 1, 1], [], []>} : vector<1x16xf32>, vector<16x256xf32>, vector<1x256xf32> -> vector<1x256xf32>
    %557 = arith.addf %548, %556 : vector<1x256xf32>
    %c0_356 = arith.constant 0 : index
    %c17_357 = arith.constant 17 : index
    %558 = vector.load %arg19[%c0_356, %c17_357] : memref<16x290xf32, #tpu.memory_space<vmem>>, vector<16x256xf32>
    %c4_358 = arith.constant 4 : index
    %c0_359 = arith.constant 0 : index
    %c0_360 = arith.constant 0 : index
    %559 = vector.load %arg14[%c4_358, %c0_359, %c0_360] : memref<9x1x16xf32, #tpu.memory_space<vmem>>, vector<1x1x16xf32>
    %560 = vector.shape_cast %559 : vector<1x1x16xf32> to vector<1x16xf32>
    %cst_361 = arith.constant dense<0.000000e+00> : vector<1x256xf32>
    %561 = tpu.matmul %560, %558, %cst_361 {dimension_numbers = #tpu.dot_dimension_numbers<[1], [0], [0], [1], [0, 0, 1, 1], [], []>} : vector<1x16xf32>, vector<16x256xf32>, vector<1x256xf32> -> vector<1x256xf32>
    %562 = arith.addf %557, %561 : vector<1x256xf32>
    %c0_362 = arith.constant 0 : index
    %c18_363 = arith.constant 18 : index
    %563 = vector.load %arg19[%c0_362, %c18_363] : memref<16x290xf32, #tpu.memory_space<vmem>>, vector<16x256xf32>
    %cst_364 = arith.constant 0.000000e+00 : f32
    %564 = vector.shape_cast %371 : vector<1x256xi1> to vector<1x256xi1>
    %565 = vector.broadcast %564 : vector<1x256xi1> to vector<16x256xi1>
    %566 = vector.broadcast %cst_364 : f32 to vector<16x256xf32>
    %567 = arith.select %565, %563, %566 : vector<16x256xi1>, vector<16x256xf32>
    %c5_365 = arith.constant 5 : index
    %c0_366 = arith.constant 0 : index
    %c0_367 = arith.constant 0 : index
    %568 = vector.load %arg14[%c5_365, %c0_366, %c0_367] : memref<9x1x16xf32, #tpu.memory_space<vmem>>, vector<1x1x16xf32>
    %569 = vector.shape_cast %568 : vector<1x1x16xf32> to vector<1x16xf32>
    %cst_368 = arith.constant dense<0.000000e+00> : vector<1x256xf32>
    %570 = tpu.matmul %569, %567, %cst_368 {dimension_numbers = #tpu.dot_dimension_numbers<[1], [0], [0], [1], [0, 0, 1, 1], [], []>} : vector<1x16xf32>, vector<16x256xf32>, vector<1x256xf32> -> vector<1x256xf32>
    %571 = arith.addf %562, %570 : vector<1x256xf32>
    %c0_369 = arith.constant 0 : index
    %c32_370 = arith.constant 32 : index
    %572 = vector.load %arg19[%c0_369, %c32_370] : memref<16x290xf32, #tpu.memory_space<vmem>>, vector<16x256xf32>
    %cst_371 = arith.constant 0.000000e+00 : f32
    %573 = vector.shape_cast %369 : vector<1x256xi1> to vector<1x256xi1>
    %574 = vector.broadcast %573 : vector<1x256xi1> to vector<16x256xi1>
    %575 = vector.broadcast %cst_371 : f32 to vector<16x256xf32>
    %576 = arith.select %574, %572, %575 : vector<16x256xi1>, vector<16x256xf32>
    %c6_372 = arith.constant 6 : index
    %c0_373 = arith.constant 0 : index
    %c0_374 = arith.constant 0 : index
    %577 = vector.load %arg14[%c6_372, %c0_373, %c0_374] : memref<9x1x16xf32, #tpu.memory_space<vmem>>, vector<1x1x16xf32>
    %578 = vector.shape_cast %577 : vector<1x1x16xf32> to vector<1x16xf32>
    %cst_375 = arith.constant dense<0.000000e+00> : vector<1x256xf32>
    %579 = tpu.matmul %578, %576, %cst_375 {dimension_numbers = #tpu.dot_dimension_numbers<[1], [0], [0], [1], [0, 0, 1, 1], [], []>} : vector<1x16xf32>, vector<16x256xf32>, vector<1x256xf32> -> vector<1x256xf32>
    %580 = arith.addf %571, %579 : vector<1x256xf32>
    %c0_376 = arith.constant 0 : index
    %c33_377 = arith.constant 33 : index
    %581 = vector.load %arg19[%c0_376, %c33_377] : memref<16x290xf32, #tpu.memory_space<vmem>>, vector<16x256xf32>
    %c7_378 = arith.constant 7 : index
    %c0_379 = arith.constant 0 : index
    %c0_380 = arith.constant 0 : index
    %582 = vector.load %arg14[%c7_378, %c0_379, %c0_380] : memref<9x1x16xf32, #tpu.memory_space<vmem>>, vector<1x1x16xf32>
    %583 = vector.shape_cast %582 : vector<1x1x16xf32> to vector<1x16xf32>
    %cst_381 = arith.constant dense<0.000000e+00> : vector<1x256xf32>
    %584 = tpu.matmul %583, %581, %cst_381 {dimension_numbers = #tpu.dot_dimension_numbers<[1], [0], [0], [1], [0, 0, 1, 1], [], []>} : vector<1x16xf32>, vector<16x256xf32>, vector<1x256xf32> -> vector<1x256xf32>
    %585 = arith.addf %580, %584 : vector<1x256xf32>
    %c0_382 = arith.constant 0 : index
    %c34_383 = arith.constant 34 : index
    %586 = vector.load %arg19[%c0_382, %c34_383] : memref<16x290xf32, #tpu.memory_space<vmem>>, vector<16x256xf32>
    %cst_384 = arith.constant 0.000000e+00 : f32
    %587 = vector.shape_cast %371 : vector<1x256xi1> to vector<1x256xi1>
    %588 = vector.broadcast %587 : vector<1x256xi1> to vector<16x256xi1>
    %589 = vector.broadcast %cst_384 : f32 to vector<16x256xf32>
    %590 = arith.select %588, %586, %589 : vector<16x256xi1>, vector<16x256xf32>
    %c8_385 = arith.constant 8 : index
    %c0_386 = arith.constant 0 : index
    %c0_387 = arith.constant 0 : index
    %591 = vector.load %arg14[%c8_385, %c0_386, %c0_387] : memref<9x1x16xf32, #tpu.memory_space<vmem>>, vector<1x1x16xf32>
    %592 = vector.shape_cast %591 : vector<1x1x16xf32> to vector<1x16xf32>
    %cst_388 = arith.constant dense<0.000000e+00> : vector<1x256xf32>
    %593 = tpu.matmul %592, %590, %cst_388 {dimension_numbers = #tpu.dot_dimension_numbers<[1], [0], [0], [1], [0, 0, 1, 1], [], []>} : vector<1x16xf32>, vector<16x256xf32>, vector<1x256xf32> -> vector<1x256xf32>
    %594 = arith.addf %585, %593 : vector<1x256xf32>
    %c0_389 = arith.constant 0 : index
    %c0_390 = arith.constant 0 : index
    %595 = vector.load %arg15[%c0_389, %c0_390] : memref<1x1xf32, #tpu.memory_space<vmem>>, vector<1x1xf32>
    %596 = vector.broadcast %595 : vector<1x1xf32> to vector<1x256xf32>
    %597 = arith.addf %594, %596 : vector<1x256xf32>
    %cst_391 = arith.constant 0.000000e+00 : f32
    %598 = vector.broadcast %cst_391 : f32 to vector<1x256xf32>
    %599 = arith.maximumf %597, %598 : vector<1x256xf32>
    %c0_392 = arith.constant 0 : index
    %c0_393 = arith.constant 0 : index
    %c0_394 = arith.constant 0 : index
    %600 = vector.load %arg17[%c0_392, %c0_393, %c0_394] : memref<1x1x256xf32, #tpu.memory_space<vmem>>, vector<1x1x256xf32>
    %601 = vector.shape_cast %600 : vector<1x1x256xf32> to vector<1x256xf32>
    %602 = vector.shape_cast %599 : vector<1x256xf32> to vector<1x1x256xf32>
    tpu.vector_store %arg17[%c0_392, %c0_393, %c0_394], %602 {strides = array<i32>} : memref<1x1x256xf32, #tpu.memory_space<vmem>>, vector<1x1x256xf32>,
    return
  }
  func.func @transform_0(%arg0: i32) -> (i32, i32, i32) {
    %c0_i32 = arith.constant 0 : i32
    %c0_i32_0 = arith.constant 0 : i32
    %c0_i32_1 = arith.constant 0 : i32
    return %arg0, %c0_i32, %c0_i32_0 : i32, i32, i32
  }
  func.func @transform_1(%arg0: i32) -> (i32, i32, i32) {
    %c0_i32 = arith.constant 0 : i32
    %c0_i32_0 = arith.constant 0 : i32
    %c0_i32_1 = arith.constant 0 : i32
    return %arg0, %c0_i32, %c0_i32_0 : i32, i32, i32
  }
  func.func @transform_2(%arg0: i32) -> (i32, i32, i32) {
    %c0_i32 = arith.constant 0 : i32
    %c0_i32_0 = arith.constant 0 : i32
    %c0_i32_1 = arith.constant 0 : i32
    return %arg0, %c0_i32, %c0_i32_0 : i32, i32, i32
  }
  func.func @transform_3(%arg0: i32) -> (i32, i32, i32) {
    %c0_i32 = arith.constant 0 : i32
    %c0_i32_0 = arith.constant 0 : i32
    %c0_i32_1 = arith.constant 0 : i32
    %c0_i32_2 = arith.constant 0 : i32
    return %c0_i32, %c0_i32_0, %c0_i32_1 : i32, i32, i32
  }
  func.func @transform_4(%arg0: i32) -> (i32, i32) {
    %c0_i32 = arith.constant 0 : i32
    %c0_i32_0 = arith.constant 0 : i32
    %c0_i32_1 = arith.constant 0 : i32
    return %c0_i32, %c0_i32_0 : i32, i32
  }
  func.func @transform_5(%arg0: i32) -> (i32, i32, i32) {
    %c0_i32 = arith.constant 0 : i32
    %c0_i32_0 = arith.constant 0 : i32
    %c0_i32_1 = arith.constant 0 : i32
    %c0_i32_2 = arith.constant 0 : i32
    return %c0_i32, %c0_i32_0, %c0_i32_1 : i32, i32, i32
  }
  func.func @transform_6(%arg0: i32) -> (i32, i32) {
    %c0_i32 = arith.constant 0 : i32
    %c0_i32_0 = arith.constant 0 : i32
    %c0_i32_1 = arith.constant 0 : i32
    return %c0_i32, %c0_i32_0 : i32, i32
  }
  func.func @transform_7(%arg0: i32) -> (i32, i32, i32) {
    %c0_i32 = arith.constant 0 : i32
    %c0_i32_0 = arith.constant 0 : i32
    %c0_i32_1 = arith.constant 0 : i32
    %c0_i32_2 = arith.constant 0 : i32
    return %c0_i32, %c0_i32_0, %c0_i32_1 : i32, i32, i32
  }
  func.func @transform_8(%arg0: i32) -> (i32, i32) {
    %c0_i32 = arith.constant 0 : i32
    %c0_i32_0 = arith.constant 0 : i32
    %c0_i32_1 = arith.constant 0 : i32
    return %c0_i32, %c0_i32_0 : i32, i32
  }
  func.func @transform_9(%arg0: i32) -> (i32, i32, i32) {
    %c0_i32 = arith.constant 0 : i32
    %c0_i32_0 = arith.constant 0 : i32
    %c0_i32_1 = arith.constant 0 : i32
    %c0_i32_2 = arith.constant 0 : i32
    return %c0_i32, %c0_i32_0, %c0_i32_1 : i32, i32, i32
  }
  func.func @transform_10(%arg0: i32) -> (i32, i32) {
    %c0_i32 = arith.constant 0 : i32
    %c0_i32_0 = arith.constant 0 : i32
    %c0_i32_1 = arith.constant 0 : i32
    return %c0_i32, %c0_i32_0 : i32, i32
  }
  func.func @transform_11(%arg0: i32) -> (i32, i32, i32) {
    %c0_i32 = arith.constant 0 : i32
    %c0_i32_0 = arith.constant 0 : i32
    %c0_i32_1 = arith.constant 0 : i32
    %c0_i32_2 = arith.constant 0 : i32
    return %c0_i32, %c0_i32_0, %c0_i32_1 : i32, i32, i32
  }
  func.func @transform_12(%arg0: i32) -> (i32, i32) {
    %c0_i32 = arith.constant 0 : i32
    %c0_i32_0 = arith.constant 0 : i32
    %c0_i32_1 = arith.constant 0 : i32
    return %c0_i32, %c0_i32_0 : i32, i32
  }
  func.func @transform_13(%arg0: i32) -> (i32, i32, i32) {
    %c0_i32 = arith.constant 0 : i32
    %c0_i32_0 = arith.constant 0 : i32
    %c0_i32_1 = arith.constant 0 : i32
    %c0_i32_2 = arith.constant 0 : i32
    return %c0_i32, %c0_i32_0, %c0_i32_1 : i32, i32, i32
  }
  func.func @transform_14(%arg0: i32) -> (i32, i32) {
    %c0_i32 = arith.constant 0 : i32
    %c0_i32_0 = arith.constant 0 : i32
    %c0_i32_1 = arith.constant 0 : i32
    return %c0_i32, %c0_i32_0 : i32, i32
  }
  func.func @transform_15(%arg0: i32) -> (i32, i32, i32) {
    %c0_i32 = arith.constant 0 : i32
    %c0_i32_0 = arith.constant 0 : i32
    %c0_i32_1 = arith.constant 0 : i32
    return %arg0, %c0_i32, %c0_i32_0 : i32, i32, i32
  }
  func.func @transform_16(%arg0: i32) -> (i32, i32, i32) {
    %c0_i32 = arith.constant 0 : i32
    %c0_i32_0 = arith.constant 0 : i32
    %c0_i32_1 = arith.constant 0 : i32
    return %arg0, %c0_i32, %c0_i32_0 : i32, i32, i32
  }
}

module attributes {stable_mosaic.version = 11 : i64} {
  func.func @kernel(%arg0: i32, %arg1: memref<1x1x256xf32, #tpu.memory_space<vmem>>, %arg2: memref<1x1x256xf32, #tpu.memory_space<vmem>>, %arg3: memref<1x1x256xf32, #tpu.memory_space<vmem>>, %arg4: memref<9x1x3xf32, #tpu.memory_space<vmem>>, %arg5: memref<1x1xf32, #tpu.memory_space<vmem>>, %arg6: memref<1x1x256xf32, #tpu.memory_space<vmem>>, %arg7: memref<3x290xf32, #tpu.memory_space<vmem>>) attributes {dimension_semantics = [#tpu.dimension_semantics<parallel>], iteration_bounds = array<i64: 2>, scalar_prefetch = 0 : i64, scratch_operands = 1 : i64, tpu.core_type = #tpu.core_type<tc>, window_params = [{transform_indices = @transform_0, window_bounds = array<i64: 1, 1, 256>}, {transform_indices = @transform_1, window_bounds = array<i64: 1, 1, 256>}, {transform_indices = @transform_2, window_bounds = array<i64: 1, 1, 256>}, {pipeline_mode = #tpu.pipeline_mode<synchronous>, transform_indices = @transform_3, window_bounds = array<i64: 9, 1, 3>}, {pipeline_mode = #tpu.pipeline_mode<synchronous>, transform_indices = @transform_4, window_bounds = array<i64: 1, 1>}, {transform_indices = @transform_5, window_bounds = array<i64: 1, 1, 256>}]} {
    %c0 = arith.constant 0 : index
    %c0_0 = arith.constant 0 : index
    %c0_1 = arith.constant 0 : index
    %0 = vector.load %arg1[%c0, %c0_0, %c0_1] : memref<1x1x256xf32, #tpu.memory_space<vmem>>, vector<1x1x256xf32>
    %1 = vector.shape_cast %0 : vector<1x1x256xf32> to vector<1x256xf32>
    %c0_2 = arith.constant 0 : index
    %c0_3 = arith.constant 0 : index
    %c0_4 = arith.constant 0 : index
    %2 = vector.load %arg2[%c0_2, %c0_3, %c0_4] : memref<1x1x256xf32, #tpu.memory_space<vmem>>, vector<1x1x256xf32>
    %3 = vector.shape_cast %2 : vector<1x1x256xf32> to vector<1x256xf32>
    %c0_5 = arith.constant 0 : index
    %c0_6 = arith.constant 0 : index
    %c0_7 = arith.constant 0 : index
    %4 = vector.load %arg3[%c0_5, %c0_6, %c0_7] : memref<1x1x256xf32, #tpu.memory_space<vmem>>, vector<1x1x256xf32>
    %5 = vector.shape_cast %4 : vector<1x1x256xf32> to vector<1x256xf32>
    %cst = arith.constant 0.000000e+00 : f32
    %6 = vector.broadcast %cst : f32 to vector<3x17xf32>
    %c0_8 = arith.constant 0 : index
    %c0_9 = arith.constant 0 : index
    %7 = vector.load %arg7[%c0_8, %c0_9] : memref<3x290xf32, #tpu.memory_space<vmem>>, vector<3x17xf32>
    tpu.vector_store %arg7[%c0_8, %c0_9], %6 {strides = array<i32>} : memref<3x290xf32, #tpu.memory_space<vmem>>, vector<3x17xf32>,
    %cst_10 = arith.constant 0.000000e+00 : f32
    %8 = vector.broadcast %cst_10 : f32 to vector<3x17xf32>
    %c0_11 = arith.constant 0 : index
    %c273 = arith.constant 273 : index
    %9 = vector.load %arg7[%c0_11, %c273] : memref<3x290xf32, #tpu.memory_space<vmem>>, vector<3x17xf32>
    tpu.vector_store %arg7[%c0_11, %c273], %8 {strides = array<i32>} : memref<3x290xf32, #tpu.memory_space<vmem>>, vector<3x17xf32>,
    %10 = tpu.iota {dimensions = array<i32: 1>} : vector<1x256xi32>
    %c16_i32 = arith.constant 16 : i32
    %c0_i32 = arith.constant 0 : i32
    %11 = arith.cmpi eq, %c16_i32, %c0_i32 : i32
    %c1_i32 = arith.constant 1 : i32
    %12 = arith.select %11, %c1_i32, %c16_i32 : i32
    %13 = vector.broadcast %12 : i32 to vector<1x256xi32>
    %14 = arith.remsi %10, %13 : vector<1x256xi32>
    %c0_i32_12 = arith.constant 0 : i32
    %15 = vector.broadcast %c0_i32_12 : i32 to vector<1x256xi32>
    %16 = arith.cmpi ne, %14, %15 : vector<1x256xi32>
    %c0_i32_13 = arith.constant 0 : i32
    %17 = vector.broadcast %c0_i32_13 : i32 to vector<1x256xi32>
    %18 = arith.cmpi slt, %14, %17 : vector<1x256xi32>
    %c0_i32_14 = arith.constant 0 : i32
    %19 = arith.cmpi slt, %12, %c0_i32_14 : i32
    %20 = vector.broadcast %19 : i1 to vector<1x256xi1>
    %21 = vector.broadcast %20 : vector<1x256xi1> to vector<1x256xi1>
    %22 = arith.xori %18, %21 : vector<1x256xi1>
    %23 = arith.andi %22, %16 : vector<1x256xi1>
    %24 = vector.broadcast %12 : i32 to vector<1x256xi32>
    %25 = arith.addi %14, %24 : vector<1x256xi32>
    %26 = arith.select %23, %25, %14 : vector<1x256xi1>, vector<1x256xi32>
    %c1_i32_15 = arith.constant 1 : i32
    %27 = vector.broadcast %c1_i32_15 : i32 to vector<1x256xi32>
    %28 = arith.cmpi sge, %26, %27 : vector<1x256xi32>
    %c14_i32 = arith.constant 14 : i32
    %29 = vector.broadcast %c14_i32 : i32 to vector<1x256xi32>
    %30 = arith.cmpi sle, %26, %29 : vector<1x256xi32>
    %c0_16 = arith.constant 0 : index
    %c17 = arith.constant 17 : index
    %31 = vector.load %arg7[%c0_16, %c17] : memref<3x290xf32, #tpu.memory_space<vmem>>, vector<1x256xf32>
    tpu.vector_store %arg7[%c0_16, %c17], %1 {strides = array<i32>} : memref<3x290xf32, #tpu.memory_space<vmem>>, vector<1x256xf32>,
    %c1 = arith.constant 1 : index
    %c17_17 = arith.constant 17 : index
    %32 = vector.load %arg7[%c1, %c17_17] : memref<3x290xf32, #tpu.memory_space<vmem>>, vector<1x256xf32>
    tpu.vector_store %arg7[%c1, %c17_17], %3 {strides = array<i32>} : memref<3x290xf32, #tpu.memory_space<vmem>>, vector<1x256xf32>,
    %c2 = arith.constant 2 : index
    %c17_18 = arith.constant 17 : index
    %33 = vector.load %arg7[%c2, %c17_18] : memref<3x290xf32, #tpu.memory_space<vmem>>, vector<1x256xf32>
    tpu.vector_store %arg7[%c2, %c17_18], %5 {strides = array<i32>} : memref<3x290xf32, #tpu.memory_space<vmem>>, vector<1x256xf32>,
    %c0_19 = arith.constant 0 : index
    %c0_20 = arith.constant 0 : index
    %34 = vector.load %arg7[%c0_19, %c0_20] : memref<3x290xf32, #tpu.memory_space<vmem>>, vector<3x256xf32>
    %cst_21 = arith.constant 0.000000e+00 : f32
    %35 = vector.shape_cast %28 : vector<1x256xi1> to vector<1x256xi1>
    %36 = vector.broadcast %35 : vector<1x256xi1> to vector<3x256xi1>
    %37 = vector.broadcast %cst_21 : f32 to vector<3x256xf32>
    %38 = arith.select %36, %34, %37 : vector<3x256xi1>, vector<3x256xf32>
    %c0_22 = arith.constant 0 : index
    %c0_23 = arith.constant 0 : index
    %c0_24 = arith.constant 0 : index
    %39 = vector.load %arg4[%c0_22, %c0_23, %c0_24] : memref<9x1x3xf32, #tpu.memory_space<vmem>>, vector<1x1x3xf32>
    %40 = vector.shape_cast %39 : vector<1x1x3xf32> to vector<1x3xf32>
    %41 = vector.extract_strided_slice %40 {offsets = [0, 0], sizes = [1, 1], strides = [1, 1]} : vector<1x3xf32> to vector<1x1xf32>
    %42 = vector.extract_strided_slice %38 {offsets = [0, 0], sizes = [1, 256], strides = [1, 1]} : vector<3x256xf32> to vector<1x256xf32>
    %43 = vector.broadcast %41 : vector<1x1xf32> to vector<1x256xf32>
    %44 = arith.mulf %43, %42 : vector<1x256xf32>
    %45 = vector.extract_strided_slice %40 {offsets = [0, 1], sizes = [1, 1], strides = [1, 1]} : vector<1x3xf32> to vector<1x1xf32>
    %46 = vector.extract_strided_slice %38 {offsets = [1, 0], sizes = [1, 256], strides = [1, 1]} : vector<3x256xf32> to vector<1x256xf32>
    %47 = vector.broadcast %45 : vector<1x1xf32> to vector<1x256xf32>
    %48 = arith.mulf %47, %46 : vector<1x256xf32>
    %49 = arith.addf %44, %48 : vector<1x256xf32>
    %50 = vector.extract_strided_slice %40 {offsets = [0, 2], sizes = [1, 1], strides = [1, 1]} : vector<1x3xf32> to vector<1x1xf32>
    %51 = vector.extract_strided_slice %38 {offsets = [2, 0], sizes = [1, 256], strides = [1, 1]} : vector<3x256xf32> to vector<1x256xf32>
    %52 = vector.broadcast %50 : vector<1x1xf32> to vector<1x256xf32>
    %53 = arith.mulf %52, %51 : vector<1x256xf32>
    %54 = arith.addf %49, %53 : vector<1x256xf32>
    %c0_25 = arith.constant 0 : index
    %c1_26 = arith.constant 1 : index
    %55 = vector.load %arg7[%c0_25, %c1_26] : memref<3x290xf32, #tpu.memory_space<vmem>>, vector<3x256xf32>
    %c1_27 = arith.constant 1 : index
    %c0_28 = arith.constant 0 : index
    %c0_29 = arith.constant 0 : index
    %56 = vector.load %arg4[%c1_27, %c0_28, %c0_29] : memref<9x1x3xf32, #tpu.memory_space<vmem>>, vector<1x1x3xf32>
    %57 = vector.shape_cast %56 : vector<1x1x3xf32> to vector<1x3xf32>
    %58 = vector.extract_strided_slice %57 {offsets = [0, 0], sizes = [1, 1], strides = [1, 1]} : vector<1x3xf32> to vector<1x1xf32>
    %59 = vector.extract_strided_slice %55 {offsets = [0, 0], sizes = [1, 256], strides = [1, 1]} : vector<3x256xf32> to vector<1x256xf32>
    %60 = vector.broadcast %58 : vector<1x1xf32> to vector<1x256xf32>
    %61 = arith.mulf %60, %59 : vector<1x256xf32>
    %62 = arith.addf %54, %61 : vector<1x256xf32>
    %63 = vector.extract_strided_slice %57 {offsets = [0, 1], sizes = [1, 1], strides = [1, 1]} : vector<1x3xf32> to vector<1x1xf32>
    %64 = vector.extract_strided_slice %55 {offsets = [1, 0], sizes = [1, 256], strides = [1, 1]} : vector<3x256xf32> to vector<1x256xf32>
    %65 = vector.broadcast %63 : vector<1x1xf32> to vector<1x256xf32>
    %66 = arith.mulf %65, %64 : vector<1x256xf32>
    %67 = arith.addf %62, %66 : vector<1x256xf32>
    %68 = vector.extract_strided_slice %57 {offsets = [0, 2], sizes = [1, 1], strides = [1, 1]} : vector<1x3xf32> to vector<1x1xf32>
    %69 = vector.extract_strided_slice %55 {offsets = [2, 0], sizes = [1, 256], strides = [1, 1]} : vector<3x256xf32> to vector<1x256xf32>
    %70 = vector.broadcast %68 : vector<1x1xf32> to vector<1x256xf32>
    %71 = arith.mulf %70, %69 : vector<1x256xf32>
    %72 = arith.addf %67, %71 : vector<1x256xf32>
    %c0_30 = arith.constant 0 : index
    %c2_31 = arith.constant 2 : index
    %73 = vector.load %arg7[%c0_30, %c2_31] : memref<3x290xf32, #tpu.memory_space<vmem>>, vector<3x256xf32>
    %cst_32 = arith.constant 0.000000e+00 : f32
    %74 = vector.shape_cast %30 : vector<1x256xi1> to vector<1x256xi1>
    %75 = vector.broadcast %74 : vector<1x256xi1> to vector<3x256xi1>
    %76 = vector.broadcast %cst_32 : f32 to vector<3x256xf32>
    %77 = arith.select %75, %73, %76 : vector<3x256xi1>, vector<3x256xf32>
    %c2_33 = arith.constant 2 : index
    %c0_34 = arith.constant 0 : index
    %c0_35 = arith.constant 0 : index
    %78 = vector.load %arg4[%c2_33, %c0_34, %c0_35] : memref<9x1x3xf32, #tpu.memory_space<vmem>>, vector<1x1x3xf32>
    %79 = vector.shape_cast %78 : vector<1x1x3xf32> to vector<1x3xf32>
    %80 = vector.extract_strided_slice %79 {offsets = [0, 0], sizes = [1, 1], strides = [1, 1]} : vector<1x3xf32> to vector<1x1xf32>
    %81 = vector.extract_strided_slice %77 {offsets = [0, 0], sizes = [1, 256], strides = [1, 1]} : vector<3x256xf32> to vector<1x256xf32>
    %82 = vector.broadcast %80 : vector<1x1xf32> to vector<1x256xf32>
    %83 = arith.mulf %82, %81 : vector<1x256xf32>
    %84 = arith.addf %72, %83 : vector<1x256xf32>
    %85 = vector.extract_strided_slice %79 {offsets = [0, 1], sizes = [1, 1], strides = [1, 1]} : vector<1x3xf32> to vector<1x1xf32>
    %86 = vector.extract_strided_slice %77 {offsets = [1, 0], sizes = [1, 256], strides = [1, 1]} : vector<3x256xf32> to vector<1x256xf32>
    %87 = vector.broadcast %85 : vector<1x1xf32> to vector<1x256xf32>
    %88 = arith.mulf %87, %86 : vector<1x256xf32>
    %89 = arith.addf %84, %88 : vector<1x256xf32>
    %90 = vector.extract_strided_slice %79 {offsets = [0, 2], sizes = [1, 1], strides = [1, 1]} : vector<1x3xf32> to vector<1x1xf32>
    %91 = vector.extract_strided_slice %77 {offsets = [2, 0], sizes = [1, 256], strides = [1, 1]} : vector<3x256xf32> to vector<1x256xf32>
    %92 = vector.broadcast %90 : vector<1x1xf32> to vector<1x256xf32>
    %93 = arith.mulf %92, %91 : vector<1x256xf32>
    %94 = arith.addf %89, %93 : vector<1x256xf32>
    %c0_36 = arith.constant 0 : index
    %c16 = arith.constant 16 : index
    %95 = vector.load %arg7[%c0_36, %c16] : memref<3x290xf32, #tpu.memory_space<vmem>>, vector<3x256xf32>
    %cst_37 = arith.constant 0.000000e+00 : f32
    %96 = vector.shape_cast %28 : vector<1x256xi1> to vector<1x256xi1>
    %97 = vector.broadcast %96 : vector<1x256xi1> to vector<3x256xi1>
    %98 = vector.broadcast %cst_37 : f32 to vector<3x256xf32>
    %99 = arith.select %97, %95, %98 : vector<3x256xi1>, vector<3x256xf32>
    %c3 = arith.constant 3 : index
    %c0_38 = arith.constant 0 : index
    %c0_39 = arith.constant 0 : index
    %100 = vector.load %arg4[%c3, %c0_38, %c0_39] : memref<9x1x3xf32, #tpu.memory_space<vmem>>, vector<1x1x3xf32>
    %101 = vector.shape_cast %100 : vector<1x1x3xf32> to vector<1x3xf32>
    %102 = vector.extract_strided_slice %101 {offsets = [0, 0], sizes = [1, 1], strides = [1, 1]} : vector<1x3xf32> to vector<1x1xf32>
    %103 = vector.extract_strided_slice %99 {offsets = [0, 0], sizes = [1, 256], strides = [1, 1]} : vector<3x256xf32> to vector<1x256xf32>
    %104 = vector.broadcast %102 : vector<1x1xf32> to vector<1x256xf32>
    %105 = arith.mulf %104, %103 : vector<1x256xf32>
    %106 = arith.addf %94, %105 : vector<1x256xf32>
    %107 = vector.extract_strided_slice %101 {offsets = [0, 1], sizes = [1, 1], strides = [1, 1]} : vector<1x3xf32> to vector<1x1xf32>
    %108 = vector.extract_strided_slice %99 {offsets = [1, 0], sizes = [1, 256], strides = [1, 1]} : vector<3x256xf32> to vector<1x256xf32>
    %109 = vector.broadcast %107 : vector<1x1xf32> to vector<1x256xf32>
    %110 = arith.mulf %109, %108 : vector<1x256xf32>
    %111 = arith.addf %106, %110 : vector<1x256xf32>
    %112 = vector.extract_strided_slice %101 {offsets = [0, 2], sizes = [1, 1], strides = [1, 1]} : vector<1x3xf32> to vector<1x1xf32>
    %113 = vector.extract_strided_slice %99 {offsets = [2, 0], sizes = [1, 256], strides = [1, 1]} : vector<3x256xf32> to vector<1x256xf32>
    %114 = vector.broadcast %112 : vector<1x1xf32> to vector<1x256xf32>
    %115 = arith.mulf %114, %113 : vector<1x256xf32>
    %116 = arith.addf %111, %115 : vector<1x256xf32>
    %c0_40 = arith.constant 0 : index
    %c17_41 = arith.constant 17 : index
    %117 = vector.load %arg7[%c0_40, %c17_41] : memref<3x290xf32, #tpu.memory_space<vmem>>, vector<3x256xf32>
    %c4 = arith.constant 4 : index
    %c0_42 = arith.constant 0 : index
    %c0_43 = arith.constant 0 : index
    %118 = vector.load %arg4[%c4, %c0_42, %c0_43] : memref<9x1x3xf32, #tpu.memory_space<vmem>>, vector<1x1x3xf32>
    %119 = vector.shape_cast %118 : vector<1x1x3xf32> to vector<1x3xf32>
    %120 = vector.extract_strided_slice %119 {offsets = [0, 0], sizes = [1, 1], strides = [1, 1]} : vector<1x3xf32> to vector<1x1xf32>
    %121 = vector.extract_strided_slice %117 {offsets = [0, 0], sizes = [1, 256], strides = [1, 1]} : vector<3x256xf32> to vector<1x256xf32>
    %122 = vector.broadcast %120 : vector<1x1xf32> to vector<1x256xf32>
    %123 = arith.mulf %122, %121 : vector<1x256xf32>
    %124 = arith.addf %116, %123 : vector<1x256xf32>
    %125 = vector.extract_strided_slice %119 {offsets = [0, 1], sizes = [1, 1], strides = [1, 1]} : vector<1x3xf32> to vector<1x1xf32>
    %126 = vector.extract_strided_slice %117 {offsets = [1, 0], sizes = [1, 256], strides = [1, 1]} : vector<3x256xf32> to vector<1x256xf32>
    %127 = vector.broadcast %125 : vector<1x1xf32> to vector<1x256xf32>
    %128 = arith.mulf %127, %126 : vector<1x256xf32>
    %129 = arith.addf %124, %128 : vector<1x256xf32>
    %130 = vector.extract_strided_slice %119 {offsets = [0, 2], sizes = [1, 1], strides = [1, 1]} : vector<1x3xf32> to vector<1x1xf32>
    %131 = vector.extract_strided_slice %117 {offsets = [2, 0], sizes = [1, 256], strides = [1, 1]} : vector<3x256xf32> to vector<1x256xf32>
    %132 = vector.broadcast %130 : vector<1x1xf32> to vector<1x256xf32>
    %133 = arith.mulf %132, %131 : vector<1x256xf32>
    %134 = arith.addf %129, %133 : vector<1x256xf32>
    %c0_44 = arith.constant 0 : index
    %c18 = arith.constant 18 : index
    %135 = vector.load %arg7[%c0_44, %c18] : memref<3x290xf32, #tpu.memory_space<vmem>>, vector<3x256xf32>
    %cst_45 = arith.constant 0.000000e+00 : f32
    %136 = vector.shape_cast %30 : vector<1x256xi1> to vector<1x256xi1>
    %137 = vector.broadcast %136 : vector<1x256xi1> to vector<3x256xi1>
    %138 = vector.broadcast %cst_45 : f32 to vector<3x256xf32>
    %139 = arith.select %137, %135, %138 : vector<3x256xi1>, vector<3x256xf32>
    %c5 = arith.constant 5 : index
    %c0_46 = arith.constant 0 : index
    %c0_47 = arith.constant 0 : index
    %140 = vector.load %arg4[%c5, %c0_46, %c0_47] : memref<9x1x3xf32, #tpu.memory_space<vmem>>, vector<1x1x3xf32>
    %141 = vector.shape_cast %140 : vector<1x1x3xf32> to vector<1x3xf32>
    %142 = vector.extract_strided_slice %141 {offsets = [0, 0], sizes = [1, 1], strides = [1, 1]} : vector<1x3xf32> to vector<1x1xf32>
    %143 = vector.extract_strided_slice %139 {offsets = [0, 0], sizes = [1, 256], strides = [1, 1]} : vector<3x256xf32> to vector<1x256xf32>
    %144 = vector.broadcast %142 : vector<1x1xf32> to vector<1x256xf32>
    %145 = arith.mulf %144, %143 : vector<1x256xf32>
    %146 = arith.addf %134, %145 : vector<1x256xf32>
    %147 = vector.extract_strided_slice %141 {offsets = [0, 1], sizes = [1, 1], strides = [1, 1]} : vector<1x3xf32> to vector<1x1xf32>
    %148 = vector.extract_strided_slice %139 {offsets = [1, 0], sizes = [1, 256], strides = [1, 1]} : vector<3x256xf32> to vector<1x256xf32>
    %149 = vector.broadcast %147 : vector<1x1xf32> to vector<1x256xf32>
    %150 = arith.mulf %149, %148 : vector<1x256xf32>
    %151 = arith.addf %146, %150 : vector<1x256xf32>
    %152 = vector.extract_strided_slice %141 {offsets = [0, 2], sizes = [1, 1], strides = [1, 1]} : vector<1x3xf32> to vector<1x1xf32>
    %153 = vector.extract_strided_slice %139 {offsets = [2, 0], sizes = [1, 256], strides = [1, 1]} : vector<3x256xf32> to vector<1x256xf32>
    %154 = vector.broadcast %152 : vector<1x1xf32> to vector<1x256xf32>
    %155 = arith.mulf %154, %153 : vector<1x256xf32>
    %156 = arith.addf %151, %155 : vector<1x256xf32>
    %c0_48 = arith.constant 0 : index
    %c32 = arith.constant 32 : index
    %157 = vector.load %arg7[%c0_48, %c32] : memref<3x290xf32, #tpu.memory_space<vmem>>, vector<3x256xf32>
    %cst_49 = arith.constant 0.000000e+00 : f32
    %158 = vector.shape_cast %28 : vector<1x256xi1> to vector<1x256xi1>
    %159 = vector.broadcast %158 : vector<1x256xi1> to vector<3x256xi1>
    %160 = vector.broadcast %cst_49 : f32 to vector<3x256xf32>
    %161 = arith.select %159, %157, %160 : vector<3x256xi1>, vector<3x256xf32>
    %c6 = arith.constant 6 : index
    %c0_50 = arith.constant 0 : index
    %c0_51 = arith.constant 0 : index
    %162 = vector.load %arg4[%c6, %c0_50, %c0_51] : memref<9x1x3xf32, #tpu.memory_space<vmem>>, vector<1x1x3xf32>
    %163 = vector.shape_cast %162 : vector<1x1x3xf32> to vector<1x3xf32>
    %164 = vector.extract_strided_slice %163 {offsets = [0, 0], sizes = [1, 1], strides = [1, 1]} : vector<1x3xf32> to vector<1x1xf32>
    %165 = vector.extract_strided_slice %161 {offsets = [0, 0], sizes = [1, 256], strides = [1, 1]} : vector<3x256xf32> to vector<1x256xf32>
    %166 = vector.broadcast %164 : vector<1x1xf32> to vector<1x256xf32>
    %167 = arith.mulf %166, %165 : vector<1x256xf32>
    %168 = arith.addf %156, %167 : vector<1x256xf32>
    %169 = vector.extract_strided_slice %163 {offsets = [0, 1], sizes = [1, 1], strides = [1, 1]} : vector<1x3xf32> to vector<1x1xf32>
    %170 = vector.extract_strided_slice %161 {offsets = [1, 0], sizes = [1, 256], strides = [1, 1]} : vector<3x256xf32> to vector<1x256xf32>
    %171 = vector.broadcast %169 : vector<1x1xf32> to vector<1x256xf32>
    %172 = arith.mulf %171, %170 : vector<1x256xf32>
    %173 = arith.addf %168, %172 : vector<1x256xf32>
    %174 = vector.extract_strided_slice %163 {offsets = [0, 2], sizes = [1, 1], strides = [1, 1]} : vector<1x3xf32> to vector<1x1xf32>
    %175 = vector.extract_strided_slice %161 {offsets = [2, 0], sizes = [1, 256], strides = [1, 1]} : vector<3x256xf32> to vector<1x256xf32>
    %176 = vector.broadcast %174 : vector<1x1xf32> to vector<1x256xf32>
    %177 = arith.mulf %176, %175 : vector<1x256xf32>
    %178 = arith.addf %173, %177 : vector<1x256xf32>
    %c0_52 = arith.constant 0 : index
    %c33 = arith.constant 33 : index
    %179 = vector.load %arg7[%c0_52, %c33] : memref<3x290xf32, #tpu.memory_space<vmem>>, vector<3x256xf32>
    %c7 = arith.constant 7 : index
    %c0_53 = arith.constant 0 : index
    %c0_54 = arith.constant 0 : index
    %180 = vector.load %arg4[%c7, %c0_53, %c0_54] : memref<9x1x3xf32, #tpu.memory_space<vmem>>, vector<1x1x3xf32>
    %181 = vector.shape_cast %180 : vector<1x1x3xf32> to vector<1x3xf32>
    %182 = vector.extract_strided_slice %181 {offsets = [0, 0], sizes = [1, 1], strides = [1, 1]} : vector<1x3xf32> to vector<1x1xf32>
    %183 = vector.extract_strided_slice %179 {offsets = [0, 0], sizes = [1, 256], strides = [1, 1]} : vector<3x256xf32> to vector<1x256xf32>
    %184 = vector.broadcast %182 : vector<1x1xf32> to vector<1x256xf32>
    %185 = arith.mulf %184, %183 : vector<1x256xf32>
    %186 = arith.addf %178, %185 : vector<1x256xf32>
    %187 = vector.extract_strided_slice %181 {offsets = [0, 1], sizes = [1, 1], strides = [1, 1]} : vector<1x3xf32> to vector<1x1xf32>
    %188 = vector.extract_strided_slice %179 {offsets = [1, 0], sizes = [1, 256], strides = [1, 1]} : vector<3x256xf32> to vector<1x256xf32>
    %189 = vector.broadcast %187 : vector<1x1xf32> to vector<1x256xf32>
    %190 = arith.mulf %189, %188 : vector<1x256xf32>
    %191 = arith.addf %186, %190 : vector<1x256xf32>
    %192 = vector.extract_strided_slice %181 {offsets = [0, 2], sizes = [1, 1], strides = [1, 1]} : vector<1x3xf32> to vector<1x1xf32>
    %193 = vector.extract_strided_slice %179 {offsets = [2, 0], sizes = [1, 256], strides = [1, 1]} : vector<3x256xf32> to vector<1x256xf32>
    %194 = vector.broadcast %192 : vector<1x1xf32> to vector<1x256xf32>
    %195 = arith.mulf %194, %193 : vector<1x256xf32>
    %196 = arith.addf %191, %195 : vector<1x256xf32>
    %c0_55 = arith.constant 0 : index
    %c34 = arith.constant 34 : index
    %197 = vector.load %arg7[%c0_55, %c34] : memref<3x290xf32, #tpu.memory_space<vmem>>, vector<3x256xf32>
    %cst_56 = arith.constant 0.000000e+00 : f32
    %198 = vector.shape_cast %30 : vector<1x256xi1> to vector<1x256xi1>
    %199 = vector.broadcast %198 : vector<1x256xi1> to vector<3x256xi1>
    %200 = vector.broadcast %cst_56 : f32 to vector<3x256xf32>
    %201 = arith.select %199, %197, %200 : vector<3x256xi1>, vector<3x256xf32>
    %c8 = arith.constant 8 : index
    %c0_57 = arith.constant 0 : index
    %c0_58 = arith.constant 0 : index
    %202 = vector.load %arg4[%c8, %c0_57, %c0_58] : memref<9x1x3xf32, #tpu.memory_space<vmem>>, vector<1x1x3xf32>
    %203 = vector.shape_cast %202 : vector<1x1x3xf32> to vector<1x3xf32>
    %204 = vector.extract_strided_slice %203 {offsets = [0, 0], sizes = [1, 1], strides = [1, 1]} : vector<1x3xf32> to vector<1x1xf32>
    %205 = vector.extract_strided_slice %201 {offsets = [0, 0], sizes = [1, 256], strides = [1, 1]} : vector<3x256xf32> to vector<1x256xf32>
    %206 = vector.broadcast %204 : vector<1x1xf32> to vector<1x256xf32>
    %207 = arith.mulf %206, %205 : vector<1x256xf32>
    %208 = arith.addf %196, %207 : vector<1x256xf32>
    %209 = vector.extract_strided_slice %203 {offsets = [0, 1], sizes = [1, 1], strides = [1, 1]} : vector<1x3xf32> to vector<1x1xf32>
    %210 = vector.extract_strided_slice %201 {offsets = [1, 0], sizes = [1, 256], strides = [1, 1]} : vector<3x256xf32> to vector<1x256xf32>
    %211 = vector.broadcast %209 : vector<1x1xf32> to vector<1x256xf32>
    %212 = arith.mulf %211, %210 : vector<1x256xf32>
    %213 = arith.addf %208, %212 : vector<1x256xf32>
    %214 = vector.extract_strided_slice %203 {offsets = [0, 2], sizes = [1, 1], strides = [1, 1]} : vector<1x3xf32> to vector<1x1xf32>
    %215 = vector.extract_strided_slice %201 {offsets = [2, 0], sizes = [1, 256], strides = [1, 1]} : vector<3x256xf32> to vector<1x256xf32>
    %216 = vector.broadcast %214 : vector<1x1xf32> to vector<1x256xf32>
    %217 = arith.mulf %216, %215 : vector<1x256xf32>
    %218 = arith.addf %213, %217 : vector<1x256xf32>
    %c0_59 = arith.constant 0 : index
    %c0_60 = arith.constant 0 : index
    %219 = vector.load %arg5[%c0_59, %c0_60] : memref<1x1xf32, #tpu.memory_space<vmem>>, vector<1x1xf32>
    %220 = vector.broadcast %219 : vector<1x1xf32> to vector<1x256xf32>
    %221 = arith.addf %218, %220 : vector<1x256xf32>
    %cst_61 = arith.constant 0.000000e+00 : f32
    %222 = vector.broadcast %cst_61 : f32 to vector<1x256xf32>
    %223 = arith.maximumf %221, %222 : vector<1x256xf32>
    %c0_62 = arith.constant 0 : index
    %c0_63 = arith.constant 0 : index
    %c0_64 = arith.constant 0 : index
    %224 = vector.load %arg6[%c0_62, %c0_63, %c0_64] : memref<1x1x256xf32, #tpu.memory_space<vmem>>, vector<1x1x256xf32>
    %225 = vector.shape_cast %224 : vector<1x1x256xf32> to vector<1x256xf32>
    %226 = vector.shape_cast %223 : vector<1x256xf32> to vector<1x1x256xf32>
    tpu.vector_store %arg6[%c0_62, %c0_63, %c0_64], %226 {strides = array<i32>} : memref<1x1x256xf32, #tpu.memory_space<vmem>>, vector<1x1x256xf32>,
    return
  }
  func.func @transform_0(%arg0: i32) -> (i32, i32, i32) {
    %c0_i32 = arith.constant 0 : i32
    %c0_i32_0 = arith.constant 0 : i32
    %c0_i32_1 = arith.constant 0 : i32
    return %arg0, %c0_i32, %c0_i32_0 : i32, i32, i32
  }
  func.func @transform_1(%arg0: i32) -> (i32, i32, i32) {
    %c0_i32 = arith.constant 0 : i32
    %c0_i32_0 = arith.constant 0 : i32
    %c0_i32_1 = arith.constant 0 : i32
    return %arg0, %c0_i32, %c0_i32_0 : i32, i32, i32
  }
  func.func @transform_2(%arg0: i32) -> (i32, i32, i32) {
    %c0_i32 = arith.constant 0 : i32
    %c0_i32_0 = arith.constant 0 : i32
    %c0_i32_1 = arith.constant 0 : i32
    return %arg0, %c0_i32, %c0_i32_0 : i32, i32, i32
  }
  func.func @transform_3(%arg0: i32) -> (i32, i32, i32) {
    %c0_i32 = arith.constant 0 : i32
    %c0_i32_0 = arith.constant 0 : i32
    %c0_i32_1 = arith.constant 0 : i32
    %c0_i32_2 = arith.constant 0 : i32
    return %c0_i32, %c0_i32_0, %c0_i32_1 : i32, i32, i32
  }
  func.func @transform_4(%arg0: i32) -> (i32, i32) {
    %c0_i32 = arith.constant 0 : i32
    %c0_i32_0 = arith.constant 0 : i32
    %c0_i32_1 = arith.constant 0 : i32
    return %c0_i32, %c0_i32_0 : i32, i32
  }
  func.func @transform_5(%arg0: i32) -> (i32, i32, i32) {
    %c0_i32 = arith.constant 0 : i32
    %c0_i32_0 = arith.constant 0 : i32
    %c0_i32_1 = arith.constant 0 : i32
    return %arg0, %c0_i32, %c0_i32_0 : i32, i32, i32
  }
}

</mosaic_0001>

<llo_original>
// kernel: reverse.0
$region0: #{reverse.0}
  %s0 = inlined_call_operand.vmem [shape: f32[2,1,16,7], index: 0, kind: input, shape index: {}]
  %s1 = inlined_call_operand.vmem [shape: f32[2,1,16,7], index: 1, kind: output, shape index: {}]
  $region1: #{reverse.0} parent=0
    #allocation0 [shape = 'u8[16384]{0}', space=vmem, size = 0x4000, scoped, tag = 'operand span for operand 0']
    #allocation1 [shape = 'u8[8192]{0}', space=vmem, size = 0x2000, scoped, tag = 'operand span for operand 1']
    %s2 = scalar_lea.vmem [#allocation0], 8
    // Predicated region
    $region2: #{reverse.0} parent=1 // pred_check
      _
    $region3: #{reverse.0} parent=1 // pred_check_branch
      %4 = sbr.rel (0) target = $region5
    $region4: #{reverse.0} parent=1 // pred_region
      // Predicated region
      $region6: #{reverse.0} parent=4 // pred_check
        _
      $region7: #{reverse.0} parent=4 // pred_check_branch
        %6 = sbr.rel (0) target = $region9
      $region8: #{reverse.0} parent=4 // pred_region
        // Predicated region
        $region21: #{reverse.0} parent=8 // pred_check
          _
        $region22: #{reverse.0} parent=8 // pred_check_branch
          %23 = sbr.rel (0) target = $region24
        $region23: #{reverse.0} parent=8 // pred_region
          loop: start=0, step=1, limit=1
          $region25: #{reverse.0} parent=23 // loop_pre_header
            _
          $region26: #{reverse.0} parent=23 // loop_header
            %s25 = sphi 0, %s29
            %p26 = scmp.ge.s32.totalorder %s25, 1
            %s30 = sphi %s0, %s0
            %s31 = sphi %s2, %s2
          $region27: #{reverse.0} parent=23 // loop_header_branch
            %28 = sbr.rel (%p26) target = $region31
          $region28: #{reverse.0} parent=23 // loop_body
            %v32 = vld [vmem:[%s30] sm:$0xff]
            %33 = vst [vmem:[%s31] sm:$0xff] %v32
            %v34 = vld [vmem:[%s30 + $0x8] sm:$0xff]
            %35 = vst [vmem:[%s31 + $0x10] sm:$0xff] %v34
          $region29: #{reverse.0} parent=23 // loop_footer
            %s29 = sadd.s32 1, %s25
          $region30: #{reverse.0} parent=23 // loop_footer_branch
            %24 = sbr.rel target = $region26
          $region31: #{reverse.0} parent=23 // loop_exit
            _
        $region24: #{reverse.0} parent=8 // pred_fallthru
          _
        // Predicated region
        $region32: #{reverse.0} parent=8 // pred_check
          _
        $region33: #{reverse.0} parent=8 // pred_check_branch
          %37 = sbr.rel target = $region35
        $region34: #{reverse.0} parent=8 // pred_region
          _
        $region35: #{reverse.0} parent=8 // pred_fallthru
          _
      $region9: #{reverse.0} parent=4 // pred_fallthru
        _
      // Predicated region
      $region10: #{reverse.0} parent=4 // pred_check
        _
      $region11: #{reverse.0} parent=4 // pred_check_branch
        %8 = sbr.rel target = $region13
      $region12: #{reverse.0} parent=4 // pred_region
        loop: start=0, step=1, limit=1
        $region14: #{reverse.0} parent=12 // loop_pre_header
          _
        $region15: #{reverse.0} parent=12 // loop_header
          %s11 = sphi 0, %s15
          %p12 = scmp.ge.s32.totalorder %s11, 1
          %s16 = sphi %s0, %s0
          %s17 = sphi %s2, %s2
        $region16: #{reverse.0} parent=12 // loop_header_branch
          %14 = sbr.rel (%p12) target = $region20
        $region17: #{reverse.0} parent=12 // loop_body
          %v18 = vld [vmem:[%s16] sm:$0xff]
          %19 = vst [vmem:[%s17] sm:$0xff] %v18
          %v20 = vld [vmem:[%s16 + $0x8] sm:$0xff]
          %21 = vst [vmem:[%s17 + $0x10] sm:$0xff] %v20
        $region18: #{reverse.0} parent=12 // loop_footer
          %s15 = sadd.s32 1, %s11
        $region19: #{reverse.0} parent=12 // loop_footer_branch
          %10 = sbr.rel target = $region15
        $region20: #{reverse.0} parent=12 // loop_exit
          _
      $region13: #{reverse.0} parent=4 // pred_fallthru
        _
    $region5: #{reverse.0} parent=1 // pred_fallthru
      _
    %38 = vnop
    %s39 = scalar_lea.vmem [#allocation0], 7
    %v40 = vld [vmem:[%s39] ss:$-1 sm:$0xff]
    %v41 = vrot.slane %v40, 1
    %42 = vst [vmem:[#allocation1] sm:$0xff] %v41
    %s43 = scalar_lea.vmem [#allocation0], 8
    %s44 = scalar_lea.vmem %s43, 7 [#allocation0]
    %v45 = vld [vmem:[%s44] ss:$-1 sm:$0xff]
    %v46 = vrot.slane %v45, 1
    %v47 = vlaneseq
    %v48 = vshrl.u32 %v47, 7
    %vm49 = vcmp.lt.s32.totalorder %v48, 7
    %50 = vst.msk [vmem:[#allocation1] sm:$0xff] %vm49, %v46
    %s51 = scalar_lea.vmem [#allocation1], 8
    %s52 = scalar_lea.vmem [#allocation0], 16
    %s53 = scalar_lea.vmem %s52, 7 [#allocation0]
    %v54 = vld [vmem:[%s53] ss:$-1 sm:$0xff]
    %v55 = vrot.slane %v54, 1
    %56 = vst [vmem:[%s51] sm:$0xff] %v55
    %s57 = scalar_lea.vmem %s52, 8 [#allocation0]
    %s58 = scalar_lea.vmem %s57, 7 [#allocation0]
    %v59 = vld [vmem:[%s58] ss:$-1 sm:$0xff]
    %v60 = vrot.slane %v59, 1
    %v61 = vlaneseq
    %v62 = vshrl.u32 %v61, 7
    %vm63 = vcmp.lt.s32.totalorder %v62, 7
    %64 = vst.msk [vmem:[%s51] sm:$0xff] %vm63, %v60
    // Predicated region
    $region36: #{reverse.0} parent=1 // pred_check
      _
    $region37: #{reverse.0} parent=1 // pred_check_branch
      %66 = sbr.rel (0) target = $region39
    $region38: #{reverse.0} parent=1 // pred_region
      // Predicated region
      $region40: #{reverse.0} parent=38 // pred_check
        _
      $region41: #{reverse.0} parent=38 // pred_check_branch
        %68 = sbr.rel (0) target = $region43
      $region42: #{reverse.0} parent=38 // pred_region
        // Predicated region
        $region55: #{reverse.0} parent=42 // pred_check
          _
        $region56: #{reverse.0} parent=42 // pred_check_branch
          %85 = sbr.rel (0) target = $region58
        $region57: #{reverse.0} parent=42 // pred_region
          loop: start=0, step=1, limit=1
          $region59: #{reverse.0} parent=57 // loop_pre_header
            _
          $region60: #{reverse.0} parent=57 // loop_header
            %s87 = sphi 0, %s91
            %p88 = scmp.ge.s32.totalorder %s87, 1
            %s92 = sphi [#allocation1], [#allocation1]
            %s93 = sphi %s1, %s1
          $region61: #{reverse.0} parent=57 // loop_header_branch
            %90 = sbr.rel (%p88) target = $region65
          $region62: #{reverse.0} parent=57 // loop_body
            %v94 = vld [vmem:[%s92] sm:$0xff]
            %95 = vst [vmem:[%s93] sm:$0xff] %v94
            %v96 = vld [vmem:[%s92 + $0x8] sm:$0xff]
            %97 = vst [vmem:[%s93 + $0x8] sm:$0xff] %v96
          $region63: #{reverse.0} parent=57 // loop_footer
            %s91 = sadd.s32 1, %s87
          $region64: #{reverse.0} parent=57 // loop_footer_branch
            %86 = sbr.rel target = $region60
          $region65: #{reverse.0} parent=57 // loop_exit
            _
        $region58: #{reverse.0} parent=42 // pred_fallthru
          _
        // Predicated region
        $region66: #{reverse.0} parent=42 // pred_check
          _
        $region67: #{reverse.0} parent=42 // pred_check_branch
          %99 = sbr.rel target = $region69
        $region68: #{reverse.0} parent=42 // pred_region
          _
        $region69: #{reverse.0} parent=42 // pred_fallthru
          _
      $region43: #{reverse.0} parent=38 // pred_fallthru
        _
      // Predicated region
      $region44: #{reverse.0} parent=38 // pred_check
        _
      $region45: #{reverse.0} parent=38 // pred_check_branch
        %70 = sbr.rel target = $region47
      $region46: #{reverse.0} parent=38 // pred_region
        loop: start=0, step=1, limit=1
        $region48: #{reverse.0} parent=46 // loop_pre_header
          _
        $region49: #{reverse.0} parent=46 // loop_header
          %s73 = sphi 0, %s77
          %p74 = scmp.ge.s32.totalorder %s73, 1
          %s78 = sphi [#allocation1], [#allocation1]
          %s79 = sphi %s1, %s1
        $region50: #{reverse.0} parent=46 // loop_header_branch
          %76 = sbr.rel (%p74) target = $region54
        $region51: #{reverse.0} parent=46 // loop_body
          %v80 = vld [vmem:[%s78] sm:$0xff]
          %81 = vst [vmem:[%s79] sm:$0xff] %v80
          %v82 = vld [vmem:[%s78 + $0x8] sm:$0xff]
          %83 = vst [vmem:[%s79 + $0x8] sm:$0xff] %v82
        $region52: #{reverse.0} parent=46 // loop_footer
          %s77 = sadd.s32 1, %s73
        $region53: #{reverse.0} parent=46 // loop_footer_branch
          %72 = sbr.rel target = $region49
        $region54: #{reverse.0} parent=46 // loop_exit
          _
      $region47: #{reverse.0} parent=38 // pred_fallthru
        _
    $region39: #{reverse.0} parent=1 // pred_fallthru
      _
    %100 = vnop

// kernel: fft_block_forward.3
$region0: #{fft_block_forward.3}
  #allocation0 [shape = 'u32[]', space=smem, size = 0x4, offset = 0x4, fixed_abs, tag = 'smem constant byte address 0x4 - core index']
  #allocation1 [shape = 'u32[144,128]{1,0:T(1,128)}', space=vmem, size = 0x12000, scoped, tag = 'internal scratch']
  #allocation2 [shape = 'f32[3,290]{1,0:T(4,128)}', space=vmem, size = 0x1800, scoped, tag = 'scratch operand']
  #allocation3 [shape = 'f32[1,1]{1,0:T(1,128)S(1)}', space=vmem, size = 0x200, scoped, tag = 'scoped memory for fft_block_forward.3']
  %s0 = inlined_call_operand.vmem [shape: f32[2,1,256], index: 0, kind: input, shape index: {}]
  %s1 = inlined_call_operand.vmem [shape: f32[2,1,256], index: 1, kind: input, shape index: {}]
  %s2 = inlined_call_operand.vmem [shape: f32[2,1,256], index: 2, kind: input, shape index: {}]
  %s3 = inlined_call_operand.vmem [shape: f32[9,1,3], index: 3, kind: input, shape index: {}]
  %s4 = inlined_call_operand.<no memory space> [shape: f32[1,1], index: 4, kind: input, shape index: {}]
  %s5 = inlined_call_operand.vmem [shape: f32[2,1,256], index: 5, kind: output, shape index: {}]
  %s6 = sld [smem:[#allocation0]]
  $region53: #{fft_block_forward.3} parent=0
    _
  %s8 = ssub.s32 1, %s6
  %s9 = scalar_select 0, %s8, %s6
  %v10 = vstv %s4
  %11 = vst [vmem:[#allocation3] sm:$0x1] %v10
  loop: start=0, step=1, limit=4
  $region2: #{fft_block_forward.3} parent=0 // loop_pre_header
    _
  $region3: #{fft_block_forward.3} parent=0 // loop_header
    %s13 = sphi 0, %s17
    %p14 = scmp.ge.s32.totalorder %s13, 4
    %s23 = sphi 0, %s25
    %s26 = sphi 0, %s23
    %s27 = sphi 0, %s26
    %s43 = sphi 0, %s27
    %s49 = sphi 0, %s51
    %s52 = sphi 0, %s49
    %s53 = sphi 0, %s52
    %s69 = sphi 0, %s53
    %s75 = sphi 0, %s77
    %s78 = sphi 0, %s75
    %s79 = sphi 0, %s78
    %s95 = sphi 0, %s79
    %s99 = sphi 0, %s99
    %s101 = sphi 0, %s99
    %s102 = sphi 0, %s101
    %s116 = sphi 0, %s102
    %s120 = sphi 0, %s120
    %s122 = sphi 0, %s120
    %s123 = sphi 0, %s122
    %s137 = sphi 0, %s123
    %s143 = sphi 0, %s145
    %s146 = sphi 0, %s143
    %s147 = sphi 0, %s146
    %s163 = sphi 0, %s147
  $region4: #{fft_block_forward.3} parent=0 // loop_header_branch
    %16 = sbr.rel (%p14) target = $region8
  $region5: #{fft_block_forward.3} parent=0 // loop_body
    %s18 = ssub.s32 %s13, 1
    %s19 = ssub.s32 %s13, 2
    %s20 = sadd.s32 %s13, 1
    %s21 = ssub.s32 %s13, %s20
    %p22 = scmp.eq.s32.totalorder %s21, 0
    %s24 = sadd.s32 %s23, 1
    %s25 = scalar_select %p22, %s23, %s24
    %p28 = pneg %p22
    %p29 = scmp.eq.s32.totalorder %s13, 1
    %p30 = por %p28, %p29
    %p31 = scmp.ne.s32.totalorder %s23, %s26
    %p32 = scmp.eq.s32.totalorder %s13, 0
    %p33 = por %p31, %p32
    %p34 = scmp.ne.s32.totalorder %s23, %s26
    %p35 = scmp.eq.s32.totalorder %s18, 1
    %p36 = por %p34, %p35
    %p37 = scmp.ne.s32.totalorder %s26, %s27
    %p38 = scmp.eq.s32.totalorder %s18, 0
    %p39 = por %p37, %p38
    %p40 = scmp.ne.s32.totalorder %s26, %s27
    %p41 = scmp.eq.s32.totalorder %s19, 1
    %p42 = por %p40, %p41
    %p44 = scmp.ne.s32.totalorder %s27, %s43
    %p45 = scmp.eq.s32.totalorder %s19, 0
    %p46 = por %p44, %p45
    %s47 = ssub.s32 %s13, %s20
    %p48 = scmp.eq.s32.totalorder %s47, 0
    %s50 = sadd.s32 %s49, 1
    %s51 = scalar_select %p48, %s49, %s50
    %p54 = pneg %p48
    %p55 = scmp.eq.s32.totalorder %s13, 1
    %p56 = por %p54, %p55
    %p57 = scmp.ne.s32.totalorder %s49, %s52
    %p58 = scmp.eq.s32.totalorder %s13, 0
    %p59 = por %p57, %p58
    %p60 = scmp.ne.s32.totalorder %s49, %s52
    %p61 = scmp.eq.s32.totalorder %s18, 1
    %p62 = por %p60, %p61
    %p63 = scmp.ne.s32.totalorder %s52, %s53
    %p64 = scmp.eq.s32.totalorder %s18, 0
    %p65 = por %p63, %p64
    %p66 = scmp.ne.s32.totalorder %s52, %s53
    %p67 = scmp.eq.s32.totalorder %s19, 1
    %p68 = por %p66, %p67
    %p70 = scmp.ne.s32.totalorder %s53, %s69
    %p71 = scmp.eq.s32.totalorder %s19, 0
    %p72 = por %p70, %p71
    %s73 = ssub.s32 %s13, %s20
    %p74 = scmp.eq.s32.totalorder %s73, 0
    %s76 = sadd.s32 %s75, 1
    %s77 = scalar_select %p74, %s75, %s76
    %p80 = pneg %p74
    %p81 = scmp.eq.s32.totalorder %s13, 1
    %p82 = por %p80, %p81
    %p83 = scmp.ne.s32.totalorder %s75, %s78
    %p84 = scmp.eq.s32.totalorder %s13, 0
    %p85 = por %p83, %p84
    %p86 = scmp.ne.s32.totalorder %s75, %s78
    %p87 = scmp.eq.s32.totalorder %s18, 1
    %p88 = por %p86, %p87
    %p89 = scmp.ne.s32.totalorder %s78, %s79
    %p90 = scmp.eq.s32.totalorder %s18, 0
    %p91 = por %p89, %p90
    %p92 = scmp.ne.s32.totalorder %s78, %s79
    %p93 = scmp.eq.s32.totalorder %s19, 1
    %p94 = por %p92, %p93
    %p96 = scmp.ne.s32.totalorder %s79, %s95
    %p97 = scmp.eq.s32.totalorder %s19, 0
    %p98 = por %p96, %p97
    %s100 = sadd.s32 %s99, 1
    %p103 = scmp.eq.s32.totalorder %s13, 1
    %p104 = scmp.ne.s32.totalorder %s99, %s101
    %p105 = scmp.eq.s32.totalorder %s13, 0
    %p106 = por %p104, %p105
    %p107 = scmp.ne.s32.totalorder %s99, %s101
    %p108 = scmp.eq.s32.totalorder %s18, 1
    %p109 = por %p107, %p108
    %p110 = scmp.ne.s32.totalorder %s101, %s102
    %p111 = scmp.eq.s32.totalorder %s18, 0
    %p112 = por %p110, %p111
    %p113 = scmp.ne.s32.totalorder %s101, %s102
    %p114 = scmp.eq.s32.totalorder %s19, 1
    %p115 = por %p113, %p114
    %p117 = scmp.ne.s32.totalorder %s102, %s116
    %p118 = scmp.eq.s32.totalorder %s19, 0
    %p119 = por %p117, %p118
    %s121 = sadd.s32 %s120, 1
    %p124 = scmp.eq.s32.totalorder %s13, 1
    %p125 = scmp.ne.s32.totalorder %s120, %s122
    %p126 = scmp.eq.s32.totalorder %s13, 0
    %p127 = por %p125, %p126
    %p128 = scmp.ne.s32.totalorder %s120, %s122
    %p129 = scmp.eq.s32.totalorder %s18, 1
    %p130 = por %p128, %p129
    %p131 = scmp.ne.s32.totalorder %s122, %s123
    %p132 = scmp.eq.s32.totalorder %s18, 0
    %p133 = por %p131, %p132
    %p134 = scmp.ne.s32.totalorder %s122, %s123
    %p135 = scmp.eq.s32.totalorder %s19, 1
    %p136 = por %p134, %p135
    %p138 = scmp.ne.s32.totalorder %s123, %s137
    %p139 = scmp.eq.s32.totalorder %s19, 0
    %p140 = por %p138, %p139
    %s141 = ssub.s32 %s13, %s20
    %p142 = scmp.eq.s32.totalorder %s141, 0
    %s144 = sadd.s32 %s143, 1
    %s145 = scalar_select %p142, %s143, %s144
    %p148 = pneg %p142
    %p149 = scmp.eq.s32.totalorder %s13, 1
    %p150 = por %p148, %p149
    %p151 = scmp.ne.s32.totalorder %s143, %s146
    %p152 = scmp.eq.s32.totalorder %s13, 0
    %p153 = por %p151, %p152
    %p154 = scmp.ne.s32.totalorder %s143, %s146
    %p155 = scmp.eq.s32.totalorder %s18, 1
    %p156 = por %p154, %p155
    %p157 = scmp.ne.s32.totalorder %s146, %s147
    %p158 = scmp.eq.s32.totalorder %s18, 0
    %p159 = por %p157, %p158
    %p160 = scmp.ne.s32.totalorder %s146, %s147
    %p161 = scmp.eq.s32.totalorder %s19, 1
    %p162 = por %p160, %p161
    %p164 = scmp.ne.s32.totalorder %s147, %s163
    %p165 = scmp.eq.s32.totalorder %s19, 0
    %p166 = por %p164, %p165
    %p167 = scmp.le.s32.totalorder 1, %s13
    %p168 = scmp.lt.s32.totalorder %s13, 3
    %p169 = pnand %p167, %p168
    %p170 = pneg %p169
    // Predicated region
    $region9: #{fft_block_forward.3} parent=5 // pred_check
      _
    $region10: #{fft_block_forward.3} parent=5 // pred_check_branch
      %172 = sbr.rel (%p169) target = $region12
    $region11: #{fft_block_forward.3} parent=5 // pred_region
      %s173 = ssub.s32 %s13, 1
      // Predicated region
      $region13: #{fft_block_forward.3} parent=11 // pred_check
        %p174 = pneg %p112
      $region14: #{fft_block_forward.3} parent=11 // pred_check_branch
        %176 = sbr.rel (%p174) target = $region16
      $region15: #{fft_block_forward.3} parent=11 // pred_region
        _
      $region16: #{fft_block_forward.3} parent=11 // pred_fallthru
        _
      // Predicated region
      $region17: #{fft_block_forward.3} parent=11 // pred_check
        %p177 = pneg %p133
      $region18: #{fft_block_forward.3} parent=11 // pred_check_branch
        %179 = sbr.rel (%p177) target = $region20
      $region19: #{fft_block_forward.3} parent=11 // pred_region
        _
      $region20: #{fft_block_forward.3} parent=11 // pred_fallthru
        _
    $region12: #{fft_block_forward.3} parent=5 // pred_fallthru
      _
    %p180 = scmp.lt.s32.totalorder %s13, 2
    // Predicated region
    $region21: #{fft_block_forward.3} parent=5 // pred_check
      %p181 = pneg %p180
    $region22: #{fft_block_forward.3} parent=5 // pred_check_branch
      %183 = sbr.rel (%p181) target = $region24
    $region23: #{fft_block_forward.3} parent=5 // pred_region
      // Predicated region
      $region25: #{fft_block_forward.3} parent=23 // pred_check
        %p184 = pneg %p33
      $region26: #{fft_block_forward.3} parent=23 // pred_check_branch
        %186 = sbr.rel (%p184) target = $region28
      $region27: #{fft_block_forward.3} parent=23 // pred_region
        %p187 = scmp.lt.s32.totalorder %s13, 1
        %s188 = scalar_select %p187, %s13, 1
        %s189 = smul.addr %s188, 2
        %s190 = scalar_lea.vmem %s0, %s189
      $region28: #{fft_block_forward.3} parent=23 // pred_fallthru
        _
      // Predicated region
      $region29: #{fft_block_forward.3} parent=23 // pred_check
        %p191 = pneg %p59
      $region30: #{fft_block_forward.3} parent=23 // pred_check_branch
        %193 = sbr.rel (%p191) target = $region32
      $region31: #{fft_block_forward.3} parent=23 // pred_region
        %p194 = scmp.lt.s32.totalorder %s13, 1
        %s195 = scalar_select %p194, %s13, 1
        %s196 = smul.addr %s195, 2
        %s197 = scalar_lea.vmem %s1, %s196
      $region32: #{fft_block_forward.3} parent=23 // pred_fallthru
        _
      // Predicated region
      $region33: #{fft_block_forward.3} parent=23 // pred_check
        %p198 = pneg %p85
      $region34: #{fft_block_forward.3} parent=23 // pred_check_branch
        %200 = sbr.rel (%p198) target = $region36
      $region35: #{fft_block_forward.3} parent=23 // pred_region
        %p201 = scmp.lt.s32.totalorder %s13, 1
        %s202 = scalar_select %p201, %s13, 1
        %s203 = smul.addr %s202, 2
        %s204 = scalar_lea.vmem %s2, %s203
      $region36: #{fft_block_forward.3} parent=23 // pred_fallthru
        _
    $region24: #{fft_block_forward.3} parent=5 // pred_fallthru
      _
    %p205 = scmp.le.s32.totalorder 1, %s13
    %p206 = scmp.lt.s32.totalorder %s13, 3
    %p207 = pnand %p205, %p206
    %p208 = pneg %p207
    // Predicated region
    $region37: #{fft_block_forward.3} parent=5 // pred_check
      _
    $region38: #{fft_block_forward.3} parent=5 // pred_check_branch
      %210 = sbr.rel (%p207) target = $region40
    $region39: #{fft_block_forward.3} parent=5 // pred_region
      %s211 = ssub.s32 %s13, 1
      %p212 = scmp.lt.s32.totalorder %s18, 1
      %s213 = scalar_select %p212, %s18, 1
      %s214 = smul.addr %s213, 2
      %s215 = scalar_lea.vmem %s0, %s214
      %p216 = pneg %p39
      %p217 = pneg %p36
      %p218 = scmp.lt.s32.totalorder %s18, 1
      %s219 = scalar_select %p218, %s18, 1
      %s220 = smul.addr %s219, 2
      %s221 = scalar_lea.vmem %s1, %s220
      %p222 = pneg %p65
      %p223 = pneg %p62
      %p224 = scmp.lt.s32.totalorder %s18, 1
      %s225 = scalar_select %p224, %s18, 1
      %s226 = smul.addr %s225, 2
      %s227 = scalar_lea.vmem %s2, %s226
      %p228 = pneg %p91
      %p229 = pneg %p88
      %p230 = pneg %p112
      %p231 = pneg %p109
      %p232 = pneg %p133
      %p233 = pneg %p130
      %p234 = pneg %p159
      %p235 = pneg %p156
      %p236 = scmp.lt.s32.totalorder %s18, 1
      %s237 = scalar_select %p236, %s18, 1
      %s238 = smul.addr %s237, 2
      %s239 = scalar_lea.vmem %s5, %s238
      %p240 = scmp.lt.s32.totalorder %s18, 1
      %s241 = scalar_select %p240, %s18, 1
      %s242 = smul.addr %s241, 2
      %s243 = scalar_lea.vmem %s0, %s242
      %p244 = scmp.lt.s32.totalorder %s18, 1
      %s245 = scalar_select %p244, %s18, 1
      %s246 = smul.addr %s245, 2
      %s247 = scalar_lea.vmem %s1, %s246
      %p248 = scmp.lt.s32.totalorder %s18, 1
      %s249 = scalar_select %p248, %s18, 1
      %s250 = smul.addr %s249, 2
      %s251 = scalar_lea.vmem %s2, %s250
      %p252 = scmp.lt.s32.totalorder %s18, 1
      %s253 = scalar_select %p252, %s18, 1
      %s254 = smul.addr %s253, 2
      %s255 = scalar_lea.vmem %s5, %s254
      %v256 = vld [vmem:[%s243] sm:$0x3]
      %v257 = vld [vmem:[%s247] sm:$0x3]
      %v258 = vld [vmem:[%s251] sm:$0x3]
      %vm259 = vcmask 133120
      %260 = vst.msk [vmem:[#allocation2] sm:$0x7] %vm259, 0.0
      %vm261 = vcmask 272520
      %262 = vst.msk [vmem:[#allocation2 + $0x8] sm:$0x7] %vm261, 0.0
      %v263 = vlaneseq
      %v264 = vand.u32 %v263, 127
      %v265 = vadd.s32 %v264, 128
      %vm266 = vcmp.lt.s32.totalorder %v264, 0
      %v267 = vsub.s32 0, %v264
      %v268 = vsel %vm266, %v267, %v264
      %v269 = vshrl.u32 %v268, 4
      %v270 = vand.u32 %v268, 15
      %v271 = vsub.s32 0, %v270
      %v272 = vsel %vm266, %v271, %v270
      %vm273 = vcmp.lt.s32.totalorder %v265, 0
      %v274 = vsub.s32 0, %v265
      %v275 = vsel %vm273, %v274, %v265
      %v276 = vshrl.u32 %v275, 4
      %v277 = vand.u32 %v275, 15
      %v278 = vsub.s32 0, %v277
      %v279 = vsel %vm273, %v278, %v277
      %vm280 = vcmp.ne.s32.totalorder %v272, 0
      %vm281 = vcmp.ne.s32.totalorder %v279, 0
      %vm282 = vcmp.lt.s32.totalorder %v272, 0
      %vm283 = vcmp.lt.s32.totalorder %v279, 0
      %vm284 = vmand %vm282, %vm280
      %vm285 = vmand %vm283, %vm281
      %v286 = vadd.s32 %v272, 16
      %v287 = vadd.s32 %v279, 16
      %v288 = vsel %vm284, %v286, %v272
      %v289 = vsel %vm285, %v287, %v279
      %vm290 = vcmp.ge.s32.totalorder %v288, 1
      %vm291 = vcmp.ge.s32.totalorder %v289, 1
      %vm292 = vcmp.le.s32.totalorder %v288, 14
      %vm293 = vcmp.le.s32.totalorder %v289, 14
      %295 = vrot.lane.b32.xlu0 %v256, 17
      %v296 = vpop.permute.xlu0 %295
      %v297 = vrot.slane %v296, 7
      %vm298 = vcmask 138240
      %v299 = vsel %vm298, %v297, %v296
      %v301 = vlaneseq
      %vm302 = vcmp.ge.s32.totalorder %v301, 17
      %vm303 = vcmp.lt.s32.totalorder %v301, 273
      %vm304 = vmand %vm302, %vm303
      %305 = vst.msk [vmem:[#allocation2] ss:$4 sm:$0x7] %vm304, %v299
      %307 = vrot.lane.b32.xlu0 %v257, 17
      %v308 = vpop.permute.xlu0 %307
      %v309 = vrot.slane %v308, 7
      %v310 = vsel %vm298, %v309, %v308
      %s312 = scalar_lea.vmem [#allocation2], 1
      %313 = vst.msk [vmem:[%s312] ss:$4 sm:$0x7] %vm304, %v310
      %315 = vrot.lane.b32.xlu0 %v258, 17
      %v316 = vpop.permute.xlu0 %315
      %v317 = vrot.slane %v316, 7
      %v318 = vsel %vm298, %v317, %v316
      %s320 = scalar_lea.vmem [#allocation2], 2
      %321 = vst.msk [vmem:[%s320] ss:$4 sm:$0x7] %vm304, %v318
      %v322 = vld [vmem:[#allocation2] sm:$0x77]
      %v323 = vsel %vm290, 1, 0
      %v324 = vsel %vm291, 1, 0
      %vm325 = vcmp.eq.s32.totalorder %v323, 1
      %vm326 = vcmp.eq.s32.totalorder %v324, 1
      %v328 = vcombine.high %v322, %v322
      %v330 = vsel %vm325, %v322, 0.0
      %v331 = vsel %vm326, %v328, 0.0
      %v332 = vld [vmem:[%s3] sm:$0x1]
      %334 = vset.pattern.permute.xlu0 0
      %335 = vperm.xlu0 %334, %v332
      %v336 = vpop.permute.xlu0 %335
      %v338 = vlaneseq
      %v339 = vshrl.u32 %v338, 7
      %v340 = vsub.s32 0, %v339
      %v341 = vrot.slane %v336, %v340
      %v342 = vmul.f32 %v341, %v330
      %v343 = vmul.f32 %v341, %v331
      %344 = vset.pattern.permute.xlu0 1
      %345 = vperm.xlu0 %344, %v332
      %v346 = vpop.permute.xlu0 %345
      %v348 = vlaneseq
      %v349 = vshrl.u32 %v348, 7
      %v350 = vsub.s32 0, %v349
      %v351 = vrot.slane %v346, %v350
      %v352 = vmul.f32 %v351, %v330
      %v353 = vmul.f32 %v351, %v331
      %v356 = vrot.slane %v352, 1
      %v357 = vrot.slane %v353, 1
      %v360 = vadd.f32 %v342, %v356
      %v361 = vadd.f32 %v343, %v357
      %362 = vset.pattern.permute.xlu0 2
      %363 = vperm.xlu0 %362, %v332
      %v364 = vpop.permute.xlu0 %363
      %v366 = vlaneseq
      %v367 = vshrl.u32 %v366, 7
      %v368 = vsub.s32 0, %v367
      %v369 = vrot.slane %v364, %v368
      %v370 = vmul.f32 %v369, %v330
      %v371 = vmul.f32 %v369, %v331
      %v374 = vrot.slane %v370, 2
      %v375 = vrot.slane %v371, 2
      %v378 = vadd.f32 %v360, %v374
      %v379 = vadd.f32 %v361, %v375
      %v380 = vld [vmem:[#allocation2] sm:$0x77]
      %v381 = vld [vmem:[#allocation2 + $0x8] sm:$0x7]
      %s382 = scalar_lea.vmem %s3, 1
      %v383 = vld [vmem:[%s382] sm:$0x1]
      %385 = vset.pattern.permute.xlu0 0
      %386 = vperm.xlu0 %385, %v383
      %v387 = vpop.permute.xlu0 %386
      %v389 = vlaneseq
      %v390 = vshrl.u32 %v389, 7
      %v391 = vsub.s32 0, %v390
      %v392 = vrot.slane %v387, %v391
      %v393 = vmul.f32 %v392, %v380
      %v394 = vmul.f32 %v392, %v381
      %v397 = vlaneseq
      %v398 = vshrl.u32 %v397, 7
      %v399 = vsub.s32 0, %v398
      %v400 = vrot.slane %v393, %v399
      %v401 = vlaneseq
      %v402 = vshrl.u32 %v401, 7
      %v403 = vsub.s32 4, %v402
      %v404 = vrot.slane %v393, %v403
      %v405 = vlaneseq
      %v406 = vshrl.u32 %v405, 7
      %v407 = vsub.s32 0, %v406
      %v408 = vrot.slane %v394, %v407
      %409 = vrot.lane.b32.xlu0 %v400, 127
      %v410 = vpop.permute.xlu0 %409
      %411 = vrot.lane.b32.xlu0 %v404, 127
      %v412 = vpop.permute.xlu0 %411
      %413 = vrot.lane.b32.xlu0 %v408, 127
      %v414 = vpop.permute.xlu0 %413
      %vm415 = vcmask 1039360
      %v416 = vsel %vm415, %v410, %v412
      %v417 = vsel %vm415, %v412, %v414
      %v420 = vadd.f32 %v378, %v416
      %v421 = vadd.f32 %v379, %v417
      %422 = vset.pattern.permute.xlu0 1
      %423 = vperm.xlu0 %422, %v383
      %v424 = vpop.permute.xlu0 %423
      %v426 = vlaneseq
      %v427 = vshrl.u32 %v426, 7
      %v428 = vsub.s32 0, %v427
      %v429 = vrot.slane %v424, %v428
      %v430 = vmul.f32 %v429, %v380
      %v431 = vmul.f32 %v429, %v381
      %v434 = vlaneseq
      %v435 = vshrl.u32 %v434, 7
      %v436 = vsub.s32 1, %v435
      %v437 = vrot.slane %v430, %v436
      %v438 = vlaneseq
      %v439 = vshrl.u32 %v438, 7
      %v440 = vsub.s32 5, %v439
      %v441 = vrot.slane %v430, %v440
      %v442 = vlaneseq
      %v443 = vshrl.u32 %v442, 7
      %v444 = vsub.s32 1, %v443
      %v445 = vrot.slane %v431, %v444
      %446 = vrot.lane.b32.xlu0 %v437, 127
      %v447 = vpop.permute.xlu0 %446
      %448 = vrot.lane.b32.xlu0 %v441, 127
      %v449 = vpop.permute.xlu0 %448
      %450 = vrot.lane.b32.xlu0 %v445, 127
      %v451 = vpop.permute.xlu0 %450
      %v452 = vsel %vm415, %v447, %v449
      %v453 = vsel %vm415, %v449, %v451
      %v456 = vadd.f32 %v420, %v452
      %v457 = vadd.f32 %v421, %v453
      %458 = vset.pattern.permute.xlu0 2
      %459 = vperm.xlu0 %458, %v383
      %v460 = vpop.permute.xlu0 %459
      %v462 = vlaneseq
      %v463 = vshrl.u32 %v462, 7
      %v464 = vsub.s32 0, %v463
      %v465 = vrot.slane %v460, %v464
      %v466 = vmul.f32 %v465, %v380
      %v467 = vmul.f32 %v465, %v381
      %v470 = vlaneseq
      %v471 = vshrl.u32 %v470, 7
      %v472 = vsub.s32 2, %v471
      %v473 = vrot.slane %v466, %v472
      %v474 = vlaneseq
      %v475 = vshrl.u32 %v474, 7
      %v476 = vsub.s32 6, %v475
      %v477 = vrot.slane %v466, %v476
      %v478 = vlaneseq
      %v479 = vshrl.u32 %v478, 7
      %v480 = vsub.s32 2, %v479
      %v481 = vrot.slane %v467, %v480
      %482 = vrot.lane.b32.xlu0 %v473, 127
      %v483 = vpop.permute.xlu0 %482
      %484 = vrot.lane.b32.xlu0 %v477, 127
      %v485 = vpop.permute.xlu0 %484
      %486 = vrot.lane.b32.xlu0 %v481, 127
      %v487 = vpop.permute.xlu0 %486
      %v488 = vsel %vm415, %v483, %v485
      %v489 = vsel %vm415, %v485, %v487
      %v492 = vadd.f32 %v456, %v488
      %v493 = vadd.f32 %v457, %v489
      %v494 = vsel %vm292, 1, 0
      %v495 = vsel %vm293, 1, 0
      %vm496 = vcmp.eq.s32.totalorder %v494, 1
      %vm497 = vcmp.eq.s32.totalorder %v495, 1
      %v500 = vcombine.high %v380, %v380
      %501 = vrot.lane.b32.xlu0 %v380, 126
      %v502 = vpop.permute.xlu0 %501
      %503 = vrot.lane.b32.xlu0 %v500, 126
      %v504 = vpop.permute.xlu0 %503
      %505 = vrot.lane.b32.xlu0 %v381, 126
      %v506 = vpop.permute.xlu0 %505
      %vm507 = vcmask 1031168
      %v508 = vsel %vm507, %v502, %v504
      %v509 = vsel %vm507, %v504, %v506
      %v512 = vsel %vm496, %v508, 0.0
      %v513 = vsel %vm497, %v509, 0.0
      %s514 = scalar_lea.vmem %s3, 2
      %v515 = vld [vmem:[%s514] sm:$0x1]
      %517 = vset.pattern.permute.xlu0 0
      %518 = vperm.xlu0 %517, %v515
      %v519 = vpop.permute.xlu0 %518
      %v521 = vlaneseq
      %v522 = vshrl.u32 %v521, 7
      %v523 = vsub.s32 0, %v522
      %v524 = vrot.slane %v519, %v523
      %v525 = vmul.f32 %v524, %v512
      %v526 = vmul.f32 %v524, %v513
      %v527 = vadd.f32 %v492, %v525
      %v528 = vadd.f32 %v493, %v526
      %529 = vset.pattern.permute.xlu0 1
      %530 = vperm.xlu0 %529, %v515
      %v531 = vpop.permute.xlu0 %530
      %v533 = vlaneseq
      %v534 = vshrl.u32 %v533, 7
      %v535 = vsub.s32 0, %v534
      %v536 = vrot.slane %v531, %v535
      %v537 = vmul.f32 %v536, %v512
      %v538 = vmul.f32 %v536, %v513
      %v541 = vrot.slane %v537, 1
      %v542 = vrot.slane %v538, 1
      %v545 = vadd.f32 %v527, %v541
      %v546 = vadd.f32 %v528, %v542
      %547 = vset.pattern.permute.xlu0 2
      %548 = vperm.xlu0 %547, %v515
      %v549 = vpop.permute.xlu0 %548
      %v551 = vlaneseq
      %v552 = vshrl.u32 %v551, 7
      %v553 = vsub.s32 0, %v552
      %v554 = vrot.slane %v549, %v553
      %v555 = vmul.f32 %v554, %v512
      %v556 = vmul.f32 %v554, %v513
      %v559 = vrot.slane %v555, 2
      %v560 = vrot.slane %v556, 2
      %v563 = vadd.f32 %v545, %v559
      %v564 = vadd.f32 %v546, %v560
      %v565 = vld [vmem:[#allocation2] sm:$0x77]
      %v566 = vld [vmem:[#allocation2 + $0x8] sm:$0x7]
      %v569 = vcombine.high %v565, %v565
      %570 = vrot.lane.b32.xlu0 %v565, 112
      %v571 = vpop.permute.xlu0 %570
      %572 = vrot.lane.b32.xlu0 %v569, 112
      %v573 = vpop.permute.xlu0 %572
      %574 = vrot.lane.b32.xlu0 %v566, 112
      %v575 = vpop.permute.xlu0 %574
      %vm576 = vcmask 916480
      %v577 = vsel %vm576, %v571, %v573
      %v578 = vsel %vm576, %v573, %v575
      %v581 = vsel %vm325, %v577, 0.0
      %v582 = vsel %vm326, %v578, 0.0
      %s583 = scalar_lea.vmem %s3, 3
      %v584 = vld [vmem:[%s583] sm:$0x1]
      %586 = vset.pattern.permute.xlu0 0
      %587 = vperm.xlu0 %586, %v584
      %v588 = vpop.permute.xlu0 %587
      %v590 = vlaneseq
      %v591 = vshrl.u32 %v590, 7
      %v592 = vsub.s32 0, %v591
      %v593 = vrot.slane %v588, %v592
      %v594 = vmul.f32 %v593, %v581
      %v595 = vmul.f32 %v593, %v582
      %v596 = vadd.f32 %v563, %v594
      %v597 = vadd.f32 %v564, %v595
      %598 = vset.pattern.permute.xlu0 1
      %599 = vperm.xlu0 %598, %v584
      %v600 = vpop.permute.xlu0 %599
      %v602 = vlaneseq
      %v603 = vshrl.u32 %v602, 7
      %v604 = vsub.s32 0, %v603
      %v605 = vrot.slane %v600, %v604
      %v606 = vmul.f32 %v605, %v581
      %v607 = vmul.f32 %v605, %v582
      %v610 = vrot.slane %v606, 1
      %v611 = vrot.slane %v607, 1
      %v614 = vadd.f32 %v596, %v610
      %v615 = vadd.f32 %v597, %v611
      %616 = vset.pattern.permute.xlu0 2
      %617 = vperm.xlu0 %616, %v584
      %v618 = vpop.permute.xlu0 %617
      %v620 = vlaneseq
      %v621 = vshrl.u32 %v620, 7
      %v622 = vsub.s32 0, %v621
      %v623 = vrot.slane %v618, %v622
      %v624 = vmul.f32 %v623, %v581
      %v625 = vmul.f32 %v623, %v582
      %v628 = vrot.slane %v624, 2
      %v629 = vrot.slane %v625, 2
      %v632 = vadd.f32 %v614, %v628
      %v633 = vadd.f32 %v615, %v629
      %v634 = vld [vmem:[#allocation2] sm:$0x77]
      %v635 = vld [vmem:[#allocation2 + $0x8] sm:$0x7]
      %s636 = scalar_lea.vmem %s3, 4
      %v637 = vld [vmem:[%s636] sm:$0x1]
      %639 = vset.pattern.permute.xlu0 0
      %640 = vperm.xlu0 %639, %v637
      %v641 = vpop.permute.xlu0 %640
      %v643 = vlaneseq
      %v644 = vshrl.u32 %v643, 7
      %v645 = vsub.s32 0, %v644
      %v646 = vrot.slane %v641, %v645
      %v647 = vmul.f32 %v646, %v634
      %v648 = vmul.f32 %v646, %v635
      %v651 = vlaneseq
      %v652 = vshrl.u32 %v651, 7
      %v653 = vsub.s32 0, %v652
      %v654 = vrot.slane %v647, %v653
      %v655 = vlaneseq
      %v656 = vshrl.u32 %v655, 7
      %v657 = vsub.s32 4, %v656
      %v658 = vrot.slane %v647, %v657
      %v659 = vlaneseq
      %v660 = vshrl.u32 %v659, 7
      %v661 = vsub.s32 0, %v660
      %v662 = vrot.slane %v648, %v661
      %663 = vrot.lane.b32.xlu0 %v654, 111
      %v664 = vpop.permute.xlu0 %663
      %665 = vrot.lane.b32.xlu0 %v658, 111
      %v666 = vpop.permute.xlu0 %665
      %667 = vrot.lane.b32.xlu0 %v662, 111
      %v668 = vpop.permute.xlu0 %667
      %vm669 = vcmask 908288
      %v670 = vsel %vm669, %v664, %v666
      %v671 = vsel %vm669, %v666, %v668
      %v674 = vadd.f32 %v632, %v670
      %v675 = vadd.f32 %v633, %v671
      %676 = vset.pattern.permute.xlu0 1
      %677 = vperm.xlu0 %676, %v637
      %v678 = vpop.permute.xlu0 %677
      %v680 = vlaneseq
      %v681 = vshrl.u32 %v680, 7
      %v682 = vsub.s32 0, %v681
      %v683 = vrot.slane %v678, %v682
      %v684 = vmul.f32 %v683, %v634
      %v685 = vmul.f32 %v683, %v635
      %v688 = vlaneseq
      %v689 = vshrl.u32 %v688, 7
      %v690 = vsub.s32 1, %v689
      %v691 = vrot.slane %v684, %v690
      %v692 = vlaneseq
      %v693 = vshrl.u32 %v692, 7
      %v694 = vsub.s32 5, %v693
      %v695 = vrot.slane %v684, %v694
      %v696 = vlaneseq
      %v697 = vshrl.u32 %v696, 7
      %v698 = vsub.s32 1, %v697
      %v699 = vrot.slane %v685, %v698
      %700 = vrot.lane.b32.xlu0 %v691, 111
      %v701 = vpop.permute.xlu0 %700
      %702 = vrot.lane.b32.xlu0 %v695, 111
      %v703 = vpop.permute.xlu0 %702
      %704 = vrot.lane.b32.xlu0 %v699, 111
      %v705 = vpop.permute.xlu0 %704
      %v706 = vsel %vm669, %v701, %v703
      %v707 = vsel %vm669, %v703, %v705
      %v710 = vadd.f32 %v674, %v706
      %v711 = vadd.f32 %v675, %v707
      %712 = vset.pattern.permute.xlu0 2
      %713 = vperm.xlu0 %712, %v637
      %v714 = vpop.permute.xlu0 %713
      %v716 = vlaneseq
      %v717 = vshrl.u32 %v716, 7
      %v718 = vsub.s32 0, %v717
      %v719 = vrot.slane %v714, %v718
      %v720 = vmul.f32 %v719, %v634
      %v721 = vmul.f32 %v719, %v635
      %v724 = vlaneseq
      %v725 = vshrl.u32 %v724, 7
      %v726 = vsub.s32 2, %v725
      %v727 = vrot.slane %v720, %v726
      %v728 = vlaneseq
      %v729 = vshrl.u32 %v728, 7
      %v730 = vsub.s32 6, %v729
      %v731 = vrot.slane %v720, %v730
      %v732 = vlaneseq
      %v733 = vshrl.u32 %v732, 7
      %v734 = vsub.s32 2, %v733
      %v735 = vrot.slane %v721, %v734
      %736 = vrot.lane.b32.xlu0 %v727, 111
      %v737 = vpop.permute.xlu0 %736
      %738 = vrot.lane.b32.xlu0 %v731, 111
      %v739 = vpop.permute.xlu0 %738
      %740 = vrot.lane.b32.xlu0 %v735, 111
      %v741 = vpop.permute.xlu0 %740
      %v742 = vsel %vm669, %v737, %v739
      %v743 = vsel %vm669, %v739, %v741
      %v746 = vadd.f32 %v710, %v742
      %v747 = vadd.f32 %v711, %v743
      %v750 = vcombine.high %v634, %v634
      %751 = vrot.lane.b32.xlu0 %v634, 110
      %v752 = vpop.permute.xlu0 %751
      %753 = vrot.lane.b32.xlu0 %v750, 110
      %v754 = vpop.permute.xlu0 %753
      %755 = vrot.lane.b32.xlu0 %v635, 110
      %v756 = vpop.permute.xlu0 %755
      %vm757 = vcmask 900096
      %v758 = vsel %vm757, %v752, %v754
      %v759 = vsel %vm757, %v754, %v756
      %v762 = vsel %vm496, %v758, 0.0
      %v763 = vsel %vm497, %v759, 0.0
      %s764 = scalar_lea.vmem %s3, 5
      %v765 = vld [vmem:[%s764] sm:$0x1]
      %767 = vset.pattern.permute.xlu0 0
      %768 = vperm.xlu0 %767, %v765
      %v769 = vpop.permute.xlu0 %768
      %v771 = vlaneseq
      %v772 = vshrl.u32 %v771, 7
      %v773 = vsub.s32 0, %v772
      %v774 = vrot.slane %v769, %v773
      %v775 = vmul.f32 %v774, %v762
      %v776 = vmul.f32 %v774, %v763
      %v777 = vadd.f32 %v746, %v775
      %v778 = vadd.f32 %v747, %v776
      %779 = vset.pattern.permute.xlu0 1
      %780 = vperm.xlu0 %779, %v765
      %v781 = vpop.permute.xlu0 %780
      %v783 = vlaneseq
      %v784 = vshrl.u32 %v783, 7
      %v785 = vsub.s32 0, %v784
      %v786 = vrot.slane %v781, %v785
      %v787 = vmul.f32 %v786, %v762
      %v788 = vmul.f32 %v786, %v763
      %v791 = vrot.slane %v787, 1
      %v792 = vrot.slane %v788, 1
      %v795 = vadd.f32 %v777, %v791
      %v796 = vadd.f32 %v778, %v792
      %797 = vset.pattern.permute.xlu0 2
      %798 = vperm.xlu0 %797, %v765
      %v799 = vpop.permute.xlu0 %798
      %v801 = vlaneseq
      %v802 = vshrl.u32 %v801, 7
      %v803 = vsub.s32 0, %v802
      %v804 = vrot.slane %v799, %v803
      %v805 = vmul.f32 %v804, %v762
      %v806 = vmul.f32 %v804, %v763
      %v809 = vrot.slane %v805, 2
      %v810 = vrot.slane %v806, 2
      %v813 = vadd.f32 %v795, %v809
      %v814 = vadd.f32 %v796, %v810
      %v815 = vld [vmem:[#allocation2] sm:$0x77]
      %v816 = vld [vmem:[#allocation2 + $0x8] sm:$0x7]
      %v819 = vcombine.high %v815, %v815
      %820 = vrot.lane.b32.xlu0 %v815, 96
      %v821 = vpop.permute.xlu0 %820
      %822 = vrot.lane.b32.xlu0 %v819, 96
      %v823 = vpop.permute.xlu0 %822
      %824 = vrot.lane.b32.xlu0 %v816, 96
      %v825 = vpop.permute.xlu0 %824
      %vm826 = vcmask 785408
      %v827 = vsel %vm826, %v821, %v823
      %v828 = vsel %vm826, %v823, %v825
      %v831 = vsel %vm325, %v827, 0.0
      %v832 = vsel %vm326, %v828, 0.0
      %s833 = scalar_lea.vmem %s3, 6
      %v834 = vld [vmem:[%s833] sm:$0x1]
      %836 = vset.pattern.permute.xlu0 0
      %837 = vperm.xlu0 %836, %v834
      %v838 = vpop.permute.xlu0 %837
      %v840 = vlaneseq
      %v841 = vshrl.u32 %v840, 7
      %v842 = vsub.s32 0, %v841
      %v843 = vrot.slane %v838, %v842
      %v844 = vmul.f32 %v843, %v831
      %v845 = vmul.f32 %v843, %v832
      %v846 = vadd.f32 %v813, %v844
      %v847 = vadd.f32 %v814, %v845
      %848 = vset.pattern.permute.xlu0 1
      %849 = vperm.xlu0 %848, %v834
      %v850 = vpop.permute.xlu0 %849
      %v852 = vlaneseq
      %v853 = vshrl.u32 %v852, 7
      %v854 = vsub.s32 0, %v853
      %v855 = vrot.slane %v850, %v854
      %v856 = vmul.f32 %v855, %v831
      %v857 = vmul.f32 %v855, %v832
      %v860 = vrot.slane %v856, 1
      %v861 = vrot.slane %v857, 1
      %v864 = vadd.f32 %v846, %v860
      %v865 = vadd.f32 %v847, %v861
      %866 = vset.pattern.permute.xlu0 2
      %867 = vperm.xlu0 %866, %v834
      %v868 = vpop.permute.xlu0 %867
      %v870 = vlaneseq
      %v871 = vshrl.u32 %v870, 7
      %v872 = vsub.s32 0, %v871
      %v873 = vrot.slane %v868, %v872
      %v874 = vmul.f32 %v873, %v831
      %v875 = vmul.f32 %v873, %v832
      %v878 = vrot.slane %v874, 2
      %v879 = vrot.slane %v875, 2
      %v882 = vadd.f32 %v864, %v878
      %v883 = vadd.f32 %v865, %v879
      %v884 = vld [vmem:[#allocation2] sm:$0x77]
      %v885 = vld [vmem:[#allocation2 + $0x8] sm:$0x7]
      %s886 = scalar_lea.vmem %s3, 7
      %v887 = vld [vmem:[%s886] sm:$0x1]
      %889 = vset.pattern.permute.xlu0 0
      %890 = vperm.xlu0 %889, %v887
      %v891 = vpop.permute.xlu0 %890
      %v893 = vlaneseq
      %v894 = vshrl.u32 %v893, 7
      %v895 = vsub.s32 0, %v894
      %v896 = vrot.slane %v891, %v895
      %v897 = vmul.f32 %v896, %v884
      %v898 = vmul.f32 %v896, %v885
      %v901 = vlaneseq
      %v902 = vshrl.u32 %v901, 7
      %v903 = vsub.s32 0, %v902
      %v904 = vrot.slane %v897, %v903
      %v905 = vlaneseq
      %v906 = vshrl.u32 %v905, 7
      %v907 = vsub.s32 4, %v906
      %v908 = vrot.slane %v897, %v907
      %v909 = vlaneseq
      %v910 = vshrl.u32 %v909, 7
      %v911 = vsub.s32 0, %v910
      %v912 = vrot.slane %v898, %v911
      %913 = vrot.lane.b32.xlu0 %v904, 95
      %v914 = vpop.permute.xlu0 %913
      %915 = vrot.lane.b32.xlu0 %v908, 95
      %v916 = vpop.permute.xlu0 %915
      %917 = vrot.lane.b32.xlu0 %v912, 95
      %v918 = vpop.permute.xlu0 %917
      %vm919 = vcmask 777216
      %v920 = vsel %vm919, %v914, %v916
      %v921 = vsel %vm919, %v916, %v918
      %v924 = vadd.f32 %v882, %v920
      %v925 = vadd.f32 %v883, %v921
      %926 = vset.pattern.permute.xlu0 1
      %927 = vperm.xlu0 %926, %v887
      %v928 = vpop.permute.xlu0 %927
      %v930 = vlaneseq
      %v931 = vshrl.u32 %v930, 7
      %v932 = vsub.s32 0, %v931
      %v933 = vrot.slane %v928, %v932
      %v934 = vmul.f32 %v933, %v884
      %v935 = vmul.f32 %v933, %v885
      %v938 = vlaneseq
      %v939 = vshrl.u32 %v938, 7
      %v940 = vsub.s32 1, %v939
      %v941 = vrot.slane %v934, %v940
      %v942 = vlaneseq
      %v943 = vshrl.u32 %v942, 7
      %v944 = vsub.s32 5, %v943
      %v945 = vrot.slane %v934, %v944
      %v946 = vlaneseq
      %v947 = vshrl.u32 %v946, 7
      %v948 = vsub.s32 1, %v947
      %v949 = vrot.slane %v935, %v948
      %950 = vrot.lane.b32.xlu0 %v941, 95
      %v951 = vpop.permute.xlu0 %950
      %952 = vrot.lane.b32.xlu0 %v945, 95
      %v953 = vpop.permute.xlu0 %952
      %954 = vrot.lane.b32.xlu0 %v949, 95
      %v955 = vpop.permute.xlu0 %954
      %v956 = vsel %vm919, %v951, %v953
      %v957 = vsel %vm919, %v953, %v955
      %v960 = vadd.f32 %v924, %v956
      %v961 = vadd.f32 %v925, %v957
      %962 = vset.pattern.permute.xlu0 2
      %963 = vperm.xlu0 %962, %v887
      %v964 = vpop.permute.xlu0 %963
      %v966 = vlaneseq
      %v967 = vshrl.u32 %v966, 7
      %v968 = vsub.s32 0, %v967
      %v969 = vrot.slane %v964, %v968
      %v970 = vmul.f32 %v969, %v884
      %v971 = vmul.f32 %v969, %v885
      %v974 = vlaneseq
      %v975 = vshrl.u32 %v974, 7
      %v976 = vsub.s32 2, %v975
      %v977 = vrot.slane %v970, %v976
      %v978 = vlaneseq
      %v979 = vshrl.u32 %v978, 7
      %v980 = vsub.s32 6, %v979
      %v981 = vrot.slane %v970, %v980
      %v982 = vlaneseq
      %v983 = vshrl.u32 %v982, 7
      %v984 = vsub.s32 2, %v983
      %v985 = vrot.slane %v971, %v984
      %986 = vrot.lane.b32.xlu0 %v977, 95
      %v987 = vpop.permute.xlu0 %986
      %988 = vrot.lane.b32.xlu0 %v981, 95
      %v989 = vpop.permute.xlu0 %988
      %990 = vrot.lane.b32.xlu0 %v985, 95
      %v991 = vpop.permute.xlu0 %990
      %v992 = vsel %vm919, %v987, %v989
      %v993 = vsel %vm919, %v989, %v991
      %v996 = vadd.f32 %v960, %v992
      %v997 = vadd.f32 %v961, %v993
      %v1000 = vcombine.high %v884, %v884
      %1001 = vrot.lane.b32.xlu0 %v884, 94
      %v1002 = vpop.permute.xlu0 %1001
      %1003 = vrot.lane.b32.xlu0 %v1000, 94
      %v1004 = vpop.permute.xlu0 %1003
      %1005 = vrot.lane.b32.xlu0 %v885, 94
      %v1006 = vpop.permute.xlu0 %1005
      %vm1007 = vcmask 769024
      %v1008 = vsel %vm1007, %v1002, %v1004
      %v1009 = vsel %vm1007, %v1004, %v1006
      %v1012 = vsel %vm496, %v1008, 0.0
      %v1013 = vsel %vm497, %v1009, 0.0
      %s1014 = scalar_lea.vmem %s3, 8
      %v1015 = vld [vmem:[%s1014] sm:$0x1]
      %1017 = vset.pattern.permute.xlu0 0
      %1018 = vperm.xlu0 %1017, %v1015
      %v1019 = vpop.permute.xlu0 %1018
      %v1021 = vlaneseq
      %v1022 = vshrl.u32 %v1021, 7
      %v1023 = vsub.s32 0, %v1022
      %v1024 = vrot.slane %v1019, %v1023
      %v1025 = vmul.f32 %v1024, %v1012
      %v1026 = vmul.f32 %v1024, %v1013
      %v1027 = vadd.f32 %v996, %v1025
      %v1028 = vadd.f32 %v997, %v1026
      %1029 = vset.pattern.permute.xlu0 1
      %1030 = vperm.xlu0 %1029, %v1015
      %v1031 = vpop.permute.xlu0 %1030
      %v1033 = vlaneseq
      %v1034 = vshrl.u32 %v1033, 7
      %v1035 = vsub.s32 0, %v1034
      %v1036 = vrot.slane %v1031, %v1035
      %v1037 = vmul.f32 %v1036, %v1012
      %v1038 = vmul.f32 %v1036, %v1013
      %v1041 = vrot.slane %v1037, 1
      %v1042 = vrot.slane %v1038, 1
      %v1045 = vadd.f32 %v1027, %v1041
      %v1046 = vadd.f32 %v1028, %v1042
      %1047 = vset.pattern.permute.xlu0 2
      %1048 = vperm.xlu0 %1047, %v1015
      %v1049 = vpop.permute.xlu0 %1048
      %v1051 = vlaneseq
      %v1052 = vshrl.u32 %v1051, 7
      %v1053 = vsub.s32 0, %v1052
      %v1054 = vrot.slane %v1049, %v1053
      %v1055 = vmul.f32 %v1054, %v1012
      %v1056 = vmul.f32 %v1054, %v1013
      %v1059 = vrot.slane %v1055, 2
      %v1060 = vrot.slane %v1056, 2
      %v1063 = vadd.f32 %v1045, %v1059
      %v1064 = vadd.f32 %v1046, %v1060
      %v1065 = vld [vmem:[#allocation3] sm:$0x1]
      %1067 = vset.pattern.permute.xlu0 0
      %1068 = vperm.xlu0 %1067, %v1065
      %v1069 = vpop.permute.xlu0 %1068
      %v1071 = vlaneseq
      %v1072 = vshrl.u32 %v1071, 7
      %v1073 = vsub.s32 0, %v1072
      %v1074 = vrot.slane %v1069, %v1073
      %v1075 = vadd.f32 %v1063, %v1074
      %v1076 = vadd.f32 %v1064, %v1074
      %v1077 = vmax.f32 %v1075, 0.0
      %v1078 = vmax.f32 %v1076, 0.0
      %v1081 = vcombine.low %v1077, %v1078
      %v1083 = vunpack.c.l.s4 1966171168
      %v1084 = vunpack.c.0.s8 %v1083
      %v1085 = vlaneseq
      %v1086 = vshrl.u32 %v1085, 7
      %v1087 = vsub.s32 %v1084, %v1086
      %v1088 = vrot.slane %v1081, %v1087
      %v1090 = vunpack.c.l.s4 1966171168
      %v1091 = vunpack.c.0.s8 %v1090
      %v1092 = vlaneseq
      %v1093 = vshrl.u32 %v1092, 7
      %v1094 = vsub.s32 %v1091, %v1093
      %v1095 = vrot.slane %v1088, %v1094
      %vm1097 = vcmp.ge.s32.totalorder %v301, 0
      %vm1098 = vcmp.lt.s32.totalorder %v301, 256
      %vm1099 = vmand %vm1097, %vm1098
      %1100 = vst.msk [vmem:[%s255] sm:$0x3] %vm1099, %v1095
      %p1101 = scmp.lt.s32.totalorder %s18, 1
      %s1102 = scalar_select %p1101, %s18, 1
      %s1103 = smul.addr %s1102, 2
      %s1104 = scalar_lea.vmem %s5, %s1103
      // Predicated region
      $region41: #{fft_block_forward.3} parent=39 // pred_check
        %p1105 = pneg %p156
      $region42: #{fft_block_forward.3} parent=39 // pred_check_branch
        %1107 = sbr.rel (%p1105) target = $region44
      $region43: #{fft_block_forward.3} parent=39 // pred_region
        _
      $region44: #{fft_block_forward.3} parent=39 // pred_fallthru
        _
    $region40: #{fft_block_forward.3} parent=5 // pred_fallthru
      _
    %p1108 = scmp.le.s32.totalorder 2, %s13
    // Predicated region
    $region45: #{fft_block_forward.3} parent=5 // pred_check
      %p1109 = pneg %p1108
    $region46: #{fft_block_forward.3} parent=5 // pred_check_branch
      %1111 = sbr.rel (%p1109) target = $region48
    $region47: #{fft_block_forward.3} parent=5 // pred_region
      %s1112 = ssub.s32 %s13, 2
      // Predicated region
      $region49: #{fft_block_forward.3} parent=47 // pred_check
        %p1113 = pneg %p162
      $region50: #{fft_block_forward.3} parent=47 // pred_check_branch
        %1115 = sbr.rel (%p1113) target = $region52
      $region51: #{fft_block_forward.3} parent=47 // pred_region
        %p1116 = scmp.lt.s32.totalorder %s19, 1
        %s1117 = scalar_select %p1116, %s19, 1
        %s1118 = smul.addr %s1117, 2
        %s1119 = scalar_lea.vmem %s5, %s1118
      $region52: #{fft_block_forward.3} parent=47 // pred_fallthru
        _
    $region48: #{fft_block_forward.3} parent=5 // pred_fallthru
      _
  $region6: #{fft_block_forward.3} parent=0 // loop_footer
    %s17 = sadd.s32 1, %s13
  $region7: #{fft_block_forward.3} parent=0 // loop_footer_branch
    %12 = sbr.rel target = $region3
  $region8: #{fft_block_forward.3} parent=0 // loop_exit
    _

// kernel: fft_block_forward.2
$region0: #{fft_block_forward.2}
  #allocation0 [shape = 'u32[]', space=smem, size = 0x4, offset = 0x4, fixed_abs, tag = 'smem constant byte address 0x4 - core index']
  #allocation1 [shape = 'u32[144,128]{1,0:T(1,128)}', space=vmem, size = 0x12000, scoped, tag = 'internal scratch']
  #allocation2 [shape = 'f32[16,178]{1,0:T(8,128)}', space=vmem, size = 0x4000, scoped, tag = 'scratch operand']
  #allocation3 [shape = 'f32[16,290]{1,0:T(8,128)}', space=vmem, size = 0x6000, scoped, tag = 'scratch operand']
  #allocation4 [shape = 'f32[1,1]{1,0:T(1,128)S(1)}', space=vmem, size = 0x200, scoped, tag = 'scoped memory for fft_block_forward.2']
  %s0 = inlined_call_operand.vmem [shape: f32[2,1,144], index: 0, kind: input, shape index: {}]
  %s1 = inlined_call_operand.vmem [shape: f32[2,1,144], index: 1, kind: input, shape index: {}]
  %s2 = inlined_call_operand.vmem [shape: f32[2,1,256], index: 2, kind: input, shape index: {}]
  %s3 = inlined_call_operand.vmem [shape: f32[9,16,2], index: 3, kind: input, shape index: {}]
  %s4 = inlined_call_operand.vmem [shape: f32[16,1], index: 4, kind: input, shape index: {}]
  %s5 = inlined_call_operand.vmem [shape: f32[9,16,16], index: 5, kind: input, shape index: {}]
  %s6 = inlined_call_operand.vmem [shape: f32[16,1], index: 6, kind: input, shape index: {}]
  %s7 = inlined_call_operand.vmem [shape: f32[9,2,16], index: 7, kind: input, shape index: {}]
  %s8 = inlined_call_operand.vmem [shape: f32[2,1], index: 8, kind: input, shape index: {}]
  %s9 = inlined_call_operand.vmem [shape: f32[9,16,1], index: 9, kind: input, shape index: {}]
  %s10 = inlined_call_operand.vmem [shape: f32[16,1], index: 10, kind: input, shape index: {}]
  %s11 = inlined_call_operand.vmem [shape: f32[9,16,16], index: 11, kind: input, shape index: {}]
  %s12 = inlined_call_operand.vmem [shape: f32[16,1], index: 12, kind: input, shape index: {}]
  %s13 = inlined_call_operand.vmem [shape: f32[9,1,16], index: 13, kind: input, shape index: {}]
  %s14 = inlined_call_operand.<no memory space> [shape: f32[1,1], index: 14, kind: input, shape index: {}]
  %s15 = inlined_call_operand.vmem [shape: f32[2,2,144], index: 15, kind: output, shape index: {0}]
  %s16 = inlined_call_operand.vmem [shape: f32[2,1,256], index: 16, kind: output, shape index: {1}]
  %17 = xla_tuple %s15, %s16
  %s18 = sld [smem:[#allocation0]]
  $region101: #{fft_block_forward.2} parent=0
    _
  %s20 = ssub.s32 1, %s18
  %s21 = scalar_select 0, %s20, %s18
  %v22 = vstv %s14
  %23 = vst [vmem:[#allocation4] sm:$0x1] %v22
  loop: start=0, step=1, limit=4
  $region2: #{fft_block_forward.2} parent=0 // loop_pre_header
    _
  $region3: #{fft_block_forward.2} parent=0 // loop_header
    %s25 = sphi 0, %s29
    %p26 = scmp.ge.s32.totalorder %s25, 4
    %s35 = sphi 0, %s37
    %s38 = sphi 0, %s35
    %s39 = sphi 0, %s38
    %s55 = sphi 0, %s39
    %s61 = sphi 0, %s63
    %s64 = sphi 0, %s61
    %s65 = sphi 0, %s64
    %s81 = sphi 0, %s65
    %s87 = sphi 0, %s89
    %s90 = sphi 0, %s87
    %s91 = sphi 0, %s90
    %s107 = sphi 0, %s91
    %s111 = sphi 0, %s111
    %s113 = sphi 0, %s111
    %s114 = sphi 0, %s113
    %s128 = sphi 0, %s114
    %s132 = sphi 0, %s132
    %s134 = sphi 0, %s132
    %s135 = sphi 0, %s134
    %s149 = sphi 0, %s135
    %s153 = sphi 0, %s153
    %s155 = sphi 0, %s153
    %s156 = sphi 0, %s155
    %s170 = sphi 0, %s156
    %s174 = sphi 0, %s174
    %s176 = sphi 0, %s174
    %s177 = sphi 0, %s176
    %s191 = sphi 0, %s177
    %s195 = sphi 0, %s195
    %s197 = sphi 0, %s195
    %s198 = sphi 0, %s197
    %s212 = sphi 0, %s198
    %s216 = sphi 0, %s216
    %s218 = sphi 0, %s216
    %s219 = sphi 0, %s218
    %s233 = sphi 0, %s219
    %s237 = sphi 0, %s237
    %s239 = sphi 0, %s237
    %s240 = sphi 0, %s239
    %s254 = sphi 0, %s240
    %s258 = sphi 0, %s258
    %s260 = sphi 0, %s258
    %s261 = sphi 0, %s260
    %s275 = sphi 0, %s261
    %s279 = sphi 0, %s279
    %s281 = sphi 0, %s279
    %s282 = sphi 0, %s281
    %s296 = sphi 0, %s282
    %s300 = sphi 0, %s300
    %s302 = sphi 0, %s300
    %s303 = sphi 0, %s302
    %s317 = sphi 0, %s303
    %s321 = sphi 0, %s321
    %s323 = sphi 0, %s321
    %s324 = sphi 0, %s323
    %s338 = sphi 0, %s324
    %s342 = sphi 0, %s342
    %s344 = sphi 0, %s342
    %s345 = sphi 0, %s344
    %s359 = sphi 0, %s345
    %s365 = sphi 0, %s367
    %s368 = sphi 0, %s365
    %s369 = sphi 0, %s368
    %s385 = sphi 0, %s369
    %s391 = sphi 0, %s393
    %s394 = sphi 0, %s391
    %s395 = sphi 0, %s394
    %s411 = sphi 0, %s395
  $region4: #{fft_block_forward.2} parent=0 // loop_header_branch
    %28 = sbr.rel (%p26) target = $region8
  $region5: #{fft_block_forward.2} parent=0 // loop_body
    %s30 = ssub.s32 %s25, 1
    %s31 = ssub.s32 %s25, 2
    %s32 = sadd.s32 %s25, 1
    %s33 = ssub.s32 %s25, %s32
    %p34 = scmp.eq.s32.totalorder %s33, 0
    %s36 = sadd.s32 %s35, 1
    %s37 = scalar_select %p34, %s35, %s36
    %p40 = pneg %p34
    %p41 = scmp.eq.s32.totalorder %s25, 1
    %p42 = por %p40, %p41
    %p43 = scmp.ne.s32.totalorder %s35, %s38
    %p44 = scmp.eq.s32.totalorder %s25, 0
    %p45 = por %p43, %p44
    %p46 = scmp.ne.s32.totalorder %s35, %s38
    %p47 = scmp.eq.s32.totalorder %s30, 1
    %p48 = por %p46, %p47
    %p49 = scmp.ne.s32.totalorder %s38, %s39
    %p50 = scmp.eq.s32.totalorder %s30, 0
    %p51 = por %p49, %p50
    %p52 = scmp.ne.s32.totalorder %s38, %s39
    %p53 = scmp.eq.s32.totalorder %s31, 1
    %p54 = por %p52, %p53
    %p56 = scmp.ne.s32.totalorder %s39, %s55
    %p57 = scmp.eq.s32.totalorder %s31, 0
    %p58 = por %p56, %p57
    %s59 = ssub.s32 %s25, %s32
    %p60 = scmp.eq.s32.totalorder %s59, 0
    %s62 = sadd.s32 %s61, 1
    %s63 = scalar_select %p60, %s61, %s62
    %p66 = pneg %p60
    %p67 = scmp.eq.s32.totalorder %s25, 1
    %p68 = por %p66, %p67
    %p69 = scmp.ne.s32.totalorder %s61, %s64
    %p70 = scmp.eq.s32.totalorder %s25, 0
    %p71 = por %p69, %p70
    %p72 = scmp.ne.s32.totalorder %s61, %s64
    %p73 = scmp.eq.s32.totalorder %s30, 1
    %p74 = por %p72, %p73
    %p75 = scmp.ne.s32.totalorder %s64, %s65
    %p76 = scmp.eq.s32.totalorder %s30, 0
    %p77 = por %p75, %p76
    %p78 = scmp.ne.s32.totalorder %s64, %s65
    %p79 = scmp.eq.s32.totalorder %s31, 1
    %p80 = por %p78, %p79
    %p82 = scmp.ne.s32.totalorder %s65, %s81
    %p83 = scmp.eq.s32.totalorder %s31, 0
    %p84 = por %p82, %p83
    %s85 = ssub.s32 %s25, %s32
    %p86 = scmp.eq.s32.totalorder %s85, 0
    %s88 = sadd.s32 %s87, 1
    %s89 = scalar_select %p86, %s87, %s88
    %p92 = pneg %p86
    %p93 = scmp.eq.s32.totalorder %s25, 1
    %p94 = por %p92, %p93
    %p95 = scmp.ne.s32.totalorder %s87, %s90
    %p96 = scmp.eq.s32.totalorder %s25, 0
    %p97 = por %p95, %p96
    %p98 = scmp.ne.s32.totalorder %s87, %s90
    %p99 = scmp.eq.s32.totalorder %s30, 1
    %p100 = por %p98, %p99
    %p101 = scmp.ne.s32.totalorder %s90, %s91
    %p102 = scmp.eq.s32.totalorder %s30, 0
    %p103 = por %p101, %p102
    %p104 = scmp.ne.s32.totalorder %s90, %s91
    %p105 = scmp.eq.s32.totalorder %s31, 1
    %p106 = por %p104, %p105
    %p108 = scmp.ne.s32.totalorder %s91, %s107
    %p109 = scmp.eq.s32.totalorder %s31, 0
    %p110 = por %p108, %p109
    %s112 = sadd.s32 %s111, 1
    %p115 = scmp.eq.s32.totalorder %s25, 1
    %p116 = scmp.ne.s32.totalorder %s111, %s113
    %p117 = scmp.eq.s32.totalorder %s25, 0
    %p118 = por %p116, %p117
    %p119 = scmp.ne.s32.totalorder %s111, %s113
    %p120 = scmp.eq.s32.totalorder %s30, 1
    %p121 = por %p119, %p120
    %p122 = scmp.ne.s32.totalorder %s113, %s114
    %p123 = scmp.eq.s32.totalorder %s30, 0
    %p124 = por %p122, %p123
    %p125 = scmp.ne.s32.totalorder %s113, %s114
    %p126 = scmp.eq.s32.totalorder %s31, 1
    %p127 = por %p125, %p126
    %p129 = scmp.ne.s32.totalorder %s114, %s128
    %p130 = scmp.eq.s32.totalorder %s31, 0
    %p131 = por %p129, %p130
    %s133 = sadd.s32 %s132, 1
    %p136 = scmp.eq.s32.totalorder %s25, 1
    %p137 = scmp.ne.s32.totalorder %s132, %s134
    %p138 = scmp.eq.s32.totalorder %s25, 0
    %p139 = por %p137, %p138
    %p140 = scmp.ne.s32.totalorder %s132, %s134
    %p141 = scmp.eq.s32.totalorder %s30, 1
    %p142 = por %p140, %p141
    %p143 = scmp.ne.s32.totalorder %s134, %s135
    %p144 = scmp.eq.s32.totalorder %s30, 0
    %p145 = por %p143, %p144
    %p146 = scmp.ne.s32.totalorder %s134, %s135
    %p147 = scmp.eq.s32.totalorder %s31, 1
    %p148 = por %p146, %p147
    %p150 = scmp.ne.s32.totalorder %s135, %s149
    %p151 = scmp.eq.s32.totalorder %s31, 0
    %p152 = por %p150, %p151
    %s154 = sadd.s32 %s153, 1
    %p157 = scmp.eq.s32.totalorder %s25, 1
    %p158 = scmp.ne.s32.totalorder %s153, %s155
    %p159 = scmp.eq.s32.totalorder %s25, 0
    %p160 = por %p158, %p159
    %p161 = scmp.ne.s32.totalorder %s153, %s155
    %p162 = scmp.eq.s32.totalorder %s30, 1
    %p163 = por %p161, %p162
    %p164 = scmp.ne.s32.totalorder %s155, %s156
    %p165 = scmp.eq.s32.totalorder %s30, 0
    %p166 = por %p164, %p165
    %p167 = scmp.ne.s32.totalorder %s155, %s156
    %p168 = scmp.eq.s32.totalorder %s31, 1
    %p169 = por %p167, %p168
    %p171 = scmp.ne.s32.totalorder %s156, %s170
    %p172 = scmp.eq.s32.totalorder %s31, 0
    %p173 = por %p171, %p172
    %s175 = sadd.s32 %s174, 1
    %p178 = scmp.eq.s32.totalorder %s25, 1
    %p179 = scmp.ne.s32.totalorder %s174, %s176
    %p180 = scmp.eq.s32.totalorder %s25, 0
    %p181 = por %p179, %p180
    %p182 = scmp.ne.s32.totalorder %s174, %s176
    %p183 = scmp.eq.s32.totalorder %s30, 1
    %p184 = por %p182, %p183
    %p185 = scmp.ne.s32.totalorder %s176, %s177
    %p186 = scmp.eq.s32.totalorder %s30, 0
    %p187 = por %p185, %p186
    %p188 = scmp.ne.s32.totalorder %s176, %s177
    %p189 = scmp.eq.s32.totalorder %s31, 1
    %p190 = por %p188, %p189
    %p192 = scmp.ne.s32.totalorder %s177, %s191
    %p193 = scmp.eq.s32.totalorder %s31, 0
    %p194 = por %p192, %p193
    %s196 = sadd.s32 %s195, 1
    %p199 = scmp.eq.s32.totalorder %s25, 1
    %p200 = scmp.ne.s32.totalorder %s195, %s197
    %p201 = scmp.eq.s32.totalorder %s25, 0
    %p202 = por %p200, %p201
    %p203 = scmp.ne.s32.totalorder %s195, %s197
    %p204 = scmp.eq.s32.totalorder %s30, 1
    %p205 = por %p203, %p204
    %p206 = scmp.ne.s32.totalorder %s197, %s198
    %p207 = scmp.eq.s32.totalorder %s30, 0
    %p208 = por %p206, %p207
    %p209 = scmp.ne.s32.totalorder %s197, %s198
    %p210 = scmp.eq.s32.totalorder %s31, 1
    %p211 = por %p209, %p210
    %p213 = scmp.ne.s32.totalorder %s198, %s212
    %p214 = scmp.eq.s32.totalorder %s31, 0
    %p215 = por %p213, %p214
    %s217 = sadd.s32 %s216, 1
    %p220 = scmp.eq.s32.totalorder %s25, 1
    %p221 = scmp.ne.s32.totalorder %s216, %s218
    %p222 = scmp.eq.s32.totalorder %s25, 0
    %p223 = por %p221, %p222
    %p224 = scmp.ne.s32.totalorder %s216, %s218
    %p225 = scmp.eq.s32.totalorder %s30, 1
    %p226 = por %p224, %p225
    %p227 = scmp.ne.s32.totalorder %s218, %s219
    %p228 = scmp.eq.s32.totalorder %s30, 0
    %p229 = por %p227, %p228
    %p230 = scmp.ne.s32.totalorder %s218, %s219
    %p231 = scmp.eq.s32.totalorder %s31, 1
    %p232 = por %p230, %p231
    %p234 = scmp.ne.s32.totalorder %s219, %s233
    %p235 = scmp.eq.s32.totalorder %s31, 0
    %p236 = por %p234, %p235
    %s238 = sadd.s32 %s237, 1
    %p241 = scmp.eq.s32.totalorder %s25, 1
    %p242 = scmp.ne.s32.totalorder %s237, %s239
    %p243 = scmp.eq.s32.totalorder %s25, 0
    %p244 = por %p242, %p243
    %p245 = scmp.ne.s32.totalorder %s237, %s239
    %p246 = scmp.eq.s32.totalorder %s30, 1
    %p247 = por %p245, %p246
    %p248 = scmp.ne.s32.totalorder %s239, %s240
    %p249 = scmp.eq.s32.totalorder %s30, 0
    %p250 = por %p248, %p249
    %p251 = scmp.ne.s32.totalorder %s239, %s240
    %p252 = scmp.eq.s32.totalorder %s31, 1
    %p253 = por %p251, %p252
    %p255 = scmp.ne.s32.totalorder %s240, %s254
    %p256 = scmp.eq.s32.totalorder %s31, 0
    %p257 = por %p255, %p256
    %s259 = sadd.s32 %s258, 1
    %p262 = scmp.eq.s32.totalorder %s25, 1
    %p263 = scmp.ne.s32.totalorder %s258, %s260
    %p264 = scmp.eq.s32.totalorder %s25, 0
    %p265 = por %p263, %p264
    %p266 = scmp.ne.s32.totalorder %s258, %s260
    %p267 = scmp.eq.s32.totalorder %s30, 1
    %p268 = por %p266, %p267
    %p269 = scmp.ne.s32.totalorder %s260, %s261
    %p270 = scmp.eq.s32.totalorder %s30, 0
    %p271 = por %p269, %p270
    %p272 = scmp.ne.s32.totalorder %s260, %s261
    %p273 = scmp.eq.s32.totalorder %s31, 1
    %p274 = por %p272, %p273
    %p276 = scmp.ne.s32.totalorder %s261, %s275
    %p277 = scmp.eq.s32.totalorder %s31, 0
    %p278 = por %p276, %p277
    %s280 = sadd.s32 %s279, 1
    %p283 = scmp.eq.s32.totalorder %s25, 1
    %p284 = scmp.ne.s32.totalorder %s279, %s281
    %p285 = scmp.eq.s32.totalorder %s25, 0
    %p286 = por %p284, %p285
    %p287 = scmp.ne.s32.totalorder %s279, %s281
    %p288 = scmp.eq.s32.totalorder %s30, 1
    %p289 = por %p287, %p288
    %p290 = scmp.ne.s32.totalorder %s281, %s282
    %p291 = scmp.eq.s32.totalorder %s30, 0
    %p292 = por %p290, %p291
    %p293 = scmp.ne.s32.totalorder %s281, %s282
    %p294 = scmp.eq.s32.totalorder %s31, 1
    %p295 = por %p293, %p294
    %p297 = scmp.ne.s32.totalorder %s282, %s296
    %p298 = scmp.eq.s32.totalorder %s31, 0
    %p299 = por %p297, %p298
    %s301 = sadd.s32 %s300, 1
    %p304 = scmp.eq.s32.totalorder %s25, 1
    %p305 = scmp.ne.s32.totalorder %s300, %s302
    %p306 = scmp.eq.s32.totalorder %s25, 0
    %p307 = por %p305, %p306
    %p308 = scmp.ne.s32.totalorder %s300, %s302
    %p309 = scmp.eq.s32.totalorder %s30, 1
    %p310 = por %p308, %p309
    %p311 = scmp.ne.s32.totalorder %s302, %s303
    %p312 = scmp.eq.s32.totalorder %s30, 0
    %p313 = por %p311, %p312
    %p314 = scmp.ne.s32.totalorder %s302, %s303
    %p315 = scmp.eq.s32.totalorder %s31, 1
    %p316 = por %p314, %p315
    %p318 = scmp.ne.s32.totalorder %s303, %s317
    %p319 = scmp.eq.s32.totalorder %s31, 0
    %p320 = por %p318, %p319
    %s322 = sadd.s32 %s321, 1
    %p325 = scmp.eq.s32.totalorder %s25, 1
    %p326 = scmp.ne.s32.totalorder %s321, %s323
    %p327 = scmp.eq.s32.totalorder %s25, 0
    %p328 = por %p326, %p327
    %p329 = scmp.ne.s32.totalorder %s321, %s323
    %p330 = scmp.eq.s32.totalorder %s30, 1
    %p331 = por %p329, %p330
    %p332 = scmp.ne.s32.totalorder %s323, %s324
    %p333 = scmp.eq.s32.totalorder %s30, 0
    %p334 = por %p332, %p333
    %p335 = scmp.ne.s32.totalorder %s323, %s324
    %p336 = scmp.eq.s32.totalorder %s31, 1
    %p337 = por %p335, %p336
    %p339 = scmp.ne.s32.totalorder %s324, %s338
    %p340 = scmp.eq.s32.totalorder %s31, 0
    %p341 = por %p339, %p340
    %s343 = sadd.s32 %s342, 1
    %p346 = scmp.eq.s32.totalorder %s25, 1
    %p347 = scmp.ne.s32.totalorder %s342, %s344
    %p348 = scmp.eq.s32.totalorder %s25, 0
    %p349 = por %p347, %p348
    %p350 = scmp.ne.s32.totalorder %s342, %s344
    %p351 = scmp.eq.s32.totalorder %s30, 1
    %p352 = por %p350, %p351
    %p353 = scmp.ne.s32.totalorder %s344, %s345
    %p354 = scmp.eq.s32.totalorder %s30, 0
    %p355 = por %p353, %p354
    %p356 = scmp.ne.s32.totalorder %s344, %s345
    %p357 = scmp.eq.s32.totalorder %s31, 1
    %p358 = por %p356, %p357
    %p360 = scmp.ne.s32.totalorder %s345, %s359
    %p361 = scmp.eq.s32.totalorder %s31, 0
    %p362 = por %p360, %p361
    %s363 = ssub.s32 %s25, %s32
    %p364 = scmp.eq.s32.totalorder %s363, 0
    %s366 = sadd.s32 %s365, 1
    %s367 = scalar_select %p364, %s365, %s366
    %p370 = pneg %p364
    %p371 = scmp.eq.s32.totalorder %s25, 1
    %p372 = por %p370, %p371
    %p373 = scmp.ne.s32.totalorder %s365, %s368
    %p374 = scmp.eq.s32.totalorder %s25, 0
    %p375 = por %p373, %p374
    %p376 = scmp.ne.s32.totalorder %s365, %s368
    %p377 = scmp.eq.s32.totalorder %s30, 1
    %p378 = por %p376, %p377
    %p379 = scmp.ne.s32.totalorder %s368, %s369
    %p380 = scmp.eq.s32.totalorder %s30, 0
    %p381 = por %p379, %p380
    %p382 = scmp.ne.s32.totalorder %s368, %s369
    %p383 = scmp.eq.s32.totalorder %s31, 1
    %p384 = por %p382, %p383
    %p386 = scmp.ne.s32.totalorder %s369, %s385
    %p387 = scmp.eq.s32.totalorder %s31, 0
    %p388 = por %p386, %p387
    %s389 = ssub.s32 %s25, %s32
    %p390 = scmp.eq.s32.totalorder %s389, 0
    %s392 = sadd.s32 %s391, 1
    %s393 = scalar_select %p390, %s391, %s392
    %p396 = pneg %p390
    %p397 = scmp.eq.s32.totalorder %s25, 1
    %p398 = por %p396, %p397
    %p399 = scmp.ne.s32.totalorder %s391, %s394
    %p400 = scmp.eq.s32.totalorder %s25, 0
    %p401 = por %p399, %p400
    %p402 = scmp.ne.s32.totalorder %s391, %s394
    %p403 = scmp.eq.s32.totalorder %s30, 1
    %p404 = por %p402, %p403
    %p405 = scmp.ne.s32.totalorder %s394, %s395
    %p406 = scmp.eq.s32.totalorder %s30, 0
    %p407 = por %p405, %p406
    %p408 = scmp.ne.s32.totalorder %s394, %s395
    %p409 = scmp.eq.s32.totalorder %s31, 1
    %p410 = por %p408, %p409
    %p412 = scmp.ne.s32.totalorder %s395, %s411
    %p413 = scmp.eq.s32.totalorder %s31, 0
    %p414 = por %p412, %p413
    %p415 = scmp.le.s32.totalorder 1, %s25
    %p416 = scmp.lt.s32.totalorder %s25, 3
    %p417 = pnand %p415, %p416
    %p418 = pneg %p417
    // Predicated region
    $region9: #{fft_block_forward.2} parent=5 // pred_check
      _
    $region10: #{fft_block_forward.2} parent=5 // pred_check_branch
      %420 = sbr.rel (%p417) target = $region12
    $region11: #{fft_block_forward.2} parent=5 // pred_region
      %s421 = ssub.s32 %s25, 1
      // Predicated region
      $region13: #{fft_block_forward.2} parent=11 // pred_check
        %p422 = pneg %p124
      $region14: #{fft_block_forward.2} parent=11 // pred_check_branch
        %424 = sbr.rel (%p422) target = $region16
      $region15: #{fft_block_forward.2} parent=11 // pred_region
        _
      $region16: #{fft_block_forward.2} parent=11 // pred_fallthru
        _
      // Predicated region
      $region17: #{fft_block_forward.2} parent=11 // pred_check
        %p425 = pneg %p145
      $region18: #{fft_block_forward.2} parent=11 // pred_check_branch
        %427 = sbr.rel (%p425) target = $region20
      $region19: #{fft_block_forward.2} parent=11 // pred_region
        _
      $region20: #{fft_block_forward.2} parent=11 // pred_fallthru
        _
      // Predicated region
      $region21: #{fft_block_forward.2} parent=11 // pred_check
        %p428 = pneg %p166
      $region22: #{fft_block_forward.2} parent=11 // pred_check_branch
        %430 = sbr.rel (%p428) target = $region24
      $region23: #{fft_block_forward.2} parent=11 // pred_region
        _
      $region24: #{fft_block_forward.2} parent=11 // pred_fallthru
        _
      // Predicated region
      $region25: #{fft_block_forward.2} parent=11 // pred_check
        %p431 = pneg %p187
      $region26: #{fft_block_forward.2} parent=11 // pred_check_branch
        %433 = sbr.rel (%p431) target = $region28
      $region27: #{fft_block_forward.2} parent=11 // pred_region
        _
      $region28: #{fft_block_forward.2} parent=11 // pred_fallthru
        _
      // Predicated region
      $region29: #{fft_block_forward.2} parent=11 // pred_check
        %p434 = pneg %p208
      $region30: #{fft_block_forward.2} parent=11 // pred_check_branch
        %436 = sbr.rel (%p434) target = $region32
      $region31: #{fft_block_forward.2} parent=11 // pred_region
        _
      $region32: #{fft_block_forward.2} parent=11 // pred_fallthru
        _
      // Predicated region
      $region33: #{fft_block_forward.2} parent=11 // pred_check
        %p437 = pneg %p229
      $region34: #{fft_block_forward.2} parent=11 // pred_check_branch
        %439 = sbr.rel (%p437) target = $region36
      $region35: #{fft_block_forward.2} parent=11 // pred_region
        _
      $region36: #{fft_block_forward.2} parent=11 // pred_fallthru
        _
      // Predicated region
      $region37: #{fft_block_forward.2} parent=11 // pred_check
        %p440 = pneg %p250
      $region38: #{fft_block_forward.2} parent=11 // pred_check_branch
        %442 = sbr.rel (%p440) target = $region40
      $region39: #{fft_block_forward.2} parent=11 // pred_region
        _
      $region40: #{fft_block_forward.2} parent=11 // pred_fallthru
        _
      // Predicated region
      $region41: #{fft_block_forward.2} parent=11 // pred_check
        %p443 = pneg %p271
      $region42: #{fft_block_forward.2} parent=11 // pred_check_branch
        %445 = sbr.rel (%p443) target = $region44
      $region43: #{fft_block_forward.2} parent=11 // pred_region
        _
      $region44: #{fft_block_forward.2} parent=11 // pred_fallthru
        _
      // Predicated region
      $region45: #{fft_block_forward.2} parent=11 // pred_check
        %p446 = pneg %p292
      $region46: #{fft_block_forward.2} parent=11 // pred_check_branch
        %448 = sbr.rel (%p446) target = $region48
      $region47: #{fft_block_forward.2} parent=11 // pred_region
        _
      $region48: #{fft_block_forward.2} parent=11 // pred_fallthru
        _
      // Predicated region
      $region49: #{fft_block_forward.2} parent=11 // pred_check
        %p449 = pneg %p313
      $region50: #{fft_block_forward.2} parent=11 // pred_check_branch
        %451 = sbr.rel (%p449) target = $region52
      $region51: #{fft_block_forward.2} parent=11 // pred_region
        _
      $region52: #{fft_block_forward.2} parent=11 // pred_fallthru
        _
      // Predicated region
      $region53: #{fft_block_forward.2} parent=11 // pred_check
        %p452 = pneg %p334
      $region54: #{fft_block_forward.2} parent=11 // pred_check_branch
        %454 = sbr.rel (%p452) target = $region56
      $region55: #{fft_block_forward.2} parent=11 // pred_region
        _
      $region56: #{fft_block_forward.2} parent=11 // pred_fallthru
        _
      // Predicated region
      $region57: #{fft_block_forward.2} parent=11 // pred_check
        %p455 = pneg %p355
      $region58: #{fft_block_forward.2} parent=11 // pred_check_branch
        %457 = sbr.rel (%p455) target = $region60
      $region59: #{fft_block_forward.2} parent=11 // pred_region
        _
      $region60: #{fft_block_forward.2} parent=11 // pred_fallthru
        _
    $region12: #{fft_block_forward.2} parent=5 // pred_fallthru
      _
    %p458 = scmp.lt.s32.totalorder %s25, 2
    // Predicated region
    $region61: #{fft_block_forward.2} parent=5 // pred_check
      %p459 = pneg %p458
    $region62: #{fft_block_forward.2} parent=5 // pred_check_branch
      %461 = sbr.rel (%p459) target = $region64
    $region63: #{fft_block_forward.2} parent=5 // pred_region
      // Predicated region
      $region65: #{fft_block_forward.2} parent=63 // pred_check
        %p462 = pneg %p45
      $region66: #{fft_block_forward.2} parent=63 // pred_check_branch
        %464 = sbr.rel (%p462) target = $region68
      $region67: #{fft_block_forward.2} parent=63 // pred_region
        %p465 = scmp.lt.s32.totalorder %s25, 1
        %s466 = scalar_select %p465, %s25, 1
        %s467 = smul.addr %s466, 2
        %s468 = scalar_lea.vmem %s0, %s467
      $region68: #{fft_block_forward.2} parent=63 // pred_fallthru
        _
      // Predicated region
      $region69: #{fft_block_forward.2} parent=63 // pred_check
        %p469 = pneg %p71
      $region70: #{fft_block_forward.2} parent=63 // pred_check_branch
        %471 = sbr.rel (%p469) target = $region72
      $region71: #{fft_block_forward.2} parent=63 // pred_region
        %p472 = scmp.lt.s32.totalorder %s25, 1
        %s473 = scalar_select %p472, %s25, 1
        %s474 = smul.addr %s473, 2
        %s475 = scalar_lea.vmem %s1, %s474
      $region72: #{fft_block_forward.2} parent=63 // pred_fallthru
        _
      // Predicated region
      $region73: #{fft_block_forward.2} parent=63 // pred_check
        %p476 = pneg %p97
      $region74: #{fft_block_forward.2} parent=63 // pred_check_branch
        %478 = sbr.rel (%p476) target = $region76
      $region75: #{fft_block_forward.2} parent=63 // pred_region
        %p479 = scmp.lt.s32.totalorder %s25, 1
        %s480 = scalar_select %p479, %s25, 1
        %s481 = smul.addr %s480, 2
        %s482 = scalar_lea.vmem %s2, %s481
      $region76: #{fft_block_forward.2} parent=63 // pred_fallthru
        _
    $region64: #{fft_block_forward.2} parent=5 // pred_fallthru
      _
    %p483 = scmp.le.s32.totalorder 1, %s25
    %p484 = scmp.lt.s32.totalorder %s25, 3
    %p485 = pnand %p483, %p484
    %p486 = pneg %p485
    // Predicated region
    $region77: #{fft_block_forward.2} parent=5 // pred_check
      _
    $region78: #{fft_block_forward.2} parent=5 // pred_check_branch
      %488 = sbr.rel (%p485) target = $region80
    $region79: #{fft_block_forward.2} parent=5 // pred_region
      %s489 = ssub.s32 %s25, 1
      %p490 = scmp.lt.s32.totalorder %s30, 1
      %s491 = scalar_select %p490, %s30, 1
      %s492 = smul.addr %s491, 2
      %s493 = scalar_lea.vmem %s0, %s492
      %p494 = pneg %p51
      %p495 = pneg %p48
      %p496 = scmp.lt.s32.totalorder %s30, 1
      %s497 = scalar_select %p496, %s30, 1
      %s498 = smul.addr %s497, 2
      %s499 = scalar_lea.vmem %s1, %s498
      %p500 = pneg %p77
      %p501 = pneg %p74
      %p502 = scmp.lt.s32.totalorder %s30, 1
      %s503 = scalar_select %p502, %s30, 1
      %s504 = smul.addr %s503, 2
      %s505 = scalar_lea.vmem %s2, %s504
      %p506 = pneg %p103
      %p507 = pneg %p100
      %p508 = pneg %p124
      %p509 = pneg %p121
      %p510 = pneg %p145
      %p511 = pneg %p142
      %p512 = pneg %p166
      %p513 = pneg %p163
      %p514 = pneg %p187
      %p515 = pneg %p184
      %p516 = pneg %p208
      %p517 = pneg %p205
      %p518 = pneg %p229
      %p519 = pneg %p226
      %p520 = pneg %p250
      %p521 = pneg %p247
      %p522 = pneg %p271
      %p523 = pneg %p268
      %p524 = pneg %p292
      %p525 = pneg %p289
      %p526 = pneg %p313
      %p527 = pneg %p310
      %p528 = pneg %p334
      %p529 = pneg %p331
      %p530 = pneg %p355
      %p531 = pneg %p352
      %p532 = pneg %p381
      %p533 = pneg %p378
      %p534 = scmp.lt.s32.totalorder %s30, 1
      %s535 = scalar_select %p534, %s30, 1
      %s536 = smul.addr %s535, 2
      %s537 = smul.addr %s536, 2
      %s538 = scalar_lea.vmem %s15, %s537
      %p539 = pneg %p407
      %p540 = pneg %p404
      %p541 = scmp.lt.s32.totalorder %s30, 1
      %s542 = scalar_select %p541, %s30, 1
      %s543 = smul.addr %s542, 2
      %s544 = scalar_lea.vmem %s16, %s543
      %p545 = scmp.lt.s32.totalorder %s30, 1
      %s546 = scalar_select %p545, %s30, 1
      %s547 = smul.addr %s546, 2
      %s548 = scalar_lea.vmem %s0, %s547
      %p549 = scmp.lt.s32.totalorder %s30, 1
      %s550 = scalar_select %p549, %s30, 1
      %s551 = smul.addr %s550, 2
      %s552 = scalar_lea.vmem %s1, %s551
      %p553 = scmp.lt.s32.totalorder %s30, 1
      %s554 = scalar_select %p553, %s30, 1
      %s555 = smul.addr %s554, 2
      %s556 = scalar_lea.vmem %s2, %s555
      %p557 = scmp.lt.s32.totalorder %s30, 1
      %s558 = scalar_select %p557, %s30, 1
      %s559 = smul.addr %s558, 2
      %s560 = smul.addr %s559, 2
      %s561 = scalar_lea.vmem %s15, %s560
      %p562 = scmp.lt.s32.totalorder %s30, 1
      %s563 = scalar_select %p562, %s30, 1
      %s564 = smul.addr %s563, 2
      %s565 = scalar_lea.vmem %s16, %s564
      %v566 = vld [vmem:[%s548] sm:$0x3]
      %v567 = vld [vmem:[%s552] sm:$0x3]
      %vm568 = vcmask 138240
      %569 = vst.msk [vmem:[#allocation2] sm:$0xff] %vm568, 0.0
      %570 = vst.msk [vmem:[#allocation2 + $0x10] sm:$0xff] %vm568, 0.0
      %vm571 = vcmask 408840
      %572 = vst.msk [vmem:[#allocation2 + $0x8] sm:$0xff] %vm571, 0.0
      %573 = vst.msk [vmem:[#allocation2 + $0x18] sm:$0xff] %vm571, 0.0
      %v574 = vlaneseq
      %v575 = vand.u32 %v574, 127
      %v576 = vadd.s32 %v575, 128
      %vm577 = vcmp.lt.s32.totalorder %v575, 0
      %v578 = vsub.s32 0, %v575
      %v579 = vsel %vm577, %v578, %v575
      %v580 = vshrl.u32 %v579, 4
      %v581 = vand.u32 %v579, 15
      %v582 = vsub.s32 0, %v581
      %v583 = vsel %vm577, %v582, %v581
      %vm584 = vcmp.lt.s32.totalorder %v576, 0
      %v585 = vsub.s32 0, %v576
      %v586 = vsel %vm584, %v585, %v576
      %v587 = vshrl.u32 %v586, 4
      %v588 = vand.u32 %v586, 15
      %v589 = vsub.s32 0, %v588
      %v590 = vsel %vm584, %v589, %v588
      %vm591 = vcmp.ne.s32.totalorder %v583, 0
      %vm592 = vcmp.ne.s32.totalorder %v590, 0
      %vm593 = vcmp.lt.s32.totalorder %v583, 0
      %vm594 = vcmp.lt.s32.totalorder %v590, 0
      %vm595 = vmand %vm593, %vm591
      %vm596 = vmand %vm594, %vm592
      %v597 = vadd.s32 %v583, 16
      %v598 = vadd.s32 %v590, 16
      %v599 = vsel %vm595, %v597, %v583
      %v600 = vsel %vm596, %v598, %v590
      %vm601 = vcmp.ge.s32.totalorder %v599, 1
      %vm602 = vcmp.ge.s32.totalorder %v600, 1
      %vm603 = vcmp.le.s32.totalorder %v599, 14
      %vm604 = vcmp.le.s32.totalorder %v600, 14
      %606 = vrot.lane.b32.xlu0 %v566, 17
      %v607 = vpop.permute.xlu0 %606
      %v608 = vrot.slane %v607, 7
      %v609 = vsel %vm568, %v608, %v607
      %v611 = vlaneseq
      %vm612 = vcmp.ge.s32.totalorder %v611, 17
      %vm613 = vcmp.lt.s32.totalorder %v611, 161
      %vm614 = vmand %vm612, %vm613
      %615 = vst.msk [vmem:[#allocation2] ss:$8 sm:$0x3] %vm614, %v609
      %616 = vst.msk [vmem:[#allocation2] ss:$8 sm:$0x0] %vm614, %v609
      %618 = vrot.lane.b32.xlu0 %v567, 17
      %v619 = vpop.permute.xlu0 %618
      %v620 = vrot.slane %v619, 7
      %v621 = vsel %vm568, %v620, %v619
      %s623 = scalar_lea.vmem [#allocation2], 1
      %624 = vst.msk [vmem:[%s623] ss:$8 sm:$0x3] %vm614, %v621
      %625 = vst.msk [vmem:[%s623] ss:$8 sm:$0x0] %vm614, %v621
      %v626 = vld [vmem:[#allocation2] sm:$0x3]
      %v627 = vld [vmem:[#allocation2 + $0x8] sm:$0x3]
      %v628 = vsel %vm601, 1, 0
      %v629 = vsel %vm602, 1, 0
      %vm630 = vcmp.eq.s32.totalorder %v628, 1
      %vm631 = vcmp.eq.s32.totalorder %v629, 1
      %v632 = vsel %vm630, %v626, 0.0
      %v633 = vsel %vm631, %v627, 0.0
      %v634 = vld [vmem:[%s3] sm:$0xff]
      %v635 = vld [vmem:[%s3 + $0x8] sm:$0xff]
      %637 = vset.pattern.permute.xlu0 0
      %638 = vperm.xlu0 %637, %v634
      %v639 = vpop.permute.xlu0 %638
      %642 = vset.pattern.permute.xlu0 0
      %643 = vperm.xlu0 %642, %v635
      %v644 = vpop.permute.xlu0 %643
      %v646 = vlaneseq
      %v647 = vshrl.u32 %v646, 7
      %v648 = vsub.s32 0, %v647
      %v649 = vrot.slane %v632, %v648
      %v650 = vlaneseq
      %v651 = vshrl.u32 %v650, 7
      %v652 = vsub.s32 0, %v651
      %v653 = vrot.slane %v633, %v652
      %v654 = vmul.f32 %v639, %v649
      %v655 = vmul.f32 %v639, %v653
      %v656 = vmul.f32 %v644, %v649
      %v657 = vmul.f32 %v644, %v653
      %658 = vset.pattern.permute.xlu0 1
      %659 = vperm.xlu0 %658, %v634
      %v660 = vpop.permute.xlu0 %659
      %662 = vset.pattern.permute.xlu0 1
      %663 = vperm.xlu0 %662, %v635
      %v664 = vpop.permute.xlu0 %663
      %v666 = vlaneseq
      %v667 = vshrl.u32 %v666, 7
      %v668 = vsub.s32 1, %v667
      %v669 = vrot.slane %v632, %v668
      %v670 = vlaneseq
      %v671 = vshrl.u32 %v670, 7
      %v672 = vsub.s32 1, %v671
      %v673 = vrot.slane %v633, %v672
      %v674 = vmul.f32 %v660, %v669
      %v675 = vmul.f32 %v660, %v673
      %v676 = vmul.f32 %v664, %v669
      %v677 = vmul.f32 %v664, %v673
      %v678 = vadd.f32 %v654, %v674
      %v679 = vadd.f32 %v655, %v675
      %v680 = vadd.f32 %v656, %v676
      %v681 = vadd.f32 %v657, %v677
      %s682 = scalar_lea.vmem %s3, 16
      %v683 = vld [vmem:[%s682] sm:$0xff]
      %v684 = vld [vmem:[%s682 + $0x8] sm:$0xff]
      %686 = vset.pattern.permute.xlu0 0
      %687 = vperm.xlu0 %686, %v683
      %v688 = vpop.permute.xlu0 %687
      %691 = vset.pattern.permute.xlu0 0
      %692 = vperm.xlu0 %691, %v684
      %v693 = vpop.permute.xlu0 %692
      %v695 = vlaneseq
      %v696 = vshrl.u32 %v695, 7
      %v697 = vsub.s32 0, %v696
      %v698 = vrot.slane %v626, %v697
      %v699 = vlaneseq
      %v700 = vshrl.u32 %v699, 7
      %v701 = vsub.s32 0, %v700
      %v702 = vrot.slane %v627, %v701
      %v703 = vmul.f32 %v688, %v698
      %v704 = vmul.f32 %v688, %v702
      %v705 = vmul.f32 %v693, %v698
      %v706 = vmul.f32 %v693, %v702
      %711 = vrot.lane.b32.xlu0 %v703, 127
      %v712 = vpop.permute.xlu0 %711
      %713 = vrot.lane.b32.xlu0 %v704, 127
      %v714 = vpop.permute.xlu0 %713
      %715 = vrot.lane.b32.xlu0 %v705, 127
      %v716 = vpop.permute.xlu0 %715
      %717 = vrot.lane.b32.xlu0 %v706, 127
      %v718 = vpop.permute.xlu0 %717
      %vm719 = vcmask 1039360
      %v720 = vsel %vm719, %v712, %v714
      %v721 = vsel %vm719, %v716, %v718
      %v726 = vadd.f32 %v678, %v720
      %v727 = vadd.f32 %v679, %v714
      %v728 = vadd.f32 %v680, %v721
      %v729 = vadd.f32 %v681, %v718
      %730 = vset.pattern.permute.xlu0 1
      %731 = vperm.xlu0 %730, %v683
      %v732 = vpop.permute.xlu0 %731
      %734 = vset.pattern.permute.xlu0 1
      %735 = vperm.xlu0 %734, %v684
      %v736 = vpop.permute.xlu0 %735
      %v738 = vlaneseq
      %v739 = vshrl.u32 %v738, 7
      %v740 = vsub.s32 1, %v739
      %v741 = vrot.slane %v626, %v740
      %v742 = vlaneseq
      %v743 = vshrl.u32 %v742, 7
      %v744 = vsub.s32 1, %v743
      %v745 = vrot.slane %v627, %v744
      %v746 = vmul.f32 %v732, %v741
      %v747 = vmul.f32 %v732, %v745
      %v748 = vmul.f32 %v736, %v741
      %v749 = vmul.f32 %v736, %v745
      %754 = vrot.lane.b32.xlu0 %v746, 127
      %v755 = vpop.permute.xlu0 %754
      %756 = vrot.lane.b32.xlu0 %v747, 127
      %v757 = vpop.permute.xlu0 %756
      %758 = vrot.lane.b32.xlu0 %v748, 127
      %v759 = vpop.permute.xlu0 %758
      %760 = vrot.lane.b32.xlu0 %v749, 127
      %v761 = vpop.permute.xlu0 %760
      %v762 = vsel %vm719, %v755, %v757
      %v763 = vsel %vm719, %v759, %v761
      %v768 = vadd.f32 %v726, %v762
      %v769 = vadd.f32 %v727, %v757
      %v770 = vadd.f32 %v728, %v763
      %v771 = vadd.f32 %v729, %v761
      %v772 = vsel %vm603, 1, 0
      %v773 = vsel %vm604, 1, 0
      %vm774 = vcmp.eq.s32.totalorder %v772, 1
      %vm775 = vcmp.eq.s32.totalorder %v773, 1
      %778 = vrot.lane.b32.xlu0 %v626, 126
      %v779 = vpop.permute.xlu0 %778
      %780 = vrot.lane.b32.xlu0 %v627, 126
      %v781 = vpop.permute.xlu0 %780
      %vm782 = vcmask 1031168
      %v783 = vsel %vm782, %v779, %v781
      %v786 = vsel %vm774, %v783, 0.0
      %v787 = vsel %vm775, %v781, 0.0
      %s788 = scalar_lea.vmem %s3, 32
      %v789 = vld [vmem:[%s788] sm:$0xff]
      %v790 = vld [vmem:[%s788 + $0x8] sm:$0xff]
      %792 = vset.pattern.permute.xlu0 0
      %793 = vperm.xlu0 %792, %v789
      %v794 = vpop.permute.xlu0 %793
      %797 = vset.pattern.permute.xlu0 0
      %798 = vperm.xlu0 %797, %v790
      %v799 = vpop.permute.xlu0 %798
      %v801 = vlaneseq
      %v802 = vshrl.u32 %v801, 7
      %v803 = vsub.s32 0, %v802
      %v804 = vrot.slane %v786, %v803
      %v805 = vlaneseq
      %v806 = vshrl.u32 %v805, 7
      %v807 = vsub.s32 0, %v806
      %v808 = vrot.slane %v787, %v807
      %v809 = vmul.f32 %v794, %v804
      %v810 = vmul.f32 %v794, %v808
      %v811 = vmul.f32 %v799, %v804
      %v812 = vmul.f32 %v799, %v808
      %v813 = vadd.f32 %v768, %v809
      %v814 = vadd.f32 %v769, %v810
      %v815 = vadd.f32 %v770, %v811
      %v816 = vadd.f32 %v771, %v812
      %817 = vset.pattern.permute.xlu0 1
      %818 = vperm.xlu0 %817, %v789
      %v819 = vpop.permute.xlu0 %818
      %821 = vset.pattern.permute.xlu0 1
      %822 = vperm.xlu0 %821, %v790
      %v823 = vpop.permute.xlu0 %822
      %v825 = vlaneseq
      %v826 = vshrl.u32 %v825, 7
      %v827 = vsub.s32 1, %v826
      %v828 = vrot.slane %v786, %v827
      %v829 = vlaneseq
      %v830 = vshrl.u32 %v829, 7
      %v831 = vsub.s32 1, %v830
      %v832 = vrot.slane %v787, %v831
      %v833 = vmul.f32 %v819, %v828
      %v834 = vmul.f32 %v819, %v832
      %v835 = vmul.f32 %v823, %v828
      %v836 = vmul.f32 %v823, %v832
      %v837 = vadd.f32 %v813, %v833
      %v838 = vadd.f32 %v814, %v834
      %v839 = vadd.f32 %v815, %v835
      %v840 = vadd.f32 %v816, %v836
      %841 = vrot.lane.b32.xlu0 %v626, 112
      %v842 = vpop.permute.xlu0 %841
      %843 = vrot.lane.b32.xlu0 %v627, 112
      %v844 = vpop.permute.xlu0 %843
      %vm845 = vcmask 916480
      %v846 = vsel %vm845, %v842, %v844
      %v849 = vsel %vm630, %v846, 0.0
      %v850 = vsel %vm631, %v844, 0.0
      %s851 = scalar_lea.vmem %s3, 48
      %v852 = vld [vmem:[%s851] sm:$0xff]
      %v853 = vld [vmem:[%s851 + $0x8] sm:$0xff]
      %855 = vset.pattern.permute.xlu0 0
      %856 = vperm.xlu0 %855, %v852
      %v857 = vpop.permute.xlu0 %856
      %860 = vset.pattern.permute.xlu0 0
      %861 = vperm.xlu0 %860, %v853
      %v862 = vpop.permute.xlu0 %861
      %v864 = vlaneseq
      %v865 = vshrl.u32 %v864, 7
      %v866 = vsub.s32 0, %v865
      %v867 = vrot.slane %v849, %v866
      %v868 = vlaneseq
      %v869 = vshrl.u32 %v868, 7
      %v870 = vsub.s32 0, %v869
      %v871 = vrot.slane %v850, %v870
      %v872 = vmul.f32 %v857, %v867
      %v873 = vmul.f32 %v857, %v871
      %v874 = vmul.f32 %v862, %v867
      %v875 = vmul.f32 %v862, %v871
      %v876 = vadd.f32 %v837, %v872
      %v877 = vadd.f32 %v838, %v873
      %v878 = vadd.f32 %v839, %v874
      %v879 = vadd.f32 %v840, %v875
      %880 = vset.pattern.permute.xlu0 1
      %881 = vperm.xlu0 %880, %v852
      %v882 = vpop.permute.xlu0 %881
      %884 = vset.pattern.permute.xlu0 1
      %885 = vperm.xlu0 %884, %v853
      %v886 = vpop.permute.xlu0 %885
      %v888 = vlaneseq
      %v889 = vshrl.u32 %v888, 7
      %v890 = vsub.s32 1, %v889
      %v891 = vrot.slane %v849, %v890
      %v892 = vlaneseq
      %v893 = vshrl.u32 %v892, 7
      %v894 = vsub.s32 1, %v893
      %v895 = vrot.slane %v850, %v894
      %v896 = vmul.f32 %v882, %v891
      %v897 = vmul.f32 %v882, %v895
      %v898 = vmul.f32 %v886, %v891
      %v899 = vmul.f32 %v886, %v895
      %v900 = vadd.f32 %v876, %v896
      %v901 = vadd.f32 %v877, %v897
      %v902 = vadd.f32 %v878, %v898
      %v903 = vadd.f32 %v879, %v899
      %s904 = scalar_lea.vmem %s3, 64
      %v905 = vld [vmem:[%s904] sm:$0xff]
      %v906 = vld [vmem:[%s904 + $0x8] sm:$0xff]
      %908 = vset.pattern.permute.xlu0 0
      %909 = vperm.xlu0 %908, %v905
      %v910 = vpop.permute.xlu0 %909
      %913 = vset.pattern.permute.xlu0 0
      %914 = vperm.xlu0 %913, %v906
      %v915 = vpop.permute.xlu0 %914
      %v917 = vmul.f32 %v910, %v698
      %v918 = vmul.f32 %v910, %v702
      %v919 = vmul.f32 %v915, %v698
      %v920 = vmul.f32 %v915, %v702
      %925 = vrot.lane.b32.xlu0 %v917, 111
      %v926 = vpop.permute.xlu0 %925
      %927 = vrot.lane.b32.xlu0 %v918, 111
      %v928 = vpop.permute.xlu0 %927
      %929 = vrot.lane.b32.xlu0 %v919, 111
      %v930 = vpop.permute.xlu0 %929
      %931 = vrot.lane.b32.xlu0 %v920, 111
      %v932 = vpop.permute.xlu0 %931
      %vm933 = vcmask 908288
      %v934 = vsel %vm933, %v926, %v928
      %v935 = vsel %vm933, %v930, %v932
      %v940 = vadd.f32 %v900, %v934
      %v941 = vadd.f32 %v901, %v928
      %v942 = vadd.f32 %v902, %v935
      %v943 = vadd.f32 %v903, %v932
      %944 = vset.pattern.permute.xlu0 1
      %945 = vperm.xlu0 %944, %v905
      %v946 = vpop.permute.xlu0 %945
      %948 = vset.pattern.permute.xlu0 1
      %949 = vperm.xlu0 %948, %v906
      %v950 = vpop.permute.xlu0 %949
      %v952 = vmul.f32 %v946, %v741
      %v953 = vmul.f32 %v946, %v745
      %v954 = vmul.f32 %v950, %v741
      %v955 = vmul.f32 %v950, %v745
      %960 = vrot.lane.b32.xlu0 %v952, 111
      %v961 = vpop.permute.xlu0 %960
      %962 = vrot.lane.b32.xlu0 %v953, 111
      %v963 = vpop.permute.xlu0 %962
      %964 = vrot.lane.b32.xlu0 %v954, 111
      %v965 = vpop.permute.xlu0 %964
      %966 = vrot.lane.b32.xlu0 %v955, 111
      %v967 = vpop.permute.xlu0 %966
      %v968 = vsel %vm933, %v961, %v963
      %v969 = vsel %vm933, %v965, %v967
      %v974 = vadd.f32 %v940, %v968
      %v975 = vadd.f32 %v941, %v963
      %v976 = vadd.f32 %v942, %v969
      %v977 = vadd.f32 %v943, %v967
      %978 = vrot.lane.b32.xlu0 %v626, 110
      %v979 = vpop.permute.xlu0 %978
      %980 = vrot.lane.b32.xlu0 %v627, 110
      %v981 = vpop.permute.xlu0 %980
      %vm982 = vcmask 900096
      %v983 = vsel %vm982, %v979, %v981
      %v986 = vsel %vm774, %v983, 0.0
      %v987 = vsel %vm775, %v981, 0.0
      %s988 = scalar_lea.vmem %s3, 80
      %v989 = vld [vmem:[%s988] sm:$0xff]
      %v990 = vld [vmem:[%s988 + $0x8] sm:$0xff]
      %992 = vset.pattern.permute.xlu0 0
      %993 = vperm.xlu0 %992, %v989
      %v994 = vpop.permute.xlu0 %993
      %997 = vset.pattern.permute.xlu0 0
      %998 = vperm.xlu0 %997, %v990
      %v999 = vpop.permute.xlu0 %998
      %v1001 = vlaneseq
      %v1002 = vshrl.u32 %v1001, 7
      %v1003 = vsub.s32 0, %v1002
      %v1004 = vrot.slane %v986, %v1003
      %v1005 = vlaneseq
      %v1006 = vshrl.u32 %v1005, 7
      %v1007 = vsub.s32 0, %v1006
      %v1008 = vrot.slane %v987, %v1007
      %v1009 = vmul.f32 %v994, %v1004
      %v1010 = vmul.f32 %v994, %v1008
      %v1011 = vmul.f32 %v999, %v1004
      %v1012 = vmul.f32 %v999, %v1008
      %v1013 = vadd.f32 %v974, %v1009
      %v1014 = vadd.f32 %v975, %v1010
      %v1015 = vadd.f32 %v976, %v1011
      %v1016 = vadd.f32 %v977, %v1012
      %1017 = vset.pattern.permute.xlu0 1
      %1018 = vperm.xlu0 %1017, %v989
      %v1019 = vpop.permute.xlu0 %1018
      %1021 = vset.pattern.permute.xlu0 1
      %1022 = vperm.xlu0 %1021, %v990
      %v1023 = vpop.permute.xlu0 %1022
      %v1025 = vlaneseq
      %v1026 = vshrl.u32 %v1025, 7
      %v1027 = vsub.s32 1, %v1026
      %v1028 = vrot.slane %v986, %v1027
      %v1029 = vlaneseq
      %v1030 = vshrl.u32 %v1029, 7
      %v1031 = vsub.s32 1, %v1030
      %v1032 = vrot.slane %v987, %v1031
      %v1033 = vmul.f32 %v1019, %v1028
      %v1034 = vmul.f32 %v1019, %v1032
      %v1035 = vmul.f32 %v1023, %v1028
      %v1036 = vmul.f32 %v1023, %v1032
      %v1037 = vadd.f32 %v1013, %v1033
      %v1038 = vadd.f32 %v1014, %v1034
      %v1039 = vadd.f32 %v1015, %v1035
      %v1040 = vadd.f32 %v1016, %v1036
      %1041 = vrot.lane.b32.xlu0 %v626, 96
      %v1042 = vpop.permute.xlu0 %1041
      %1043 = vrot.lane.b32.xlu0 %v627, 96
      %v1044 = vpop.permute.xlu0 %1043
      %vm1045 = vcmask 785408
      %v1046 = vsel %vm1045, %v1042, %v1044
      %v1049 = vsel %vm630, %v1046, 0.0
      %v1050 = vsel %vm631, %v1044, 0.0
      %s1051 = scalar_lea.vmem %s3, 96
      %v1052 = vld [vmem:[%s1051] sm:$0xff]
      %v1053 = vld [vmem:[%s1051 + $0x8] sm:$0xff]
      %1055 = vset.pattern.permute.xlu0 0
      %1056 = vperm.xlu0 %1055, %v1052
      %v1057 = vpop.permute.xlu0 %1056
      %1060 = vset.pattern.permute.xlu0 0
      %1061 = vperm.xlu0 %1060, %v1053
      %v1062 = vpop.permute.xlu0 %1061
      %v1064 = vlaneseq
      %v1065 = vshrl.u32 %v1064, 7
      %v1066 = vsub.s32 0, %v1065
      %v1067 = vrot.slane %v1049, %v1066
      %v1068 = vlaneseq
      %v1069 = vshrl.u32 %v1068, 7
      %v1070 = vsub.s32 0, %v1069
      %v1071 = vrot.slane %v1050, %v1070
      %v1072 = vmul.f32 %v1057, %v1067
      %v1073 = vmul.f32 %v1057, %v1071
      %v1074 = vmul.f32 %v1062, %v1067
      %v1075 = vmul.f32 %v1062, %v1071
      %v1076 = vadd.f32 %v1037, %v1072
      %v1077 = vadd.f32 %v1038, %v1073
      %v1078 = vadd.f32 %v1039, %v1074
      %v1079 = vadd.f32 %v1040, %v1075
      %1080 = vset.pattern.permute.xlu0 1
      %1081 = vperm.xlu0 %1080, %v1052
      %v1082 = vpop.permute.xlu0 %1081
      %1084 = vset.pattern.permute.xlu0 1
      %1085 = vperm.xlu0 %1084, %v1053
      %v1086 = vpop.permute.xlu0 %1085
      %v1088 = vlaneseq
      %v1089 = vshrl.u32 %v1088, 7
      %v1090 = vsub.s32 1, %v1089
      %v1091 = vrot.slane %v1049, %v1090
      %v1092 = vlaneseq
      %v1093 = vshrl.u32 %v1092, 7
      %v1094 = vsub.s32 1, %v1093
      %v1095 = vrot.slane %v1050, %v1094
      %v1096 = vmul.f32 %v1082, %v1091
      %v1097 = vmul.f32 %v1082, %v1095
      %v1098 = vmul.f32 %v1086, %v1091
      %v1099 = vmul.f32 %v1086, %v1095
      %v1100 = vadd.f32 %v1076, %v1096
      %v1101 = vadd.f32 %v1077, %v1097
      %v1102 = vadd.f32 %v1078, %v1098
      %v1103 = vadd.f32 %v1079, %v1099
      %s1104 = scalar_lea.vmem %s3, 112
      %v1105 = vld [vmem:[%s1104] sm:$0xff]
      %v1106 = vld [vmem:[%s1104 + $0x8] sm:$0xff]
      %1108 = vset.pattern.permute.xlu0 0
      %1109 = vperm.xlu0 %1108, %v1105
      %v1110 = vpop.permute.xlu0 %1109
      %1113 = vset.pattern.permute.xlu0 0
      %1114 = vperm.xlu0 %1113, %v1106
      %v1115 = vpop.permute.xlu0 %1114
      %v1117 = vmul.f32 %v1110, %v698
      %v1118 = vmul.f32 %v1110, %v702
      %v1119 = vmul.f32 %v1115, %v698
      %v1120 = vmul.f32 %v1115, %v702
      %1125 = vrot.lane.b32.xlu0 %v1117, 95
      %v1126 = vpop.permute.xlu0 %1125
      %1127 = vrot.lane.b32.xlu0 %v1118, 95
      %v1128 = vpop.permute.xlu0 %1127
      %1129 = vrot.lane.b32.xlu0 %v1119, 95
      %v1130 = vpop.permute.xlu0 %1129
      %1131 = vrot.lane.b32.xlu0 %v1120, 95
      %v1132 = vpop.permute.xlu0 %1131
      %vm1133 = vcmask 777216
      %v1134 = vsel %vm1133, %v1126, %v1128
      %v1135 = vsel %vm1133, %v1130, %v1132
      %v1140 = vadd.f32 %v1100, %v1134
      %v1141 = vadd.f32 %v1101, %v1128
      %v1142 = vadd.f32 %v1102, %v1135
      %v1143 = vadd.f32 %v1103, %v1132
      %1144 = vset.pattern.permute.xlu0 1
      %1145 = vperm.xlu0 %1144, %v1105
      %v1146 = vpop.permute.xlu0 %1145
      %1148 = vset.pattern.permute.xlu0 1
      %1149 = vperm.xlu0 %1148, %v1106
      %v1150 = vpop.permute.xlu0 %1149
      %v1152 = vmul.f32 %v1146, %v741
      %v1153 = vmul.f32 %v1146, %v745
      %v1154 = vmul.f32 %v1150, %v741
      %v1155 = vmul.f32 %v1150, %v745
      %1160 = vrot.lane.b32.xlu0 %v1152, 95
      %v1161 = vpop.permute.xlu0 %1160
      %1162 = vrot.lane.b32.xlu0 %v1153, 95
      %v1163 = vpop.permute.xlu0 %1162
      %1164 = vrot.lane.b32.xlu0 %v1154, 95
      %v1165 = vpop.permute.xlu0 %1164
      %1166 = vrot.lane.b32.xlu0 %v1155, 95
      %v1167 = vpop.permute.xlu0 %1166
      %v1168 = vsel %vm1133, %v1161, %v1163
      %v1169 = vsel %vm1133, %v1165, %v1167
      %v1174 = vadd.f32 %v1140, %v1168
      %v1175 = vadd.f32 %v1141, %v1163
      %v1176 = vadd.f32 %v1142, %v1169
      %v1177 = vadd.f32 %v1143, %v1167
      %1178 = vrot.lane.b32.xlu0 %v626, 94
      %v1179 = vpop.permute.xlu0 %1178
      %1180 = vrot.lane.b32.xlu0 %v627, 94
      %v1181 = vpop.permute.xlu0 %1180
      %vm1182 = vcmask 769024
      %v1183 = vsel %vm1182, %v1179, %v1181
      %v1186 = vsel %vm774, %v1183, 0.0
      %v1187 = vsel %vm775, %v1181, 0.0
      %s1188 = scalar_lea.vmem %s3, 128
      %v1189 = vld [vmem:[%s1188] sm:$0xff]
      %v1190 = vld [vmem:[%s1188 + $0x8] sm:$0xff]
      %1192 = vset.pattern.permute.xlu0 0
      %1193 = vperm.xlu0 %1192, %v1189
      %v1194 = vpop.permute.xlu0 %1193
      %1197 = vset.pattern.permute.xlu0 0
      %1198 = vperm.xlu0 %1197, %v1190
      %v1199 = vpop.permute.xlu0 %1198
      %v1201 = vlaneseq
      %v1202 = vshrl.u32 %v1201, 7
      %v1203 = vsub.s32 0, %v1202
      %v1204 = vrot.slane %v1186, %v1203
      %v1205 = vlaneseq
      %v1206 = vshrl.u32 %v1205, 7
      %v1207 = vsub.s32 0, %v1206
      %v1208 = vrot.slane %v1187, %v1207
      %v1209 = vmul.f32 %v1194, %v1204
      %v1210 = vmul.f32 %v1194, %v1208
      %v1211 = vmul.f32 %v1199, %v1204
      %v1212 = vmul.f32 %v1199, %v1208
      %v1213 = vadd.f32 %v1174, %v1209
      %v1214 = vadd.f32 %v1175, %v1210
      %v1215 = vadd.f32 %v1176, %v1211
      %v1216 = vadd.f32 %v1177, %v1212
      %1217 = vset.pattern.permute.xlu0 1
      %1218 = vperm.xlu0 %1217, %v1189
      %v1219 = vpop.permute.xlu0 %1218
      %1221 = vset.pattern.permute.xlu0 1
      %1222 = vperm.xlu0 %1221, %v1190
      %v1223 = vpop.permute.xlu0 %1222
      %v1225 = vlaneseq
      %v1226 = vshrl.u32 %v1225, 7
      %v1227 = vsub.s32 1, %v1226
      %v1228 = vrot.slane %v1186, %v1227
      %v1229 = vlaneseq
      %v1230 = vshrl.u32 %v1229, 7
      %v1231 = vsub.s32 1, %v1230
      %v1232 = vrot.slane %v1187, %v1231
      %v1233 = vmul.f32 %v1219, %v1228
      %v1234 = vmul.f32 %v1219, %v1232
      %v1235 = vmul.f32 %v1223, %v1228
      %v1236 = vmul.f32 %v1223, %v1232
      %v1237 = vadd.f32 %v1213, %v1233
      %v1238 = vadd.f32 %v1214, %v1234
      %v1239 = vadd.f32 %v1215, %v1235
      %v1240 = vadd.f32 %v1216, %v1236
      %v1241 = vld [vmem:[%s4] sm:$0xff]
      %v1242 = vld [vmem:[%s4 + $0x8] sm:$0xff]
      %1244 = vset.pattern.permute.xlu0 0
      %1245 = vperm.xlu0 %1244, %v1241
      %v1246 = vpop.permute.xlu0 %1245
      %1249 = vset.pattern.permute.xlu0 0
      %1250 = vperm.xlu0 %1249, %v1242
      %v1251 = vpop.permute.xlu0 %1250
      %v1253 = vadd.f32 %v1237, %v1246
      %v1254 = vadd.f32 %v1238, %v1246
      %v1255 = vadd.f32 %v1239, %v1251
      %v1256 = vadd.f32 %v1240, %v1251
      %v1257 = vmax.f32 %v1253, 0.0
      %v1258 = vmax.f32 %v1254, 0.0
      %v1259 = vmax.f32 %v1255, 0.0
      %v1260 = vmax.f32 %v1256, 0.0
      %1265 = vrot.lane.b32.xlu0 %v1257, 17
      %v1266 = vpop.permute.xlu0 %1265
      %1267 = vrot.lane.b32.xlu0 %v1258, 17
      %v1268 = vpop.permute.xlu0 %1267
      %1269 = vrot.lane.b32.xlu0 %v1259, 17
      %v1270 = vpop.permute.xlu0 %1269
      %1271 = vrot.lane.b32.xlu0 %v1260, 17
      %v1272 = vpop.permute.xlu0 %1271
      %v1273 = vsel %vm568, %v1266, %v1268
      %v1274 = vsel %vm568, %v1270, %v1272
      %vm1279 = vcmask 1047688
      %1280 = vst.msk [vmem:[#allocation2] sm:$0xff] %vm1279, %v1266
      %vm1281 = vcmask 269312
      %1282 = vst.msk [vmem:[#allocation2 + $0x8] sm:$0xff] %vm1281, %v1273
      %1283 = vst.msk [vmem:[#allocation2 + $0x10] sm:$0xff] %vm1279, %v1270
      %1284 = vst.msk [vmem:[#allocation2 + $0x18] sm:$0xff] %vm1281, %v1274
      %v1285 = vld [vmem:[#allocation2] sm:$0xff]
      %v1286 = vld [vmem:[#allocation2 + $0x8] sm:$0xff]
      %v1287 = vld [vmem:[#allocation2 + $0x10] sm:$0xff]
      %v1288 = vld [vmem:[#allocation2 + $0x18] sm:$0xff]
      %v1289 = vsel %vm630, %v1285, 0.0
      %v1290 = vsel %vm631, %v1286, 0.0
      %v1291 = vsel %vm630, %v1287, 0.0
      %v1292 = vsel %vm631, %v1288, 0.0
      %v1293 = vld [vmem:[%s5] sm:$0xff]
      %v1294 = vld [vmem:[%s5 + $0x8] sm:$0xff]
      %s1295 = scalar_lea.vmem %s5, 16
      %v1296 = vld [vmem:[%s1295] sm:$0xff]
      %v1297 = vld [vmem:[%s1295 + $0x8] sm:$0xff]
      %1302 = vrot.lane.b32.xlu0 %v1285, 127
      %v1303 = vpop.permute.xlu0 %1302
      %1304 = vrot.lane.b32.xlu0 %v1286, 127
      %v1305 = vpop.permute.xlu0 %1304
      %1306 = vrot.lane.b32.xlu0 %v1287, 127
      %v1307 = vpop.permute.xlu0 %1306
      %1308 = vrot.lane.b32.xlu0 %v1288, 127
      %v1309 = vpop.permute.xlu0 %1308
      %v1310 = vsel %vm719, %v1303, %v1305
      %v1311 = vsel %vm719, %v1307, %v1309
      %vm1316 = vcmask 130048
      %v1318 = vsel %vm1316, %v1296, 0
      %v1321 = vsel %vm1316, %v1297, 0
      %1323 = vmatprep.subr.mxu0 %v1305
      %1324 = vmatpush1.msra.mxu0 %v1310
      %1325 = vmatprep.subr.mxu0 %v1309
      %1326 = vmatpush1.msra.mxu0 %v1311
      %1327 = vmatprep.subr.mxu0 0.0
      %1328 = vmatpush1.msra.mxu0 0.0
      %1329 = vmatprep.subr.mxu0 0.0
      %1330 = vmatpush1.msra.mxu0 0.0
      %1331 = vmatprep.subr.mxu0 0.0
      %1332 = vmatpush1.msra.mxu0 0.0
      %1333 = vmatprep.subr.mxu0 0.0
      %1334 = vmatpush1.msra.mxu0 0.0
      %1335 = vmatprep.subr.mxu0 0.0
      %1336 = vmatpush1.msra.mxu0 0.0
      %1337 = vmatprep.subr.mxu0 0.0
      %1338 = vmatpush1.msra.mxu0 0.0
      %1339 = vmatprep.subr.mxu0 0.0
      %1340 = vmatpush1.msra.mxu0 0.0
      %1341 = vmatprep.subr.mxu0 0.0
      %1342 = vmatpush1.msra.mxu0 0.0
      %1343 = vmatprep.subr.mxu0 0.0
      %1344 = vmatpush1.msra.mxu0 0.0
      %1345 = vmatprep.subr.mxu0 0.0
      %1346 = vmatpush1.msra.mxu0 0.0
      %1347 = vmatprep.subr.mxu0 0.0
      %1348 = vmatpush1.msra.mxu0 0.0
      %1349 = vmatprep.subr.mxu0 0.0
      %1350 = vmatpush1.msra.mxu0 0.0
      %1351 = vmatprep.subr.mxu0 0.0
      %1352 = vmatpush1.msra.mxu0 0.0
      %1353 = vmatprep.subr.mxu0 0.0
      %1354 = vmatpush1.msra.mxu0 0.0
      %1355 = vmatprep.subr.mxu0 0.0
      %1356 = vmatpush1.msra.mxu0 0.0
      %1357 = vmatprep.subr.mxu0 0.0
      %1358 = vmatpush1.msra.mxu0 0.0
      %1359 = vmatprep.subr.mxu0 0.0
      %1360 = vmatpush1.msra.mxu0 0.0
      %1361 = vmatprep.subr.mxu0 0.0
      %1362 = vmatpush1.msra.mxu0 0.0
      %1363 = vmatprep.subr.mxu0 0.0
      %1364 = vmatpush1.msra.mxu0 0.0
      %1365 = vmatprep.subr.mxu0 0.0
      %1366 = vmatpush1.msra.mxu0 0.0
      %1367 = vmatprep.subr.mxu0 0.0
      %1368 = vmatpush1.msra.mxu0 0.0
      %1369 = vmatprep.subr.mxu0 0.0
      %1370 = vmatpush1.msra.mxu0 0.0
      %1371 = vmatprep.subr.mxu0 0.0
      %1372 = vmatpush1.msra.mxu0 0.0
      %1373 = vmatprep.subr.mxu0 0.0
      %1374 = vmatpush1.msra.mxu0 0.0
      %1375 = vmatprep.subr.mxu0 0.0
      %1376 = vmatpush1.msra.mxu0 0.0
      %1377 = vmatprep.subr.mxu0 0.0
      %1378 = vmatpush1.msra.mxu0 0.0
      %1379 = vmatprep.subr.mxu0 0.0
      %1380 = vmatpush1.msra.mxu0 0.0
      %1381 = vmatprep.subr.mxu0 0.0
      %1382 = vmatpush1.msra.mxu0 0.0
      %1383 = vmatprep.subr.mxu0 0.0
      %1384 = vmatpush1.msra.mxu0 0.0
      %1385 = vmatprep.subr.mxu0 0.0
      %1386 = vmatpush1.msra.mxu0 0.0
      %1387 = vmatprep.mubr.f32.mxu0 0.0
      %1388 = vmatmul.mubr.f32.gmra.mrb[0].mxu0 %v1318
      %v1389 = vpop.f32.mrb[0].mxu0
      %v1390 = vadd.f32 0.0, %v1389
      %v1391 = vpop.f32.mrb[0].mxu0
      %v1392 = vadd.f32 0.0, %v1391
      %1393 = vmatprep.mubr.f32.mxu0 0.0
      %1394 = vmatmul.mubr.f32.gmra.mrb[0].mxu0 %v1321
      %v1395 = vpop.f32.mrb[0].mxu0
      %v1396 = vadd.f32 0.0, %v1395
      %v1397 = vpop.f32.mrb[0].mxu0
      %v1398 = vadd.f32 0.0, %v1397
      %1399 = vdwg.mxu0
      %v1401 = vsel %vm1316, %v1293, 0
      %v1404 = vsel %vm1316, %v1294, 0
      %1406 = vmatprep.subr.mxu0 %v1290
      %1407 = vmatpush1.msra.mxu0 %v1289
      %1408 = vmatprep.subr.mxu0 %v1292
      %1409 = vmatpush1.msra.mxu0 %v1291
      %1410 = vmatprep.subr.mxu0 0.0
      %1411 = vmatpush1.msra.mxu0 0.0
      %1412 = vmatprep.subr.mxu0 0.0
      %1413 = vmatpush1.msra.mxu0 0.0
      %1414 = vmatprep.subr.mxu0 0.0
      %1415 = vmatpush1.msra.mxu0 0.0
      %1416 = vmatprep.subr.mxu0 0.0
      %1417 = vmatpush1.msra.mxu0 0.0
      %1418 = vmatprep.subr.mxu0 0.0
      %1419 = vmatpush1.msra.mxu0 0.0
      %1420 = vmatprep.subr.mxu0 0.0
      %1421 = vmatpush1.msra.mxu0 0.0
      %1422 = vmatprep.subr.mxu0 0.0
      %1423 = vmatpush1.msra.mxu0 0.0
      %1424 = vmatprep.subr.mxu0 0.0
      %1425 = vmatpush1.msra.mxu0 0.0
      %1426 = vmatprep.subr.mxu0 0.0
      %1427 = vmatpush1.msra.mxu0 0.0
      %1428 = vmatprep.subr.mxu0 0.0
      %1429 = vmatpush1.msra.mxu0 0.0
      %1430 = vmatprep.subr.mxu0 0.0
      %1431 = vmatpush1.msra.mxu0 0.0
      %1432 = vmatprep.subr.mxu0 0.0
      %1433 = vmatpush1.msra.mxu0 0.0
      %1434 = vmatprep.subr.mxu0 0.0
      %1435 = vmatpush1.msra.mxu0 0.0
      %1436 = vmatprep.subr.mxu0 0.0
      %1437 = vmatpush1.msra.mxu0 0.0
      %1438 = vmatprep.subr.mxu0 0.0
      %1439 = vmatpush1.msra.mxu0 0.0
      %1440 = vmatprep.subr.mxu0 0.0
      %1441 = vmatpush1.msra.mxu0 0.0
      %1442 = vmatprep.subr.mxu0 0.0
      %1443 = vmatpush1.msra.mxu0 0.0
      %1444 = vmatprep.subr.mxu0 0.0
      %1445 = vmatpush1.msra.mxu0 0.0
      %1446 = vmatprep.subr.mxu0 0.0
      %1447 = vmatpush1.msra.mxu0 0.0
      %1448 = vmatprep.subr.mxu0 0.0
      %1449 = vmatpush1.msra.mxu0 0.0
      %1450 = vmatprep.subr.mxu0 0.0
      %1451 = vmatpush1.msra.mxu0 0.0
      %1452 = vmatprep.subr.mxu0 0.0
      %1453 = vmatpush1.msra.mxu0 0.0
      %1454 = vmatprep.subr.mxu0 0.0
      %1455 = vmatpush1.msra.mxu0 0.0
      %1456 = vmatprep.subr.mxu0 0.0
      %1457 = vmatpush1.msra.mxu0 0.0
      %1458 = vmatprep.subr.mxu0 0.0
      %1459 = vmatpush1.msra.mxu0 0.0
      %1460 = vmatprep.subr.mxu0 0.0
      %1461 = vmatpush1.msra.mxu0 0.0
      %1462 = vmatprep.subr.mxu0 0.0
      %1463 = vmatpush1.msra.mxu0 0.0
      %1464 = vmatprep.subr.mxu0 0.0
      %1465 = vmatpush1.msra.mxu0 0.0
      %1466 = vmatprep.subr.mxu0 0.0
      %1467 = vmatpush1.msra.mxu0 0.0
      %1468 = vmatprep.subr.mxu0 0.0
      %1469 = vmatpush1.msra.mxu0 0.0
      %1470 = vmatprep.mubr.f32.mxu0 0.0
      %1471 = vmatmul.mubr.f32.gmra.mrb[0].mxu0 %v1401
      %v1472 = vpop.f32.mrb[0].mxu0
      %v1473 = vadd.f32 %v1390, %v1472
      %v1474 = vpop.f32.mrb[0].mxu0
      %v1475 = vadd.f32 %v1392, %v1474
      %1476 = vmatprep.mubr.f32.mxu0 0.0
      %1477 = vmatmul.mubr.f32.gmra.mrb[0].mxu0 %v1404
      %v1478 = vpop.f32.mrb[0].mxu0
      %v1479 = vadd.f32 %v1396, %v1478
      %v1480 = vpop.f32.mrb[0].mxu0
      %v1481 = vadd.f32 %v1398, %v1480
      %1482 = vdwg.mxu0
      %1483 = vrot.lane.b32.xlu0 %v1285, 126
      %v1484 = vpop.permute.xlu0 %1483
      %1485 = vrot.lane.b32.xlu0 %v1286, 126
      %v1486 = vpop.permute.xlu0 %1485
      %1487 = vrot.lane.b32.xlu0 %v1287, 126
      %v1488 = vpop.permute.xlu0 %1487
      %1489 = vrot.lane.b32.xlu0 %v1288, 126
      %v1490 = vpop.permute.xlu0 %1489
      %v1491 = vsel %vm782, %v1484, %v1486
      %v1492 = vsel %vm782, %v1488, %v1490
      %v1497 = vsel %vm774, %v1491, 0.0
      %v1498 = vsel %vm775, %v1486, 0.0
      %v1499 = vsel %vm774, %v1492, 0.0
      %v1500 = vsel %vm775, %v1490, 0.0
      %s1501 = scalar_lea.vmem %s5, 32
      %v1502 = vld [vmem:[%s1501] sm:$0xff]
      %v1503 = vld [vmem:[%s1501 + $0x8] sm:$0xff]
      %v1505 = vsel %vm1316, %v1502, 0
      %v1508 = vsel %vm1316, %v1503, 0
      %1510 = vmatprep.subr.mxu0 %v1498
      %1511 = vmatpush1.msra.mxu0 %v1497
      %1512 = vmatprep.subr.mxu0 %v1500
      %1513 = vmatpush1.msra.mxu0 %v1499
      %1514 = vmatprep.subr.mxu0 0.0
      %1515 = vmatpush1.msra.mxu0 0.0
      %1516 = vmatprep.subr.mxu0 0.0
      %1517 = vmatpush1.msra.mxu0 0.0
      %1518 = vmatprep.subr.mxu0 0.0
      %1519 = vmatpush1.msra.mxu0 0.0
      %1520 = vmatprep.subr.mxu0 0.0
      %1521 = vmatpush1.msra.mxu0 0.0
      %1522 = vmatprep.subr.mxu0 0.0
      %1523 = vmatpush1.msra.mxu0 0.0
      %1524 = vmatprep.subr.mxu0 0.0
      %1525 = vmatpush1.msra.mxu0 0.0
      %1526 = vmatprep.subr.mxu0 0.0
      %1527 = vmatpush1.msra.mxu0 0.0
      %1528 = vmatprep.subr.mxu0 0.0
      %1529 = vmatpush1.msra.mxu0 0.0
      %1530 = vmatprep.subr.mxu0 0.0
      %1531 = vmatpush1.msra.mxu0 0.0
      %1532 = vmatprep.subr.mxu0 0.0
      %1533 = vmatpush1.msra.mxu0 0.0
      %1534 = vmatprep.subr.mxu0 0.0
      %1535 = vmatpush1.msra.mxu0 0.0
      %1536 = vmatprep.subr.mxu0 0.0
      %1537 = vmatpush1.msra.mxu0 0.0
      %1538 = vmatprep.subr.mxu0 0.0
      %1539 = vmatpush1.msra.mxu0 0.0
      %1540 = vmatprep.subr.mxu0 0.0
      %1541 = vmatpush1.msra.mxu0 0.0
      %1542 = vmatprep.subr.mxu0 0.0
      %1543 = vmatpush1.msra.mxu0 0.0
      %1544 = vmatprep.subr.mxu0 0.0
      %1545 = vmatpush1.msra.mxu0 0.0
      %1546 = vmatprep.subr.mxu0 0.0
      %1547 = vmatpush1.msra.mxu0 0.0
      %1548 = vmatprep.subr.mxu0 0.0
      %1549 = vmatpush1.msra.mxu0 0.0
      %1550 = vmatprep.subr.mxu0 0.0
      %1551 = vmatpush1.msra.mxu0 0.0
      %1552 = vmatprep.subr.mxu0 0.0
      %1553 = vmatpush1.msra.mxu0 0.0
      %1554 = vmatprep.subr.mxu0 0.0
      %1555 = vmatpush1.msra.mxu0 0.0
      %1556 = vmatprep.subr.mxu0 0.0
      %1557 = vmatpush1.msra.mxu0 0.0
      %1558 = vmatprep.subr.mxu0 0.0
      %1559 = vmatpush1.msra.mxu0 0.0
      %1560 = vmatprep.subr.mxu0 0.0
      %1561 = vmatpush1.msra.mxu0 0.0
      %1562 = vmatprep.subr.mxu0 0.0
      %1563 = vmatpush1.msra.mxu0 0.0
      %1564 = vmatprep.subr.mxu0 0.0
      %1565 = vmatpush1.msra.mxu0 0.0
      %1566 = vmatprep.subr.mxu0 0.0
      %1567 = vmatpush1.msra.mxu0 0.0
      %1568 = vmatprep.subr.mxu0 0.0
      %1569 = vmatpush1.msra.mxu0 0.0
      %1570 = vmatprep.subr.mxu0 0.0
      %1571 = vmatpush1.msra.mxu0 0.0
      %1572 = vmatprep.subr.mxu0 0.0
      %1573 = vmatpush1.msra.mxu0 0.0
      %1574 = vmatprep.mubr.f32.mxu0 0.0
      %1575 = vmatmul.mubr.f32.gmra.mrb[0].mxu0 %v1505
      %v1576 = vpop.f32.mrb[0].mxu0
      %v1577 = vadd.f32 0.0, %v1576
      %v1578 = vpop.f32.mrb[0].mxu0
      %v1579 = vadd.f32 0.0, %v1578
      %1580 = vmatprep.mubr.f32.mxu0 0.0
      %1581 = vmatmul.mubr.f32.gmra.mrb[0].mxu0 %v1508
      %v1582 = vpop.f32.mrb[0].mxu0
      %v1583 = vadd.f32 0.0, %v1582
      %v1584 = vpop.f32.mrb[0].mxu0
      %v1585 = vadd.f32 0.0, %v1584
      %1586 = vdwg.mxu0
      %v1587 = vadd.f32 %v1473, %v1577
      %v1588 = vadd.f32 %v1475, %v1579
      %v1589 = vadd.f32 %v1479, %v1583
      %v1590 = vadd.f32 %v1481, %v1585
      %1591 = vrot.lane.b32.xlu0 %v1285, 112
      %v1592 = vpop.permute.xlu0 %1591
      %1593 = vrot.lane.b32.xlu0 %v1286, 112
      %v1594 = vpop.permute.xlu0 %1593
      %1595 = vrot.lane.b32.xlu0 %v1287, 112
      %v1596 = vpop.permute.xlu0 %1595
      %1597 = vrot.lane.b32.xlu0 %v1288, 112
      %v1598 = vpop.permute.xlu0 %1597
      %v1599 = vsel %vm845, %v1592, %v1594
      %v1600 = vsel %vm845, %v1596, %v1598
      %v1605 = vsel %vm630, %v1599, 0.0
      %v1606 = vsel %vm631, %v1594, 0.0
      %v1607 = vsel %vm630, %v1600, 0.0
      %v1608 = vsel %vm631, %v1598, 0.0
      %s1609 = scalar_lea.vmem %s5, 48
      %v1610 = vld [vmem:[%s1609] sm:$0xff]
      %v1611 = vld [vmem:[%s1609 + $0x8] sm:$0xff]
      %v1613 = vsel %vm1316, %v1610, 0
      %v1616 = vsel %vm1316, %v1611, 0
      %1618 = vmatprep.subr.mxu0 %v1606
      %1619 = vmatpush1.msra.mxu0 %v1605
      %1620 = vmatprep.subr.mxu0 %v1608
      %1621 = vmatpush1.msra.mxu0 %v1607
      %1622 = vmatprep.subr.mxu0 0.0
      %1623 = vmatpush1.msra.mxu0 0.0
      %1624 = vmatprep.subr.mxu0 0.0
      %1625 = vmatpush1.msra.mxu0 0.0
      %1626 = vmatprep.subr.mxu0 0.0
      %1627 = vmatpush1.msra.mxu0 0.0
      %1628 = vmatprep.subr.mxu0 0.0
      %1629 = vmatpush1.msra.mxu0 0.0
      %1630 = vmatprep.subr.mxu0 0.0
      %1631 = vmatpush1.msra.mxu0 0.0
      %1632 = vmatprep.subr.mxu0 0.0
      %1633 = vmatpush1.msra.mxu0 0.0
      %1634 = vmatprep.subr.mxu0 0.0
      %1635 = vmatpush1.msra.mxu0 0.0
      %1636 = vmatprep.subr.mxu0 0.0
      %1637 = vmatpush1.msra.mxu0 0.0
      %1638 = vmatprep.subr.mxu0 0.0
      %1639 = vmatpush1.msra.mxu0 0.0
      %1640 = vmatprep.subr.mxu0 0.0
      %1641 = vmatpush1.msra.mxu0 0.0
      %1642 = vmatprep.subr.mxu0 0.0
      %1643 = vmatpush1.msra.mxu0 0.0
      %1644 = vmatprep.subr.mxu0 0.0
      %1645 = vmatpush1.msra.mxu0 0.0
      %1646 = vmatprep.subr.mxu0 0.0
      %1647 = vmatpush1.msra.mxu0 0.0
      %1648 = vmatprep.subr.mxu0 0.0
      %1649 = vmatpush1.msra.mxu0 0.0
      %1650 = vmatprep.subr.mxu0 0.0
      %1651 = vmatpush1.msra.mxu0 0.0
      %1652 = vmatprep.subr.mxu0 0.0
      %1653 = vmatpush1.msra.mxu0 0.0
      %1654 = vmatprep.subr.mxu0 0.0
      %1655 = vmatpush1.msra.mxu0 0.0
      %1656 = vmatprep.subr.mxu0 0.0
      %1657 = vmatpush1.msra.mxu0 0.0
      %1658 = vmatprep.subr.mxu0 0.0
      %1659 = vmatpush1.msra.mxu0 0.0
      %1660 = vmatprep.subr.mxu0 0.0
      %1661 = vmatpush1.msra.mxu0 0.0
      %1662 = vmatprep.subr.mxu0 0.0
      %1663 = vmatpush1.msra.mxu0 0.0
      %1664 = vmatprep.subr.mxu0 0.0
      %1665 = vmatpush1.msra.mxu0 0.0
      %1666 = vmatprep.subr.mxu0 0.0
      %1667 = vmatpush1.msra.mxu0 0.0
      %1668 = vmatprep.subr.mxu0 0.0
      %1669 = vmatpush1.msra.mxu0 0.0
      %1670 = vmatprep.subr.mxu0 0.0
      %1671 = vmatpush1.msra.mxu0 0.0
      %1672 = vmatprep.subr.mxu0 0.0
      %1673 = vmatpush1.msra.mxu0 0.0
      %1674 = vmatprep.subr.mxu0 0.0
      %1675 = vmatpush1.msra.mxu0 0.0
      %1676 = vmatprep.subr.mxu0 0.0
      %1677 = vmatpush1.msra.mxu0 0.0
      %1678 = vmatprep.subr.mxu0 0.0
      %1679 = vmatpush1.msra.mxu0 0.0
      %1680 = vmatprep.subr.mxu0 0.0
      %1681 = vmatpush1.msra.mxu0 0.0
      %1682 = vmatprep.mubr.f32.mxu0 0.0
      %1683 = vmatmul.mubr.f32.gmra.mrb[0].mxu0 %v1613
      %v1684 = vpop.f32.mrb[0].mxu0
      %v1685 = vadd.f32 0.0, %v1684
      %v1686 = vpop.f32.mrb[0].mxu0
      %v1687 = vadd.f32 0.0, %v1686
      %1688 = vmatprep.mubr.f32.mxu0 0.0
      %1689 = vmatmul.mubr.f32.gmra.mrb[0].mxu0 %v1616
      %v1690 = vpop.f32.mrb[0].mxu0
      %v1691 = vadd.f32 0.0, %v1690
      %v1692 = vpop.f32.mrb[0].mxu0
      %v1693 = vadd.f32 0.0, %v1692
      %1694 = vdwg.mxu0
      %v1695 = vadd.f32 %v1587, %v1685
      %v1696 = vadd.f32 %v1588, %v1687
      %v1697 = vadd.f32 %v1589, %v1691
      %v1698 = vadd.f32 %v1590, %v1693
      %s1699 = scalar_lea.vmem %s5, 64
      %v1700 = vld [vmem:[%s1699] sm:$0xff]
      %v1701 = vld [vmem:[%s1699 + $0x8] sm:$0xff]
      %1702 = vrot.lane.b32.xlu0 %v1285, 111
      %v1703 = vpop.permute.xlu0 %1702
      %1704 = vrot.lane.b32.xlu0 %v1286, 111
      %v1705 = vpop.permute.xlu0 %1704
      %1706 = vrot.lane.b32.xlu0 %v1287, 111
      %v1707 = vpop.permute.xlu0 %1706
      %1708 = vrot.lane.b32.xlu0 %v1288, 111
      %v1709 = vpop.permute.xlu0 %1708
      %v1710 = vsel %vm933, %v1703, %v1705
      %v1711 = vsel %vm933, %v1707, %v1709
      %v1717 = vsel %vm1316, %v1700, 0
      %v1720 = vsel %vm1316, %v1701, 0
      %1722 = vmatprep.subr.mxu0 %v1705
      %1723 = vmatpush1.msra.mxu0 %v1710
      %1724 = vmatprep.subr.mxu0 %v1709
      %1725 = vmatpush1.msra.mxu0 %v1711
      %1726 = vmatprep.subr.mxu0 0.0
      %1727 = vmatpush1.msra.mxu0 0.0
      %1728 = vmatprep.subr.mxu0 0.0
      %1729 = vmatpush1.msra.mxu0 0.0
      %1730 = vmatprep.subr.mxu0 0.0
      %1731 = vmatpush1.msra.mxu0 0.0
      %1732 = vmatprep.subr.mxu0 0.0
      %1733 = vmatpush1.msra.mxu0 0.0
      %1734 = vmatprep.subr.mxu0 0.0
      %1735 = vmatpush1.msra.mxu0 0.0
      %1736 = vmatprep.subr.mxu0 0.0
      %1737 = vmatpush1.msra.mxu0 0.0
      %1738 = vmatprep.subr.mxu0 0.0
      %1739 = vmatpush1.msra.mxu0 0.0
      %1740 = vmatprep.subr.mxu0 0.0
      %1741 = vmatpush1.msra.mxu0 0.0
      %1742 = vmatprep.subr.mxu0 0.0
      %1743 = vmatpush1.msra.mxu0 0.0
      %1744 = vmatprep.subr.mxu0 0.0
      %1745 = vmatpush1.msra.mxu0 0.0
      %1746 = vmatprep.subr.mxu0 0.0
      %1747 = vmatpush1.msra.mxu0 0.0
      %1748 = vmatprep.subr.mxu0 0.0
      %1749 = vmatpush1.msra.mxu0 0.0
      %1750 = vmatprep.subr.mxu0 0.0
      %1751 = vmatpush1.msra.mxu0 0.0
      %1752 = vmatprep.subr.mxu0 0.0
      %1753 = vmatpush1.msra.mxu0 0.0
      %1754 = vmatprep.subr.mxu0 0.0
      %1755 = vmatpush1.msra.mxu0 0.0
      %1756 = vmatprep.subr.mxu0 0.0
      %1757 = vmatpush1.msra.mxu0 0.0
      %1758 = vmatprep.subr.mxu0 0.0
      %1759 = vmatpush1.msra.mxu0 0.0
      %1760 = vmatprep.subr.mxu0 0.0
      %1761 = vmatpush1.msra.mxu0 0.0
      %1762 = vmatprep.subr.mxu0 0.0
      %1763 = vmatpush1.msra.mxu0 0.0
      %1764 = vmatprep.subr.mxu0 0.0
      %1765 = vmatpush1.msra.mxu0 0.0
      %1766 = vmatprep.subr.mxu0 0.0
      %1767 = vmatpush1.msra.mxu0 0.0
      %1768 = vmatprep.subr.mxu0 0.0
      %1769 = vmatpush1.msra.mxu0 0.0
      %1770 = vmatprep.subr.mxu0 0.0
      %1771 = vmatpush1.msra.mxu0 0.0
      %1772 = vmatprep.subr.mxu0 0.0
      %1773 = vmatpush1.msra.mxu0 0.0
      %1774 = vmatprep.subr.mxu0 0.0
      %1775 = vmatpush1.msra.mxu0 0.0
      %1776 = vmatprep.subr.mxu0 0.0
      %1777 = vmatpush1.msra.mxu0 0.0
      %1778 = vmatprep.subr.mxu0 0.0
      %1779 = vmatpush1.msra.mxu0 0.0
      %1780 = vmatprep.subr.mxu0 0.0
      %1781 = vmatpush1.msra.mxu0 0.0
      %1782 = vmatprep.subr.mxu0 0.0
      %1783 = vmatpush1.msra.mxu0 0.0
      %1784 = vmatprep.subr.mxu0 0.0
      %1785 = vmatpush1.msra.mxu0 0.0
      %1786 = vmatprep.mubr.f32.mxu0 0.0
      %1787 = vmatmul.mubr.f32.gmra.mrb[0].mxu0 %v1717
      %v1788 = vpop.f32.mrb[0].mxu0
      %v1789 = vadd.f32 0.0, %v1788
      %v1790 = vpop.f32.mrb[0].mxu0
      %v1791 = vadd.f32 0.0, %v1790
      %1792 = vmatprep.mubr.f32.mxu0 0.0
      %1793 = vmatmul.mubr.f32.gmra.mrb[0].mxu0 %v1720
      %v1794 = vpop.f32.mrb[0].mxu0
      %v1795 = vadd.f32 0.0, %v1794
      %v1796 = vpop.f32.mrb[0].mxu0
      %v1797 = vadd.f32 0.0, %v1796
      %1798 = vdwg.mxu0
      %v1799 = vadd.f32 %v1695, %v1789
      %v1800 = vadd.f32 %v1696, %v1791
      %v1801 = vadd.f32 %v1697, %v1795
      %v1802 = vadd.f32 %v1698, %v1797
      %1803 = vrot.lane.b32.xlu0 %v1285, 110
      %v1804 = vpop.permute.xlu0 %1803
      %1805 = vrot.lane.b32.xlu0 %v1286, 110
      %v1806 = vpop.permute.xlu0 %1805
      %1807 = vrot.lane.b32.xlu0 %v1287, 110
      %v1808 = vpop.permute.xlu0 %1807
      %1809 = vrot.lane.b32.xlu0 %v1288, 110
      %v1810 = vpop.permute.xlu0 %1809
      %v1811 = vsel %vm982, %v1804, %v1806
      %v1812 = vsel %vm982, %v1808, %v1810
      %v1817 = vsel %vm774, %v1811, 0.0
      %v1818 = vsel %vm775, %v1806, 0.0
      %v1819 = vsel %vm774, %v1812, 0.0
      %v1820 = vsel %vm775, %v1810, 0.0
      %s1821 = scalar_lea.vmem %s5, 80
      %v1822 = vld [vmem:[%s1821] sm:$0xff]
      %v1823 = vld [vmem:[%s1821 + $0x8] sm:$0xff]
      %v1825 = vsel %vm1316, %v1822, 0
      %v1828 = vsel %vm1316, %v1823, 0
      %1830 = vmatprep.subr.mxu0 %v1818
      %1831 = vmatpush1.msra.mxu0 %v1817
      %1832 = vmatprep.subr.mxu0 %v1820
      %1833 = vmatpush1.msra.mxu0 %v1819
      %1834 = vmatprep.subr.mxu0 0.0
      %1835 = vmatpush1.msra.mxu0 0.0
      %1836 = vmatprep.subr.mxu0 0.0
      %1837 = vmatpush1.msra.mxu0 0.0
      %1838 = vmatprep.subr.mxu0 0.0
      %1839 = vmatpush1.msra.mxu0 0.0
      %1840 = vmatprep.subr.mxu0 0.0
      %1841 = vmatpush1.msra.mxu0 0.0
      %1842 = vmatprep.subr.mxu0 0.0
      %1843 = vmatpush1.msra.mxu0 0.0
      %1844 = vmatprep.subr.mxu0 0.0
      %1845 = vmatpush1.msra.mxu0 0.0
      %1846 = vmatprep.subr.mxu0 0.0
      %1847 = vmatpush1.msra.mxu0 0.0
      %1848 = vmatprep.subr.mxu0 0.0
      %1849 = vmatpush1.msra.mxu0 0.0
      %1850 = vmatprep.subr.mxu0 0.0
      %1851 = vmatpush1.msra.mxu0 0.0
      %1852 = vmatprep.subr.mxu0 0.0
      %1853 = vmatpush1.msra.mxu0 0.0
      %1854 = vmatprep.subr.mxu0 0.0
      %1855 = vmatpush1.msra.mxu0 0.0
      %1856 = vmatprep.subr.mxu0 0.0
      %1857 = vmatpush1.msra.mxu0 0.0
      %1858 = vmatprep.subr.mxu0 0.0
      %1859 = vmatpush1.msra.mxu0 0.0
      %1860 = vmatprep.subr.mxu0 0.0
      %1861 = vmatpush1.msra.mxu0 0.0
      %1862 = vmatprep.subr.mxu0 0.0
      %1863 = vmatpush1.msra.mxu0 0.0
      %1864 = vmatprep.subr.mxu0 0.0
      %1865 = vmatpush1.msra.mxu0 0.0
      %1866 = vmatprep.subr.mxu0 0.0
      %1867 = vmatpush1.msra.mxu0 0.0
      %1868 = vmatprep.subr.mxu0 0.0
      %1869 = vmatpush1.msra.mxu0 0.0
      %1870 = vmatprep.subr.mxu0 0.0
      %1871 = vmatpush1.msra.mxu0 0.0
      %1872 = vmatprep.subr.mxu0 0.0
      %1873 = vmatpush1.msra.mxu0 0.0
      %1874 = vmatprep.subr.mxu0 0.0
      %1875 = vmatpush1.msra.mxu0 0.0
      %1876 = vmatprep.subr.mxu0 0.0
      %1877 = vmatpush1.msra.mxu0 0.0
      %1878 = vmatprep.subr.mxu0 0.0
      %1879 = vmatpush1.msra.mxu0 0.0
      %1880 = vmatprep.subr.mxu0 0.0
      %1881 = vmatpush1.msra.mxu0 0.0
      %1882 = vmatprep.subr.mxu0 0.0
      %1883 = vmatpush1.msra.mxu0 0.0
      %1884 = vmatprep.subr.mxu0 0.0
      %1885 = vmatpush1.msra.mxu0 0.0
      %1886 = vmatprep.subr.mxu0 0.0
      %1887 = vmatpush1.msra.mxu0 0.0
      %1888 = vmatprep.subr.mxu0 0.0
      %1889 = vmatpush1.msra.mxu0 0.0
      %1890 = vmatprep.subr.mxu0 0.0
      %1891 = vmatpush1.msra.mxu0 0.0
      %1892 = vmatprep.subr.mxu0 0.0
      %1893 = vmatpush1.msra.mxu0 0.0
      %1894 = vmatprep.mubr.f32.mxu0 0.0
      %1895 = vmatmul.mubr.f32.gmra.mrb[0].mxu0 %v1825
      %v1896 = vpop.f32.mrb[0].mxu0
      %v1897 = vadd.f32 0.0, %v1896
      %v1898 = vpop.f32.mrb[0].mxu0
      %v1899 = vadd.f32 0.0, %v1898
      %1900 = vmatprep.mubr.f32.mxu0 0.0
      %1901 = vmatmul.mubr.f32.gmra.mrb[0].mxu0 %v1828
      %v1902 = vpop.f32.mrb[0].mxu0
      %v1903 = vadd.f32 0.0, %v1902
      %v1904 = vpop.f32.mrb[0].mxu0
      %v1905 = vadd.f32 0.0, %v1904
      %1906 = vdwg.mxu0
      %v1907 = vadd.f32 %v1799, %v1897
      %v1908 = vadd.f32 %v1800, %v1899
      %v1909 = vadd.f32 %v1801, %v1903
      %v1910 = vadd.f32 %v1802, %v1905
      %1911 = vrot.lane.b32.xlu0 %v1285, 96
      %v1912 = vpop.permute.xlu0 %1911
      %1913 = vrot.lane.b32.xlu0 %v1286, 96
      %v1914 = vpop.permute.xlu0 %1913
      %1915 = vrot.lane.b32.xlu0 %v1287, 96
      %v1916 = vpop.permute.xlu0 %1915
      %1917 = vrot.lane.b32.xlu0 %v1288, 96
      %v1918 = vpop.permute.xlu0 %1917
      %v1919 = vsel %vm1045, %v1912, %v1914
      %v1920 = vsel %vm1045, %v1916, %v1918
      %v1925 = vsel %vm630, %v1919, 0.0
      %v1926 = vsel %vm631, %v1914, 0.0
      %v1927 = vsel %vm630, %v1920, 0.0
      %v1928 = vsel %vm631, %v1918, 0.0
      %s1929 = scalar_lea.vmem %s5, 96
      %v1930 = vld [vmem:[%s1929] sm:$0xff]
      %v1931 = vld [vmem:[%s1929 + $0x8] sm:$0xff]
      %v1933 = vsel %vm1316, %v1930, 0
      %v1936 = vsel %vm1316, %v1931, 0
      %1938 = vmatprep.subr.mxu0 %v1926
      %1939 = vmatpush1.msra.mxu0 %v1925
      %1940 = vmatprep.subr.mxu0 %v1928
      %1941 = vmatpush1.msra.mxu0 %v1927
      %1942 = vmatprep.subr.mxu0 0.0
      %1943 = vmatpush1.msra.mxu0 0.0
      %1944 = vmatprep.subr.mxu0 0.0
      %1945 = vmatpush1.msra.mxu0 0.0
      %1946 = vmatprep.subr.mxu0 0.0
      %1947 = vmatpush1.msra.mxu0 0.0
      %1948 = vmatprep.subr.mxu0 0.0
      %1949 = vmatpush1.msra.mxu0 0.0
      %1950 = vmatprep.subr.mxu0 0.0
      %1951 = vmatpush1.msra.mxu0 0.0
      %1952 = vmatprep.subr.mxu0 0.0
      %1953 = vmatpush1.msra.mxu0 0.0
      %1954 = vmatprep.subr.mxu0 0.0
      %1955 = vmatpush1.msra.mxu0 0.0
      %1956 = vmatprep.subr.mxu0 0.0
      %1957 = vmatpush1.msra.mxu0 0.0
      %1958 = vmatprep.subr.mxu0 0.0
      %1959 = vmatpush1.msra.mxu0 0.0
      %1960 = vmatprep.subr.mxu0 0.0
      %1961 = vmatpush1.msra.mxu0 0.0
      %1962 = vmatprep.subr.mxu0 0.0
      %1963 = vmatpush1.msra.mxu0 0.0
      %1964 = vmatprep.subr.mxu0 0.0
      %1965 = vmatpush1.msra.mxu0 0.0
      %1966 = vmatprep.subr.mxu0 0.0
      %1967 = vmatpush1.msra.mxu0 0.0
      %1968 = vmatprep.subr.mxu0 0.0
      %1969 = vmatpush1.msra.mxu0 0.0
      %1970 = vmatprep.subr.mxu0 0.0
      %1971 = vmatpush1.msra.mxu0 0.0
      %1972 = vmatprep.subr.mxu0 0.0
      %1973 = vmatpush1.msra.mxu0 0.0
      %1974 = vmatprep.subr.mxu0 0.0
      %1975 = vmatpush1.msra.mxu0 0.0
      %1976 = vmatprep.subr.mxu0 0.0
      %1977 = vmatpush1.msra.mxu0 0.0
      %1978 = vmatprep.subr.mxu0 0.0
      %1979 = vmatpush1.msra.mxu0 0.0
      %1980 = vmatprep.subr.mxu0 0.0
      %1981 = vmatpush1.msra.mxu0 0.0
      %1982 = vmatprep.subr.mxu0 0.0
      %1983 = vmatpush1.msra.mxu0 0.0
      %1984 = vmatprep.subr.mxu0 0.0
      %1985 = vmatpush1.msra.mxu0 0.0
      %1986 = vmatprep.subr.mxu0 0.0
      %1987 = vmatpush1.msra.mxu0 0.0
      %1988 = vmatprep.subr.mxu0 0.0
      %1989 = vmatpush1.msra.mxu0 0.0
      %1990 = vmatprep.subr.mxu0 0.0
      %1991 = vmatpush1.msra.mxu0 0.0
      %1992 = vmatprep.subr.mxu0 0.0
      %1993 = vmatpush1.msra.mxu0 0.0
      %1994 = vmatprep.subr.mxu0 0.0
      %1995 = vmatpush1.msra.mxu0 0.0
      %1996 = vmatprep.subr.mxu0 0.0
      %1997 = vmatpush1.msra.mxu0 0.0
      %1998 = vmatprep.subr.mxu0 0.0
      %1999 = vmatpush1.msra.mxu0 0.0
      %2000 = vmatprep.subr.mxu0 0.0
      %2001 = vmatpush1.msra.mxu0 0.0
      %2002 = vmatprep.mubr.f32.mxu0 0.0
      %2003 = vmatmul.mubr.f32.gmra.mrb[0].mxu0 %v1933
      %v2004 = vpop.f32.mrb[0].mxu0
      %v2005 = vadd.f32 0.0, %v2004
      %v2006 = vpop.f32.mrb[0].mxu0
      %v2007 = vadd.f32 0.0, %v2006
      %2008 = vmatprep.mubr.f32.mxu0 0.0
      %2009 = vmatmul.mubr.f32.gmra.mrb[0].mxu0 %v1936
      %v2010 = vpop.f32.mrb[0].mxu0
      %v2011 = vadd.f32 0.0, %v2010
      %v2012 = vpop.f32.mrb[0].mxu0
      %v2013 = vadd.f32 0.0, %v2012
      %2014 = vdwg.mxu0
      %v2015 = vadd.f32 %v1907, %v2005
      %v2016 = vadd.f32 %v1908, %v2007
      %v2017 = vadd.f32 %v1909, %v2011
      %v2018 = vadd.f32 %v1910, %v2013
      %s2019 = scalar_lea.vmem %s5, 112
      %v2020 = vld [vmem:[%s2019] sm:$0xff]
      %v2021 = vld [vmem:[%s2019 + $0x8] sm:$0xff]
      %2022 = vrot.lane.b32.xlu0 %v1285, 95
      %v2023 = vpop.permute.xlu0 %2022
      %2024 = vrot.lane.b32.xlu0 %v1286, 95
      %v2025 = vpop.permute.xlu0 %2024
      %2026 = vrot.lane.b32.xlu0 %v1287, 95
      %v2027 = vpop.permute.xlu0 %2026
      %2028 = vrot.lane.b32.xlu0 %v1288, 95
      %v2029 = vpop.permute.xlu0 %2028
      %v2030 = vsel %vm1133, %v2023, %v2025
      %v2031 = vsel %vm1133, %v2027, %v2029
      %v2037 = vsel %vm1316, %v2020, 0
      %v2040 = vsel %vm1316, %v2021, 0
      %2042 = vmatprep.subr.mxu0 %v2025
      %2043 = vmatpush1.msra.mxu0 %v2030
      %2044 = vmatprep.subr.mxu0 %v2029
      %2045 = vmatpush1.msra.mxu0 %v2031
      %2046 = vmatprep.subr.mxu0 0.0
      %2047 = vmatpush1.msra.mxu0 0.0
      %2048 = vmatprep.subr.mxu0 0.0
      %2049 = vmatpush1.msra.mxu0 0.0
      %2050 = vmatprep.subr.mxu0 0.0
      %2051 = vmatpush1.msra.mxu0 0.0
      %2052 = vmatprep.subr.mxu0 0.0
      %2053 = vmatpush1.msra.mxu0 0.0
      %2054 = vmatprep.subr.mxu0 0.0
      %2055 = vmatpush1.msra.mxu0 0.0
      %2056 = vmatprep.subr.mxu0 0.0
      %2057 = vmatpush1.msra.mxu0 0.0
      %2058 = vmatprep.subr.mxu0 0.0
      %2059 = vmatpush1.msra.mxu0 0.0
      %2060 = vmatprep.subr.mxu0 0.0
      %2061 = vmatpush1.msra.mxu0 0.0
      %2062 = vmatprep.subr.mxu0 0.0
      %2063 = vmatpush1.msra.mxu0 0.0
      %2064 = vmatprep.subr.mxu0 0.0
      %2065 = vmatpush1.msra.mxu0 0.0
      %2066 = vmatprep.subr.mxu0 0.0
      %2067 = vmatpush1.msra.mxu0 0.0
      %2068 = vmatprep.subr.mxu0 0.0
      %2069 = vmatpush1.msra.mxu0 0.0
      %2070 = vmatprep.subr.mxu0 0.0
      %2071 = vmatpush1.msra.mxu0 0.0
      %2072 = vmatprep.subr.mxu0 0.0
      %2073 = vmatpush1.msra.mxu0 0.0
      %2074 = vmatprep.subr.mxu0 0.0
      %2075 = vmatpush1.msra.mxu0 0.0
      %2076 = vmatprep.subr.mxu0 0.0
      %2077 = vmatpush1.msra.mxu0 0.0
      %2078 = vmatprep.subr.mxu0 0.0
      %2079 = vmatpush1.msra.mxu0 0.0
      %2080 = vmatprep.subr.mxu0 0.0
      %2081 = vmatpush1.msra.mxu0 0.0
      %2082 = vmatprep.subr.mxu0 0.0
      %2083 = vmatpush1.msra.mxu0 0.0
      %2084 = vmatprep.subr.mxu0 0.0
      %2085 = vmatpush1.msra.mxu0 0.0
      %2086 = vmatprep.subr.mxu0 0.0
      %2087 = vmatpush1.msra.mxu0 0.0
      %2088 = vmatprep.subr.mxu0 0.0
      %2089 = vmatpush1.msra.mxu0 0.0
      %2090 = vmatprep.subr.mxu0 0.0
      %2091 = vmatpush1.msra.mxu0 0.0
      %2092 = vmatprep.subr.mxu0 0.0
      %2093 = vmatpush1.msra.mxu0 0.0
      %2094 = vmatprep.subr.mxu0 0.0
      %2095 = vmatpush1.msra.mxu0 0.0
      %2096 = vmatprep.subr.mxu0 0.0
      %2097 = vmatpush1.msra.mxu0 0.0
      %2098 = vmatprep.subr.mxu0 0.0
      %2099 = vmatpush1.msra.mxu0 0.0
      %2100 = vmatprep.subr.mxu0 0.0
      %2101 = vmatpush1.msra.mxu0 0.0
      %2102 = vmatprep.subr.mxu0 0.0
      %2103 = vmatpush1.msra.mxu0 0.0
      %2104 = vmatprep.subr.mxu0 0.0
      %2105 = vmatpush1.msra.mxu0 0.0
      %2106 = vmatprep.mubr.f32.mxu0 0.0
      %2107 = vmatmul.mubr.f32.gmra.mrb[0].mxu0 %v2037
      %v2108 = vpop.f32.mrb[0].mxu0
      %v2109 = vadd.f32 0.0, %v2108
      %v2110 = vpop.f32.mrb[0].mxu0
      %v2111 = vadd.f32 0.0, %v2110
      %2112 = vmatprep.mubr.f32.mxu0 0.0
      %2113 = vmatmul.mubr.f32.gmra.mrb[0].mxu0 %v2040
      %v2114 = vpop.f32.mrb[0].mxu0
      %v2115 = vadd.f32 0.0, %v2114
      %v2116 = vpop.f32.mrb[0].mxu0
      %v2117 = vadd.f32 0.0, %v2116
      %2118 = vdwg.mxu0
      %v2119 = vadd.f32 %v2015, %v2109
      %v2120 = vadd.f32 %v2016, %v2111
      %v2121 = vadd.f32 %v2017, %v2115
      %v2122 = vadd.f32 %v2018, %v2117
      %2123 = vrot.lane.b32.xlu0 %v1285, 94
      %v2124 = vpop.permute.xlu0 %2123
      %2125 = vrot.lane.b32.xlu0 %v1286, 94
      %v2126 = vpop.permute.xlu0 %2125
      %2127 = vrot.lane.b32.xlu0 %v1287, 94
      %v2128 = vpop.permute.xlu0 %2127
      %2129 = vrot.lane.b32.xlu0 %v1288, 94
      %v2130 = vpop.permute.xlu0 %2129
      %v2131 = vsel %vm1182, %v2124, %v2126
      %v2132 = vsel %vm1182, %v2128, %v2130
      %v2137 = vsel %vm774, %v2131, 0.0
      %v2138 = vsel %vm775, %v2126, 0.0
      %v2139 = vsel %vm774, %v2132, 0.0
      %v2140 = vsel %vm775, %v2130, 0.0
      %s2141 = scalar_lea.vmem %s5, 128
      %v2142 = vld [vmem:[%s2141] sm:$0xff]
      %v2143 = vld [vmem:[%s2141 + $0x8] sm:$0xff]
      %v2145 = vsel %vm1316, %v2142, 0
      %v2148 = vsel %vm1316, %v2143, 0
      %2150 = vmatprep.subr.mxu0 %v2138
      %2151 = vmatpush1.msra.mxu0 %v2137
      %2152 = vmatprep.subr.mxu0 %v2140
      %2153 = vmatpush1.msra.mxu0 %v2139
      %2154 = vmatprep.subr.mxu0 0.0
      %2155 = vmatpush1.msra.mxu0 0.0
      %2156 = vmatprep.subr.mxu0 0.0
      %2157 = vmatpush1.msra.mxu0 0.0
      %2158 = vmatprep.subr.mxu0 0.0
      %2159 = vmatpush1.msra.mxu0 0.0
      %2160 = vmatprep.subr.mxu0 0.0
      %2161 = vmatpush1.msra.mxu0 0.0
      %2162 = vmatprep.subr.mxu0 0.0
      %2163 = vmatpush1.msra.mxu0 0.0
      %2164 = vmatprep.subr.mxu0 0.0
      %2165 = vmatpush1.msra.mxu0 0.0
      %2166 = vmatprep.subr.mxu0 0.0
      %2167 = vmatpush1.msra.mxu0 0.0
      %2168 = vmatprep.subr.mxu0 0.0
      %2169 = vmatpush1.msra.mxu0 0.0
      %2170 = vmatprep.subr.mxu0 0.0
      %2171 = vmatpush1.msra.mxu0 0.0
      %2172 = vmatprep.subr.mxu0 0.0
      %2173 = vmatpush1.msra.mxu0 0.0
      %2174 = vmatprep.subr.mxu0 0.0
      %2175 = vmatpush1.msra.mxu0 0.0
      %2176 = vmatprep.subr.mxu0 0.0
      %2177 = vmatpush1.msra.mxu0 0.0
      %2178 = vmatprep.subr.mxu0 0.0
      %2179 = vmatpush1.msra.mxu0 0.0
      %2180 = vmatprep.subr.mxu0 0.0
      %2181 = vmatpush1.msra.mxu0 0.0
      %2182 = vmatprep.subr.mxu0 0.0
      %2183 = vmatpush1.msra.mxu0 0.0
      %2184 = vmatprep.subr.mxu0 0.0
      %2185 = vmatpush1.msra.mxu0 0.0
      %2186 = vmatprep.subr.mxu0 0.0
      %2187 = vmatpush1.msra.mxu0 0.0
      %2188 = vmatprep.subr.mxu0 0.0
      %2189 = vmatpush1.msra.mxu0 0.0
      %2190 = vmatprep.subr.mxu0 0.0
      %2191 = vmatpush1.msra.mxu0 0.0
      %2192 = vmatprep.subr.mxu0 0.0
      %2193 = vmatpush1.msra.mxu0 0.0
      %2194 = vmatprep.subr.mxu0 0.0
      %2195 = vmatpush1.msra.mxu0 0.0
      %2196 = vmatprep.subr.mxu0 0.0
      %2197 = vmatpush1.msra.mxu0 0.0
      %2198 = vmatprep.subr.mxu0 0.0
      %2199 = vmatpush1.msra.mxu0 0.0
      %2200 = vmatprep.subr.mxu0 0.0
      %2201 = vmatpush1.msra.mxu0 0.0
      %2202 = vmatprep.subr.mxu0 0.0
      %2203 = vmatpush1.msra.mxu0 0.0
      %2204 = vmatprep.subr.mxu0 0.0
      %2205 = vmatpush1.msra.mxu0 0.0
      %2206 = vmatprep.subr.mxu0 0.0
      %2207 = vmatpush1.msra.mxu0 0.0
      %2208 = vmatprep.subr.mxu0 0.0
      %2209 = vmatpush1.msra.mxu0 0.0
      %2210 = vmatprep.subr.mxu0 0.0
      %2211 = vmatpush1.msra.mxu0 0.0
      %2212 = vmatprep.subr.mxu0 0.0
      %2213 = vmatpush1.msra.mxu0 0.0
      %2214 = vmatprep.mubr.f32.mxu0 0.0
      %2215 = vmatmul.mubr.f32.gmra.mrb[0].mxu0 %v2145
      %v2216 = vpop.f32.mrb[0].mxu0
      %v2217 = vadd.f32 0.0, %v2216
      %v2218 = vpop.f32.mrb[0].mxu0
      %v2219 = vadd.f32 0.0, %v2218
      %2220 = vmatprep.mubr.f32.mxu0 0.0
      %2221 = vmatmul.mubr.f32.gmra.mrb[0].mxu0 %v2148
      %v2222 = vpop.f32.mrb[0].mxu0
      %v2223 = vadd.f32 0.0, %v2222
      %v2224 = vpop.f32.mrb[0].mxu0
      %v2225 = vadd.f32 0.0, %v2224
      %2226 = vdwg.mxu0
      %v2227 = vadd.f32 %v2119, %v2217
      %v2228 = vadd.f32 %v2120, %v2219
      %v2229 = vadd.f32 %v2121, %v2223
      %v2230 = vadd.f32 %v2122, %v2225
      %v2231 = vld [vmem:[%s6] sm:$0xff]
      %v2232 = vld [vmem:[%s6 + $0x8] sm:$0xff]
      %2234 = vset.pattern.permute.xlu0 0
      %2235 = vperm.xlu0 %2234, %v2231
      %v2236 = vpop.permute.xlu0 %2235
      %2239 = vset.pattern.permute.xlu0 0
      %2240 = vperm.xlu0 %2239, %v2232
      %v2241 = vpop.permute.xlu0 %2240
      %v2243 = vadd.f32 %v2227, %v2236
      %v2244 = vadd.f32 %v2228, %v2236
      %v2245 = vadd.f32 %v2229, %v2241
      %v2246 = vadd.f32 %v2230, %v2241
      %v2247 = vmax.f32 %v2243, 0.0
      %v2248 = vmax.f32 %v2244, 0.0
      %v2249 = vmax.f32 %v2245, 0.0
      %v2250 = vmax.f32 %v2246, 0.0
      %2255 = vrot.lane.b32.xlu0 %v2247, 17
      %v2256 = vpop.permute.xlu0 %2255
      %2257 = vrot.lane.b32.xlu0 %v2248, 17
      %v2258 = vpop.permute.xlu0 %2257
      %2259 = vrot.lane.b32.xlu0 %v2249, 17
      %v2260 = vpop.permute.xlu0 %2259
      %2261 = vrot.lane.b32.xlu0 %v2250, 17
      %v2262 = vpop.permute.xlu0 %2261
      %v2263 = vsel %vm568, %v2256, %v2258
      %v2264 = vsel %vm568, %v2260, %v2262
      %2269 = vst.msk [vmem:[#allocation2] sm:$0xff] %vm1279, %v2256
      %2270 = vst.msk [vmem:[#allocation2 + $0x8] sm:$0xff] %vm1281, %v2263
      %2271 = vst.msk [vmem:[#allocation2 + $0x10] sm:$0xff] %vm1279, %v2260
      %2272 = vst.msk [vmem:[#allocation2 + $0x18] sm:$0xff] %vm1281, %v2264
      %v2273 = vld [vmem:[#allocation2] sm:$0xff]
      %v2274 = vld [vmem:[#allocation2 + $0x8] sm:$0xff]
      %v2275 = vld [vmem:[#allocation2 + $0x10] sm:$0xff]
      %v2276 = vld [vmem:[#allocation2 + $0x18] sm:$0xff]
      %v2277 = vsel %vm630, %v2273, 0.0
      %v2278 = vsel %vm631, %v2274, 0.0
      %v2279 = vsel %vm630, %v2275, 0.0
      %v2280 = vsel %vm631, %v2276, 0.0
      %v2281 = vld [vmem:[%s7] sm:$0x3]
      %s2282 = scalar_lea.vmem %s7, 2
      %v2283 = vld [vmem:[%s2282] sm:$0x3]
      %2288 = vrot.lane.b32.xlu0 %v2273, 127
      %v2289 = vpop.permute.xlu0 %2288
      %2290 = vrot.lane.b32.xlu0 %v2274, 127
      %v2291 = vpop.permute.xlu0 %2290
      %2292 = vrot.lane.b32.xlu0 %v2275, 127
      %v2293 = vpop.permute.xlu0 %2292
      %2294 = vrot.lane.b32.xlu0 %v2276, 127
      %v2295 = vpop.permute.xlu0 %2294
      %v2296 = vsel %vm719, %v2289, %v2291
      %v2297 = vsel %vm719, %v2293, %v2295
      %v2303 = vsel %vm1316, %v2283, 0
      %2305 = vmatprep.subr.mxu0 %v2291
      %2306 = vmatpush1.msra.mxu0 %v2296
      %2307 = vmatprep.subr.mxu0 %v2295
      %2308 = vmatpush1.msra.mxu0 %v2297
      %2309 = vmatprep.subr.mxu0 0.0
      %2310 = vmatpush1.msra.mxu0 0.0
      %2311 = vmatprep.subr.mxu0 0.0
      %2312 = vmatpush1.msra.mxu0 0.0
      %2313 = vmatprep.subr.mxu0 0.0
      %2314 = vmatpush1.msra.mxu0 0.0
      %2315 = vmatprep.subr.mxu0 0.0
      %2316 = vmatpush1.msra.mxu0 0.0
      %2317 = vmatprep.subr.mxu0 0.0
      %2318 = vmatpush1.msra.mxu0 0.0
      %2319 = vmatprep.subr.mxu0 0.0
      %2320 = vmatpush1.msra.mxu0 0.0
      %2321 = vmatprep.subr.mxu0 0.0
      %2322 = vmatpush1.msra.mxu0 0.0
      %2323 = vmatprep.subr.mxu0 0.0
      %2324 = vmatpush1.msra.mxu0 0.0
      %2325 = vmatprep.subr.mxu0 0.0
      %2326 = vmatpush1.msra.mxu0 0.0
      %2327 = vmatprep.subr.mxu0 0.0
      %2328 = vmatpush1.msra.mxu0 0.0
      %2329 = vmatprep.subr.mxu0 0.0
      %2330 = vmatpush1.msra.mxu0 0.0
      %2331 = vmatprep.subr.mxu0 0.0
      %2332 = vmatpush1.msra.mxu0 0.0
      %2333 = vmatprep.subr.mxu0 0.0
      %2334 = vmatpush1.msra.mxu0 0.0
      %2335 = vmatprep.subr.mxu0 0.0
      %2336 = vmatpush1.msra.mxu0 0.0
      %2337 = vmatprep.subr.mxu0 0.0
      %2338 = vmatpush1.msra.mxu0 0.0
      %2339 = vmatprep.subr.mxu0 0.0
      %2340 = vmatpush1.msra.mxu0 0.0
      %2341 = vmatprep.subr.mxu0 0.0
      %2342 = vmatpush1.msra.mxu0 0.0
      %2343 = vmatprep.subr.mxu0 0.0
      %2344 = vmatpush1.msra.mxu0 0.0
      %2345 = vmatprep.subr.mxu0 0.0
      %2346 = vmatpush1.msra.mxu0 0.0
      %2347 = vmatprep.subr.mxu0 0.0
      %2348 = vmatpush1.msra.mxu0 0.0
      %2349 = vmatprep.subr.mxu0 0.0
      %2350 = vmatpush1.msra.mxu0 0.0
      %2351 = vmatprep.subr.mxu0 0.0
      %2352 = vmatpush1.msra.mxu0 0.0
      %2353 = vmatprep.subr.mxu0 0.0
      %2354 = vmatpush1.msra.mxu0 0.0
      %2355 = vmatprep.subr.mxu0 0.0
      %2356 = vmatpush1.msra.mxu0 0.0
      %2357 = vmatprep.subr.mxu0 0.0
      %2358 = vmatpush1.msra.mxu0 0.0
      %2359 = vmatprep.subr.mxu0 0.0
      %2360 = vmatpush1.msra.mxu0 0.0
      %2361 = vmatprep.subr.mxu0 0.0
      %2362 = vmatpush1.msra.mxu0 0.0
      %2363 = vmatprep.subr.mxu0 0.0
      %2364 = vmatpush1.msra.mxu0 0.0
      %2365 = vmatprep.subr.mxu0 0.0
      %2366 = vmatpush1.msra.mxu0 0.0
      %2367 = vmatprep.subr.mxu0 0.0
      %2368 = vmatpush1.msra.mxu0 0.0
      %2369 = vmatprep.mubr.f32.mxu0 0.0
      %2370 = vmatmul.mubr.f32.gmra.mrb[0].mxu0 %v2303
      %v2371 = vpop.f32.mrb[0].mxu0
      %v2372 = vadd.f32 0.0, %v2371
      %v2373 = vpop.f32.mrb[0].mxu0
      %v2374 = vadd.f32 0.0, %v2373
      %2375 = vdwg.mxu0
      %v2377 = vsel %vm1316, %v2281, 0
      %2379 = vmatprep.subr.mxu0 %v2278
      %2380 = vmatpush1.msra.mxu0 %v2277
      %2381 = vmatprep.subr.mxu0 %v2280
      %2382 = vmatpush1.msra.mxu0 %v2279
      %2383 = vmatprep.subr.mxu0 0.0
      %2384 = vmatpush1.msra.mxu0 0.0
      %2385 = vmatprep.subr.mxu0 0.0
      %2386 = vmatpush1.msra.mxu0 0.0
      %2387 = vmatprep.subr.mxu0 0.0
      %2388 = vmatpush1.msra.mxu0 0.0
      %2389 = vmatprep.subr.mxu0 0.0
      %2390 = vmatpush1.msra.mxu0 0.0
      %2391 = vmatprep.subr.mxu0 0.0
      %2392 = vmatpush1.msra.mxu0 0.0
      %2393 = vmatprep.subr.mxu0 0.0
      %2394 = vmatpush1.msra.mxu0 0.0
      %2395 = vmatprep.subr.mxu0 0.0
      %2396 = vmatpush1.msra.mxu0 0.0
      %2397 = vmatprep.subr.mxu0 0.0
      %2398 = vmatpush1.msra.mxu0 0.0
      %2399 = vmatprep.subr.mxu0 0.0
      %2400 = vmatpush1.msra.mxu0 0.0
      %2401 = vmatprep.subr.mxu0 0.0
      %2402 = vmatpush1.msra.mxu0 0.0
      %2403 = vmatprep.subr.mxu0 0.0
      %2404 = vmatpush1.msra.mxu0 0.0
      %2405 = vmatprep.subr.mxu0 0.0
      %2406 = vmatpush1.msra.mxu0 0.0
      %2407 = vmatprep.subr.mxu0 0.0
      %2408 = vmatpush1.msra.mxu0 0.0
      %2409 = vmatprep.subr.mxu0 0.0
      %2410 = vmatpush1.msra.mxu0 0.0
      %2411 = vmatprep.subr.mxu0 0.0
      %2412 = vmatpush1.msra.mxu0 0.0
      %2413 = vmatprep.subr.mxu0 0.0
      %2414 = vmatpush1.msra.mxu0 0.0
      %2415 = vmatprep.subr.mxu0 0.0
      %2416 = vmatpush1.msra.mxu0 0.0
      %2417 = vmatprep.subr.mxu0 0.0
      %2418 = vmatpush1.msra.mxu0 0.0
      %2419 = vmatprep.subr.mxu0 0.0
      %2420 = vmatpush1.msra.mxu0 0.0
      %2421 = vmatprep.subr.mxu0 0.0
      %2422 = vmatpush1.msra.mxu0 0.0
      %2423 = vmatprep.subr.mxu0 0.0
      %2424 = vmatpush1.msra.mxu0 0.0
      %2425 = vmatprep.subr.mxu0 0.0
      %2426 = vmatpush1.msra.mxu0 0.0
      %2427 = vmatprep.subr.mxu0 0.0
      %2428 = vmatpush1.msra.mxu0 0.0
      %2429 = vmatprep.subr.mxu0 0.0
      %2430 = vmatpush1.msra.mxu0 0.0
      %2431 = vmatprep.subr.mxu0 0.0
      %2432 = vmatpush1.msra.mxu0 0.0
      %2433 = vmatprep.subr.mxu0 0.0
      %2434 = vmatpush1.msra.mxu0 0.0
      %2435 = vmatprep.subr.mxu0 0.0
      %2436 = vmatpush1.msra.mxu0 0.0
      %2437 = vmatprep.subr.mxu0 0.0
      %2438 = vmatpush1.msra.mxu0 0.0
      %2439 = vmatprep.subr.mxu0 0.0
      %2440 = vmatpush1.msra.mxu0 0.0
      %2441 = vmatprep.subr.mxu0 0.0
      %2442 = vmatpush1.msra.mxu0 0.0
      %2443 = vmatprep.mubr.f32.mxu0 0.0
      %2444 = vmatmul.mubr.f32.gmra.mrb[0].mxu0 %v2377
      %v2445 = vpop.f32.mrb[0].mxu0
      %v2446 = vadd.f32 %v2372, %v2445
      %v2447 = vpop.f32.mrb[0].mxu0
      %v2448 = vadd.f32 %v2374, %v2447
      %2449 = vdwg.mxu0
      %2450 = vrot.lane.b32.xlu0 %v2273, 126
      %v2451 = vpop.permute.xlu0 %2450
      %2452 = vrot.lane.b32.xlu0 %v2274, 126
      %v2453 = vpop.permute.xlu0 %2452
      %2454 = vrot.lane.b32.xlu0 %v2275, 126
      %v2455 = vpop.permute.xlu0 %2454
      %2456 = vrot.lane.b32.xlu0 %v2276, 126
      %v2457 = vpop.permute.xlu0 %2456
      %v2458 = vsel %vm782, %v2451, %v2453
      %v2459 = vsel %vm782, %v2455, %v2457
      %v2464 = vsel %vm774, %v2458, 0.0
      %v2465 = vsel %vm775, %v2453, 0.0
      %v2466 = vsel %vm774, %v2459, 0.0
      %v2467 = vsel %vm775, %v2457, 0.0
      %s2468 = scalar_lea.vmem %s7, 4
      %v2469 = vld [vmem:[%s2468] sm:$0x3]
      %v2471 = vsel %vm1316, %v2469, 0
      %2473 = vmatprep.subr.mxu0 %v2465
      %2474 = vmatpush1.msra.mxu0 %v2464
      %2475 = vmatprep.subr.mxu0 %v2467
      %2476 = vmatpush1.msra.mxu0 %v2466
      %2477 = vmatprep.subr.mxu0 0.0
      %2478 = vmatpush1.msra.mxu0 0.0
      %2479 = vmatprep.subr.mxu0 0.0
      %2480 = vmatpush1.msra.mxu0 0.0
      %2481 = vmatprep.subr.mxu0 0.0
      %2482 = vmatpush1.msra.mxu0 0.0
      %2483 = vmatprep.subr.mxu0 0.0
      %2484 = vmatpush1.msra.mxu0 0.0
      %2485 = vmatprep.subr.mxu0 0.0
      %2486 = vmatpush1.msra.mxu0 0.0
      %2487 = vmatprep.subr.mxu0 0.0
      %2488 = vmatpush1.msra.mxu0 0.0
      %2489 = vmatprep.subr.mxu0 0.0
      %2490 = vmatpush1.msra.mxu0 0.0
      %2491 = vmatprep.subr.mxu0 0.0
      %2492 = vmatpush1.msra.mxu0 0.0
      %2493 = vmatprep.subr.mxu0 0.0
      %2494 = vmatpush1.msra.mxu0 0.0
      %2495 = vmatprep.subr.mxu0 0.0
      %2496 = vmatpush1.msra.mxu0 0.0
      %2497 = vmatprep.subr.mxu0 0.0
      %2498 = vmatpush1.msra.mxu0 0.0
      %2499 = vmatprep.subr.mxu0 0.0
      %2500 = vmatpush1.msra.mxu0 0.0
      %2501 = vmatprep.subr.mxu0 0.0
      %2502 = vmatpush1.msra.mxu0 0.0
      %2503 = vmatprep.subr.mxu0 0.0
      %2504 = vmatpush1.msra.mxu0 0.0
      %2505 = vmatprep.subr.mxu0 0.0
      %2506 = vmatpush1.msra.mxu0 0.0
      %2507 = vmatprep.subr.mxu0 0.0
      %2508 = vmatpush1.msra.mxu0 0.0
      %2509 = vmatprep.subr.mxu0 0.0
      %2510 = vmatpush1.msra.mxu0 0.0
      %2511 = vmatprep.subr.mxu0 0.0
      %2512 = vmatpush1.msra.mxu0 0.0
      %2513 = vmatprep.subr.mxu0 0.0
      %2514 = vmatpush1.msra.mxu0 0.0
      %2515 = vmatprep.subr.mxu0 0.0
      %2516 = vmatpush1.msra.mxu0 0.0
      %2517 = vmatprep.subr.mxu0 0.0
      %2518 = vmatpush1.msra.mxu0 0.0
      %2519 = vmatprep.subr.mxu0 0.0
      %2520 = vmatpush1.msra.mxu0 0.0
      %2521 = vmatprep.subr.mxu0 0.0
      %2522 = vmatpush1.msra.mxu0 0.0
      %2523 = vmatprep.subr.mxu0 0.0
      %2524 = vmatpush1.msra.mxu0 0.0
      %2525 = vmatprep.subr.mxu0 0.0
      %2526 = vmatpush1.msra.mxu0 0.0
      %2527 = vmatprep.subr.mxu0 0.0
      %2528 = vmatpush1.msra.mxu0 0.0
      %2529 = vmatprep.subr.mxu0 0.0
      %2530 = vmatpush1.msra.mxu0 0.0
      %2531 = vmatprep.subr.mxu0 0.0
      %2532 = vmatpush1.msra.mxu0 0.0
      %2533 = vmatprep.subr.mxu0 0.0
      %2534 = vmatpush1.msra.mxu0 0.0
      %2535 = vmatprep.subr.mxu0 0.0
      %2536 = vmatpush1.msra.mxu0 0.0
      %2537 = vmatprep.mubr.f32.mxu0 0.0
      %2538 = vmatmul.mubr.f32.gmra.mrb[0].mxu0 %v2471
      %v2539 = vpop.f32.mrb[0].mxu0
      %v2540 = vadd.f32 0.0, %v2539
      %v2541 = vpop.f32.mrb[0].mxu0
      %v2542 = vadd.f32 0.0, %v2541
      %2543 = vdwg.mxu0
      %v2544 = vadd.f32 %v2446, %v2540
      %v2545 = vadd.f32 %v2448, %v2542
      %2546 = vrot.lane.b32.xlu0 %v2273, 112
      %v2547 = vpop.permute.xlu0 %2546
      %2548 = vrot.lane.b32.xlu0 %v2274, 112
      %v2549 = vpop.permute.xlu0 %2548
      %2550 = vrot.lane.b32.xlu0 %v2275, 112
      %v2551 = vpop.permute.xlu0 %2550
      %2552 = vrot.lane.b32.xlu0 %v2276, 112
      %v2553 = vpop.permute.xlu0 %2552
      %v2554 = vsel %vm845, %v2547, %v2549
      %v2555 = vsel %vm845, %v2551, %v2553
      %v2560 = vsel %vm630, %v2554, 0.0
      %v2561 = vsel %vm631, %v2549, 0.0
      %v2562 = vsel %vm630, %v2555, 0.0
      %v2563 = vsel %vm631, %v2553, 0.0
      %s2564 = scalar_lea.vmem %s7, 6
      %v2565 = vld [vmem:[%s2564] sm:$0x3]
      %v2567 = vsel %vm1316, %v2565, 0
      %2569 = vmatprep.subr.mxu0 %v2561
      %2570 = vmatpush1.msra.mxu0 %v2560
      %2571 = vmatprep.subr.mxu0 %v2563
      %2572 = vmatpush1.msra.mxu0 %v2562
      %2573 = vmatprep.subr.mxu0 0.0
      %2574 = vmatpush1.msra.mxu0 0.0
      %2575 = vmatprep.subr.mxu0 0.0
      %2576 = vmatpush1.msra.mxu0 0.0
      %2577 = vmatprep.subr.mxu0 0.0
      %2578 = vmatpush1.msra.mxu0 0.0
      %2579 = vmatprep.subr.mxu0 0.0
      %2580 = vmatpush1.msra.mxu0 0.0
      %2581 = vmatprep.subr.mxu0 0.0
      %2582 = vmatpush1.msra.mxu0 0.0
      %2583 = vmatprep.subr.mxu0 0.0
      %2584 = vmatpush1.msra.mxu0 0.0
      %2585 = vmatprep.subr.mxu0 0.0
      %2586 = vmatpush1.msra.mxu0 0.0
      %2587 = vmatprep.subr.mxu0 0.0
      %2588 = vmatpush1.msra.mxu0 0.0
      %2589 = vmatprep.subr.mxu0 0.0
      %2590 = vmatpush1.msra.mxu0 0.0
      %2591 = vmatprep.subr.mxu0 0.0
      %2592 = vmatpush1.msra.mxu0 0.0
      %2593 = vmatprep.subr.mxu0 0.0
      %2594 = vmatpush1.msra.mxu0 0.0
      %2595 = vmatprep.subr.mxu0 0.0
      %2596 = vmatpush1.msra.mxu0 0.0
      %2597 = vmatprep.subr.mxu0 0.0
      %2598 = vmatpush1.msra.mxu0 0.0
      %2599 = vmatprep.subr.mxu0 0.0
      %2600 = vmatpush1.msra.mxu0 0.0
      %2601 = vmatprep.subr.mxu0 0.0
      %2602 = vmatpush1.msra.mxu0 0.0
      %2603 = vmatprep.subr.mxu0 0.0
      %2604 = vmatpush1.msra.mxu0 0.0
      %2605 = vmatprep.subr.mxu0 0.0
      %2606 = vmatpush1.msra.mxu0 0.0
      %2607 = vmatprep.subr.mxu0 0.0
      %2608 = vmatpush1.msra.mxu0 0.0
      %2609 = vmatprep.subr.mxu0 0.0
      %2610 = vmatpush1.msra.mxu0 0.0
      %2611 = vmatprep.subr.mxu0 0.0
      %2612 = vmatpush1.msra.mxu0 0.0
      %2613 = vmatprep.subr.mxu0 0.0
      %2614 = vmatpush1.msra.mxu0 0.0
      %2615 = vmatprep.subr.mxu0 0.0
      %2616 = vmatpush1.msra.mxu0 0.0
      %2617 = vmatprep.subr.mxu0 0.0
      %2618 = vmatpush1.msra.mxu0 0.0
      %2619 = vmatprep.subr.mxu0 0.0
      %2620 = vmatpush1.msra.mxu0 0.0
      %2621 = vmatprep.subr.mxu0 0.0
      %2622 = vmatpush1.msra.mxu0 0.0
      %2623 = vmatprep.subr.mxu0 0.0
      %2624 = vmatpush1.msra.mxu0 0.0
      %2625 = vmatprep.subr.mxu0 0.0
      %2626 = vmatpush1.msra.mxu0 0.0
      %2627 = vmatprep.subr.mxu0 0.0
      %2628 = vmatpush1.msra.mxu0 0.0
      %2629 = vmatprep.subr.mxu0 0.0
      %2630 = vmatpush1.msra.mxu0 0.0
      %2631 = vmatprep.subr.mxu0 0.0
      %2632 = vmatpush1.msra.mxu0 0.0
      %2633 = vmatprep.mubr.f32.mxu0 0.0
      %2634 = vmatmul.mubr.f32.gmra.mrb[0].mxu0 %v2567
      %v2635 = vpop.f32.mrb[0].mxu0
      %v2636 = vadd.f32 0.0, %v2635
      %v2637 = vpop.f32.mrb[0].mxu0
      %v2638 = vadd.f32 0.0, %v2637
      %2639 = vdwg.mxu0
      %v2640 = vadd.f32 %v2544, %v2636
      %v2641 = vadd.f32 %v2545, %v2638
      %s2642 = scalar_lea.vmem %s7, 8
      %v2643 = vld [vmem:[%s2642] sm:$0x3]
      %2644 = vrot.lane.b32.xlu0 %v2273, 111
      %v2645 = vpop.permute.xlu0 %2644
      %2646 = vrot.lane.b32.xlu0 %v2274, 111
      %v2647 = vpop.permute.xlu0 %2646
      %2648 = vrot.lane.b32.xlu0 %v2275, 111
      %v2649 = vpop.permute.xlu0 %2648
      %2650 = vrot.lane.b32.xlu0 %v2276, 111
      %v2651 = vpop.permute.xlu0 %2650
      %v2652 = vsel %vm933, %v2645, %v2647
      %v2653 = vsel %vm933, %v2649, %v2651
      %v2659 = vsel %vm1316, %v2643, 0
      %2661 = vmatprep.subr.mxu0 %v2647
      %2662 = vmatpush1.msra.mxu0 %v2652
      %2663 = vmatprep.subr.mxu0 %v2651
      %2664 = vmatpush1.msra.mxu0 %v2653
      %2665 = vmatprep.subr.mxu0 0.0
      %2666 = vmatpush1.msra.mxu0 0.0
      %2667 = vmatprep.subr.mxu0 0.0
      %2668 = vmatpush1.msra.mxu0 0.0
      %2669 = vmatprep.subr.mxu0 0.0
      %2670 = vmatpush1.msra.mxu0 0.0
      %2671 = vmatprep.subr.mxu0 0.0
      %2672 = vmatpush1.msra.mxu0 0.0
      %2673 = vmatprep.subr.mxu0 0.0
      %2674 = vmatpush1.msra.mxu0 0.0
      %2675 = vmatprep.subr.mxu0 0.0
      %2676 = vmatpush1.msra.mxu0 0.0
      %2677 = vmatprep.subr.mxu0 0.0
      %2678 = vmatpush1.msra.mxu0 0.0
      %2679 = vmatprep.subr.mxu0 0.0
      %2680 = vmatpush1.msra.mxu0 0.0
      %2681 = vmatprep.subr.mxu0 0.0
      %2682 = vmatpush1.msra.mxu0 0.0
      %2683 = vmatprep.subr.mxu0 0.0
      %2684 = vmatpush1.msra.mxu0 0.0
      %2685 = vmatprep.subr.mxu0 0.0
      %2686 = vmatpush1.msra.mxu0 0.0
      %2687 = vmatprep.subr.mxu0 0.0
      %2688 = vmatpush1.msra.mxu0 0.0
      %2689 = vmatprep.subr.mxu0 0.0
      %2690 = vmatpush1.msra.mxu0 0.0
      %2691 = vmatprep.subr.mxu0 0.0
      %2692 = vmatpush1.msra.mxu0 0.0
      %2693 = vmatprep.subr.mxu0 0.0
      %2694 = vmatpush1.msra.mxu0 0.0
      %2695 = vmatprep.subr.mxu0 0.0
      %2696 = vmatpush1.msra.mxu0 0.0
      %2697 = vmatprep.subr.mxu0 0.0
      %2698 = vmatpush1.msra.mxu0 0.0
      %2699 = vmatprep.subr.mxu0 0.0
      %2700 = vmatpush1.msra.mxu0 0.0
      %2701 = vmatprep.subr.mxu0 0.0
      %2702 = vmatpush1.msra.mxu0 0.0
      %2703 = vmatprep.subr.mxu0 0.0
      %2704 = vmatpush1.msra.mxu0 0.0
      %2705 = vmatprep.subr.mxu0 0.0
      %2706 = vmatpush1.msra.mxu0 0.0
      %2707 = vmatprep.subr.mxu0 0.0
      %2708 = vmatpush1.msra.mxu0 0.0
      %2709 = vmatprep.subr.mxu0 0.0
      %2710 = vmatpush1.msra.mxu0 0.0
      %2711 = vmatprep.subr.mxu0 0.0
      %2712 = vmatpush1.msra.mxu0 0.0
      %2713 = vmatprep.subr.mxu0 0.0
      %2714 = vmatpush1.msra.mxu0 0.0
      %2715 = vmatprep.subr.mxu0 0.0
      %2716 = vmatpush1.msra.mxu0 0.0
      %2717 = vmatprep.subr.mxu0 0.0
      %2718 = vmatpush1.msra.mxu0 0.0
      %2719 = vmatprep.subr.mxu0 0.0
      %2720 = vmatpush1.msra.mxu0 0.0
      %2721 = vmatprep.subr.mxu0 0.0
      %2722 = vmatpush1.msra.mxu0 0.0
      %2723 = vmatprep.subr.mxu0 0.0
      %2724 = vmatpush1.msra.mxu0 0.0
      %2725 = vmatprep.mubr.f32.mxu0 0.0
      %2726 = vmatmul.mubr.f32.gmra.mrb[0].mxu0 %v2659
      %v2727 = vpop.f32.mrb[0].mxu0
      %v2728 = vadd.f32 0.0, %v2727
      %v2729 = vpop.f32.mrb[0].mxu0
      %v2730 = vadd.f32 0.0, %v2729
      %2731 = vdwg.mxu0
      %v2732 = vadd.f32 %v2640, %v2728
      %v2733 = vadd.f32 %v2641, %v2730
      %2734 = vrot.lane.b32.xlu0 %v2273, 110
      %v2735 = vpop.permute.xlu0 %2734
      %2736 = vrot.lane.b32.xlu0 %v2274, 110
      %v2737 = vpop.permute.xlu0 %2736
      %2738 = vrot.lane.b32.xlu0 %v2275, 110
      %v2739 = vpop.permute.xlu0 %2738
      %2740 = vrot.lane.b32.xlu0 %v2276, 110
      %v2741 = vpop.permute.xlu0 %2740
      %v2742 = vsel %vm982, %v2735, %v2737
      %v2743 = vsel %vm982, %v2739, %v2741
      %v2748 = vsel %vm774, %v2742, 0.0
      %v2749 = vsel %vm775, %v2737, 0.0
      %v2750 = vsel %vm774, %v2743, 0.0
      %v2751 = vsel %vm775, %v2741, 0.0
      %s2752 = scalar_lea.vmem %s7, 10
      %v2753 = vld [vmem:[%s2752] sm:$0x3]
      %v2755 = vsel %vm1316, %v2753, 0
      %2757 = vmatprep.subr.mxu0 %v2749
      %2758 = vmatpush1.msra.mxu0 %v2748
      %2759 = vmatprep.subr.mxu0 %v2751
      %2760 = vmatpush1.msra.mxu0 %v2750
      %2761 = vmatprep.subr.mxu0 0.0
      %2762 = vmatpush1.msra.mxu0 0.0
      %2763 = vmatprep.subr.mxu0 0.0
      %2764 = vmatpush1.msra.mxu0 0.0
      %2765 = vmatprep.subr.mxu0 0.0
      %2766 = vmatpush1.msra.mxu0 0.0
      %2767 = vmatprep.subr.mxu0 0.0
      %2768 = vmatpush1.msra.mxu0 0.0
      %2769 = vmatprep.subr.mxu0 0.0
      %2770 = vmatpush1.msra.mxu0 0.0
      %2771 = vmatprep.subr.mxu0 0.0
      %2772 = vmatpush1.msra.mxu0 0.0
      %2773 = vmatprep.subr.mxu0 0.0
      %2774 = vmatpush1.msra.mxu0 0.0
      %2775 = vmatprep.subr.mxu0 0.0
      %2776 = vmatpush1.msra.mxu0 0.0
      %2777 = vmatprep.subr.mxu0 0.0
      %2778 = vmatpush1.msra.mxu0 0.0
      %2779 = vmatprep.subr.mxu0 0.0
      %2780 = vmatpush1.msra.mxu0 0.0
      %2781 = vmatprep.subr.mxu0 0.0
      %2782 = vmatpush1.msra.mxu0 0.0
      %2783 = vmatprep.subr.mxu0 0.0
      %2784 = vmatpush1.msra.mxu0 0.0
      %2785 = vmatprep.subr.mxu0 0.0
      %2786 = vmatpush1.msra.mxu0 0.0
      %2787 = vmatprep.subr.mxu0 0.0
      %2788 = vmatpush1.msra.mxu0 0.0
      %2789 = vmatprep.subr.mxu0 0.0
      %2790 = vmatpush1.msra.mxu0 0.0
      %2791 = vmatprep.subr.mxu0 0.0
      %2792 = vmatpush1.msra.mxu0 0.0
      %2793 = vmatprep.subr.mxu0 0.0
      %2794 = vmatpush1.msra.mxu0 0.0
      %2795 = vmatprep.subr.mxu0 0.0
      %2796 = vmatpush1.msra.mxu0 0.0
      %2797 = vmatprep.subr.mxu0 0.0
      %2798 = vmatpush1.msra.mxu0 0.0
      %2799 = vmatprep.subr.mxu0 0.0
      %2800 = vmatpush1.msra.mxu0 0.0
      %2801 = vmatprep.subr.mxu0 0.0
      %2802 = vmatpush1.msra.mxu0 0.0
      %2803 = vmatprep.subr.mxu0 0.0
      %2804 = vmatpush1.msra.mxu0 0.0
      %2805 = vmatprep.subr.mxu0 0.0
      %2806 = vmatpush1.msra.mxu0 0.0
      %2807 = vmatprep.subr.mxu0 0.0
      %2808 = vmatpush1.msra.mxu0 0.0
      %2809 = vmatprep.subr.mxu0 0.0
      %2810 = vmatpush1.msra.mxu0 0.0
      %2811 = vmatprep.subr.mxu0 0.0
      %2812 = vmatpush1.msra.mxu0 0.0
      %2813 = vmatprep.subr.mxu0 0.0
      %2814 = vmatpush1.msra.mxu0 0.0
      %2815 = vmatprep.subr.mxu0 0.0
      %2816 = vmatpush1.msra.mxu0 0.0
      %2817 = vmatprep.subr.mxu0 0.0
      %2818 = vmatpush1.msra.mxu0 0.0
      %2819 = vmatprep.subr.mxu0 0.0
      %2820 = vmatpush1.msra.mxu0 0.0
      %2821 = vmatprep.mubr.f32.mxu0 0.0
      %2822 = vmatmul.mubr.f32.gmra.mrb[0].mxu0 %v2755
      %v2823 = vpop.f32.mrb[0].mxu0
      %v2824 = vadd.f32 0.0, %v2823
      %v2825 = vpop.f32.mrb[0].mxu0
      %v2826 = vadd.f32 0.0, %v2825
      %2827 = vdwg.mxu0
      %v2828 = vadd.f32 %v2732, %v2824
      %v2829 = vadd.f32 %v2733, %v2826
      %2830 = vrot.lane.b32.xlu0 %v2273, 96
      %v2831 = vpop.permute.xlu0 %2830
      %2832 = vrot.lane.b32.xlu0 %v2274, 96
      %v2833 = vpop.permute.xlu0 %2832
      %2834 = vrot.lane.b32.xlu0 %v2275, 96
      %v2835 = vpop.permute.xlu0 %2834
      %2836 = vrot.lane.b32.xlu0 %v2276, 96
      %v2837 = vpop.permute.xlu0 %2836
      %v2838 = vsel %vm1045, %v2831, %v2833
      %v2839 = vsel %vm1045, %v2835, %v2837
      %v2844 = vsel %vm630, %v2838, 0.0
      %v2845 = vsel %vm631, %v2833, 0.0
      %v2846 = vsel %vm630, %v2839, 0.0
      %v2847 = vsel %vm631, %v2837, 0.0
      %s2848 = scalar_lea.vmem %s7, 12
      %v2849 = vld [vmem:[%s2848] sm:$0x3]
      %v2851 = vsel %vm1316, %v2849, 0
      %2853 = vmatprep.subr.mxu0 %v2845
      %2854 = vmatpush1.msra.mxu0 %v2844
      %2855 = vmatprep.subr.mxu0 %v2847
      %2856 = vmatpush1.msra.mxu0 %v2846
      %2857 = vmatprep.subr.mxu0 0.0
      %2858 = vmatpush1.msra.mxu0 0.0
      %2859 = vmatprep.subr.mxu0 0.0
      %2860 = vmatpush1.msra.mxu0 0.0
      %2861 = vmatprep.subr.mxu0 0.0
      %2862 = vmatpush1.msra.mxu0 0.0
      %2863 = vmatprep.subr.mxu0 0.0
      %2864 = vmatpush1.msra.mxu0 0.0
      %2865 = vmatprep.subr.mxu0 0.0
      %2866 = vmatpush1.msra.mxu0 0.0
      %2867 = vmatprep.subr.mxu0 0.0
      %2868 = vmatpush1.msra.mxu0 0.0
      %2869 = vmatprep.subr.mxu0 0.0
      %2870 = vmatpush1.msra.mxu0 0.0
      %2871 = vmatprep.subr.mxu0 0.0
      %2872 = vmatpush1.msra.mxu0 0.0
      %2873 = vmatprep.subr.mxu0 0.0
      %2874 = vmatpush1.msra.mxu0 0.0
      %2875 = vmatprep.subr.mxu0 0.0
      %2876 = vmatpush1.msra.mxu0 0.0
      %2877 = vmatprep.subr.mxu0 0.0
      %2878 = vmatpush1.msra.mxu0 0.0
      %2879 = vmatprep.subr.mxu0 0.0
      %2880 = vmatpush1.msra.mxu0 0.0
      %2881 = vmatprep.subr.mxu0 0.0
      %2882 = vmatpush1.msra.mxu0 0.0
      %2883 = vmatprep.subr.mxu0 0.0
      %2884 = vmatpush1.msra.mxu0 0.0
      %2885 = vmatprep.subr.mxu0 0.0
      %2886 = vmatpush1.msra.mxu0 0.0
      %2887 = vmatprep.subr.mxu0 0.0
      %2888 = vmatpush1.msra.mxu0 0.0
      %2889 = vmatprep.subr.mxu0 0.0
      %2890 = vmatpush1.msra.mxu0 0.0
      %2891 = vmatprep.subr.mxu0 0.0
      %2892 = vmatpush1.msra.mxu0 0.0
      %2893 = vmatprep.subr.mxu0 0.0
      %2894 = vmatpush1.msra.mxu0 0.0
      %2895 = vmatprep.subr.mxu0 0.0
      %2896 = vmatpush1.msra.mxu0 0.0
      %2897 = vmatprep.subr.mxu0 0.0
      %2898 = vmatpush1.msra.mxu0 0.0
      %2899 = vmatprep.subr.mxu0 0.0
      %2900 = vmatpush1.msra.mxu0 0.0
      %2901 = vmatprep.subr.mxu0 0.0
      %2902 = vmatpush1.msra.mxu0 0.0
      %2903 = vmatprep.subr.mxu0 0.0
      %2904 = vmatpush1.msra.mxu0 0.0
      %2905 = vmatprep.subr.mxu0 0.0
      %2906 = vmatpush1.msra.mxu0 0.0
      %2907 = vmatprep.subr.mxu0 0.0
      %2908 = vmatpush1.msra.mxu0 0.0
      %2909 = vmatprep.subr.mxu0 0.0
      %2910 = vmatpush1.msra.mxu0 0.0
      %2911 = vmatprep.subr.mxu0 0.0
      %2912 = vmatpush1.msra.mxu0 0.0
      %2913 = vmatprep.subr.mxu0 0.0
      %2914 = vmatpush1.msra.mxu0 0.0
      %2915 = vmatprep.subr.mxu0 0.0
      %2916 = vmatpush1.msra.mxu0 0.0
      %2917 = vmatprep.mubr.f32.mxu0 0.0
      %2918 = vmatmul.mubr.f32.gmra.mrb[0].mxu0 %v2851
      %v2919 = vpop.f32.mrb[0].mxu0
      %v2920 = vadd.f32 0.0, %v2919
      %v2921 = vpop.f32.mrb[0].mxu0
      %v2922 = vadd.f32 0.0, %v2921
      %2923 = vdwg.mxu0
      %v2924 = vadd.f32 %v2828, %v2920
      %v2925 = vadd.f32 %v2829, %v2922
      %s2926 = scalar_lea.vmem %s7, 14
      %v2927 = vld [vmem:[%s2926] sm:$0x3]
      %2928 = vrot.lane.b32.xlu0 %v2273, 95
      %v2929 = vpop.permute.xlu0 %2928
      %2930 = vrot.lane.b32.xlu0 %v2274, 95
      %v2931 = vpop.permute.xlu0 %2930
      %2932 = vrot.lane.b32.xlu0 %v2275, 95
      %v2933 = vpop.permute.xlu0 %2932
      %2934 = vrot.lane.b32.xlu0 %v2276, 95
      %v2935 = vpop.permute.xlu0 %2934
      %v2936 = vsel %vm1133, %v2929, %v2931
      %v2937 = vsel %vm1133, %v2933, %v2935
      %v2943 = vsel %vm1316, %v2927, 0
      %2945 = vmatprep.subr.mxu0 %v2931
      %2946 = vmatpush1.msra.mxu0 %v2936
      %2947 = vmatprep.subr.mxu0 %v2935
      %2948 = vmatpush1.msra.mxu0 %v2937
      %2949 = vmatprep.subr.mxu0 0.0
      %2950 = vmatpush1.msra.mxu0 0.0
      %2951 = vmatprep.subr.mxu0 0.0
      %2952 = vmatpush1.msra.mxu0 0.0
      %2953 = vmatprep.subr.mxu0 0.0
      %2954 = vmatpush1.msra.mxu0 0.0
      %2955 = vmatprep.subr.mxu0 0.0
      %2956 = vmatpush1.msra.mxu0 0.0
      %2957 = vmatprep.subr.mxu0 0.0
      %2958 = vmatpush1.msra.mxu0 0.0
      %2959 = vmatprep.subr.mxu0 0.0
      %2960 = vmatpush1.msra.mxu0 0.0
      %2961 = vmatprep.subr.mxu0 0.0
      %2962 = vmatpush1.msra.mxu0 0.0
      %2963 = vmatprep.subr.mxu0 0.0
      %2964 = vmatpush1.msra.mxu0 0.0
      %2965 = vmatprep.subr.mxu0 0.0
      %2966 = vmatpush1.msra.mxu0 0.0
      %2967 = vmatprep.subr.mxu0 0.0
      %2968 = vmatpush1.msra.mxu0 0.0
      %2969 = vmatprep.subr.mxu0 0.0
      %2970 = vmatpush1.msra.mxu0 0.0
      %2971 = vmatprep.subr.mxu0 0.0
      %2972 = vmatpush1.msra.mxu0 0.0
      %2973 = vmatprep.subr.mxu0 0.0
      %2974 = vmatpush1.msra.mxu0 0.0
      %2975 = vmatprep.subr.mxu0 0.0
      %2976 = vmatpush1.msra.mxu0 0.0
      %2977 = vmatprep.subr.mxu0 0.0
      %2978 = vmatpush1.msra.mxu0 0.0
      %2979 = vmatprep.subr.mxu0 0.0
      %2980 = vmatpush1.msra.mxu0 0.0
      %2981 = vmatprep.subr.mxu0 0.0
      %2982 = vmatpush1.msra.mxu0 0.0
      %2983 = vmatprep.subr.mxu0 0.0
      %2984 = vmatpush1.msra.mxu0 0.0
      %2985 = vmatprep.subr.mxu0 0.0
      %2986 = vmatpush1.msra.mxu0 0.0
      %2987 = vmatprep.subr.mxu0 0.0
      %2988 = vmatpush1.msra.mxu0 0.0
      %2989 = vmatprep.subr.mxu0 0.0
      %2990 = vmatpush1.msra.mxu0 0.0
      %2991 = vmatprep.subr.mxu0 0.0
      %2992 = vmatpush1.msra.mxu0 0.0
      %2993 = vmatprep.subr.mxu0 0.0
      %2994 = vmatpush1.msra.mxu0 0.0
      %2995 = vmatprep.subr.mxu0 0.0
      %2996 = vmatpush1.msra.mxu0 0.0
      %2997 = vmatprep.subr.mxu0 0.0
      %2998 = vmatpush1.msra.mxu0 0.0
      %2999 = vmatprep.subr.mxu0 0.0
      %3000 = vmatpush1.msra.mxu0 0.0
      %3001 = vmatprep.subr.mxu0 0.0
      %3002 = vmatpush1.msra.mxu0 0.0
      %3003 = vmatprep.subr.mxu0 0.0
      %3004 = vmatpush1.msra.mxu0 0.0
      %3005 = vmatprep.subr.mxu0 0.0
      %3006 = vmatpush1.msra.mxu0 0.0
      %3007 = vmatprep.subr.mxu0 0.0
      %3008 = vmatpush1.msra.mxu0 0.0
      %3009 = vmatprep.mubr.f32.mxu0 0.0
      %3010 = vmatmul.mubr.f32.gmra.mrb[0].mxu0 %v2943
      %v3011 = vpop.f32.mrb[0].mxu0
      %v3012 = vadd.f32 0.0, %v3011
      %v3013 = vpop.f32.mrb[0].mxu0
      %v3014 = vadd.f32 0.0, %v3013
      %3015 = vdwg.mxu0
      %v3016 = vadd.f32 %v2924, %v3012
      %v3017 = vadd.f32 %v2925, %v3014
      %3018 = vrot.lane.b32.xlu0 %v2273, 94
      %v3019 = vpop.permute.xlu0 %3018
      %3020 = vrot.lane.b32.xlu0 %v2274, 94
      %v3021 = vpop.permute.xlu0 %3020
      %3022 = vrot.lane.b32.xlu0 %v2275, 94
      %v3023 = vpop.permute.xlu0 %3022
      %3024 = vrot.lane.b32.xlu0 %v2276, 94
      %v3025 = vpop.permute.xlu0 %3024
      %v3026 = vsel %vm1182, %v3019, %v3021
      %v3027 = vsel %vm1182, %v3023, %v3025
      %v3032 = vsel %vm774, %v3026, 0.0
      %v3033 = vsel %vm775, %v3021, 0.0
      %v3034 = vsel %vm774, %v3027, 0.0
      %v3035 = vsel %vm775, %v3025, 0.0
      %s3036 = scalar_lea.vmem %s7, 16
      %v3037 = vld [vmem:[%s3036] sm:$0x3]
      %v3039 = vsel %vm1316, %v3037, 0
      %3041 = vmatprep.subr.mxu0 %v3033
      %3042 = vmatpush1.msra.mxu0 %v3032
      %3043 = vmatprep.subr.mxu0 %v3035
      %3044 = vmatpush1.msra.mxu0 %v3034
      %3045 = vmatprep.subr.mxu0 0.0
      %3046 = vmatpush1.msra.mxu0 0.0
      %3047 = vmatprep.subr.mxu0 0.0
      %3048 = vmatpush1.msra.mxu0 0.0
      %3049 = vmatprep.subr.mxu0 0.0
      %3050 = vmatpush1.msra.mxu0 0.0
      %3051 = vmatprep.subr.mxu0 0.0
      %3052 = vmatpush1.msra.mxu0 0.0
      %3053 = vmatprep.subr.mxu0 0.0
      %3054 = vmatpush1.msra.mxu0 0.0
      %3055 = vmatprep.subr.mxu0 0.0
      %3056 = vmatpush1.msra.mxu0 0.0
      %3057 = vmatprep.subr.mxu0 0.0
      %3058 = vmatpush1.msra.mxu0 0.0
      %3059 = vmatprep.subr.mxu0 0.0
      %3060 = vmatpush1.msra.mxu0 0.0
      %3061 = vmatprep.subr.mxu0 0.0
      %3062 = vmatpush1.msra.mxu0 0.0
      %3063 = vmatprep.subr.mxu0 0.0
      %3064 = vmatpush1.msra.mxu0 0.0
      %3065 = vmatprep.subr.mxu0 0.0
      %3066 = vmatpush1.msra.mxu0 0.0
      %3067 = vmatprep.subr.mxu0 0.0
      %3068 = vmatpush1.msra.mxu0 0.0
      %3069 = vmatprep.subr.mxu0 0.0
      %3070 = vmatpush1.msra.mxu0 0.0
      %3071 = vmatprep.subr.mxu0 0.0
      %3072 = vmatpush1.msra.mxu0 0.0
      %3073 = vmatprep.subr.mxu0 0.0
      %3074 = vmatpush1.msra.mxu0 0.0
      %3075 = vmatprep.subr.mxu0 0.0
      %3076 = vmatpush1.msra.mxu0 0.0
      %3077 = vmatprep.subr.mxu0 0.0
      %3078 = vmatpush1.msra.mxu0 0.0
      %3079 = vmatprep.subr.mxu0 0.0
      %3080 = vmatpush1.msra.mxu0 0.0
      %3081 = vmatprep.subr.mxu0 0.0
      %3082 = vmatpush1.msra.mxu0 0.0
      %3083 = vmatprep.subr.mxu0 0.0
      %3084 = vmatpush1.msra.mxu0 0.0
      %3085 = vmatprep.subr.mxu0 0.0
      %3086 = vmatpush1.msra.mxu0 0.0
      %3087 = vmatprep.subr.mxu0 0.0
      %3088 = vmatpush1.msra.mxu0 0.0
      %3089 = vmatprep.subr.mxu0 0.0
      %3090 = vmatpush1.msra.mxu0 0.0
      %3091 = vmatprep.subr.mxu0 0.0
      %3092 = vmatpush1.msra.mxu0 0.0
      %3093 = vmatprep.subr.mxu0 0.0
      %3094 = vmatpush1.msra.mxu0 0.0
      %3095 = vmatprep.subr.mxu0 0.0
      %3096 = vmatpush1.msra.mxu0 0.0
      %3097 = vmatprep.subr.mxu0 0.0
      %3098 = vmatpush1.msra.mxu0 0.0
      %3099 = vmatprep.subr.mxu0 0.0
      %3100 = vmatpush1.msra.mxu0 0.0
      %3101 = vmatprep.subr.mxu0 0.0
      %3102 = vmatpush1.msra.mxu0 0.0
      %3103 = vmatprep.subr.mxu0 0.0
      %3104 = vmatpush1.msra.mxu0 0.0
      %3105 = vmatprep.mubr.f32.mxu0 0.0
      %3106 = vmatmul.mubr.f32.gmra.mrb[0].mxu0 %v3039
      %v3107 = vpop.f32.mrb[0].mxu0
      %v3108 = vadd.f32 0.0, %v3107
      %v3109 = vpop.f32.mrb[0].mxu0
      %v3110 = vadd.f32 0.0, %v3109
      %3111 = vdwg.mxu0
      %v3112 = vadd.f32 %v3016, %v3108
      %v3113 = vadd.f32 %v3017, %v3110
      %v3114 = vld [vmem:[%s8] sm:$0x3]
      %3116 = vset.pattern.permute.xlu0 0
      %3117 = vperm.xlu0 %3116, %v3114
      %v3118 = vpop.permute.xlu0 %3117
      %v3120 = vadd.f32 %v3112, %v3118
      %v3121 = vadd.f32 %v3113, %v3118
      %v3122 = vmax.f32 %v3120, 0.0
      %v3123 = vmax.f32 %v3121, 0.0
      %v3126 = vcombine.low %v3122, %v3123
      %v3128 = vunpack.c.l.s4 1983009808
      %v3129 = vunpack.c.0.s8 %v3128
      %v3130 = vlaneseq
      %v3131 = vshrl.u32 %v3130, 7
      %v3132 = vsub.s32 %v3129, %v3131
      %v3133 = vrot.slane %v3126, %v3132
      %vm3135 = vcmask 1041408
      %vm3136 = vcmask 125954
      %vm3137 = vmor %vm3136, %vm3135
      %3138 = vst.msk [vmem:[%s561] sm:$0xf] %vm3137, %v3133
      %v3139 = vld [vmem:[%s556] sm:$0x3]
      %3140 = vst.msk [vmem:[#allocation3] sm:$0xff] %vm568, 0.0
      %3141 = vst.msk [vmem:[#allocation3 + $0x18] sm:$0xff] %vm568, 0.0
      %vm3142 = vcmask 277640
      %3143 = vst.msk [vmem:[#allocation3 + $0x10] sm:$0xff] %vm3142, 0.0
      %3144 = vst.msk [vmem:[#allocation3 + $0x28] sm:$0xff] %vm3142, 0.0
      %3146 = vrot.lane.b32.xlu0 %v3139, 17
      %v3147 = vpop.permute.xlu0 %3146
      %v3148 = vrot.slane %v3147, 7
      %v3149 = vsel %vm568, %v3148, %v3147
      %vm3151 = vcmp.lt.s32.totalorder %v611, 273
      %vm3152 = vmand %vm612, %vm3151
      %3153 = vst.msk [vmem:[#allocation3] ss:$8 sm:$0x7] %vm3152, %v3149
      %3154 = vst.msk [vmem:[#allocation3] ss:$8 sm:$0x0] %vm3152, %v3149
      %v3155 = vld [vmem:[#allocation3] ss:$8 sm:$0x3]
      %v3157 = vlaneseq
      %v3158 = vshrl.u32 %v3157, 7
      %v3159 = vsub.s32 0, %v3158
      %v3160 = vrot.slane %v3155, %v3159
      %v3161 = vlaneseq
      %v3162 = vshrl.u32 %v3161, 7
      %v3163 = vsub.s32 1, %v3162
      %v3164 = vrot.slane %v3155, %v3163
      %v3167 = vsel %vm601, %v3160, 0.0
      %v3168 = vsel %vm602, %v3164, 0.0
      %v3169 = vld [vmem:[%s9] sm:$0xff]
      %v3170 = vld [vmem:[%s9 + $0x8] sm:$0xff]
      %3172 = vset.pattern.permute.xlu0 0
      %3173 = vperm.xlu0 %3172, %v3169
      %v3174 = vpop.permute.xlu0 %3173
      %3177 = vset.pattern.permute.xlu0 0
      %3178 = vperm.xlu0 %3177, %v3170
      %v3179 = vpop.permute.xlu0 %3178
      %v3181 = vlaneseq
      %v3182 = vshrl.u32 %v3181, 7
      %v3183 = vsub.s32 0, %v3182
      %v3184 = vrot.slane %v3167, %v3183
      %v3185 = vlaneseq
      %v3186 = vshrl.u32 %v3185, 7
      %v3187 = vsub.s32 0, %v3186
      %v3188 = vrot.slane %v3168, %v3187
      %v3189 = vmul.f32 %v3174, %v3184
      %v3190 = vmul.f32 %v3174, %v3188
      %v3191 = vmul.f32 %v3179, %v3184
      %v3192 = vmul.f32 %v3179, %v3188
      %v3193 = vld [vmem:[#allocation3] ss:$8 sm:$0x7]
      %s3194 = scalar_lea.vmem %s9, 16
      %v3195 = vld [vmem:[%s3194] sm:$0xff]
      %v3196 = vld [vmem:[%s3194 + $0x8] sm:$0xff]
      %3198 = vset.pattern.permute.xlu0 0
      %3199 = vperm.xlu0 %3198, %v3195
      %v3200 = vpop.permute.xlu0 %3199
      %3203 = vset.pattern.permute.xlu0 0
      %3204 = vperm.xlu0 %3203, %v3196
      %v3205 = vpop.permute.xlu0 %3204
      %v3208 = vlaneseq
      %v3209 = vshrl.u32 %v3208, 7
      %v3210 = vsub.s32 0, %v3209
      %v3211 = vrot.slane %v3193, %v3210
      %v3212 = vlaneseq
      %v3213 = vshrl.u32 %v3212, 7
      %v3214 = vsub.s32 1, %v3213
      %v3215 = vrot.slane %v3193, %v3214
      %v3216 = vlaneseq
      %v3217 = vshrl.u32 %v3216, 7
      %v3218 = vsub.s32 2, %v3217
      %v3219 = vrot.slane %v3193, %v3218
      %v3223 = vmul.f32 %v3200, %v3211
      %v3224 = vmul.f32 %v3200, %v3215
      %v3225 = vmul.f32 %v3200, %v3219
      %v3226 = vmul.f32 %v3205, %v3211
      %v3227 = vmul.f32 %v3205, %v3215
      %v3228 = vmul.f32 %v3205, %v3219
      %3235 = vrot.lane.b32.xlu0 %v3223, 127
      %v3236 = vpop.permute.xlu0 %3235
      %3237 = vrot.lane.b32.xlu0 %v3224, 127
      %v3238 = vpop.permute.xlu0 %3237
      %3239 = vrot.lane.b32.xlu0 %v3225, 127
      %v3240 = vpop.permute.xlu0 %3239
      %3241 = vrot.lane.b32.xlu0 %v3226, 127
      %v3242 = vpop.permute.xlu0 %3241
      %3243 = vrot.lane.b32.xlu0 %v3227, 127
      %v3244 = vpop.permute.xlu0 %3243
      %3245 = vrot.lane.b32.xlu0 %v3228, 127
      %v3246 = vpop.permute.xlu0 %3245
      %v3247 = vsel %vm719, %v3236, %v3238
      %v3248 = vsel %vm719, %v3238, %v3240
      %v3249 = vsel %vm719, %v3242, %v3244
      %v3250 = vsel %vm719, %v3244, %v3246
      %v3255 = vadd.f32 %v3189, %v3247
      %v3256 = vadd.f32 %v3190, %v3248
      %v3257 = vadd.f32 %v3191, %v3249
      %v3258 = vadd.f32 %v3192, %v3250
      %3259 = vrot.lane.b32.xlu0 %v3211, 126
      %v3260 = vpop.permute.xlu0 %3259
      %3261 = vrot.lane.b32.xlu0 %v3215, 126
      %v3262 = vpop.permute.xlu0 %3261
      %3263 = vrot.lane.b32.xlu0 %v3219, 126
      %v3264 = vpop.permute.xlu0 %3263
      %v3265 = vsel %vm782, %v3260, %v3262
      %v3266 = vsel %vm782, %v3262, %v3264
      %v3269 = vsel %vm603, %v3265, 0.0
      %v3270 = vsel %vm604, %v3266, 0.0
      %s3271 = scalar_lea.vmem %s9, 32
      %v3272 = vld [vmem:[%s3271] sm:$0xff]
      %v3273 = vld [vmem:[%s3271 + $0x8] sm:$0xff]
      %3275 = vset.pattern.permute.xlu0 0
      %3276 = vperm.xlu0 %3275, %v3272
      %v3277 = vpop.permute.xlu0 %3276
      %3280 = vset.pattern.permute.xlu0 0
      %3281 = vperm.xlu0 %3280, %v3273
      %v3282 = vpop.permute.xlu0 %3281
      %v3284 = vlaneseq
      %v3285 = vshrl.u32 %v3284, 7
      %v3286 = vsub.s32 0, %v3285
      %v3287 = vrot.slane %v3269, %v3286
      %v3288 = vlaneseq
      %v3289 = vshrl.u32 %v3288, 7
      %v3290 = vsub.s32 0, %v3289
      %v3291 = vrot.slane %v3270, %v3290
      %v3292 = vmul.f32 %v3277, %v3287
      %v3293 = vmul.f32 %v3277, %v3291
      %v3294 = vmul.f32 %v3282, %v3287
      %v3295 = vmul.f32 %v3282, %v3291
      %v3296 = vadd.f32 %v3255, %v3292
      %v3297 = vadd.f32 %v3256, %v3293
      %v3298 = vadd.f32 %v3257, %v3294
      %v3299 = vadd.f32 %v3258, %v3295
      %3300 = vrot.lane.b32.xlu0 %v3211, 112
      %v3301 = vpop.permute.xlu0 %3300
      %3302 = vrot.lane.b32.xlu0 %v3215, 112
      %v3303 = vpop.permute.xlu0 %3302
      %3304 = vrot.lane.b32.xlu0 %v3219, 112
      %v3305 = vpop.permute.xlu0 %3304
      %v3306 = vsel %vm845, %v3301, %v3303
      %v3307 = vsel %vm845, %v3303, %v3305
      %v3310 = vsel %vm601, %v3306, 0.0
      %v3311 = vsel %vm602, %v3307, 0.0
      %s3312 = scalar_lea.vmem %s9, 48
      %v3313 = vld [vmem:[%s3312] sm:$0xff]
      %v3314 = vld [vmem:[%s3312 + $0x8] sm:$0xff]
      %3316 = vset.pattern.permute.xlu0 0
      %3317 = vperm.xlu0 %3316, %v3313
      %v3318 = vpop.permute.xlu0 %3317
      %3321 = vset.pattern.permute.xlu0 0
      %3322 = vperm.xlu0 %3321, %v3314
      %v3323 = vpop.permute.xlu0 %3322
      %v3325 = vlaneseq
      %v3326 = vshrl.u32 %v3325, 7
      %v3327 = vsub.s32 0, %v3326
      %v3328 = vrot.slane %v3310, %v3327
      %v3329 = vlaneseq
      %v3330 = vshrl.u32 %v3329, 7
      %v3331 = vsub.s32 0, %v3330
      %v3332 = vrot.slane %v3311, %v3331
      %v3333 = vmul.f32 %v3318, %v3328
      %v3334 = vmul.f32 %v3318, %v3332
      %v3335 = vmul.f32 %v3323, %v3328
      %v3336 = vmul.f32 %v3323, %v3332
      %v3337 = vadd.f32 %v3296, %v3333
      %v3338 = vadd.f32 %v3297, %v3334
      %v3339 = vadd.f32 %v3298, %v3335
      %v3340 = vadd.f32 %v3299, %v3336
      %s3341 = scalar_lea.vmem %s9, 64
      %v3342 = vld [vmem:[%s3341] sm:$0xff]
      %v3343 = vld [vmem:[%s3341 + $0x8] sm:$0xff]
      %3345 = vset.pattern.permute.xlu0 0
      %3346 = vperm.xlu0 %3345, %v3342
      %v3347 = vpop.permute.xlu0 %3346
      %3350 = vset.pattern.permute.xlu0 0
      %3351 = vperm.xlu0 %3350, %v3343
      %v3352 = vpop.permute.xlu0 %3351
      %v3354 = vmul.f32 %v3347, %v3211
      %v3355 = vmul.f32 %v3347, %v3215
      %v3356 = vmul.f32 %v3347, %v3219
      %v3357 = vmul.f32 %v3352, %v3211
      %v3358 = vmul.f32 %v3352, %v3215
      %v3359 = vmul.f32 %v3352, %v3219
      %3366 = vrot.lane.b32.xlu0 %v3354, 111
      %v3367 = vpop.permute.xlu0 %3366
      %3368 = vrot.lane.b32.xlu0 %v3355, 111
      %v3369 = vpop.permute.xlu0 %3368
      %3370 = vrot.lane.b32.xlu0 %v3356, 111
      %v3371 = vpop.permute.xlu0 %3370
      %3372 = vrot.lane.b32.xlu0 %v3357, 111
      %v3373 = vpop.permute.xlu0 %3372
      %3374 = vrot.lane.b32.xlu0 %v3358, 111
      %v3375 = vpop.permute.xlu0 %3374
      %3376 = vrot.lane.b32.xlu0 %v3359, 111
      %v3377 = vpop.permute.xlu0 %3376
      %v3378 = vsel %vm933, %v3367, %v3369
      %v3379 = vsel %vm933, %v3369, %v3371
      %v3380 = vsel %vm933, %v3373, %v3375
      %v3381 = vsel %vm933, %v3375, %v3377
      %v3386 = vadd.f32 %v3337, %v3378
      %v3387 = vadd.f32 %v3338, %v3379
      %v3388 = vadd.f32 %v3339, %v3380
      %v3389 = vadd.f32 %v3340, %v3381
      %3390 = vrot.lane.b32.xlu0 %v3211, 110
      %v3391 = vpop.permute.xlu0 %3390
      %3392 = vrot.lane.b32.xlu0 %v3215, 110
      %v3393 = vpop.permute.xlu0 %3392
      %3394 = vrot.lane.b32.xlu0 %v3219, 110
      %v3395 = vpop.permute.xlu0 %3394
      %v3396 = vsel %vm982, %v3391, %v3393
      %v3397 = vsel %vm982, %v3393, %v3395
      %v3400 = vsel %vm603, %v3396, 0.0
      %v3401 = vsel %vm604, %v3397, 0.0
      %s3402 = scalar_lea.vmem %s9, 80
      %v3403 = vld [vmem:[%s3402] sm:$0xff]
      %v3404 = vld [vmem:[%s3402 + $0x8] sm:$0xff]
      %3406 = vset.pattern.permute.xlu0 0
      %3407 = vperm.xlu0 %3406, %v3403
      %v3408 = vpop.permute.xlu0 %3407
      %3411 = vset.pattern.permute.xlu0 0
      %3412 = vperm.xlu0 %3411, %v3404
      %v3413 = vpop.permute.xlu0 %3412
      %v3415 = vlaneseq
      %v3416 = vshrl.u32 %v3415, 7
      %v3417 = vsub.s32 0, %v3416
      %v3418 = vrot.slane %v3400, %v3417
      %v3419 = vlaneseq
      %v3420 = vshrl.u32 %v3419, 7
      %v3421 = vsub.s32 0, %v3420
      %v3422 = vrot.slane %v3401, %v3421
      %v3423 = vmul.f32 %v3408, %v3418
      %v3424 = vmul.f32 %v3408, %v3422
      %v3425 = vmul.f32 %v3413, %v3418
      %v3426 = vmul.f32 %v3413, %v3422
      %v3427 = vadd.f32 %v3386, %v3423
      %v3428 = vadd.f32 %v3387, %v3424
      %v3429 = vadd.f32 %v3388, %v3425
      %v3430 = vadd.f32 %v3389, %v3426
      %3431 = vrot.lane.b32.xlu0 %v3211, 96
      %v3432 = vpop.permute.xlu0 %3431
      %3433 = vrot.lane.b32.xlu0 %v3215, 96
      %v3434 = vpop.permute.xlu0 %3433
      %3435 = vrot.lane.b32.xlu0 %v3219, 96
      %v3436 = vpop.permute.xlu0 %3435
      %v3437 = vsel %vm1045, %v3432, %v3434
      %v3438 = vsel %vm1045, %v3434, %v3436
      %v3441 = vsel %vm601, %v3437, 0.0
      %v3442 = vsel %vm602, %v3438, 0.0
      %s3443 = scalar_lea.vmem %s9, 96
      %v3444 = vld [vmem:[%s3443] sm:$0xff]
      %v3445 = vld [vmem:[%s3443 + $0x8] sm:$0xff]
      %3447 = vset.pattern.permute.xlu0 0
      %3448 = vperm.xlu0 %3447, %v3444
      %v3449 = vpop.permute.xlu0 %3448
      %3452 = vset.pattern.permute.xlu0 0
      %3453 = vperm.xlu0 %3452, %v3445
      %v3454 = vpop.permute.xlu0 %3453
      %v3456 = vlaneseq
      %v3457 = vshrl.u32 %v3456, 7
      %v3458 = vsub.s32 0, %v3457
      %v3459 = vrot.slane %v3441, %v3458
      %v3460 = vlaneseq
      %v3461 = vshrl.u32 %v3460, 7
      %v3462 = vsub.s32 0, %v3461
      %v3463 = vrot.slane %v3442, %v3462
      %v3464 = vmul.f32 %v3449, %v3459
      %v3465 = vmul.f32 %v3449, %v3463
      %v3466 = vmul.f32 %v3454, %v3459
      %v3467 = vmul.f32 %v3454, %v3463
      %v3468 = vadd.f32 %v3427, %v3464
      %v3469 = vadd.f32 %v3428, %v3465
      %v3470 = vadd.f32 %v3429, %v3466
      %v3471 = vadd.f32 %v3430, %v3467
      %s3472 = scalar_lea.vmem %s9, 112
      %v3473 = vld [vmem:[%s3472] sm:$0xff]
      %v3474 = vld [vmem:[%s3472 + $0x8] sm:$0xff]
      %3476 = vset.pattern.permute.xlu0 0
      %3477 = vperm.xlu0 %3476, %v3473
      %v3478 = vpop.permute.xlu0 %3477
      %3481 = vset.pattern.permute.xlu0 0
      %3482 = vperm.xlu0 %3481, %v3474
      %v3483 = vpop.permute.xlu0 %3482
      %v3485 = vmul.f32 %v3478, %v3211
      %v3486 = vmul.f32 %v3478, %v3215
      %v3487 = vmul.f32 %v3478, %v3219
      %v3488 = vmul.f32 %v3483, %v3211
      %v3489 = vmul.f32 %v3483, %v3215
      %v3490 = vmul.f32 %v3483, %v3219
      %3497 = vrot.lane.b32.xlu0 %v3485, 95
      %v3498 = vpop.permute.xlu0 %3497
      %3499 = vrot.lane.b32.xlu0 %v3486, 95
      %v3500 = vpop.permute.xlu0 %3499
      %3501 = vrot.lane.b32.xlu0 %v3487, 95
      %v3502 = vpop.permute.xlu0 %3501
      %3503 = vrot.lane.b32.xlu0 %v3488, 95
      %v3504 = vpop.permute.xlu0 %3503
      %3505 = vrot.lane.b32.xlu0 %v3489, 95
      %v3506 = vpop.permute.xlu0 %3505
      %3507 = vrot.lane.b32.xlu0 %v3490, 95
      %v3508 = vpop.permute.xlu0 %3507
      %v3509 = vsel %vm1133, %v3498, %v3500
      %v3510 = vsel %vm1133, %v3500, %v3502
      %v3511 = vsel %vm1133, %v3504, %v3506
      %v3512 = vsel %vm1133, %v3506, %v3508
      %v3517 = vadd.f32 %v3468, %v3509
      %v3518 = vadd.f32 %v3469, %v3510
      %v3519 = vadd.f32 %v3470, %v3511
      %v3520 = vadd.f32 %v3471, %v3512
      %3521 = vrot.lane.b32.xlu0 %v3211, 94
      %v3522 = vpop.permute.xlu0 %3521
      %3523 = vrot.lane.b32.xlu0 %v3215, 94
      %v3524 = vpop.permute.xlu0 %3523
      %3525 = vrot.lane.b32.xlu0 %v3219, 94
      %v3526 = vpop.permute.xlu0 %3525
      %v3527 = vsel %vm1182, %v3522, %v3524
      %v3528 = vsel %vm1182, %v3524, %v3526
      %v3531 = vsel %vm603, %v3527, 0.0
      %v3532 = vsel %vm604, %v3528, 0.0
      %s3533 = scalar_lea.vmem %s9, 128
      %v3534 = vld [vmem:[%s3533] sm:$0xff]
      %v3535 = vld [vmem:[%s3533 + $0x8] sm:$0xff]
      %3537 = vset.pattern.permute.xlu0 0
      %3538 = vperm.xlu0 %3537, %v3534
      %v3539 = vpop.permute.xlu0 %3538
      %3542 = vset.pattern.permute.xlu0 0
      %3543 = vperm.xlu0 %3542, %v3535
      %v3544 = vpop.permute.xlu0 %3543
      %v3546 = vlaneseq
      %v3547 = vshrl.u32 %v3546, 7
      %v3548 = vsub.s32 0, %v3547
      %v3549 = vrot.slane %v3531, %v3548
      %v3550 = vlaneseq
      %v3551 = vshrl.u32 %v3550, 7
      %v3552 = vsub.s32 0, %v3551
      %v3553 = vrot.slane %v3532, %v3552
      %v3554 = vmul.f32 %v3539, %v3549
      %v3555 = vmul.f32 %v3539, %v3553
      %v3556 = vmul.f32 %v3544, %v3549
      %v3557 = vmul.f32 %v3544, %v3553
      %v3558 = vadd.f32 %v3517, %v3554
      %v3559 = vadd.f32 %v3518, %v3555
      %v3560 = vadd.f32 %v3519, %v3556
      %v3561 = vadd.f32 %v3520, %v3557
      %v3562 = vld [vmem:[%s10] sm:$0xff]
      %v3563 = vld [vmem:[%s10 + $0x8] sm:$0xff]
      %3565 = vset.pattern.permute.xlu0 0
      %3566 = vperm.xlu0 %3565, %v3562
      %v3567 = vpop.permute.xlu0 %3566
      %3570 = vset.pattern.permute.xlu0 0
      %3571 = vperm.xlu0 %3570, %v3563
      %v3572 = vpop.permute.xlu0 %3571
      %v3574 = vadd.f32 %v3558, %v3567
      %v3575 = vadd.f32 %v3559, %v3567
      %v3576 = vadd.f32 %v3560, %v3572
      %v3577 = vadd.f32 %v3561, %v3572
      %v3578 = vmax.f32 %v3574, 0.0
      %v3579 = vmax.f32 %v3575, 0.0
      %v3580 = vmax.f32 %v3576, 0.0
      %v3581 = vmax.f32 %v3577, 0.0
      %3586 = vrot.lane.b32.xlu0 %v3578, 17
      %v3587 = vpop.permute.xlu0 %3586
      %3588 = vrot.lane.b32.xlu0 %v3579, 17
      %v3589 = vpop.permute.xlu0 %3588
      %3590 = vrot.lane.b32.xlu0 %v3580, 17
      %v3591 = vpop.permute.xlu0 %3590
      %3592 = vrot.lane.b32.xlu0 %v3581, 17
      %v3593 = vpop.permute.xlu0 %3592
      %v3594 = vsel %vm568, %v3587, %v3589
      %v3595 = vsel %vm568, %v3591, %v3593
      %3602 = vst.msk [vmem:[#allocation3] sm:$0xff] %vm1279, %v3587
      %3603 = vst [vmem:[#allocation3 + $0x8] sm:$0xff] %v3594
      %3604 = vst.msk [vmem:[#allocation3 + $0x10] sm:$0xff] %vm568, %v3589
      %3605 = vst.msk [vmem:[#allocation3 + $0x18] sm:$0xff] %vm1279, %v3591
      %3606 = vst [vmem:[#allocation3 + $0x20] sm:$0xff] %v3595
      %3607 = vst.msk [vmem:[#allocation3 + $0x28] sm:$0xff] %vm568, %v3593
      %v3608 = vld [vmem:[#allocation3] sm:$0xff]
      %v3609 = vld [vmem:[#allocation3 + $0x8] sm:$0xff]
      %v3610 = vld [vmem:[#allocation3 + $0x18] sm:$0xff]
      %v3611 = vld [vmem:[#allocation3 + $0x20] sm:$0xff]
      %v3612 = vsel %vm630, %v3608, 0.0
      %v3613 = vsel %vm631, %v3609, 0.0
      %v3614 = vsel %vm630, %v3610, 0.0
      %v3615 = vsel %vm631, %v3611, 0.0
      %v3616 = vld [vmem:[%s11] sm:$0xff]
      %v3617 = vld [vmem:[%s11 + $0x8] sm:$0xff]
      %v3618 = vld [vmem:[#allocation3 + $0x10] sm:$0xff]
      %v3619 = vld [vmem:[#allocation3 + $0x28] sm:$0xff]
      %s3620 = scalar_lea.vmem %s11, 16
      %v3621 = vld [vmem:[%s3620] sm:$0xff]
      %v3622 = vld [vmem:[%s3620 + $0x8] sm:$0xff]
      %3629 = vrot.lane.b32.xlu0 %v3608, 127
      %v3630 = vpop.permute.xlu0 %3629
      %3631 = vrot.lane.b32.xlu0 %v3609, 127
      %v3632 = vpop.permute.xlu0 %3631
      %3633 = vrot.lane.b32.xlu0 %v3618, 127
      %v3634 = vpop.permute.xlu0 %3633
      %3635 = vrot.lane.b32.xlu0 %v3610, 127
      %v3636 = vpop.permute.xlu0 %3635
      %3637 = vrot.lane.b32.xlu0 %v3611, 127
      %v3638 = vpop.permute.xlu0 %3637
      %3639 = vrot.lane.b32.xlu0 %v3619, 127
      %v3640 = vpop.permute.xlu0 %3639
      %v3641 = vsel %vm719, %v3630, %v3632
      %v3642 = vsel %vm719, %v3632, %v3634
      %v3643 = vsel %vm719, %v3636, %v3638
      %v3644 = vsel %vm719, %v3638, %v3640
      %v3650 = vsel %vm1316, %v3621, 0
      %v3653 = vsel %vm1316, %v3622, 0
      %3655 = vmatprep.subr.mxu0 %v3642
      %3656 = vmatpush1.msra.mxu0 %v3641
      %3657 = vmatprep.subr.mxu0 %v3644
      %3658 = vmatpush1.msra.mxu0 %v3643
      %3659 = vmatprep.subr.mxu0 0.0
      %3660 = vmatpush1.msra.mxu0 0.0
      %3661 = vmatprep.subr.mxu0 0.0
      %3662 = vmatpush1.msra.mxu0 0.0
      %3663 = vmatprep.subr.mxu0 0.0
      %3664 = vmatpush1.msra.mxu0 0.0
      %3665 = vmatprep.subr.mxu0 0.0
      %3666 = vmatpush1.msra.mxu0 0.0
      %3667 = vmatprep.subr.mxu0 0.0
      %3668 = vmatpush1.msra.mxu0 0.0
      %3669 = vmatprep.subr.mxu0 0.0
      %3670 = vmatpush1.msra.mxu0 0.0
      %3671 = vmatprep.subr.mxu0 0.0
      %3672 = vmatpush1.msra.mxu0 0.0
      %3673 = vmatprep.subr.mxu0 0.0
      %3674 = vmatpush1.msra.mxu0 0.0
      %3675 = vmatprep.subr.mxu0 0.0
      %3676 = vmatpush1.msra.mxu0 0.0
      %3677 = vmatprep.subr.mxu0 0.0
      %3678 = vmatpush1.msra.mxu0 0.0
      %3679 = vmatprep.subr.mxu0 0.0
      %3680 = vmatpush1.msra.mxu0 0.0
      %3681 = vmatprep.subr.mxu0 0.0
      %3682 = vmatpush1.msra.mxu0 0.0
      %3683 = vmatprep.subr.mxu0 0.0
      %3684 = vmatpush1.msra.mxu0 0.0
      %3685 = vmatprep.subr.mxu0 0.0
      %3686 = vmatpush1.msra.mxu0 0.0
      %3687 = vmatprep.subr.mxu0 0.0
      %3688 = vmatpush1.msra.mxu0 0.0
      %3689 = vmatprep.subr.mxu0 0.0
      %3690 = vmatpush1.msra.mxu0 0.0
      %3691 = vmatprep.subr.mxu0 0.0
      %3692 = vmatpush1.msra.mxu0 0.0
      %3693 = vmatprep.subr.mxu0 0.0
      %3694 = vmatpush1.msra.mxu0 0.0
      %3695 = vmatprep.subr.mxu0 0.0
      %3696 = vmatpush1.msra.mxu0 0.0
      %3697 = vmatprep.subr.mxu0 0.0
      %3698 = vmatpush1.msra.mxu0 0.0
      %3699 = vmatprep.subr.mxu0 0.0
      %3700 = vmatpush1.msra.mxu0 0.0
      %3701 = vmatprep.subr.mxu0 0.0
      %3702 = vmatpush1.msra.mxu0 0.0
      %3703 = vmatprep.subr.mxu0 0.0
      %3704 = vmatpush1.msra.mxu0 0.0
      %3705 = vmatprep.subr.mxu0 0.0
      %3706 = vmatpush1.msra.mxu0 0.0
      %3707 = vmatprep.subr.mxu0 0.0
      %3708 = vmatpush1.msra.mxu0 0.0
      %3709 = vmatprep.subr.mxu0 0.0
      %3710 = vmatpush1.msra.mxu0 0.0
      %3711 = vmatprep.subr.mxu0 0.0
      %3712 = vmatpush1.msra.mxu0 0.0
      %3713 = vmatprep.subr.mxu0 0.0
      %3714 = vmatpush1.msra.mxu0 0.0
      %3715 = vmatprep.subr.mxu0 0.0
      %3716 = vmatpush1.msra.mxu0 0.0
      %3717 = vmatprep.subr.mxu0 0.0
      %3718 = vmatpush1.msra.mxu0 0.0
      %3719 = vmatprep.mubr.f32.mxu0 0.0
      %3720 = vmatmul.mubr.f32.gmra.mrb[0].mxu0 %v3650
      %v3721 = vpop.f32.mrb[0].mxu0
      %v3722 = vadd.f32 0.0, %v3721
      %v3723 = vpop.f32.mrb[0].mxu0
      %v3724 = vadd.f32 0.0, %v3723
      %3725 = vmatprep.mubr.f32.mxu0 0.0
      %3726 = vmatmul.mubr.f32.gmra.mrb[0].mxu0 %v3653
      %v3727 = vpop.f32.mrb[0].mxu0
      %v3728 = vadd.f32 0.0, %v3727
      %v3729 = vpop.f32.mrb[0].mxu0
      %v3730 = vadd.f32 0.0, %v3729
      %3731 = vdwg.mxu0
      %v3733 = vsel %vm1316, %v3616, 0
      %v3736 = vsel %vm1316, %v3617, 0
      %3738 = vmatprep.subr.mxu0 %v3613
      %3739 = vmatpush1.msra.mxu0 %v3612
      %3740 = vmatprep.subr.mxu0 %v3615
      %3741 = vmatpush1.msra.mxu0 %v3614
      %3742 = vmatprep.subr.mxu0 0.0
      %3743 = vmatpush1.msra.mxu0 0.0
      %3744 = vmatprep.subr.mxu0 0.0
      %3745 = vmatpush1.msra.mxu0 0.0
      %3746 = vmatprep.subr.mxu0 0.0
      %3747 = vmatpush1.msra.mxu0 0.0
      %3748 = vmatprep.subr.mxu0 0.0
      %3749 = vmatpush1.msra.mxu0 0.0
      %3750 = vmatprep.subr.mxu0 0.0
      %3751 = vmatpush1.msra.mxu0 0.0
      %3752 = vmatprep.subr.mxu0 0.0
      %3753 = vmatpush1.msra.mxu0 0.0
      %3754 = vmatprep.subr.mxu0 0.0
      %3755 = vmatpush1.msra.mxu0 0.0
      %3756 = vmatprep.subr.mxu0 0.0
      %3757 = vmatpush1.msra.mxu0 0.0
      %3758 = vmatprep.subr.mxu0 0.0
      %3759 = vmatpush1.msra.mxu0 0.0
      %3760 = vmatprep.subr.mxu0 0.0
      %3761 = vmatpush1.msra.mxu0 0.0
      %3762 = vmatprep.subr.mxu0 0.0
      %3763 = vmatpush1.msra.mxu0 0.0
      %3764 = vmatprep.subr.mxu0 0.0
      %3765 = vmatpush1.msra.mxu0 0.0
      %3766 = vmatprep.subr.mxu0 0.0
      %3767 = vmatpush1.msra.mxu0 0.0
      %3768 = vmatprep.subr.mxu0 0.0
      %3769 = vmatpush1.msra.mxu0 0.0
      %3770 = vmatprep.subr.mxu0 0.0
      %3771 = vmatpush1.msra.mxu0 0.0
      %3772 = vmatprep.subr.mxu0 0.0
      %3773 = vmatpush1.msra.mxu0 0.0
      %3774 = vmatprep.subr.mxu0 0.0
      %3775 = vmatpush1.msra.mxu0 0.0
      %3776 = vmatprep.subr.mxu0 0.0
      %3777 = vmatpush1.msra.mxu0 0.0
      %3778 = vmatprep.subr.mxu0 0.0
      %3779 = vmatpush1.msra.mxu0 0.0
      %3780 = vmatprep.subr.mxu0 0.0
      %3781 = vmatpush1.msra.mxu0 0.0
      %3782 = vmatprep.subr.mxu0 0.0
      %3783 = vmatpush1.msra.mxu0 0.0
      %3784 = vmatprep.subr.mxu0 0.0
      %3785 = vmatpush1.msra.mxu0 0.0
      %3786 = vmatprep.subr.mxu0 0.0
      %3787 = vmatpush1.msra.mxu0 0.0
      %3788 = vmatprep.subr.mxu0 0.0
      %3789 = vmatpush1.msra.mxu0 0.0
      %3790 = vmatprep.subr.mxu0 0.0
      %3791 = vmatpush1.msra.mxu0 0.0
      %3792 = vmatprep.subr.mxu0 0.0
      %3793 = vmatpush1.msra.mxu0 0.0
      %3794 = vmatprep.subr.mxu0 0.0
      %3795 = vmatpush1.msra.mxu0 0.0
      %3796 = vmatprep.subr.mxu0 0.0
      %3797 = vmatpush1.msra.mxu0 0.0
      %3798 = vmatprep.subr.mxu0 0.0
      %3799 = vmatpush1.msra.mxu0 0.0
      %3800 = vmatprep.subr.mxu0 0.0
      %3801 = vmatpush1.msra.mxu0 0.0
      %3802 = vmatprep.mubr.f32.mxu0 0.0
      %3803 = vmatmul.mubr.f32.gmra.mrb[0].mxu0 %v3733
      %v3804 = vpop.f32.mrb[0].mxu0
      %v3805 = vadd.f32 %v3722, %v3804
      %v3806 = vpop.f32.mrb[0].mxu0
      %v3807 = vadd.f32 %v3724, %v3806
      %3808 = vmatprep.mubr.f32.mxu0 0.0
      %3809 = vmatmul.mubr.f32.gmra.mrb[0].mxu0 %v3736
      %v3810 = vpop.f32.mrb[0].mxu0
      %v3811 = vadd.f32 %v3728, %v3810
      %v3812 = vpop.f32.mrb[0].mxu0
      %v3813 = vadd.f32 %v3730, %v3812
      %3814 = vdwg.mxu0
      %3815 = vrot.lane.b32.xlu0 %v3608, 126
      %v3816 = vpop.permute.xlu0 %3815
      %3817 = vrot.lane.b32.xlu0 %v3609, 126
      %v3818 = vpop.permute.xlu0 %3817
      %3819 = vrot.lane.b32.xlu0 %v3618, 126
      %v3820 = vpop.permute.xlu0 %3819
      %3821 = vrot.lane.b32.xlu0 %v3610, 126
      %v3822 = vpop.permute.xlu0 %3821
      %3823 = vrot.lane.b32.xlu0 %v3611, 126
      %v3824 = vpop.permute.xlu0 %3823
      %3825 = vrot.lane.b32.xlu0 %v3619, 126
      %v3826 = vpop.permute.xlu0 %3825
      %v3827 = vsel %vm782, %v3816, %v3818
      %v3828 = vsel %vm782, %v3818, %v3820
      %v3829 = vsel %vm782, %v3822, %v3824
      %v3830 = vsel %vm782, %v3824, %v3826
      %v3835 = vsel %vm774, %v3827, 0.0
      %v3836 = vsel %vm775, %v3828, 0.0
      %v3837 = vsel %vm774, %v3829, 0.0
      %v3838 = vsel %vm775, %v3830, 0.0
      %s3839 = scalar_lea.vmem %s11, 32
      %v3840 = vld [vmem:[%s3839] sm:$0xff]
      %v3841 = vld [vmem:[%s3839 + $0x8] sm:$0xff]
      %v3843 = vsel %vm1316, %v3840, 0
      %v3846 = vsel %vm1316, %v3841, 0
      %3848 = vmatprep.subr.mxu0 %v3836
      %3849 = vmatpush1.msra.mxu0 %v3835
      %3850 = vmatprep.subr.mxu0 %v3838
      %3851 = vmatpush1.msra.mxu0 %v3837
      %3852 = vmatprep.subr.mxu0 0.0
      %3853 = vmatpush1.msra.mxu0 0.0
      %3854 = vmatprep.subr.mxu0 0.0
      %3855 = vmatpush1.msra.mxu0 0.0
      %3856 = vmatprep.subr.mxu0 0.0
      %3857 = vmatpush1.msra.mxu0 0.0
      %3858 = vmatprep.subr.mxu0 0.0
      %3859 = vmatpush1.msra.mxu0 0.0
      %3860 = vmatprep.subr.mxu0 0.0
      %3861 = vmatpush1.msra.mxu0 0.0
      %3862 = vmatprep.subr.mxu0 0.0
      %3863 = vmatpush1.msra.mxu0 0.0
      %3864 = vmatprep.subr.mxu0 0.0
      %3865 = vmatpush1.msra.mxu0 0.0
      %3866 = vmatprep.subr.mxu0 0.0
      %3867 = vmatpush1.msra.mxu0 0.0
      %3868 = vmatprep.subr.mxu0 0.0
      %3869 = vmatpush1.msra.mxu0 0.0
      %3870 = vmatprep.subr.mxu0 0.0
      %3871 = vmatpush1.msra.mxu0 0.0
      %3872 = vmatprep.subr.mxu0 0.0
      %3873 = vmatpush1.msra.mxu0 0.0
      %3874 = vmatprep.subr.mxu0 0.0
      %3875 = vmatpush1.msra.mxu0 0.0
      %3876 = vmatprep.subr.mxu0 0.0
      %3877 = vmatpush1.msra.mxu0 0.0
      %3878 = vmatprep.subr.mxu0 0.0
      %3879 = vmatpush1.msra.mxu0 0.0
      %3880 = vmatprep.subr.mxu0 0.0
      %3881 = vmatpush1.msra.mxu0 0.0
      %3882 = vmatprep.subr.mxu0 0.0
      %3883 = vmatpush1.msra.mxu0 0.0
      %3884 = vmatprep.subr.mxu0 0.0
      %3885 = vmatpush1.msra.mxu0 0.0
      %3886 = vmatprep.subr.mxu0 0.0
      %3887 = vmatpush1.msra.mxu0 0.0
      %3888 = vmatprep.subr.mxu0 0.0
      %3889 = vmatpush1.msra.mxu0 0.0
      %3890 = vmatprep.subr.mxu0 0.0
      %3891 = vmatpush1.msra.mxu0 0.0
      %3892 = vmatprep.subr.mxu0 0.0
      %3893 = vmatpush1.msra.mxu0 0.0
      %3894 = vmatprep.subr.mxu0 0.0
      %3895 = vmatpush1.msra.mxu0 0.0
      %3896 = vmatprep.subr.mxu0 0.0
      %3897 = vmatpush1.msra.mxu0 0.0
      %3898 = vmatprep.subr.mxu0 0.0
      %3899 = vmatpush1.msra.mxu0 0.0
      %3900 = vmatprep.subr.mxu0 0.0
      %3901 = vmatpush1.msra.mxu0 0.0
      %3902 = vmatprep.subr.mxu0 0.0
      %3903 = vmatpush1.msra.mxu0 0.0
      %3904 = vmatprep.subr.mxu0 0.0
      %3905 = vmatpush1.msra.mxu0 0.0
      %3906 = vmatprep.subr.mxu0 0.0
      %3907 = vmatpush1.msra.mxu0 0.0
      %3908 = vmatprep.subr.mxu0 0.0
      %3909 = vmatpush1.msra.mxu0 0.0
      %3910 = vmatprep.subr.mxu0 0.0
      %3911 = vmatpush1.msra.mxu0 0.0
      %3912 = vmatprep.mubr.f32.mxu0 0.0
      %3913 = vmatmul.mubr.f32.gmra.mrb[0].mxu0 %v3843
      %v3914 = vpop.f32.mrb[0].mxu0
      %v3915 = vadd.f32 0.0, %v3914
      %v3916 = vpop.f32.mrb[0].mxu0
      %v3917 = vadd.f32 0.0, %v3916
      %3918 = vmatprep.mubr.f32.mxu0 0.0
      %3919 = vmatmul.mubr.f32.gmra.mrb[0].mxu0 %v3846
      %v3920 = vpop.f32.mrb[0].mxu0
      %v3921 = vadd.f32 0.0, %v3920
      %v3922 = vpop.f32.mrb[0].mxu0
      %v3923 = vadd.f32 0.0, %v3922
      %3924 = vdwg.mxu0
      %v3925 = vadd.f32 %v3805, %v3915
      %v3926 = vadd.f32 %v3807, %v3917
      %v3927 = vadd.f32 %v3811, %v3921
      %v3928 = vadd.f32 %v3813, %v3923
      %3929 = vrot.lane.b32.xlu0 %v3608, 112
      %v3930 = vpop.permute.xlu0 %3929
      %3931 = vrot.lane.b32.xlu0 %v3609, 112
      %v3932 = vpop.permute.xlu0 %3931
      %3933 = vrot.lane.b32.xlu0 %v3618, 112
      %v3934 = vpop.permute.xlu0 %3933
      %3935 = vrot.lane.b32.xlu0 %v3610, 112
      %v3936 = vpop.permute.xlu0 %3935
      %3937 = vrot.lane.b32.xlu0 %v3611, 112
      %v3938 = vpop.permute.xlu0 %3937
      %3939 = vrot.lane.b32.xlu0 %v3619, 112
      %v3940 = vpop.permute.xlu0 %3939
      %v3941 = vsel %vm845, %v3930, %v3932
      %v3942 = vsel %vm845, %v3932, %v3934
      %v3943 = vsel %vm845, %v3936, %v3938
      %v3944 = vsel %vm845, %v3938, %v3940
      %v3949 = vsel %vm630, %v3941, 0.0
      %v3950 = vsel %vm631, %v3942, 0.0
      %v3951 = vsel %vm630, %v3943, 0.0
      %v3952 = vsel %vm631, %v3944, 0.0
      %s3953 = scalar_lea.vmem %s11, 48
      %v3954 = vld [vmem:[%s3953] sm:$0xff]
      %v3955 = vld [vmem:[%s3953 + $0x8] sm:$0xff]
      %v3957 = vsel %vm1316, %v3954, 0
      %v3960 = vsel %vm1316, %v3955, 0
      %3962 = vmatprep.subr.mxu0 %v3950
      %3963 = vmatpush1.msra.mxu0 %v3949
      %3964 = vmatprep.subr.mxu0 %v3952
      %3965 = vmatpush1.msra.mxu0 %v3951
      %3966 = vmatprep.subr.mxu0 0.0
      %3967 = vmatpush1.msra.mxu0 0.0
      %3968 = vmatprep.subr.mxu0 0.0
      %3969 = vmatpush1.msra.mxu0 0.0
      %3970 = vmatprep.subr.mxu0 0.0
      %3971 = vmatpush1.msra.mxu0 0.0
      %3972 = vmatprep.subr.mxu0 0.0
      %3973 = vmatpush1.msra.mxu0 0.0
      %3974 = vmatprep.subr.mxu0 0.0
      %3975 = vmatpush1.msra.mxu0 0.0
      %3976 = vmatprep.subr.mxu0 0.0
      %3977 = vmatpush1.msra.mxu0 0.0
      %3978 = vmatprep.subr.mxu0 0.0
      %3979 = vmatpush1.msra.mxu0 0.0
      %3980 = vmatprep.subr.mxu0 0.0
      %3981 = vmatpush1.msra.mxu0 0.0
      %3982 = vmatprep.subr.mxu0 0.0
      %3983 = vmatpush1.msra.mxu0 0.0
      %3984 = vmatprep.subr.mxu0 0.0
      %3985 = vmatpush1.msra.mxu0 0.0
      %3986 = vmatprep.subr.mxu0 0.0
      %3987 = vmatpush1.msra.mxu0 0.0
      %3988 = vmatprep.subr.mxu0 0.0
      %3989 = vmatpush1.msra.mxu0 0.0
      %3990 = vmatprep.subr.mxu0 0.0
      %3991 = vmatpush1.msra.mxu0 0.0
      %3992 = vmatprep.subr.mxu0 0.0
      %3993 = vmatpush1.msra.mxu0 0.0
      %3994 = vmatprep.subr.mxu0 0.0
      %3995 = vmatpush1.msra.mxu0 0.0
      %3996 = vmatprep.subr.mxu0 0.0
      %3997 = vmatpush1.msra.mxu0 0.0
      %3998 = vmatprep.subr.mxu0 0.0
      %3999 = vmatpush1.msra.mxu0 0.0
      %4000 = vmatprep.subr.mxu0 0.0
      %4001 = vmatpush1.msra.mxu0 0.0
      %4002 = vmatprep.subr.mxu0 0.0
      %4003 = vmatpush1.msra.mxu0 0.0
      %4004 = vmatprep.subr.mxu0 0.0
      %4005 = vmatpush1.msra.mxu0 0.0
      %4006 = vmatprep.subr.mxu0 0.0
      %4007 = vmatpush1.msra.mxu0 0.0
      %4008 = vmatprep.subr.mxu0 0.0
      %4009 = vmatpush1.msra.mxu0 0.0
      %4010 = vmatprep.subr.mxu0 0.0
      %4011 = vmatpush1.msra.mxu0 0.0
      %4012 = vmatprep.subr.mxu0 0.0
      %4013 = vmatpush1.msra.mxu0 0.0
      %4014 = vmatprep.subr.mxu0 0.0
      %4015 = vmatpush1.msra.mxu0 0.0
      %4016 = vmatprep.subr.mxu0 0.0
      %4017 = vmatpush1.msra.mxu0 0.0
      %4018 = vmatprep.subr.mxu0 0.0
      %4019 = vmatpush1.msra.mxu0 0.0
      %4020 = vmatprep.subr.mxu0 0.0
      %4021 = vmatpush1.msra.mxu0 0.0
      %4022 = vmatprep.subr.mxu0 0.0
      %4023 = vmatpush1.msra.mxu0 0.0
      %4024 = vmatprep.subr.mxu0 0.0
      %4025 = vmatpush1.msra.mxu0 0.0
      %4026 = vmatprep.mubr.f32.mxu0 0.0
      %4027 = vmatmul.mubr.f32.gmra.mrb[0].mxu0 %v3957
      %v4028 = vpop.f32.mrb[0].mxu0
      %v4029 = vadd.f32 0.0, %v4028
      %v4030 = vpop.f32.mrb[0].mxu0
      %v4031 = vadd.f32 0.0, %v4030
      %4032 = vmatprep.mubr.f32.mxu0 0.0
      %4033 = vmatmul.mubr.f32.gmra.mrb[0].mxu0 %v3960
      %v4034 = vpop.f32.mrb[0].mxu0
      %v4035 = vadd.f32 0.0, %v4034
      %v4036 = vpop.f32.mrb[0].mxu0
      %v4037 = vadd.f32 0.0, %v4036
      %4038 = vdwg.mxu0
      %v4039 = vadd.f32 %v3925, %v4029
      %v4040 = vadd.f32 %v3926, %v4031
      %v4041 = vadd.f32 %v3927, %v4035
      %v4042 = vadd.f32 %v3928, %v4037
      %s4043 = scalar_lea.vmem %s11, 64
      %v4044 = vld [vmem:[%s4043] sm:$0xff]
      %v4045 = vld [vmem:[%s4043 + $0x8] sm:$0xff]
      %4046 = vrot.lane.b32.xlu0 %v3608, 111
      %v4047 = vpop.permute.xlu0 %4046
      %4048 = vrot.lane.b32.xlu0 %v3609, 111
      %v4049 = vpop.permute.xlu0 %4048
      %4050 = vrot.lane.b32.xlu0 %v3618, 111
      %v4051 = vpop.permute.xlu0 %4050
      %4052 = vrot.lane.b32.xlu0 %v3610, 111
      %v4053 = vpop.permute.xlu0 %4052
      %4054 = vrot.lane.b32.xlu0 %v3611, 111
      %v4055 = vpop.permute.xlu0 %4054
      %4056 = vrot.lane.b32.xlu0 %v3619, 111
      %v4057 = vpop.permute.xlu0 %4056
      %v4058 = vsel %vm933, %v4047, %v4049
      %v4059 = vsel %vm933, %v4049, %v4051
      %v4060 = vsel %vm933, %v4053, %v4055
      %v4061 = vsel %vm933, %v4055, %v4057
      %v4067 = vsel %vm1316, %v4044, 0
      %v4070 = vsel %vm1316, %v4045, 0
      %4072 = vmatprep.subr.mxu0 %v4059
      %4073 = vmatpush1.msra.mxu0 %v4058
      %4074 = vmatprep.subr.mxu0 %v4061
      %4075 = vmatpush1.msra.mxu0 %v4060
      %4076 = vmatprep.subr.mxu0 0.0
      %4077 = vmatpush1.msra.mxu0 0.0
      %4078 = vmatprep.subr.mxu0 0.0
      %4079 = vmatpush1.msra.mxu0 0.0
      %4080 = vmatprep.subr.mxu0 0.0
      %4081 = vmatpush1.msra.mxu0 0.0
      %4082 = vmatprep.subr.mxu0 0.0
      %4083 = vmatpush1.msra.mxu0 0.0
      %4084 = vmatprep.subr.mxu0 0.0
      %4085 = vmatpush1.msra.mxu0 0.0
      %4086 = vmatprep.subr.mxu0 0.0
      %4087 = vmatpush1.msra.mxu0 0.0
      %4088 = vmatprep.subr.mxu0 0.0
      %4089 = vmatpush1.msra.mxu0 0.0
      %4090 = vmatprep.subr.mxu0 0.0
      %4091 = vmatpush1.msra.mxu0 0.0
      %4092 = vmatprep.subr.mxu0 0.0
      %4093 = vmatpush1.msra.mxu0 0.0
      %4094 = vmatprep.subr.mxu0 0.0
      %4095 = vmatpush1.msra.mxu0 0.0
      %4096 = vmatprep.subr.mxu0 0.0
      %4097 = vmatpush1.msra.mxu0 0.0
      %4098 = vmatprep.subr.mxu0 0.0
      %4099 = vmatpush1.msra.mxu0 0.0
      %4100 = vmatprep.subr.mxu0 0.0
      %4101 = vmatpush1.msra.mxu0 0.0
      %4102 = vmatprep.subr.mxu0 0.0
      %4103 = vmatpush1.msra.mxu0 0.0
      %4104 = vmatprep.subr.mxu0 0.0
      %4105 = vmatpush1.msra.mxu0 0.0
      %4106 = vmatprep.subr.mxu0 0.0
      %4107 = vmatpush1.msra.mxu0 0.0
      %4108 = vmatprep.subr.mxu0 0.0
      %4109 = vmatpush1.msra.mxu0 0.0
      %4110 = vmatprep.subr.mxu0 0.0
      %4111 = vmatpush1.msra.mxu0 0.0
      %4112 = vmatprep.subr.mxu0 0.0
      %4113 = vmatpush1.msra.mxu0 0.0
      %4114 = vmatprep.subr.mxu0 0.0
      %4115 = vmatpush1.msra.mxu0 0.0
      %4116 = vmatprep.subr.mxu0 0.0
      %4117 = vmatpush1.msra.mxu0 0.0
      %4118 = vmatprep.subr.mxu0 0.0
      %4119 = vmatpush1.msra.mxu0 0.0
      %4120 = vmatprep.subr.mxu0 0.0
      %4121 = vmatpush1.msra.mxu0 0.0
      %4122 = vmatprep.subr.mxu0 0.0
      %4123 = vmatpush1.msra.mxu0 0.0
      %4124 = vmatprep.subr.mxu0 0.0
      %4125 = vmatpush1.msra.mxu0 0.0
      %4126 = vmatprep.subr.mxu0 0.0
      %4127 = vmatpush1.msra.mxu0 0.0
      %4128 = vmatprep.subr.mxu0 0.0
      %4129 = vmatpush1.msra.mxu0 0.0
      %4130 = vmatprep.subr.mxu0 0.0
      %4131 = vmatpush1.msra.mxu0 0.0
      %4132 = vmatprep.subr.mxu0 0.0
      %4133 = vmatpush1.msra.mxu0 0.0
      %4134 = vmatprep.subr.mxu0 0.0
      %4135 = vmatpush1.msra.mxu0 0.0
      %4136 = vmatprep.mubr.f32.mxu0 0.0
      %4137 = vmatmul.mubr.f32.gmra.mrb[0].mxu0 %v4067
      %v4138 = vpop.f32.mrb[0].mxu0
      %v4139 = vadd.f32 0.0, %v4138
      %v4140 = vpop.f32.mrb[0].mxu0
      %v4141 = vadd.f32 0.0, %v4140
      %4142 = vmatprep.mubr.f32.mxu0 0.0
      %4143 = vmatmul.mubr.f32.gmra.mrb[0].mxu0 %v4070
      %v4144 = vpop.f32.mrb[0].mxu0
      %v4145 = vadd.f32 0.0, %v4144
      %v4146 = vpop.f32.mrb[0].mxu0
      %v4147 = vadd.f32 0.0, %v4146
      %4148 = vdwg.mxu0
      %v4149 = vadd.f32 %v4039, %v4139
      %v4150 = vadd.f32 %v4040, %v4141
      %v4151 = vadd.f32 %v4041, %v4145
      %v4152 = vadd.f32 %v4042, %v4147
      %4153 = vrot.lane.b32.xlu0 %v3608, 110
      %v4154 = vpop.permute.xlu0 %4153
      %4155 = vrot.lane.b32.xlu0 %v3609, 110
      %v4156 = vpop.permute.xlu0 %4155
      %4157 = vrot.lane.b32.xlu0 %v3618, 110
      %v4158 = vpop.permute.xlu0 %4157
      %4159 = vrot.lane.b32.xlu0 %v3610, 110
      %v4160 = vpop.permute.xlu0 %4159
      %4161 = vrot.lane.b32.xlu0 %v3611, 110
      %v4162 = vpop.permute.xlu0 %4161
      %4163 = vrot.lane.b32.xlu0 %v3619, 110
      %v4164 = vpop.permute.xlu0 %4163
      %v4165 = vsel %vm982, %v4154, %v4156
      %v4166 = vsel %vm982, %v4156, %v4158
      %v4167 = vsel %vm982, %v4160, %v4162
      %v4168 = vsel %vm982, %v4162, %v4164
      %v4173 = vsel %vm774, %v4165, 0.0
      %v4174 = vsel %vm775, %v4166, 0.0
      %v4175 = vsel %vm774, %v4167, 0.0
      %v4176 = vsel %vm775, %v4168, 0.0
      %s4177 = scalar_lea.vmem %s11, 80
      %v4178 = vld [vmem:[%s4177] sm:$0xff]
      %v4179 = vld [vmem:[%s4177 + $0x8] sm:$0xff]
      %v4181 = vsel %vm1316, %v4178, 0
      %v4184 = vsel %vm1316, %v4179, 0
      %4186 = vmatprep.subr.mxu0 %v4174
      %4187 = vmatpush1.msra.mxu0 %v4173
      %4188 = vmatprep.subr.mxu0 %v4176
      %4189 = vmatpush1.msra.mxu0 %v4175
      %4190 = vmatprep.subr.mxu0 0.0
      %4191 = vmatpush1.msra.mxu0 0.0
      %4192 = vmatprep.subr.mxu0 0.0
      %4193 = vmatpush1.msra.mxu0 0.0
      %4194 = vmatprep.subr.mxu0 0.0
      %4195 = vmatpush1.msra.mxu0 0.0
      %4196 = vmatprep.subr.mxu0 0.0
      %4197 = vmatpush1.msra.mxu0 0.0
      %4198 = vmatprep.subr.mxu0 0.0
      %4199 = vmatpush1.msra.mxu0 0.0
      %4200 = vmatprep.subr.mxu0 0.0
      %4201 = vmatpush1.msra.mxu0 0.0
      %4202 = vmatprep.subr.mxu0 0.0
      %4203 = vmatpush1.msra.mxu0 0.0
      %4204 = vmatprep.subr.mxu0 0.0
      %4205 = vmatpush1.msra.mxu0 0.0
      %4206 = vmatprep.subr.mxu0 0.0
      %4207 = vmatpush1.msra.mxu0 0.0
      %4208 = vmatprep.subr.mxu0 0.0
      %4209 = vmatpush1.msra.mxu0 0.0
      %4210 = vmatprep.subr.mxu0 0.0
      %4211 = vmatpush1.msra.mxu0 0.0
      %4212 = vmatprep.subr.mxu0 0.0
      %4213 = vmatpush1.msra.mxu0 0.0
      %4214 = vmatprep.subr.mxu0 0.0
      %4215 = vmatpush1.msra.mxu0 0.0
      %4216 = vmatprep.subr.mxu0 0.0
      %4217 = vmatpush1.msra.mxu0 0.0
      %4218 = vmatprep.subr.mxu0 0.0
      %4219 = vmatpush1.msra.mxu0 0.0
      %4220 = vmatprep.subr.mxu0 0.0
      %4221 = vmatpush1.msra.mxu0 0.0
      %4222 = vmatprep.subr.mxu0 0.0
      %4223 = vmatpush1.msra.mxu0 0.0
      %4224 = vmatprep.subr.mxu0 0.0
      %4225 = vmatpush1.msra.mxu0 0.0
      %4226 = vmatprep.subr.mxu0 0.0
      %4227 = vmatpush1.msra.mxu0 0.0
      %4228 = vmatprep.subr.mxu0 0.0
      %4229 = vmatpush1.msra.mxu0 0.0
      %4230 = vmatprep.subr.mxu0 0.0
      %4231 = vmatpush1.msra.mxu0 0.0
      %4232 = vmatprep.subr.mxu0 0.0
      %4233 = vmatpush1.msra.mxu0 0.0
      %4234 = vmatprep.subr.mxu0 0.0
      %4235 = vmatpush1.msra.mxu0 0.0
      %4236 = vmatprep.subr.mxu0 0.0
      %4237 = vmatpush1.msra.mxu0 0.0
      %4238 = vmatprep.subr.mxu0 0.0
      %4239 = vmatpush1.msra.mxu0 0.0
      %4240 = vmatprep.subr.mxu0 0.0
      %4241 = vmatpush1.msra.mxu0 0.0
      %4242 = vmatprep.subr.mxu0 0.0
      %4243 = vmatpush1.msra.mxu0 0.0
      %4244 = vmatprep.subr.mxu0 0.0
      %4245 = vmatpush1.msra.mxu0 0.0
      %4246 = vmatprep.subr.mxu0 0.0
      %4247 = vmatpush1.msra.mxu0 0.0
      %4248 = vmatprep.subr.mxu0 0.0
      %4249 = vmatpush1.msra.mxu0 0.0
      %4250 = vmatprep.mubr.f32.mxu0 0.0
      %4251 = vmatmul.mubr.f32.gmra.mrb[0].mxu0 %v4181
      %v4252 = vpop.f32.mrb[0].mxu0
      %v4253 = vadd.f32 0.0, %v4252
      %v4254 = vpop.f32.mrb[0].mxu0
      %v4255 = vadd.f32 0.0, %v4254
      %4256 = vmatprep.mubr.f32.mxu0 0.0
      %4257 = vmatmul.mubr.f32.gmra.mrb[0].mxu0 %v4184
      %v4258 = vpop.f32.mrb[0].mxu0
      %v4259 = vadd.f32 0.0, %v4258
      %v4260 = vpop.f32.mrb[0].mxu0
      %v4261 = vadd.f32 0.0, %v4260
      %4262 = vdwg.mxu0
      %v4263 = vadd.f32 %v4149, %v4253
      %v4264 = vadd.f32 %v4150, %v4255
      %v4265 = vadd.f32 %v4151, %v4259
      %v4266 = vadd.f32 %v4152, %v4261
      %4267 = vrot.lane.b32.xlu0 %v3608, 96
      %v4268 = vpop.permute.xlu0 %4267
      %4269 = vrot.lane.b32.xlu0 %v3609, 96
      %v4270 = vpop.permute.xlu0 %4269
      %4271 = vrot.lane.b32.xlu0 %v3618, 96
      %v4272 = vpop.permute.xlu0 %4271
      %4273 = vrot.lane.b32.xlu0 %v3610, 96
      %v4274 = vpop.permute.xlu0 %4273
      %4275 = vrot.lane.b32.xlu0 %v3611, 96
      %v4276 = vpop.permute.xlu0 %4275
      %4277 = vrot.lane.b32.xlu0 %v3619, 96
      %v4278 = vpop.permute.xlu0 %4277
      %v4279 = vsel %vm1045, %v4268, %v4270
      %v4280 = vsel %vm1045, %v4270, %v4272
      %v4281 = vsel %vm1045, %v4274, %v4276
      %v4282 = vsel %vm1045, %v4276, %v4278
      %v4287 = vsel %vm630, %v4279, 0.0
      %v4288 = vsel %vm631, %v4280, 0.0
      %v4289 = vsel %vm630, %v4281, 0.0
      %v4290 = vsel %vm631, %v4282, 0.0
      %s4291 = scalar_lea.vmem %s11, 96
      %v4292 = vld [vmem:[%s4291] sm:$0xff]
      %v4293 = vld [vmem:[%s4291 + $0x8] sm:$0xff]
      %v4295 = vsel %vm1316, %v4292, 0
      %v4298 = vsel %vm1316, %v4293, 0
      %4300 = vmatprep.subr.mxu0 %v4288
      %4301 = vmatpush1.msra.mxu0 %v4287
      %4302 = vmatprep.subr.mxu0 %v4290
      %4303 = vmatpush1.msra.mxu0 %v4289
      %4304 = vmatprep.subr.mxu0 0.0
      %4305 = vmatpush1.msra.mxu0 0.0
      %4306 = vmatprep.subr.mxu0 0.0
      %4307 = vmatpush1.msra.mxu0 0.0
      %4308 = vmatprep.subr.mxu0 0.0
      %4309 = vmatpush1.msra.mxu0 0.0
      %4310 = vmatprep.subr.mxu0 0.0
      %4311 = vmatpush1.msra.mxu0 0.0
      %4312 = vmatprep.subr.mxu0 0.0
      %4313 = vmatpush1.msra.mxu0 0.0
      %4314 = vmatprep.subr.mxu0 0.0
      %4315 = vmatpush1.msra.mxu0 0.0
      %4316 = vmatprep.subr.mxu0 0.0
      %4317 = vmatpush1.msra.mxu0 0.0
      %4318 = vmatprep.subr.mxu0 0.0
      %4319 = vmatpush1.msra.mxu0 0.0
      %4320 = vmatprep.subr.mxu0 0.0
      %4321 = vmatpush1.msra.mxu0 0.0
      %4322 = vmatprep.subr.mxu0 0.0
      %4323 = vmatpush1.msra.mxu0 0.0
      %4324 = vmatprep.subr.mxu0 0.0
      %4325 = vmatpush1.msra.mxu0 0.0
      %4326 = vmatprep.subr.mxu0 0.0
      %4327 = vmatpush1.msra.mxu0 0.0
      %4328 = vmatprep.subr.mxu0 0.0
      %4329 = vmatpush1.msra.mxu0 0.0
      %4330 = vmatprep.subr.mxu0 0.0
      %4331 = vmatpush1.msra.mxu0 0.0
      %4332 = vmatprep.subr.mxu0 0.0
      %4333 = vmatpush1.msra.mxu0 0.0
      %4334 = vmatprep.subr.mxu0 0.0
      %4335 = vmatpush1.msra.mxu0 0.0
      %4336 = vmatprep.subr.mxu0 0.0
      %4337 = vmatpush1.msra.mxu0 0.0
      %4338 = vmatprep.subr.mxu0 0.0
      %4339 = vmatpush1.msra.mxu0 0.0
      %4340 = vmatprep.subr.mxu0 0.0
      %4341 = vmatpush1.msra.mxu0 0.0
      %4342 = vmatprep.subr.mxu0 0.0
      %4343 = vmatpush1.msra.mxu0 0.0
      %4344 = vmatprep.subr.mxu0 0.0
      %4345 = vmatpush1.msra.mxu0 0.0
      %4346 = vmatprep.subr.mxu0 0.0
      %4347 = vmatpush1.msra.mxu0 0.0
      %4348 = vmatprep.subr.mxu0 0.0
      %4349 = vmatpush1.msra.mxu0 0.0
      %4350 = vmatprep.subr.mxu0 0.0
      %4351 = vmatpush1.msra.mxu0 0.0
      %4352 = vmatprep.subr.mxu0 0.0
      %4353 = vmatpush1.msra.mxu0 0.0
      %4354 = vmatprep.subr.mxu0 0.0
      %4355 = vmatpush1.msra.mxu0 0.0
      %4356 = vmatprep.subr.mxu0 0.0
      %4357 = vmatpush1.msra.mxu0 0.0
      %4358 = vmatprep.subr.mxu0 0.0
      %4359 = vmatpush1.msra.mxu0 0.0
      %4360 = vmatprep.subr.mxu0 0.0
      %4361 = vmatpush1.msra.mxu0 0.0
      %4362 = vmatprep.subr.mxu0 0.0
      %4363 = vmatpush1.msra.mxu0 0.0
      %4364 = vmatprep.mubr.f32.mxu0 0.0
      %4365 = vmatmul.mubr.f32.gmra.mrb[0].mxu0 %v4295
      %v4366 = vpop.f32.mrb[0].mxu0
      %v4367 = vadd.f32 0.0, %v4366
      %v4368 = vpop.f32.mrb[0].mxu0
      %v4369 = vadd.f32 0.0, %v4368
      %4370 = vmatprep.mubr.f32.mxu0 0.0
      %4371 = vmatmul.mubr.f32.gmra.mrb[0].mxu0 %v4298
      %v4372 = vpop.f32.mrb[0].mxu0
      %v4373 = vadd.f32 0.0, %v4372
      %v4374 = vpop.f32.mrb[0].mxu0
      %v4375 = vadd.f32 0.0, %v4374
      %4376 = vdwg.mxu0
      %v4377 = vadd.f32 %v4263, %v4367
      %v4378 = vadd.f32 %v4264, %v4369
      %v4379 = vadd.f32 %v4265, %v4373
      %v4380 = vadd.f32 %v4266, %v4375
      %s4381 = scalar_lea.vmem %s11, 112
      %v4382 = vld [vmem:[%s4381] sm:$0xff]
      %v4383 = vld [vmem:[%s4381 + $0x8] sm:$0xff]
      %4384 = vrot.lane.b32.xlu0 %v3608, 95
      %v4385 = vpop.permute.xlu0 %4384
      %4386 = vrot.lane.b32.xlu0 %v3609, 95
      %v4387 = vpop.permute.xlu0 %4386
      %4388 = vrot.lane.b32.xlu0 %v3618, 95
      %v4389 = vpop.permute.xlu0 %4388
      %4390 = vrot.lane.b32.xlu0 %v3610, 95
      %v4391 = vpop.permute.xlu0 %4390
      %4392 = vrot.lane.b32.xlu0 %v3611, 95
      %v4393 = vpop.permute.xlu0 %4392
      %4394 = vrot.lane.b32.xlu0 %v3619, 95
      %v4395 = vpop.permute.xlu0 %4394
      %v4396 = vsel %vm1133, %v4385, %v4387
      %v4397 = vsel %vm1133, %v4387, %v4389
      %v4398 = vsel %vm1133, %v4391, %v4393
      %v4399 = vsel %vm1133, %v4393, %v4395
      %v4405 = vsel %vm1316, %v4382, 0
      %v4408 = vsel %vm1316, %v4383, 0
      %4410 = vmatprep.subr.mxu0 %v4397
      %4411 = vmatpush1.msra.mxu0 %v4396
      %4412 = vmatprep.subr.mxu0 %v4399
      %4413 = vmatpush1.msra.mxu0 %v4398
      %4414 = vmatprep.subr.mxu0 0.0
      %4415 = vmatpush1.msra.mxu0 0.0
      %4416 = vmatprep.subr.mxu0 0.0
      %4417 = vmatpush1.msra.mxu0 0.0
      %4418 = vmatprep.subr.mxu0 0.0
      %4419 = vmatpush1.msra.mxu0 0.0
      %4420 = vmatprep.subr.mxu0 0.0
      %4421 = vmatpush1.msra.mxu0 0.0
      %4422 = vmatprep.subr.mxu0 0.0
      %4423 = vmatpush1.msra.mxu0 0.0
      %4424 = vmatprep.subr.mxu0 0.0
      %4425 = vmatpush1.msra.mxu0 0.0
      %4426 = vmatprep.subr.mxu0 0.0
      %4427 = vmatpush1.msra.mxu0 0.0
      %4428 = vmatprep.subr.mxu0 0.0
      %4429 = vmatpush1.msra.mxu0 0.0
      %4430 = vmatprep.subr.mxu0 0.0
      %4431 = vmatpush1.msra.mxu0 0.0
      %4432 = vmatprep.subr.mxu0 0.0
      %4433 = vmatpush1.msra.mxu0 0.0
      %4434 = vmatprep.subr.mxu0 0.0
      %4435 = vmatpush1.msra.mxu0 0.0
      %4436 = vmatprep.subr.mxu0 0.0
      %4437 = vmatpush1.msra.mxu0 0.0
      %4438 = vmatprep.subr.mxu0 0.0
      %4439 = vmatpush1.msra.mxu0 0.0
      %4440 = vmatprep.subr.mxu0 0.0
      %4441 = vmatpush1.msra.mxu0 0.0
      %4442 = vmatprep.subr.mxu0 0.0
      %4443 = vmatpush1.msra.mxu0 0.0
      %4444 = vmatprep.subr.mxu0 0.0
      %4445 = vmatpush1.msra.mxu0 0.0
      %4446 = vmatprep.subr.mxu0 0.0
      %4447 = vmatpush1.msra.mxu0 0.0
      %4448 = vmatprep.subr.mxu0 0.0
      %4449 = vmatpush1.msra.mxu0 0.0
      %4450 = vmatprep.subr.mxu0 0.0
      %4451 = vmatpush1.msra.mxu0 0.0
      %4452 = vmatprep.subr.mxu0 0.0
      %4453 = vmatpush1.msra.mxu0 0.0
      %4454 = vmatprep.subr.mxu0 0.0
      %4455 = vmatpush1.msra.mxu0 0.0
      %4456 = vmatprep.subr.mxu0 0.0
      %4457 = vmatpush1.msra.mxu0 0.0
      %4458 = vmatprep.subr.mxu0 0.0
      %4459 = vmatpush1.msra.mxu0 0.0
      %4460 = vmatprep.subr.mxu0 0.0
      %4461 = vmatpush1.msra.mxu0 0.0
      %4462 = vmatprep.subr.mxu0 0.0
      %4463 = vmatpush1.msra.mxu0 0.0
      %4464 = vmatprep.subr.mxu0 0.0
      %4465 = vmatpush1.msra.mxu0 0.0
      %4466 = vmatprep.subr.mxu0 0.0
      %4467 = vmatpush1.msra.mxu0 0.0
      %4468 = vmatprep.subr.mxu0 0.0
      %4469 = vmatpush1.msra.mxu0 0.0
      %4470 = vmatprep.subr.mxu0 0.0
      %4471 = vmatpush1.msra.mxu0 0.0
      %4472 = vmatprep.subr.mxu0 0.0
      %4473 = vmatpush1.msra.mxu0 0.0
      %4474 = vmatprep.mubr.f32.mxu0 0.0
      %4475 = vmatmul.mubr.f32.gmra.mrb[0].mxu0 %v4405
      %v4476 = vpop.f32.mrb[0].mxu0
      %v4477 = vadd.f32 0.0, %v4476
      %v4478 = vpop.f32.mrb[0].mxu0
      %v4479 = vadd.f32 0.0, %v4478
      %4480 = vmatprep.mubr.f32.mxu0 0.0
      %4481 = vmatmul.mubr.f32.gmra.mrb[0].mxu0 %v4408
      %v4482 = vpop.f32.mrb[0].mxu0
      %v4483 = vadd.f32 0.0, %v4482
      %v4484 = vpop.f32.mrb[0].mxu0
      %v4485 = vadd.f32 0.0, %v4484
      %4486 = vdwg.mxu0
      %v4487 = vadd.f32 %v4377, %v4477
      %v4488 = vadd.f32 %v4378, %v4479
      %v4489 = vadd.f32 %v4379, %v4483
      %v4490 = vadd.f32 %v4380, %v4485
      %4491 = vrot.lane.b32.xlu0 %v3608, 94
      %v4492 = vpop.permute.xlu0 %4491
      %4493 = vrot.lane.b32.xlu0 %v3609, 94
      %v4494 = vpop.permute.xlu0 %4493
      %4495 = vrot.lane.b32.xlu0 %v3618, 94
      %v4496 = vpop.permute.xlu0 %4495
      %4497 = vrot.lane.b32.xlu0 %v3610, 94
      %v4498 = vpop.permute.xlu0 %4497
      %4499 = vrot.lane.b32.xlu0 %v3611, 94
      %v4500 = vpop.permute.xlu0 %4499
      %4501 = vrot.lane.b32.xlu0 %v3619, 94
      %v4502 = vpop.permute.xlu0 %4501
      %v4503 = vsel %vm1182, %v4492, %v4494
      %v4504 = vsel %vm1182, %v4494, %v4496
      %v4505 = vsel %vm1182, %v4498, %v4500
      %v4506 = vsel %vm1182, %v4500, %v4502
      %v4511 = vsel %vm774, %v4503, 0.0
      %v4512 = vsel %vm775, %v4504, 0.0
      %v4513 = vsel %vm774, %v4505, 0.0
      %v4514 = vsel %vm775, %v4506, 0.0
      %s4515 = scalar_lea.vmem %s11, 128
      %v4516 = vld [vmem:[%s4515] sm:$0xff]
      %v4517 = vld [vmem:[%s4515 + $0x8] sm:$0xff]
      %v4519 = vsel %vm1316, %v4516, 0
      %v4522 = vsel %vm1316, %v4517, 0
      %4524 = vmatprep.subr.mxu0 %v4512
      %4525 = vmatpush1.msra.mxu0 %v4511
      %4526 = vmatprep.subr.mxu0 %v4514
      %4527 = vmatpush1.msra.mxu0 %v4513
      %4528 = vmatprep.subr.mxu0 0.0
      %4529 = vmatpush1.msra.mxu0 0.0
      %4530 = vmatprep.subr.mxu0 0.0
      %4531 = vmatpush1.msra.mxu0 0.0
      %4532 = vmatprep.subr.mxu0 0.0
      %4533 = vmatpush1.msra.mxu0 0.0
      %4534 = vmatprep.subr.mxu0 0.0
      %4535 = vmatpush1.msra.mxu0 0.0
      %4536 = vmatprep.subr.mxu0 0.0
      %4537 = vmatpush1.msra.mxu0 0.0
      %4538 = vmatprep.subr.mxu0 0.0
      %4539 = vmatpush1.msra.mxu0 0.0
      %4540 = vmatprep.subr.mxu0 0.0
      %4541 = vmatpush1.msra.mxu0 0.0
      %4542 = vmatprep.subr.mxu0 0.0
      %4543 = vmatpush1.msra.mxu0 0.0
      %4544 = vmatprep.subr.mxu0 0.0
      %4545 = vmatpush1.msra.mxu0 0.0
      %4546 = vmatprep.subr.mxu0 0.0
      %4547 = vmatpush1.msra.mxu0 0.0
      %4548 = vmatprep.subr.mxu0 0.0
      %4549 = vmatpush1.msra.mxu0 0.0
      %4550 = vmatprep.subr.mxu0 0.0
      %4551 = vmatpush1.msra.mxu0 0.0
      %4552 = vmatprep.subr.mxu0 0.0
      %4553 = vmatpush1.msra.mxu0 0.0
      %4554 = vmatprep.subr.mxu0 0.0
      %4555 = vmatpush1.msra.mxu0 0.0
      %4556 = vmatprep.subr.mxu0 0.0
      %4557 = vmatpush1.msra.mxu0 0.0
      %4558 = vmatprep.subr.mxu0 0.0
      %4559 = vmatpush1.msra.mxu0 0.0
      %4560 = vmatprep.subr.mxu0 0.0
      %4561 = vmatpush1.msra.mxu0 0.0
      %4562 = vmatprep.subr.mxu0 0.0
      %4563 = vmatpush1.msra.mxu0 0.0
      %4564 = vmatprep.subr.mxu0 0.0
      %4565 = vmatpush1.msra.mxu0 0.0
      %4566 = vmatprep.subr.mxu0 0.0
      %4567 = vmatpush1.msra.mxu0 0.0
      %4568 = vmatprep.subr.mxu0 0.0
      %4569 = vmatpush1.msra.mxu0 0.0
      %4570 = vmatprep.subr.mxu0 0.0
      %4571 = vmatpush1.msra.mxu0 0.0
      %4572 = vmatprep.subr.mxu0 0.0
      %4573 = vmatpush1.msra.mxu0 0.0
      %4574 = vmatprep.subr.mxu0 0.0
      %4575 = vmatpush1.msra.mxu0 0.0
      %4576 = vmatprep.subr.mxu0 0.0
      %4577 = vmatpush1.msra.mxu0 0.0
      %4578 = vmatprep.subr.mxu0 0.0
      %4579 = vmatpush1.msra.mxu0 0.0
      %4580 = vmatprep.subr.mxu0 0.0
      %4581 = vmatpush1.msra.mxu0 0.0
      %4582 = vmatprep.subr.mxu0 0.0
      %4583 = vmatpush1.msra.mxu0 0.0
      %4584 = vmatprep.subr.mxu0 0.0
      %4585 = vmatpush1.msra.mxu0 0.0
      %4586 = vmatprep.subr.mxu0 0.0
      %4587 = vmatpush1.msra.mxu0 0.0
      %4588 = vmatprep.mubr.f32.mxu0 0.0
      %4589 = vmatmul.mubr.f32.gmra.mrb[0].mxu0 %v4519
      %v4590 = vpop.f32.mrb[0].mxu0
      %v4591 = vadd.f32 0.0, %v4590
      %v4592 = vpop.f32.mrb[0].mxu0
      %v4593 = vadd.f32 0.0, %v4592
      %4594 = vmatprep.mubr.f32.mxu0 0.0
      %4595 = vmatmul.mubr.f32.gmra.mrb[0].mxu0 %v4522
      %v4596 = vpop.f32.mrb[0].mxu0
      %v4597 = vadd.f32 0.0, %v4596
      %v4598 = vpop.f32.mrb[0].mxu0
      %v4599 = vadd.f32 0.0, %v4598
      %4600 = vdwg.mxu0
      %v4601 = vadd.f32 %v4487, %v4591
      %v4602 = vadd.f32 %v4488, %v4593
      %v4603 = vadd.f32 %v4489, %v4597
      %v4604 = vadd.f32 %v4490, %v4599
      %v4605 = vld [vmem:[%s12] sm:$0xff]
      %v4606 = vld [vmem:[%s12 + $0x8] sm:$0xff]
      %4608 = vset.pattern.permute.xlu0 0
      %4609 = vperm.xlu0 %4608, %v4605
      %v4610 = vpop.permute.xlu0 %4609
      %4613 = vset.pattern.permute.xlu0 0
      %4614 = vperm.xlu0 %4613, %v4606
      %v4615 = vpop.permute.xlu0 %4614
      %v4617 = vadd.f32 %v4601, %v4610
      %v4618 = vadd.f32 %v4602, %v4610
      %v4619 = vadd.f32 %v4603, %v4615
      %v4620 = vadd.f32 %v4604, %v4615
      %v4621 = vmax.f32 %v4617, 0.0
      %v4622 = vmax.f32 %v4618, 0.0
      %v4623 = vmax.f32 %v4619, 0.0
      %v4624 = vmax.f32 %v4620, 0.0
      %4629 = vrot.lane.b32.xlu0 %v4621, 17
      %v4630 = vpop.permute.xlu0 %4629
      %4631 = vrot.lane.b32.xlu0 %v4622, 17
      %v4632 = vpop.permute.xlu0 %4631
      %4633 = vrot.lane.b32.xlu0 %v4623, 17
      %v4634 = vpop.permute.xlu0 %4633
      %4635 = vrot.lane.b32.xlu0 %v4624, 17
      %v4636 = vpop.permute.xlu0 %4635
      %v4637 = vsel %vm568, %v4630, %v4632
      %v4638 = vsel %vm568, %v4634, %v4636
      %4645 = vst.msk [vmem:[#allocation3] sm:$0xff] %vm1279, %v4630
      %4646 = vst [vmem:[#allocation3 + $0x8] sm:$0xff] %v4637
      %4647 = vst.msk [vmem:[#allocation3 + $0x10] sm:$0xff] %vm568, %v4632
      %4648 = vst.msk [vmem:[#allocation3 + $0x18] sm:$0xff] %vm1279, %v4634
      %4649 = vst [vmem:[#allocation3 + $0x20] sm:$0xff] %v4638
      %4650 = vst.msk [vmem:[#allocation3 + $0x28] sm:$0xff] %vm568, %v4636
      %v4651 = vld [vmem:[#allocation3] sm:$0xff]
      %v4652 = vld [vmem:[#allocation3 + $0x8] sm:$0xff]
      %v4653 = vld [vmem:[#allocation3 + $0x18] sm:$0xff]
      %v4654 = vld [vmem:[#allocation3 + $0x20] sm:$0xff]
      %v4655 = vsel %vm630, %v4651, 0.0
      %v4656 = vsel %vm631, %v4652, 0.0
      %v4657 = vsel %vm630, %v4653, 0.0
      %v4658 = vsel %vm631, %v4654, 0.0
      %v4659 = vld [vmem:[%s13] sm:$0x1]
      %v4660 = vld [vmem:[#allocation3 + $0x10] sm:$0xff]
      %v4661 = vld [vmem:[#allocation3 + $0x28] sm:$0xff]
      %s4662 = scalar_lea.vmem %s13, 1
      %v4663 = vld [vmem:[%s4662] sm:$0x1]
      %4670 = vrot.lane.b32.xlu0 %v4651, 127
      %v4671 = vpop.permute.xlu0 %4670
      %4672 = vrot.lane.b32.xlu0 %v4652, 127
      %v4673 = vpop.permute.xlu0 %4672
      %4674 = vrot.lane.b32.xlu0 %v4660, 127
      %v4675 = vpop.permute.xlu0 %4674
      %4676 = vrot.lane.b32.xlu0 %v4653, 127
      %v4677 = vpop.permute.xlu0 %4676
      %4678 = vrot.lane.b32.xlu0 %v4654, 127
      %v4679 = vpop.permute.xlu0 %4678
      %4680 = vrot.lane.b32.xlu0 %v4661, 127
      %v4681 = vpop.permute.xlu0 %4680
      %v4682 = vsel %vm719, %v4671, %v4673
      %v4683 = vsel %vm719, %v4673, %v4675
      %v4684 = vsel %vm719, %v4677, %v4679
      %v4685 = vsel %vm719, %v4679, %v4681
      %v4691 = vsel %vm1316, %v4663, 0
      %4693 = vmatprep.subr.mxu0 %v4683
      %4694 = vmatpush1.msra.mxu0 %v4682
      %4695 = vmatprep.subr.mxu0 %v4685
      %4696 = vmatpush1.msra.mxu0 %v4684
      %4697 = vmatprep.subr.mxu0 0.0
      %4698 = vmatpush1.msra.mxu0 0.0
      %4699 = vmatprep.subr.mxu0 0.0
      %4700 = vmatpush1.msra.mxu0 0.0
      %4701 = vmatprep.subr.mxu0 0.0
      %4702 = vmatpush1.msra.mxu0 0.0
      %4703 = vmatprep.subr.mxu0 0.0
      %4704 = vmatpush1.msra.mxu0 0.0
      %4705 = vmatprep.subr.mxu0 0.0
      %4706 = vmatpush1.msra.mxu0 0.0
      %4707 = vmatprep.subr.mxu0 0.0
      %4708 = vmatpush1.msra.mxu0 0.0
      %4709 = vmatprep.subr.mxu0 0.0
      %4710 = vmatpush1.msra.mxu0 0.0
      %4711 = vmatprep.subr.mxu0 0.0
      %4712 = vmatpush1.msra.mxu0 0.0
      %4713 = vmatprep.subr.mxu0 0.0
      %4714 = vmatpush1.msra.mxu0 0.0
      %4715 = vmatprep.subr.mxu0 0.0
      %4716 = vmatpush1.msra.mxu0 0.0
      %4717 = vmatprep.subr.mxu0 0.0
      %4718 = vmatpush1.msra.mxu0 0.0
      %4719 = vmatprep.subr.mxu0 0.0
      %4720 = vmatpush1.msra.mxu0 0.0
      %4721 = vmatprep.subr.mxu0 0.0
      %4722 = vmatpush1.msra.mxu0 0.0
      %4723 = vmatprep.subr.mxu0 0.0
      %4724 = vmatpush1.msra.mxu0 0.0
      %4725 = vmatprep.subr.mxu0 0.0
      %4726 = vmatpush1.msra.mxu0 0.0
      %4727 = vmatprep.subr.mxu0 0.0
      %4728 = vmatpush1.msra.mxu0 0.0
      %4729 = vmatprep.subr.mxu0 0.0
      %4730 = vmatpush1.msra.mxu0 0.0
      %4731 = vmatprep.subr.mxu0 0.0
      %4732 = vmatpush1.msra.mxu0 0.0
      %4733 = vmatprep.subr.mxu0 0.0
      %4734 = vmatpush1.msra.mxu0 0.0
      %4735 = vmatprep.subr.mxu0 0.0
      %4736 = vmatpush1.msra.mxu0 0.0
      %4737 = vmatprep.subr.mxu0 0.0
      %4738 = vmatpush1.msra.mxu0 0.0
      %4739 = vmatprep.subr.mxu0 0.0
      %4740 = vmatpush1.msra.mxu0 0.0
      %4741 = vmatprep.subr.mxu0 0.0
      %4742 = vmatpush1.msra.mxu0 0.0
      %4743 = vmatprep.subr.mxu0 0.0
      %4744 = vmatpush1.msra.mxu0 0.0
      %4745 = vmatprep.subr.mxu0 0.0
      %4746 = vmatpush1.msra.mxu0 0.0
      %4747 = vmatprep.subr.mxu0 0.0
      %4748 = vmatpush1.msra.mxu0 0.0
      %4749 = vmatprep.subr.mxu0 0.0
      %4750 = vmatpush1.msra.mxu0 0.0
      %4751 = vmatprep.subr.mxu0 0.0
      %4752 = vmatpush1.msra.mxu0 0.0
      %4753 = vmatprep.subr.mxu0 0.0
      %4754 = vmatpush1.msra.mxu0 0.0
      %4755 = vmatprep.subr.mxu0 0.0
      %4756 = vmatpush1.msra.mxu0 0.0
      %4757 = vmatprep.mubr.f32.mxu0 0.0
      %4758 = vmatmul.mubr.f32.gmra.mrb[0].mxu0 %v4691
      %v4759 = vpop.f32.mrb[0].mxu0
      %v4760 = vadd.f32 0.0, %v4759
      %v4761 = vpop.f32.mrb[0].mxu0
      %v4762 = vadd.f32 0.0, %v4761
      %4763 = vdwg.mxu0
      %v4765 = vsel %vm1316, %v4659, 0
      %4767 = vmatprep.subr.mxu0 %v4656
      %4768 = vmatpush1.msra.mxu0 %v4655
      %4769 = vmatprep.subr.mxu0 %v4658
      %4770 = vmatpush1.msra.mxu0 %v4657
      %4771 = vmatprep.subr.mxu0 0.0
      %4772 = vmatpush1.msra.mxu0 0.0
      %4773 = vmatprep.subr.mxu0 0.0
      %4774 = vmatpush1.msra.mxu0 0.0
      %4775 = vmatprep.subr.mxu0 0.0
      %4776 = vmatpush1.msra.mxu0 0.0
      %4777 = vmatprep.subr.mxu0 0.0
      %4778 = vmatpush1.msra.mxu0 0.0
      %4779 = vmatprep.subr.mxu0 0.0
      %4780 = vmatpush1.msra.mxu0 0.0
      %4781 = vmatprep.subr.mxu0 0.0
      %4782 = vmatpush1.msra.mxu0 0.0
      %4783 = vmatprep.subr.mxu0 0.0
      %4784 = vmatpush1.msra.mxu0 0.0
      %4785 = vmatprep.subr.mxu0 0.0
      %4786 = vmatpush1.msra.mxu0 0.0
      %4787 = vmatprep.subr.mxu0 0.0
      %4788 = vmatpush1.msra.mxu0 0.0
      %4789 = vmatprep.subr.mxu0 0.0
      %4790 = vmatpush1.msra.mxu0 0.0
      %4791 = vmatprep.subr.mxu0 0.0
      %4792 = vmatpush1.msra.mxu0 0.0
      %4793 = vmatprep.subr.mxu0 0.0
      %4794 = vmatpush1.msra.mxu0 0.0
      %4795 = vmatprep.subr.mxu0 0.0
      %4796 = vmatpush1.msra.mxu0 0.0
      %4797 = vmatprep.subr.mxu0 0.0
      %4798 = vmatpush1.msra.mxu0 0.0
      %4799 = vmatprep.subr.mxu0 0.0
      %4800 = vmatpush1.msra.mxu0 0.0
      %4801 = vmatprep.subr.mxu0 0.0
      %4802 = vmatpush1.msra.mxu0 0.0
      %4803 = vmatprep.subr.mxu0 0.0
      %4804 = vmatpush1.msra.mxu0 0.0
      %4805 = vmatprep.subr.mxu0 0.0
      %4806 = vmatpush1.msra.mxu0 0.0
      %4807 = vmatprep.subr.mxu0 0.0
      %4808 = vmatpush1.msra.mxu0 0.0
      %4809 = vmatprep.subr.mxu0 0.0
      %4810 = vmatpush1.msra.mxu0 0.0
      %4811 = vmatprep.subr.mxu0 0.0
      %4812 = vmatpush1.msra.mxu0 0.0
      %4813 = vmatprep.subr.mxu0 0.0
      %4814 = vmatpush1.msra.mxu0 0.0
      %4815 = vmatprep.subr.mxu0 0.0
      %4816 = vmatpush1.msra.mxu0 0.0
      %4817 = vmatprep.subr.mxu0 0.0
      %4818 = vmatpush1.msra.mxu0 0.0
      %4819 = vmatprep.subr.mxu0 0.0
      %4820 = vmatpush1.msra.mxu0 0.0
      %4821 = vmatprep.subr.mxu0 0.0
      %4822 = vmatpush1.msra.mxu0 0.0
      %4823 = vmatprep.subr.mxu0 0.0
      %4824 = vmatpush1.msra.mxu0 0.0
      %4825 = vmatprep.subr.mxu0 0.0
      %4826 = vmatpush1.msra.mxu0 0.0
      %4827 = vmatprep.subr.mxu0 0.0
      %4828 = vmatpush1.msra.mxu0 0.0
      %4829 = vmatprep.subr.mxu0 0.0
      %4830 = vmatpush1.msra.mxu0 0.0
      %4831 = vmatprep.mubr.f32.mxu0 0.0
      %4832 = vmatmul.mubr.f32.gmra.mrb[0].mxu0 %v4765
      %v4833 = vpop.f32.mrb[0].mxu0
      %v4834 = vadd.f32 %v4760, %v4833
      %v4835 = vpop.f32.mrb[0].mxu0
      %v4836 = vadd.f32 %v4762, %v4835
      %4837 = vdwg.mxu0
      %4838 = vrot.lane.b32.xlu0 %v4651, 126
      %v4839 = vpop.permute.xlu0 %4838
      %4840 = vrot.lane.b32.xlu0 %v4652, 126
      %v4841 = vpop.permute.xlu0 %4840
      %4842 = vrot.lane.b32.xlu0 %v4660, 126
      %v4843 = vpop.permute.xlu0 %4842
      %4844 = vrot.lane.b32.xlu0 %v4653, 126
      %v4845 = vpop.permute.xlu0 %4844
      %4846 = vrot.lane.b32.xlu0 %v4654, 126
      %v4847 = vpop.permute.xlu0 %4846
      %4848 = vrot.lane.b32.xlu0 %v4661, 126
      %v4849 = vpop.permute.xlu0 %4848
      %v4850 = vsel %vm782, %v4839, %v4841
      %v4851 = vsel %vm782, %v4841, %v4843
      %v4852 = vsel %vm782, %v4845, %v4847
      %v4853 = vsel %vm782, %v4847, %v4849
      %v4858 = vsel %vm774, %v4850, 0.0
      %v4859 = vsel %vm775, %v4851, 0.0
      %v4860 = vsel %vm774, %v4852, 0.0
      %v4861 = vsel %vm775, %v4853, 0.0
      %s4862 = scalar_lea.vmem %s13, 2
      %v4863 = vld [vmem:[%s4862] sm:$0x1]
      %v4865 = vsel %vm1316, %v4863, 0
      %4867 = vmatprep.subr.mxu0 %v4859
      %4868 = vmatpush1.msra.mxu0 %v4858
      %4869 = vmatprep.subr.mxu0 %v4861
      %4870 = vmatpush1.msra.mxu0 %v4860
      %4871 = vmatprep.subr.mxu0 0.0
      %4872 = vmatpush1.msra.mxu0 0.0
      %4873 = vmatprep.subr.mxu0 0.0
      %4874 = vmatpush1.msra.mxu0 0.0
      %4875 = vmatprep.subr.mxu0 0.0
      %4876 = vmatpush1.msra.mxu0 0.0
      %4877 = vmatprep.subr.mxu0 0.0
      %4878 = vmatpush1.msra.mxu0 0.0
      %4879 = vmatprep.subr.mxu0 0.0
      %4880 = vmatpush1.msra.mxu0 0.0
      %4881 = vmatprep.subr.mxu0 0.0
      %4882 = vmatpush1.msra.mxu0 0.0
      %4883 = vmatprep.subr.mxu0 0.0
      %4884 = vmatpush1.msra.mxu0 0.0
      %4885 = vmatprep.subr.mxu0 0.0
      %4886 = vmatpush1.msra.mxu0 0.0
      %4887 = vmatprep.subr.mxu0 0.0
      %4888 = vmatpush1.msra.mxu0 0.0
      %4889 = vmatprep.subr.mxu0 0.0
      %4890 = vmatpush1.msra.mxu0 0.0
      %4891 = vmatprep.subr.mxu0 0.0
      %4892 = vmatpush1.msra.mxu0 0.0
      %4893 = vmatprep.subr.mxu0 0.0
      %4894 = vmatpush1.msra.mxu0 0.0
      %4895 = vmatprep.subr.mxu0 0.0
      %4896 = vmatpush1.msra.mxu0 0.0
      %4897 = vmatprep.subr.mxu0 0.0
      %4898 = vmatpush1.msra.mxu0 0.0
      %4899 = vmatprep.subr.mxu0 0.0
      %4900 = vmatpush1.msra.mxu0 0.0
      %4901 = vmatprep.subr.mxu0 0.0
      %4902 = vmatpush1.msra.mxu0 0.0
      %4903 = vmatprep.subr.mxu0 0.0
      %4904 = vmatpush1.msra.mxu0 0.0
      %4905 = vmatprep.subr.mxu0 0.0
      %4906 = vmatpush1.msra.mxu0 0.0
      %4907 = vmatprep.subr.mxu0 0.0
      %4908 = vmatpush1.msra.mxu0 0.0
      %4909 = vmatprep.subr.mxu0 0.0
      %4910 = vmatpush1.msra.mxu0 0.0
      %4911 = vmatprep.subr.mxu0 0.0
      %4912 = vmatpush1.msra.mxu0 0.0
      %4913 = vmatprep.subr.mxu0 0.0
      %4914 = vmatpush1.msra.mxu0 0.0
      %4915 = vmatprep.subr.mxu0 0.0
      %4916 = vmatpush1.msra.mxu0 0.0
      %4917 = vmatprep.subr.mxu0 0.0
      %4918 = vmatpush1.msra.mxu0 0.0
      %4919 = vmatprep.subr.mxu0 0.0
      %4920 = vmatpush1.msra.mxu0 0.0
      %4921 = vmatprep.subr.mxu0 0.0
      %4922 = vmatpush1.msra.mxu0 0.0
      %4923 = vmatprep.subr.mxu0 0.0
      %4924 = vmatpush1.msra.mxu0 0.0
      %4925 = vmatprep.subr.mxu0 0.0
      %4926 = vmatpush1.msra.mxu0 0.0
      %4927 = vmatprep.subr.mxu0 0.0
      %4928 = vmatpush1.msra.mxu0 0.0
      %4929 = vmatprep.subr.mxu0 0.0
      %4930 = vmatpush1.msra.mxu0 0.0
      %4931 = vmatprep.mubr.f32.mxu0 0.0
      %4932 = vmatmul.mubr.f32.gmra.mrb[0].mxu0 %v4865
      %v4933 = vpop.f32.mrb[0].mxu0
      %v4934 = vadd.f32 0.0, %v4933
      %v4935 = vpop.f32.mrb[0].mxu0
      %v4936 = vadd.f32 0.0, %v4935
      %4937 = vdwg.mxu0
      %v4938 = vadd.f32 %v4834, %v4934
      %v4939 = vadd.f32 %v4836, %v4936
      %4940 = vrot.lane.b32.xlu0 %v4651, 112
      %v4941 = vpop.permute.xlu0 %4940
      %4942 = vrot.lane.b32.xlu0 %v4652, 112
      %v4943 = vpop.permute.xlu0 %4942
      %4944 = vrot.lane.b32.xlu0 %v4660, 112
      %v4945 = vpop.permute.xlu0 %4944
      %4946 = vrot.lane.b32.xlu0 %v4653, 112
      %v4947 = vpop.permute.xlu0 %4946
      %4948 = vrot.lane.b32.xlu0 %v4654, 112
      %v4949 = vpop.permute.xlu0 %4948
      %4950 = vrot.lane.b32.xlu0 %v4661, 112
      %v4951 = vpop.permute.xlu0 %4950
      %v4952 = vsel %vm845, %v4941, %v4943
      %v4953 = vsel %vm845, %v4943, %v4945
      %v4954 = vsel %vm845, %v4947, %v4949
      %v4955 = vsel %vm845, %v4949, %v4951
      %v4960 = vsel %vm630, %v4952, 0.0
      %v4961 = vsel %vm631, %v4953, 0.0
      %v4962 = vsel %vm630, %v4954, 0.0
      %v4963 = vsel %vm631, %v4955, 0.0
      %s4964 = scalar_lea.vmem %s13, 3
      %v4965 = vld [vmem:[%s4964] sm:$0x1]
      %v4967 = vsel %vm1316, %v4965, 0
      %4969 = vmatprep.subr.mxu0 %v4961
      %4970 = vmatpush1.msra.mxu0 %v4960
      %4971 = vmatprep.subr.mxu0 %v4963
      %4972 = vmatpush1.msra.mxu0 %v4962
      %4973 = vmatprep.subr.mxu0 0.0
      %4974 = vmatpush1.msra.mxu0 0.0
      %4975 = vmatprep.subr.mxu0 0.0
      %4976 = vmatpush1.msra.mxu0 0.0
      %4977 = vmatprep.subr.mxu0 0.0
      %4978 = vmatpush1.msra.mxu0 0.0
      %4979 = vmatprep.subr.mxu0 0.0
      %4980 = vmatpush1.msra.mxu0 0.0
      %4981 = vmatprep.subr.mxu0 0.0
      %4982 = vmatpush1.msra.mxu0 0.0
      %4983 = vmatprep.subr.mxu0 0.0
      %4984 = vmatpush1.msra.mxu0 0.0
      %4985 = vmatprep.subr.mxu0 0.0
      %4986 = vmatpush1.msra.mxu0 0.0
      %4987 = vmatprep.subr.mxu0 0.0
      %4988 = vmatpush1.msra.mxu0 0.0
      %4989 = vmatprep.subr.mxu0 0.0
      %4990 = vmatpush1.msra.mxu0 0.0
      %4991 = vmatprep.subr.mxu0 0.0
      %4992 = vmatpush1.msra.mxu0 0.0
      %4993 = vmatprep.subr.mxu0 0.0
      %4994 = vmatpush1.msra.mxu0 0.0
      %4995 = vmatprep.subr.mxu0 0.0
      %4996 = vmatpush1.msra.mxu0 0.0
      %4997 = vmatprep.subr.mxu0 0.0
      %4998 = vmatpush1.msra.mxu0 0.0
      %4999 = vmatprep.subr.mxu0 0.0
      %5000 = vmatpush1.msra.mxu0 0.0
      %5001 = vmatprep.subr.mxu0 0.0
      %5002 = vmatpush1.msra.mxu0 0.0
      %5003 = vmatprep.subr.mxu0 0.0
      %5004 = vmatpush1.msra.mxu0 0.0
      %5005 = vmatprep.subr.mxu0 0.0
      %5006 = vmatpush1.msra.mxu0 0.0
      %5007 = vmatprep.subr.mxu0 0.0
      %5008 = vmatpush1.msra.mxu0 0.0
      %5009 = vmatprep.subr.mxu0 0.0
      %5010 = vmatpush1.msra.mxu0 0.0
      %5011 = vmatprep.subr.mxu0 0.0
      %5012 = vmatpush1.msra.mxu0 0.0
      %5013 = vmatprep.subr.mxu0 0.0
      %5014 = vmatpush1.msra.mxu0 0.0
      %5015 = vmatprep.subr.mxu0 0.0
      %5016 = vmatpush1.msra.mxu0 0.0
      %5017 = vmatprep.subr.mxu0 0.0
      %5018 = vmatpush1.msra.mxu0 0.0
      %5019 = vmatprep.subr.mxu0 0.0
      %5020 = vmatpush1.msra.mxu0 0.0
      %5021 = vmatprep.subr.mxu0 0.0
      %5022 = vmatpush1.msra.mxu0 0.0
      %5023 = vmatprep.subr.mxu0 0.0
      %5024 = vmatpush1.msra.mxu0 0.0
      %5025 = vmatprep.subr.mxu0 0.0
      %5026 = vmatpush1.msra.mxu0 0.0
      %5027 = vmatprep.subr.mxu0 0.0
      %5028 = vmatpush1.msra.mxu0 0.0
      %5029 = vmatprep.subr.mxu0 0.0
      %5030 = vmatpush1.msra.mxu0 0.0
      %5031 = vmatprep.subr.mxu0 0.0
      %5032 = vmatpush1.msra.mxu0 0.0
      %5033 = vmatprep.mubr.f32.mxu0 0.0
      %5034 = vmatmul.mubr.f32.gmra.mrb[0].mxu0 %v4967
      %v5035 = vpop.f32.mrb[0].mxu0
      %v5036 = vadd.f32 0.0, %v5035
      %v5037 = vpop.f32.mrb[0].mxu0
      %v5038 = vadd.f32 0.0, %v5037
      %5039 = vdwg.mxu0
      %v5040 = vadd.f32 %v4938, %v5036
      %v5041 = vadd.f32 %v4939, %v5038
      %s5042 = scalar_lea.vmem %s13, 4
      %v5043 = vld [vmem:[%s5042] sm:$0x1]
      %5044 = vrot.lane.b32.xlu0 %v4651, 111
      %v5045 = vpop.permute.xlu0 %5044
      %5046 = vrot.lane.b32.xlu0 %v4652, 111
      %v5047 = vpop.permute.xlu0 %5046
      %5048 = vrot.lane.b32.xlu0 %v4660, 111
      %v5049 = vpop.permute.xlu0 %5048
      %5050 = vrot.lane.b32.xlu0 %v4653, 111
      %v5051 = vpop.permute.xlu0 %5050
      %5052 = vrot.lane.b32.xlu0 %v4654, 111
      %v5053 = vpop.permute.xlu0 %5052
      %5054 = vrot.lane.b32.xlu0 %v4661, 111
      %v5055 = vpop.permute.xlu0 %5054
      %v5056 = vsel %vm933, %v5045, %v5047
      %v5057 = vsel %vm933, %v5047, %v5049
      %v5058 = vsel %vm933, %v5051, %v5053
      %v5059 = vsel %vm933, %v5053, %v5055
      %v5065 = vsel %vm1316, %v5043, 0
      %5067 = vmatprep.subr.mxu0 %v5057
      %5068 = vmatpush1.msra.mxu0 %v5056
      %5069 = vmatprep.subr.mxu0 %v5059
      %5070 = vmatpush1.msra.mxu0 %v5058
      %5071 = vmatprep.subr.mxu0 0.0
      %5072 = vmatpush1.msra.mxu0 0.0
      %5073 = vmatprep.subr.mxu0 0.0
      %5074 = vmatpush1.msra.mxu0 0.0
      %5075 = vmatprep.subr.mxu0 0.0
      %5076 = vmatpush1.msra.mxu0 0.0
      %5077 = vmatprep.subr.mxu0 0.0
      %5078 = vmatpush1.msra.mxu0 0.0
      %5079 = vmatprep.subr.mxu0 0.0
      %5080 = vmatpush1.msra.mxu0 0.0
      %5081 = vmatprep.subr.mxu0 0.0
      %5082 = vmatpush1.msra.mxu0 0.0
      %5083 = vmatprep.subr.mxu0 0.0
      %5084 = vmatpush1.msra.mxu0 0.0
      %5085 = vmatprep.subr.mxu0 0.0
      %5086 = vmatpush1.msra.mxu0 0.0
      %5087 = vmatprep.subr.mxu0 0.0
      %5088 = vmatpush1.msra.mxu0 0.0
      %5089 = vmatprep.subr.mxu0 0.0
      %5090 = vmatpush1.msra.mxu0 0.0
      %5091 = vmatprep.subr.mxu0 0.0
      %5092 = vmatpush1.msra.mxu0 0.0
      %5093 = vmatprep.subr.mxu0 0.0
      %5094 = vmatpush1.msra.mxu0 0.0
      %5095 = vmatprep.subr.mxu0 0.0
      %5096 = vmatpush1.msra.mxu0 0.0
      %5097 = vmatprep.subr.mxu0 0.0
      %5098 = vmatpush1.msra.mxu0 0.0
      %5099 = vmatprep.subr.mxu0 0.0
      %5100 = vmatpush1.msra.mxu0 0.0
      %5101 = vmatprep.subr.mxu0 0.0
      %5102 = vmatpush1.msra.mxu0 0.0
      %5103 = vmatprep.subr.mxu0 0.0
      %5104 = vmatpush1.msra.mxu0 0.0
      %5105 = vmatprep.subr.mxu0 0.0
      %5106 = vmatpush1.msra.mxu0 0.0
      %5107 = vmatprep.subr.mxu0 0.0
      %5108 = vmatpush1.msra.mxu0 0.0
      %5109 = vmatprep.subr.mxu0 0.0
      %5110 = vmatpush1.msra.mxu0 0.0
      %5111 = vmatprep.subr.mxu0 0.0
      %5112 = vmatpush1.msra.mxu0 0.0
      %5113 = vmatprep.subr.mxu0 0.0
      %5114 = vmatpush1.msra.mxu0 0.0
      %5115 = vmatprep.subr.mxu0 0.0
      %5116 = vmatpush1.msra.mxu0 0.0
      %5117 = vmatprep.subr.mxu0 0.0
      %5118 = vmatpush1.msra.mxu0 0.0
      %5119 = vmatprep.subr.mxu0 0.0
      %5120 = vmatpush1.msra.mxu0 0.0
      %5121 = vmatprep.subr.mxu0 0.0
      %5122 = vmatpush1.msra.mxu0 0.0
      %5123 = vmatprep.subr.mxu0 0.0
      %5124 = vmatpush1.msra.mxu0 0.0
      %5125 = vmatprep.subr.mxu0 0.0
      %5126 = vmatpush1.msra.mxu0 0.0
      %5127 = vmatprep.subr.mxu0 0.0
      %5128 = vmatpush1.msra.mxu0 0.0
      %5129 = vmatprep.subr.mxu0 0.0
      %5130 = vmatpush1.msra.mxu0 0.0
      %5131 = vmatprep.mubr.f32.mxu0 0.0
      %5132 = vmatmul.mubr.f32.gmra.mrb[0].mxu0 %v5065
      %v5133 = vpop.f32.mrb[0].mxu0
      %v5134 = vadd.f32 0.0, %v5133
      %v5135 = vpop.f32.mrb[0].mxu0
      %v5136 = vadd.f32 0.0, %v5135
      %5137 = vdwg.mxu0
      %v5138 = vadd.f32 %v5040, %v5134
      %v5139 = vadd.f32 %v5041, %v5136
      %5140 = vrot.lane.b32.xlu0 %v4651, 110
      %v5141 = vpop.permute.xlu0 %5140
      %5142 = vrot.lane.b32.xlu0 %v4652, 110
      %v5143 = vpop.permute.xlu0 %5142
      %5144 = vrot.lane.b32.xlu0 %v4660, 110
      %v5145 = vpop.permute.xlu0 %5144
      %5146 = vrot.lane.b32.xlu0 %v4653, 110
      %v5147 = vpop.permute.xlu0 %5146
      %5148 = vrot.lane.b32.xlu0 %v4654, 110
      %v5149 = vpop.permute.xlu0 %5148
      %5150 = vrot.lane.b32.xlu0 %v4661, 110
      %v5151 = vpop.permute.xlu0 %5150
      %v5152 = vsel %vm982, %v5141, %v5143
      %v5153 = vsel %vm982, %v5143, %v5145
      %v5154 = vsel %vm982, %v5147, %v5149
      %v5155 = vsel %vm982, %v5149, %v5151
      %v5160 = vsel %vm774, %v5152, 0.0
      %v5161 = vsel %vm775, %v5153, 0.0
      %v5162 = vsel %vm774, %v5154, 0.0
      %v5163 = vsel %vm775, %v5155, 0.0
      %s5164 = scalar_lea.vmem %s13, 5
      %v5165 = vld [vmem:[%s5164] sm:$0x1]
      %v5167 = vsel %vm1316, %v5165, 0
      %5169 = vmatprep.subr.mxu0 %v5161
      %5170 = vmatpush1.msra.mxu0 %v5160
      %5171 = vmatprep.subr.mxu0 %v5163
      %5172 = vmatpush1.msra.mxu0 %v5162
      %5173 = vmatprep.subr.mxu0 0.0
      %5174 = vmatpush1.msra.mxu0 0.0
      %5175 = vmatprep.subr.mxu0 0.0
      %5176 = vmatpush1.msra.mxu0 0.0
      %5177 = vmatprep.subr.mxu0 0.0
      %5178 = vmatpush1.msra.mxu0 0.0
      %5179 = vmatprep.subr.mxu0 0.0
      %5180 = vmatpush1.msra.mxu0 0.0
      %5181 = vmatprep.subr.mxu0 0.0
      %5182 = vmatpush1.msra.mxu0 0.0
      %5183 = vmatprep.subr.mxu0 0.0
      %5184 = vmatpush1.msra.mxu0 0.0
      %5185 = vmatprep.subr.mxu0 0.0
      %5186 = vmatpush1.msra.mxu0 0.0
      %5187 = vmatprep.subr.mxu0 0.0
      %5188 = vmatpush1.msra.mxu0 0.0
      %5189 = vmatprep.subr.mxu0 0.0
      %5190 = vmatpush1.msra.mxu0 0.0
      %5191 = vmatprep.subr.mxu0 0.0
      %5192 = vmatpush1.msra.mxu0 0.0
      %5193 = vmatprep.subr.mxu0 0.0
      %5194 = vmatpush1.msra.mxu0 0.0
      %5195 = vmatprep.subr.mxu0 0.0
      %5196 = vmatpush1.msra.mxu0 0.0
      %5197 = vmatprep.subr.mxu0 0.0
      %5198 = vmatpush1.msra.mxu0 0.0
      %5199 = vmatprep.subr.mxu0 0.0
      %5200 = vmatpush1.msra.mxu0 0.0
      %5201 = vmatprep.subr.mxu0 0.0
      %5202 = vmatpush1.msra.mxu0 0.0
      %5203 = vmatprep.subr.mxu0 0.0
      %5204 = vmatpush1.msra.mxu0 0.0
      %5205 = vmatprep.subr.mxu0 0.0
      %5206 = vmatpush1.msra.mxu0 0.0
      %5207 = vmatprep.subr.mxu0 0.0
      %5208 = vmatpush1.msra.mxu0 0.0
      %5209 = vmatprep.subr.mxu0 0.0
      %5210 = vmatpush1.msra.mxu0 0.0
      %5211 = vmatprep.subr.mxu0 0.0
      %5212 = vmatpush1.msra.mxu0 0.0
      %5213 = vmatprep.subr.mxu0 0.0
      %5214 = vmatpush1.msra.mxu0 0.0
      %5215 = vmatprep.subr.mxu0 0.0
      %5216 = vmatpush1.msra.mxu0 0.0
      %5217 = vmatprep.subr.mxu0 0.0
      %5218 = vmatpush1.msra.mxu0 0.0
      %5219 = vmatprep.subr.mxu0 0.0
      %5220 = vmatpush1.msra.mxu0 0.0
      %5221 = vmatprep.subr.mxu0 0.0
      %5222 = vmatpush1.msra.mxu0 0.0
      %5223 = vmatprep.subr.mxu0 0.0
      %5224 = vmatpush1.msra.mxu0 0.0
      %5225 = vmatprep.subr.mxu0 0.0
      %5226 = vmatpush1.msra.mxu0 0.0
      %5227 = vmatprep.subr.mxu0 0.0
      %5228 = vmatpush1.msra.mxu0 0.0
      %5229 = vmatprep.subr.mxu0 0.0
      %5230 = vmatpush1.msra.mxu0 0.0
      %5231 = vmatprep.subr.mxu0 0.0
      %5232 = vmatpush1.msra.mxu0 0.0
      %5233 = vmatprep.mubr.f32.mxu0 0.0
      %5234 = vmatmul.mubr.f32.gmra.mrb[0].mxu0 %v5167
      %v5235 = vpop.f32.mrb[0].mxu0
      %v5236 = vadd.f32 0.0, %v5235
      %v5237 = vpop.f32.mrb[0].mxu0
      %v5238 = vadd.f32 0.0, %v5237
      %5239 = vdwg.mxu0
      %v5240 = vadd.f32 %v5138, %v5236
      %v5241 = vadd.f32 %v5139, %v5238
      %5242 = vrot.lane.b32.xlu0 %v4651, 96
      %v5243 = vpop.permute.xlu0 %5242
      %5244 = vrot.lane.b32.xlu0 %v4652, 96
      %v5245 = vpop.permute.xlu0 %5244
      %5246 = vrot.lane.b32.xlu0 %v4660, 96
      %v5247 = vpop.permute.xlu0 %5246
      %5248 = vrot.lane.b32.xlu0 %v4653, 96
      %v5249 = vpop.permute.xlu0 %5248
      %5250 = vrot.lane.b32.xlu0 %v4654, 96
      %v5251 = vpop.permute.xlu0 %5250
      %5252 = vrot.lane.b32.xlu0 %v4661, 96
      %v5253 = vpop.permute.xlu0 %5252
      %v5254 = vsel %vm1045, %v5243, %v5245
      %v5255 = vsel %vm1045, %v5245, %v5247
      %v5256 = vsel %vm1045, %v5249, %v5251
      %v5257 = vsel %vm1045, %v5251, %v5253
      %v5262 = vsel %vm630, %v5254, 0.0
      %v5263 = vsel %vm631, %v5255, 0.0
      %v5264 = vsel %vm630, %v5256, 0.0
      %v5265 = vsel %vm631, %v5257, 0.0
      %s5266 = scalar_lea.vmem %s13, 6
      %v5267 = vld [vmem:[%s5266] sm:$0x1]
      %v5269 = vsel %vm1316, %v5267, 0
      %5271 = vmatprep.subr.mxu0 %v5263
      %5272 = vmatpush1.msra.mxu0 %v5262
      %5273 = vmatprep.subr.mxu0 %v5265
      %5274 = vmatpush1.msra.mxu0 %v5264
      %5275 = vmatprep.subr.mxu0 0.0
      %5276 = vmatpush1.msra.mxu0 0.0
      %5277 = vmatprep.subr.mxu0 0.0
      %5278 = vmatpush1.msra.mxu0 0.0
      %5279 = vmatprep.subr.mxu0 0.0
      %5280 = vmatpush1.msra.mxu0 0.0
      %5281 = vmatprep.subr.mxu0 0.0
      %5282 = vmatpush1.msra.mxu0 0.0
      %5283 = vmatprep.subr.mxu0 0.0
      %5284 = vmatpush1.msra.mxu0 0.0
      %5285 = vmatprep.subr.mxu0 0.0
      %5286 = vmatpush1.msra.mxu0 0.0
      %5287 = vmatprep.subr.mxu0 0.0
      %5288 = vmatpush1.msra.mxu0 0.0
      %5289 = vmatprep.subr.mxu0 0.0
      %5290 = vmatpush1.msra.mxu0 0.0
      %5291 = vmatprep.subr.mxu0 0.0
      %5292 = vmatpush1.msra.mxu0 0.0
      %5293 = vmatprep.subr.mxu0 0.0
      %5294 = vmatpush1.msra.mxu0 0.0
      %5295 = vmatprep.subr.mxu0 0.0
      %5296 = vmatpush1.msra.mxu0 0.0
      %5297 = vmatprep.subr.mxu0 0.0
      %5298 = vmatpush1.msra.mxu0 0.0
      %5299 = vmatprep.subr.mxu0 0.0
      %5300 = vmatpush1.msra.mxu0 0.0
      %5301 = vmatprep.subr.mxu0 0.0
      %5302 = vmatpush1.msra.mxu0 0.0
      %5303 = vmatprep.subr.mxu0 0.0
      %5304 = vmatpush1.msra.mxu0 0.0
      %5305 = vmatprep.subr.mxu0 0.0
      %5306 = vmatpush1.msra.mxu0 0.0
      %5307 = vmatprep.subr.mxu0 0.0
      %5308 = vmatpush1.msra.mxu0 0.0
      %5309 = vmatprep.subr.mxu0 0.0
      %5310 = vmatpush1.msra.mxu0 0.0
      %5311 = vmatprep.subr.mxu0 0.0
      %5312 = vmatpush1.msra.mxu0 0.0
      %5313 = vmatprep.subr.mxu0 0.0
      %5314 = vmatpush1.msra.mxu0 0.0
      %5315 = vmatprep.subr.mxu0 0.0
      %5316 = vmatpush1.msra.mxu0 0.0
      %5317 = vmatprep.subr.mxu0 0.0
      %5318 = vmatpush1.msra.mxu0 0.0
      %5319 = vmatprep.subr.mxu0 0.0
      %5320 = vmatpush1.msra.mxu0 0.0
      %5321 = vmatprep.subr.mxu0 0.0
      %5322 = vmatpush1.msra.mxu0 0.0
      %5323 = vmatprep.subr.mxu0 0.0
      %5324 = vmatpush1.msra.mxu0 0.0
      %5325 = vmatprep.subr.mxu0 0.0
      %5326 = vmatpush1.msra.mxu0 0.0
      %5327 = vmatprep.subr.mxu0 0.0
      %5328 = vmatpush1.msra.mxu0 0.0
      %5329 = vmatprep.subr.mxu0 0.0
      %5330 = vmatpush1.msra.mxu0 0.0
      %5331 = vmatprep.subr.mxu0 0.0
      %5332 = vmatpush1.msra.mxu0 0.0
      %5333 = vmatprep.subr.mxu0 0.0
      %5334 = vmatpush1.msra.mxu0 0.0
      %5335 = vmatprep.mubr.f32.mxu0 0.0
      %5336 = vmatmul.mubr.f32.gmra.mrb[0].mxu0 %v5269
      %v5337 = vpop.f32.mrb[0].mxu0
      %v5338 = vadd.f32 0.0, %v5337
      %v5339 = vpop.f32.mrb[0].mxu0
      %v5340 = vadd.f32 0.0, %v5339
      %5341 = vdwg.mxu0
      %v5342 = vadd.f32 %v5240, %v5338
      %v5343 = vadd.f32 %v5241, %v5340
      %s5344 = scalar_lea.vmem %s13, 7
      %v5345 = vld [vmem:[%s5344] sm:$0x1]
      %5346 = vrot.lane.b32.xlu0 %v4651, 95
      %v5347 = vpop.permute.xlu0 %5346
      %5348 = vrot.lane.b32.xlu0 %v4652, 95
      %v5349 = vpop.permute.xlu0 %5348
      %5350 = vrot.lane.b32.xlu0 %v4660, 95
      %v5351 = vpop.permute.xlu0 %5350
      %5352 = vrot.lane.b32.xlu0 %v4653, 95
      %v5353 = vpop.permute.xlu0 %5352
      %5354 = vrot.lane.b32.xlu0 %v4654, 95
      %v5355 = vpop.permute.xlu0 %5354
      %5356 = vrot.lane.b32.xlu0 %v4661, 95
      %v5357 = vpop.permute.xlu0 %5356
      %v5358 = vsel %vm1133, %v5347, %v5349
      %v5359 = vsel %vm1133, %v5349, %v5351
      %v5360 = vsel %vm1133, %v5353, %v5355
      %v5361 = vsel %vm1133, %v5355, %v5357
      %v5367 = vsel %vm1316, %v5345, 0
      %5369 = vmatprep.subr.mxu0 %v5359
      %5370 = vmatpush1.msra.mxu0 %v5358
      %5371 = vmatprep.subr.mxu0 %v5361
      %5372 = vmatpush1.msra.mxu0 %v5360
      %5373 = vmatprep.subr.mxu0 0.0
      %5374 = vmatpush1.msra.mxu0 0.0
      %5375 = vmatprep.subr.mxu0 0.0
      %5376 = vmatpush1.msra.mxu0 0.0
      %5377 = vmatprep.subr.mxu0 0.0
      %5378 = vmatpush1.msra.mxu0 0.0
      %5379 = vmatprep.subr.mxu0 0.0
      %5380 = vmatpush1.msra.mxu0 0.0
      %5381 = vmatprep.subr.mxu0 0.0
      %5382 = vmatpush1.msra.mxu0 0.0
      %5383 = vmatprep.subr.mxu0 0.0
      %5384 = vmatpush1.msra.mxu0 0.0
      %5385 = vmatprep.subr.mxu0 0.0
      %5386 = vmatpush1.msra.mxu0 0.0
      %5387 = vmatprep.subr.mxu0 0.0
      %5388 = vmatpush1.msra.mxu0 0.0
      %5389 = vmatprep.subr.mxu0 0.0
      %5390 = vmatpush1.msra.mxu0 0.0
      %5391 = vmatprep.subr.mxu0 0.0
      %5392 = vmatpush1.msra.mxu0 0.0
      %5393 = vmatprep.subr.mxu0 0.0
      %5394 = vmatpush1.msra.mxu0 0.0
      %5395 = vmatprep.subr.mxu0 0.0
      %5396 = vmatpush1.msra.mxu0 0.0
      %5397 = vmatprep.subr.mxu0 0.0
      %5398 = vmatpush1.msra.mxu0 0.0
      %5399 = vmatprep.subr.mxu0 0.0
      %5400 = vmatpush1.msra.mxu0 0.0
      %5401 = vmatprep.subr.mxu0 0.0
      %5402 = vmatpush1.msra.mxu0 0.0
      %5403 = vmatprep.subr.mxu0 0.0
      %5404 = vmatpush1.msra.mxu0 0.0
      %5405 = vmatprep.subr.mxu0 0.0
      %5406 = vmatpush1.msra.mxu0 0.0
      %5407 = vmatprep.subr.mxu0 0.0
      %5408 = vmatpush1.msra.mxu0 0.0
      %5409 = vmatprep.subr.mxu0 0.0
      %5410 = vmatpush1.msra.mxu0 0.0
      %5411 = vmatprep.subr.mxu0 0.0
      %5412 = vmatpush1.msra.mxu0 0.0
      %5413 = vmatprep.subr.mxu0 0.0
      %5414 = vmatpush1.msra.mxu0 0.0
      %5415 = vmatprep.subr.mxu0 0.0
      %5416 = vmatpush1.msra.mxu0 0.0
      %5417 = vmatprep.subr.mxu0 0.0
      %5418 = vmatpush1.msra.mxu0 0.0
      %5419 = vmatprep.subr.mxu0 0.0
      %5420 = vmatpush1.msra.mxu0 0.0
      %5421 = vmatprep.subr.mxu0 0.0
      %5422 = vmatpush1.msra.mxu0 0.0
      %5423 = vmatprep.subr.mxu0 0.0
      %5424 = vmatpush1.msra.mxu0 0.0
      %5425 = vmatprep.subr.mxu0 0.0
      %5426 = vmatpush1.msra.mxu0 0.0
      %5427 = vmatprep.subr.mxu0 0.0
      %5428 = vmatpush1.msra.mxu0 0.0
      %5429 = vmatprep.subr.mxu0 0.0
      %5430 = vmatpush1.msra.mxu0 0.0
      %5431 = vmatprep.subr.mxu0 0.0
      %5432 = vmatpush1.msra.mxu0 0.0
      %5433 = vmatprep.mubr.f32.mxu0 0.0
      %5434 = vmatmul.mubr.f32.gmra.mrb[0].mxu0 %v5367
      %v5435 = vpop.f32.mrb[0].mxu0
      %v5436 = vadd.f32 0.0, %v5435
      %v5437 = vpop.f32.mrb[0].mxu0
      %v5438 = vadd.f32 0.0, %v5437
      %5439 = vdwg.mxu0
      %v5440 = vadd.f32 %v5342, %v5436
      %v5441 = vadd.f32 %v5343, %v5438
      %5442 = vrot.lane.b32.xlu0 %v4651, 94
      %v5443 = vpop.permute.xlu0 %5442
      %5444 = vrot.lane.b32.xlu0 %v4652, 94
      %v5445 = vpop.permute.xlu0 %5444
      %5446 = vrot.lane.b32.xlu0 %v4660, 94
      %v5447 = vpop.permute.xlu0 %5446
      %5448 = vrot.lane.b32.xlu0 %v4653, 94
      %v5449 = vpop.permute.xlu0 %5448
      %5450 = vrot.lane.b32.xlu0 %v4654, 94
      %v5451 = vpop.permute.xlu0 %5450
      %5452 = vrot.lane.b32.xlu0 %v4661, 94
      %v5453 = vpop.permute.xlu0 %5452
      %v5454 = vsel %vm1182, %v5443, %v5445
      %v5455 = vsel %vm1182, %v5445, %v5447
      %v5456 = vsel %vm1182, %v5449, %v5451
      %v5457 = vsel %vm1182, %v5451, %v5453
      %v5462 = vsel %vm774, %v5454, 0.0
      %v5463 = vsel %vm775, %v5455, 0.0
      %v5464 = vsel %vm774, %v5456, 0.0
      %v5465 = vsel %vm775, %v5457, 0.0
      %s5466 = scalar_lea.vmem %s13, 8
      %v5467 = vld [vmem:[%s5466] sm:$0x1]
      %v5469 = vsel %vm1316, %v5467, 0
      %5471 = vmatprep.subr.mxu0 %v5463
      %5472 = vmatpush1.msra.mxu0 %v5462
      %5473 = vmatprep.subr.mxu0 %v5465
      %5474 = vmatpush1.msra.mxu0 %v5464
      %5475 = vmatprep.subr.mxu0 0.0
      %5476 = vmatpush1.msra.mxu0 0.0
      %5477 = vmatprep.subr.mxu0 0.0
      %5478 = vmatpush1.msra.mxu0 0.0
      %5479 = vmatprep.subr.mxu0 0.0
      %5480 = vmatpush1.msra.mxu0 0.0
      %5481 = vmatprep.subr.mxu0 0.0
      %5482 = vmatpush1.msra.mxu0 0.0
      %5483 = vmatprep.subr.mxu0 0.0
      %5484 = vmatpush1.msra.mxu0 0.0
      %5485 = vmatprep.subr.mxu0 0.0
      %5486 = vmatpush1.msra.mxu0 0.0
      %5487 = vmatprep.subr.mxu0 0.0
      %5488 = vmatpush1.msra.mxu0 0.0
      %5489 = vmatprep.subr.mxu0 0.0
      %5490 = vmatpush1.msra.mxu0 0.0
      %5491 = vmatprep.subr.mxu0 0.0
      %5492 = vmatpush1.msra.mxu0 0.0
      %5493 = vmatprep.subr.mxu0 0.0
      %5494 = vmatpush1.msra.mxu0 0.0
      %5495 = vmatprep.subr.mxu0 0.0
      %5496 = vmatpush1.msra.mxu0 0.0
      %5497 = vmatprep.subr.mxu0 0.0
      %5498 = vmatpush1.msra.mxu0 0.0
      %5499 = vmatprep.subr.mxu0 0.0
      %5500 = vmatpush1.msra.mxu0 0.0
      %5501 = vmatprep.subr.mxu0 0.0
      %5502 = vmatpush1.msra.mxu0 0.0
      %5503 = vmatprep.subr.mxu0 0.0
      %5504 = vmatpush1.msra.mxu0 0.0
      %5505 = vmatprep.subr.mxu0 0.0
      %5506 = vmatpush1.msra.mxu0 0.0
      %5507 = vmatprep.subr.mxu0 0.0
      %5508 = vmatpush1.msra.mxu0 0.0
      %5509 = vmatprep.subr.mxu0 0.0
      %5510 = vmatpush1.msra.mxu0 0.0
      %5511 = vmatprep.subr.mxu0 0.0
      %5512 = vmatpush1.msra.mxu0 0.0
      %5513 = vmatprep.subr.mxu0 0.0
      %5514 = vmatpush1.msra.mxu0 0.0
      %5515 = vmatprep.subr.mxu0 0.0
      %5516 = vmatpush1.msra.mxu0 0.0
      %5517 = vmatprep.subr.mxu0 0.0
      %5518 = vmatpush1.msra.mxu0 0.0
      %5519 = vmatprep.subr.mxu0 0.0
      %5520 = vmatpush1.msra.mxu0 0.0
      %5521 = vmatprep.subr.mxu0 0.0
      %5522 = vmatpush1.msra.mxu0 0.0
      %5523 = vmatprep.subr.mxu0 0.0
      %5524 = vmatpush1.msra.mxu0 0.0
      %5525 = vmatprep.subr.mxu0 0.0
      %5526 = vmatpush1.msra.mxu0 0.0
      %5527 = vmatprep.subr.mxu0 0.0
      %5528 = vmatpush1.msra.mxu0 0.0
      %5529 = vmatprep.subr.mxu0 0.0
      %5530 = vmatpush1.msra.mxu0 0.0
      %5531 = vmatprep.subr.mxu0 0.0
      %5532 = vmatpush1.msra.mxu0 0.0
      %5533 = vmatprep.subr.mxu0 0.0
      %5534 = vmatpush1.msra.mxu0 0.0
      %5535 = vmatprep.mubr.f32.mxu0 0.0
      %5536 = vmatmul.mubr.f32.gmra.mrb[0].mxu0 %v5469
      %v5537 = vpop.f32.mrb[0].mxu0
      %v5538 = vadd.f32 0.0, %v5537
      %v5539 = vpop.f32.mrb[0].mxu0
      %v5540 = vadd.f32 0.0, %v5539
      %5541 = vdwg.mxu0
      %v5542 = vadd.f32 %v5440, %v5538
      %v5543 = vadd.f32 %v5441, %v5540
      %v5544 = vld [vmem:[#allocation4] sm:$0x1]
      %5546 = vset.pattern.permute.xlu0 0
      %5547 = vperm.xlu0 %5546, %v5544
      %v5548 = vpop.permute.xlu0 %5547
      %v5550 = vlaneseq
      %v5551 = vshrl.u32 %v5550, 7
      %v5552 = vsub.s32 0, %v5551
      %v5553 = vrot.slane %v5548, %v5552
      %v5554 = vadd.f32 %v5542, %v5553
      %v5555 = vadd.f32 %v5543, %v5553
      %v5556 = vmax.f32 %v5554, 0.0
      %v5557 = vmax.f32 %v5555, 0.0
      %v5560 = vcombine.low %v5556, %v5557
      %v5562 = vunpack.c.l.s4 1966171168
      %v5563 = vunpack.c.0.s8 %v5562
      %v5564 = vlaneseq
      %v5565 = vshrl.u32 %v5564, 7
      %v5566 = vsub.s32 %v5563, %v5565
      %v5567 = vrot.slane %v5560, %v5566
      %v5569 = vunpack.c.l.s4 1966171168
      %v5570 = vunpack.c.0.s8 %v5569
      %v5571 = vlaneseq
      %v5572 = vshrl.u32 %v5571, 7
      %v5573 = vsub.s32 %v5570, %v5572
      %v5574 = vrot.slane %v5567, %v5573
      %vm5576 = vcmp.ge.s32.totalorder %v611, 0
      %vm5577 = vcmp.lt.s32.totalorder %v611, 256
      %vm5578 = vmand %vm5576, %vm5577
      %5579 = vst.msk [vmem:[%s565] sm:$0x3] %vm5578, %v5574
      %p5580 = scmp.lt.s32.totalorder %s30, 1
      %s5581 = scalar_select %p5580, %s30, 1
      %s5582 = smul.addr %s5581, 2
      %s5583 = smul.addr %s5582, 2
      %s5584 = scalar_lea.vmem %s15, %s5583
      %p5585 = scmp.lt.s32.totalorder %s30, 1
      %s5586 = scalar_select %p5585, %s30, 1
      %s5587 = smul.addr %s5586, 2
      %s5588 = scalar_lea.vmem %s16, %s5587
      // Predicated region
      $region81: #{fft_block_forward.2} parent=79 // pred_check
        %p5589 = pneg %p378
      $region82: #{fft_block_forward.2} parent=79 // pred_check_branch
        %5591 = sbr.rel (%p5589) target = $region84
      $region83: #{fft_block_forward.2} parent=79 // pred_region
        _
      $region84: #{fft_block_forward.2} parent=79 // pred_fallthru
        _
      // Predicated region
      $region85: #{fft_block_forward.2} parent=79 // pred_check
        %p5592 = pneg %p404
      $region86: #{fft_block_forward.2} parent=79 // pred_check_branch
        %5594 = sbr.rel (%p5592) target = $region88
      $region87: #{fft_block_forward.2} parent=79 // pred_region
        _
      $region88: #{fft_block_forward.2} parent=79 // pred_fallthru
        _
    $region80: #{fft_block_forward.2} parent=5 // pred_fallthru
      _
    %p5595 = scmp.le.s32.totalorder 2, %s25
    // Predicated region
    $region89: #{fft_block_forward.2} parent=5 // pred_check
      %p5596 = pneg %p5595
    $region90: #{fft_block_forward.2} parent=5 // pred_check_branch
      %5598 = sbr.rel (%p5596) target = $region92
    $region91: #{fft_block_forward.2} parent=5 // pred_region
      %s5599 = ssub.s32 %s25, 2
      // Predicated region
      $region93: #{fft_block_forward.2} parent=91 // pred_check
        %p5600 = pneg %p384
      $region94: #{fft_block_forward.2} parent=91 // pred_check_branch
        %5602 = sbr.rel (%p5600) target = $region96
      $region95: #{fft_block_forward.2} parent=91 // pred_region
        %p5603 = scmp.lt.s32.totalorder %s31, 1
        %s5604 = scalar_select %p5603, %s31, 1
        %s5605 = smul.addr %s5604, 2
        %s5606 = smul.addr %s5605, 2
        %s5607 = scalar_lea.vmem %s15, %s5606
      $region96: #{fft_block_forward.2} parent=91 // pred_fallthru
        _
      // Predicated region
      $region97: #{fft_block_forward.2} parent=91 // pred_check
        %p5608 = pneg %p410
      $region98: #{fft_block_forward.2} parent=91 // pred_check_branch
        %5610 = sbr.rel (%p5608) target = $region100
      $region99: #{fft_block_forward.2} parent=91 // pred_region
        %p5611 = scmp.lt.s32.totalorder %s31, 1
        %s5612 = scalar_select %p5611, %s31, 1
        %s5613 = smul.addr %s5612, 2
        %s5614 = scalar_lea.vmem %s16, %s5613
      $region100: #{fft_block_forward.2} parent=91 // pred_fallthru
        _
    $region92: #{fft_block_forward.2} parent=5 // pred_fallthru
      _
  $region6: #{fft_block_forward.2} parent=0 // loop_footer
    %s29 = sadd.s32 1, %s25
  $region7: #{fft_block_forward.2} parent=0 // loop_footer_branch
    %24 = sbr.rel target = $region3
  $region8: #{fft_block_forward.2} parent=0 // loop_exit
    _

</llo_original>
